<compile_context>
chip_gen: v5e
topology: v5e:2x2
jax: 0.10.0
libtpu: 0.0.40
codegen_flags: <defaults>
</compile_context>

<pallas_src>
import jax
import jax.numpy as jnp
from jax import lax
from jax.experimental import pallas as pl
from jax.experimental.pallas import tpu as pltpu

# ----- model hyperparameters (from the training script) -----
DATA_DIM = 88
HIDDEN_DIM = 20
OUTPUT_DIM = 2          # len(['pushup-down', 'pushup-up'])
SEQ_LENGTH = 30
BATCH = 2

# ----- kernel layout constants -----
GP = 32                 # lanes per LSTM gate block (4 gates -> one 128-lane vector)
GW = 4 * GP             # 128: packed gate width == packed hidden/state width
D_PAD = 128             # lane-padded input feature width
BP = 8                  # sublane-padded batch rows (one (8,128) tile per timestep)


# ------------------------------------- kernel --------------------------------------------

def _lstm_mlp_kernel(
    x_ref,                       # (T*BP, D_PAD) bf16  time-major, batch-padded input
    w_ih0_ref,                   # (D_PAD, GW)   bf16  layer-0 input weights (packed)
    w_hh0_ref,                   # (GW, GW)      bf16  layer-0 recurrent weights
    b0_ref,                      # (1, GW)       f32   layer-0 combined bias (b_ih + b_hh)
    w_ih1_ref,                   # (GW, GW)      bf16  layer-1 input weights
    w_hh1_ref,                   # (GW, GW)      bf16  layer-1 recurrent weights
    b1_ref,                      # (1, GW)       f32
    w_fc1_ref, b_fc1_ref,        # (GW, GW) bf16, (1, GW) f32
    w_fc2_ref, b_fc2_ref,        # (GW, GW) bf16, (1, GW) f32
    w_fc3_ref, b_fc3_ref,        # (GW, O)  bf16, (1, O)  f32
    out_ref,                     # (B, O) f32
    gx_scr,                      # (T*BP, GW) f32 scratch: hoisted layer-0 input projection
):
    T = x_ref.shape[0] // BP

    # ---- hoisted layer-0 input projection + bias: one batched bf16 matmul, f32 accumulate --
    gx_scr[...] = (
        jnp.dot(x_ref[...], w_ih0_ref[...], preferred_element_type=jnp.float32)
        + b0_ref[...]
    )

    # ---- tiny loop-invariant values (1 vreg each); big weights are read at their dot sites --
    b1 = b1_ref[...]
    lane = lax.broadcasted_iota(jnp.int32, (BP, GW), 1)
    g_mask = (lane >= 2 * GP) & (lane < 3 * GP)        # cell-gate (tanh) lanes

    def gate_update(gates, c_prev):
        # gates: (BP, GW); gate blocks i|f|g|o at lane offsets 0, GP, 2GP, 3GP.
        # One sigmoid + one tanh over the whole vector, per-lane select (2 EUP pushes),
        # then XLU rolls align f / g / o onto lanes [0, GP) where the state lives.
        act = jnp.where(g_mask, jnp.tanh(gates), jax.nn.sigmoid(gates))
        f_al = pltpu.roll(act, shift=3 * GP, axis=1)   # f -> lanes [0, GP)
        g_al = pltpu.roll(act, shift=2 * GP, axis=1)   # g -> lanes [0, GP)
        o_al = pltpu.roll(act, shift=GP, axis=1)       # o -> lanes [0, GP)
        # Only lanes [0, GP) are meaningful; higher lanes carry bounded junk that is
        # annihilated by zero weight rows in every downstream matmul.
        c_new = f_al * c_prev + act * g_al
        h_new = o_al * jnp.tanh(c_new)
        return h_new, c_new

    def step(t, carry):
        h0, c0, h1, c1 = carry
        # layer 0: input projection precomputed; only the recurrent matmul is serial.
        row = pl.multiple_of(t * BP, BP)               # (8,128)-tile-aligned read
        g0 = gx_scr[pl.ds(row, BP), :] + jnp.dot(
            h0.astype(jnp.bfloat16), w_hh0_ref[...],
            preferred_element_type=jnp.float32)
        h0, c0 = gate_update(g0, c0)
        # layer 1: two small dots summed (no per-step concatenate).
        g1 = (jnp.dot(h0.astype(jnp.bfloat16), w_ih1_ref[...],
                      preferred_element_type=jnp.float32)
              + jnp.dot(h1.astype(jnp.bfloat16), w_hh1_ref[...],
                        preferred_element_type=jnp.float32)
              + b1)
        h1, c1 = gate_update(g1, c1)
        return h0, c0, h1, c1

    zeros = jnp.zeros((BP, GW), jnp.float32)           # PyTorch zero initial (h0, c0)
    _, _, h_top, _ = lax.fori_loop(0, T, step, (zeros, zeros, zeros, zeros),
                                   unroll=True)

    # ---- MLP head: silu(fc1) -> silu(fc2) -> fc3 -> softmax(dim=1) ----
    z = jnp.dot(h_top.astype(jnp.bfloat16), w_fc1_ref[...],
                preferred_element_type=jnp.float32) + b_fc1_ref[...]
    z = z * jax.nn.sigmoid(z)                          # SiLU (f32)
    z = jnp.dot(z.astype(jnp.bfloat16), w_fc2_ref[...],
                preferred_element_type=jnp.float32) + b_fc2_ref[...]
    z = z * jax.nn.sigmoid(z)                          # SiLU (f32)
    logits = jnp.dot(z.astype(jnp.bfloat16), w_fc3_ref[...],
                     preferred_element_type=jnp.float32) + b_fc3_ref[...]

    # numerically stable softmax; EUP approx reciprocal + multiply instead of divide
    m = jnp.max(logits, axis=1, keepdims=True)
    e = jnp.exp(logits - m)
    s = jnp.sum(e, axis=1, keepdims=True)
    p = e * pl.reciprocal(s, approx=True)
    out_ref[...] = p[:out_ref.shape[0], :]             # drop batch-padding rows


# -------------------------- one-time weight packing (NOT in the hot path) -----------------

def _pack_gate_weight(w, in_pad):
    """PyTorch gate-stacked weight (4H, in) -> (in_pad, GW) bf16: transposed, gate g's H
    outputs placed at lanes [g*GP, g*GP+H), zeros elsewhere."""
    H = HIDDEN_DIM
    in_dim = w.shape[1]
    wt = jnp.asarray(w, jnp.float32).T.reshape(in_dim, 4, H)       # (in, gate, H)
    out = jnp.zeros((in_pad, 4, GP), jnp.float32).at[:in_dim, :, :H].set(wt)
    return out.reshape(in_pad, GW).astype(jnp.bfloat16)


def _pack_gate_bias(b):
    H = HIDDEN_DIM
    bb = jnp.asarray(b, jnp.float32).reshape(4, H)
    return jnp.zeros((4, GP), jnp.float32).at[:, :H].set(bb).reshape(1, GW)


def _pack_fc(w, b, out_pad):
    """PyTorch linear (out, in) -> transposed & padded (GW, out_pad) bf16, bias (1, out_pad) f32."""
    o, i = w.shape
    wp = jnp.zeros((GW, out_pad), jnp.float32).at[:i, :o].set(jnp.asarray(w, jnp.float32).T)
    bp = jnp.zeros((1, out_pad), jnp.float32).at[0, :o].set(b)
    return wp.astype(jnp.bfloat16), bp


def pack_params(params):
    """Pack all weights ONCE (transpose, gate-lane pack, pad, bf16) outside the per-call path."""
    w_fc1, b_fc1 = _pack_fc(params["w_fc1"], params["b_fc1"], GW)
    w_fc2, b_fc2 = _pack_fc(params["w_fc2"], params["b_fc2"], GW)
    w_fc3, b_fc3 = _pack_fc(params["w_fc3"], params["b_fc3"], OUTPUT_DIM)
    return (
        _pack_gate_weight(params["w_ih0"], D_PAD),     # (D_PAD, GW)
        _pack_gate_weight(params["w_hh0"], GW),        # (GW, GW)
        _pack_gate_bias(params["b0"]),                 # (1, GW)
        _pack_gate_weight(params["w_ih1"], GW),        # (GW, GW)
        _pack_gate_weight(params["w_hh1"], GW),        # (GW, GW)
        _pack_gate_bias(params["b1"]),                 # (1, GW)
        w_fc1, b_fc1, w_fc2, b_fc2, w_fc3, b_fc3,
    )


# ------------------------------------- parameters ----------------------------------------

def init_params(key):
    """PyTorch-style uniform(-1/sqrt(H), 1/sqrt(H)) init, deterministic."""
    k = 1.0 / jnp.sqrt(jnp.float32(HIDDEN_DIM))
    keys = jax.random.split(key, 16)

    def u(kk, shape):
        return jax.random.uniform(kk, shape, jnp.float32, minval=-k, maxval=k)

    H, D, O = HIDDEN_DIM, DATA_DIM, OUTPUT_DIM
    return dict(
        w_ih0=u(keys[0], (4 * H, D)),
        w_hh0=u(keys[1], (4 * H, H)),
        b0=u(keys[2], (4 * H,)) + u(keys[3], (4 * H,)),            # b_ih + b_hh
        w_ih1=u(keys[4], (4 * H, H)),
        w_hh1=u(keys[5], (4 * H, H)),
        b1=u(keys[6], (4 * H,)) + u(keys[7], (4 * H,)),
        w_fc1=u(keys[8], (H, H)),
        b_fc1=u(keys[9], (H,)),
        w_fc2=u(keys[10], (H, H)),
        b_fc2=u(keys[11], (H,)),
        w_fc3=u(keys[12], (O, H)),
        b_fc3=u(keys[13], (O,)),
    )


# -------------------------------------- forward ------------------------------------------

@jax.jit
def model_forward(x, packed):
    # matches `x = x.view([-1, seq_length, data_dim])`
    x = x.reshape(-1, SEQ_LENGTH, DATA_DIM).astype(jnp.float32)
    B = x.shape[0]
    assert B <= BP, "kernel handles a single (<=8)-row batch tile"

    # time-major, batch rows padded B->BP, features padded DATA_DIM->D_PAD, bf16 operand
    x_tm = jnp.transpose(x, (1, 0, 2))                             # (T, B, D)
    x_tm = jnp.pad(x_tm, ((0, 0), (0, BP - B), (0, D_PAD - DATA_DIM)))
    x_tm = x_tm.reshape(SEQ_LENGTH * BP, D_PAD).astype(jnp.bfloat16)

    vmem = pl.BlockSpec(memory_space=pltpu.MemorySpace.VMEM)
    return pl.pallas_call(
        _lstm_mlp_kernel,
        out_shape=jax.ShapeDtypeStruct((B, OUTPUT_DIM), jnp.float32),
        in_specs=[vmem] * (1 + len(packed)),
        out_specs=vmem,
        scratch_shapes=[
            pltpu.VMEM((SEQ_LENGTH * BP, GW), jnp.float32),        # hoisted layer-0 gates
        ],
    )(x_tm, *packed)


if __name__ == "__main__":
    key = jax.random.PRNGKey(0)
    k_params, k_x = jax.random.split(key)

    params = init_params(k_params)
    packed = pack_params(params)                    # one-time packing, outside hot path
    x = jax.random.normal(k_x, (BATCH, SEQ_LENGTH, DATA_DIM), jnp.float32)

    out = model_forward(x, packed)
    out = jax.block_until_ready(out)

    assert out.shape == (BATCH, OUTPUT_DIM)
    assert bool(jnp.all(jnp.isfinite(out)))
    # softmax rows must sum to ~1 (approx reciprocal + bf16 matmuls => loose tolerance)
    assert bool(jnp.all(jnp.abs(jnp.sum(out, axis=1) - 1.0) < 1e-2))
    print("KERNEL_OK")
</pallas_src>

<mosaic_0001>
module attributes {stable_mosaic.version = 11 : i64} {
  func.func @_lstm_mlp_kernel(%arg0: memref<240x128xbf16, #tpu.memory_space<vmem>>, %arg1: memref<128x128xbf16, #tpu.memory_space<vmem>>, %arg2: memref<128x128xbf16, #tpu.memory_space<vmem>>, %arg3: memref<1x128xf32, #tpu.memory_space<vmem>>, %arg4: memref<128x128xbf16, #tpu.memory_space<vmem>>, %arg5: memref<128x128xbf16, #tpu.memory_space<vmem>>, %arg6: memref<1x128xf32, #tpu.memory_space<vmem>>, %arg7: memref<128x128xbf16, #tpu.memory_space<vmem>>, %arg8: memref<1x128xf32, #tpu.memory_space<vmem>>, %arg9: memref<128x128xbf16, #tpu.memory_space<vmem>>, %arg10: memref<1x128xf32, #tpu.memory_space<vmem>>, %arg11: memref<128x2xbf16, #tpu.memory_space<vmem>>, %arg12: memref<1x2xf32, #tpu.memory_space<vmem>>, %arg13: memref<2x2xf32, #tpu.memory_space<vmem>>, %arg14: memref<240x128xf32, #tpu.memory_space<vmem>>) attributes {dimension_semantics = [], scalar_prefetch = 0 : i64, scratch_operands = 1 : i64, tpu.core_type = #tpu.core_type<tc>} {
    %c0 = arith.constant 0 : index
    %c0_0 = arith.constant 0 : index
    %0 = vector.load %arg0[%c0, %c0_0] : memref<240x128xbf16, #tpu.memory_space<vmem>>, vector<240x128xbf16>
    %c0_1 = arith.constant 0 : index
    %c0_2 = arith.constant 0 : index
    %1 = vector.load %arg1[%c0_1, %c0_2] : memref<128x128xbf16, #tpu.memory_space<vmem>>, vector<128x128xbf16>
    %cst = arith.constant dense<0.000000e+00> : vector<240x128xf32>
    %2 = tpu.matmul %0, %1, %cst {dimension_numbers = #tpu.dot_dimension_numbers<[1], [0], [0], [1], [0, 0, 1, 1], [], []>} : vector<240x128xbf16>, vector<128x128xbf16>, vector<240x128xf32> -> vector<240x128xf32>
    %c0_3 = arith.constant 0 : index
    %c0_4 = arith.constant 0 : index
    %3 = vector.load %arg3[%c0_3, %c0_4] : memref<1x128xf32, #tpu.memory_space<vmem>>, vector<1x128xf32>
    %4 = vector.broadcast %3 : vector<1x128xf32> to vector<240x128xf32>
    %5 = arith.addf %2, %4 : vector<240x128xf32>
    %c0_5 = arith.constant 0 : index
    %c0_6 = arith.constant 0 : index
    %6 = vector.load %arg14[%c0_5, %c0_6] : memref<240x128xf32, #tpu.memory_space<vmem>>, vector<240x128xf32>
    tpu.vector_store %arg14[%c0_5, %c0_6], %5 {strides = array<i32>} : memref<240x128xf32, #tpu.memory_space<vmem>>, vector<240x128xf32>,
    %c0_7 = arith.constant 0 : index
    %c0_8 = arith.constant 0 : index
    %7 = vector.load %arg6[%c0_7, %c0_8] : memref<1x128xf32, #tpu.memory_space<vmem>>, vector<1x128xf32>
    %8 = tpu.iota {dimensions = array<i32: 1>} : vector<8x128xi32>
    %c64_i32 = arith.constant 64 : i32
    %9 = vector.broadcast %c64_i32 : i32 to vector<8x128xi32>
    %10 = arith.cmpi sge, %8, %9 : vector<8x128xi32>
    %c96_i32 = arith.constant 96 : i32
    %11 = vector.broadcast %c96_i32 : i32 to vector<8x128xi32>
    %12 = arith.cmpi slt, %8, %11 : vector<8x128xi32>
    %13 = arith.andi %10, %12 : vector<8x128xi1>
    %cst_9 = arith.constant 0.000000e+00 : f32
    %14 = vector.broadcast %cst_9 : f32 to vector<8x128xf32>
    %c0_i32 = arith.constant 0 : i32
    %c8_i32 = arith.constant 8 : i32
    %15 = arith.muli %c0_i32, %c8_i32 : i32
    %16 = tpu.assume_multiple %15, 8 : i32
    %17 = arith.index_cast %16 : i32 to index
    %c0_10 = arith.constant 0 : index
    %18 = vector.load %arg14[%17, %c0_10] : memref<240x128xf32, #tpu.memory_space<vmem>>, vector<8x128xf32>
    %19 = arith.truncf %14 : vector<8x128xf32> to vector<8x128xbf16>
    %c0_11 = arith.constant 0 : index
    %c0_12 = arith.constant 0 : index
    %20 = vector.load %arg2[%c0_11, %c0_12] : memref<128x128xbf16, #tpu.memory_space<vmem>>, vector<128x128xbf16>
    %cst_13 = arith.constant dense<0.000000e+00> : vector<8x128xf32>
    %21 = tpu.matmul %19, %20, %cst_13 {dimension_numbers = #tpu.dot_dimension_numbers<[1], [0], [0], [1], [0, 0, 1, 1], [], []>} : vector<8x128xbf16>, vector<128x128xbf16>, vector<8x128xf32> -> vector<8x128xf32>
    %22 = arith.addf %18, %21 : vector<8x128xf32>
    %23 = math.tanh %22 : vector<8x128xf32>
    %24 = arith.negf %22 : vector<8x128xf32>
    %25 = math.exp %24 : vector<8x128xf32>
    %cst_14 = arith.constant 1.000000e+00 : f32
    %26 = vector.broadcast %cst_14 : f32 to vector<8x128xf32>
    %27 = arith.addf %26, %25 : vector<8x128xf32>
    %28 = arith.divf %26, %27 : vector<8x128xf32>
    %29 = arith.select %13, %23, %28 : vector<8x128xi1>, vector<8x128xf32>
    %c96_i32_15 = arith.constant 96 : i32
    %30 = tpu.dynamic_rotate %29 by %c96_i32_15 dim 1 : vector<8x128xf32>, i32 -> vector<8x128xf32>
    %c64_i32_16 = arith.constant 64 : i32
    %31 = tpu.dynamic_rotate %29 by %c64_i32_16 dim 1 : vector<8x128xf32>, i32 -> vector<8x128xf32>
    %c32_i32 = arith.constant 32 : i32
    %32 = tpu.dynamic_rotate %29 by %c32_i32 dim 1 : vector<8x128xf32>, i32 -> vector<8x128xf32>
    %33 = arith.mulf %30, %14 : vector<8x128xf32>
    %34 = arith.mulf %29, %31 : vector<8x128xf32>
    %35 = arith.addf %33, %34 : vector<8x128xf32>
    %36 = math.tanh %35 : vector<8x128xf32>
    %37 = arith.mulf %32, %36 : vector<8x128xf32>
    %38 = arith.truncf %37 : vector<8x128xf32> to vector<8x128xbf16>
    %c0_17 = arith.constant 0 : index
    %c0_18 = arith.constant 0 : index
    %39 = vector.load %arg4[%c0_17, %c0_18] : memref<128x128xbf16, #tpu.memory_space<vmem>>, vector<128x128xbf16>
    %cst_19 = arith.constant dense<0.000000e+00> : vector<8x128xf32>
    %40 = tpu.matmul %38, %39, %cst_19 {dimension_numbers = #tpu.dot_dimension_numbers<[1], [0], [0], [1], [0, 0, 1, 1], [], []>} : vector<8x128xbf16>, vector<128x128xbf16>, vector<8x128xf32> -> vector<8x128xf32>
    %41 = arith.truncf %14 : vector<8x128xf32> to vector<8x128xbf16>
    %c0_20 = arith.constant 0 : index
    %c0_21 = arith.constant 0 : index
    %42 = vector.load %arg5[%c0_20, %c0_21] : memref<128x128xbf16, #tpu.memory_space<vmem>>, vector<128x128xbf16>
    %cst_22 = arith.constant dense<0.000000e+00> : vector<8x128xf32>
    %43 = tpu.matmul %41, %42, %cst_22 {dimension_numbers = #tpu.dot_dimension_numbers<[1], [0], [0], [1], [0, 0, 1, 1], [], []>} : vector<8x128xbf16>, vector<128x128xbf16>, vector<8x128xf32> -> vector<8x128xf32>
    %44 = arith.addf %40, %43 : vector<8x128xf32>
    %45 = vector.broadcast %7 : vector<1x128xf32> to vector<8x128xf32>
    %46 = arith.addf %44, %45 : vector<8x128xf32>
    %47 = math.tanh %46 : vector<8x128xf32>
    %48 = arith.negf %46 : vector<8x128xf32>
    %49 = math.exp %48 : vector<8x128xf32>
    %cst_23 = arith.constant 1.000000e+00 : f32
    %50 = vector.broadcast %cst_23 : f32 to vector<8x128xf32>
    %51 = arith.addf %50, %49 : vector<8x128xf32>
    %52 = arith.divf %50, %51 : vector<8x128xf32>
    %53 = arith.select %13, %47, %52 : vector<8x128xi1>, vector<8x128xf32>
    %c96_i32_24 = arith.constant 96 : i32
    %54 = tpu.dynamic_rotate %53 by %c96_i32_24 dim 1 : vector<8x128xf32>, i32 -> vector<8x128xf32>
    %c64_i32_25 = arith.constant 64 : i32
    %55 = tpu.dynamic_rotate %53 by %c64_i32_25 dim 1 : vector<8x128xf32>, i32 -> vector<8x128xf32>
    %c32_i32_26 = arith.constant 32 : i32
    %56 = tpu.dynamic_rotate %53 by %c32_i32_26 dim 1 : vector<8x128xf32>, i32 -> vector<8x128xf32>
    %57 = arith.mulf %54, %14 : vector<8x128xf32>
    %58 = arith.mulf %53, %55 : vector<8x128xf32>
    %59 = arith.addf %57, %58 : vector<8x128xf32>
    %60 = math.tanh %59 : vector<8x128xf32>
    %61 = arith.mulf %56, %60 : vector<8x128xf32>
    %c1_i32 = arith.constant 1 : i32
    %c8_i32_27 = arith.constant 8 : i32
    %62 = arith.muli %c1_i32, %c8_i32_27 : i32
    %63 = tpu.assume_multiple %62, 8 : i32
    %64 = arith.index_cast %63 : i32 to index
    %c0_28 = arith.constant 0 : index
    %65 = vector.load %arg14[%64, %c0_28] : memref<240x128xf32, #tpu.memory_space<vmem>>, vector<8x128xf32>
    %66 = arith.truncf %37 : vector<8x128xf32> to vector<8x128xbf16>
    %c0_29 = arith.constant 0 : index
    %c0_30 = arith.constant 0 : index
    %67 = vector.load %arg2[%c0_29, %c0_30] : memref<128x128xbf16, #tpu.memory_space<vmem>>, vector<128x128xbf16>
    %cst_31 = arith.constant dense<0.000000e+00> : vector<8x128xf32>
    %68 = tpu.matmul %66, %67, %cst_31 {dimension_numbers = #tpu.dot_dimension_numbers<[1], [0], [0], [1], [0, 0, 1, 1], [], []>} : vector<8x128xbf16>, vector<128x128xbf16>, vector<8x128xf32> -> vector<8x128xf32>
    %69 = arith.addf %65, %68 : vector<8x128xf32>
    %70 = math.tanh %69 : vector<8x128xf32>
    %71 = arith.negf %69 : vector<8x128xf32>
    %72 = math.exp %71 : vector<8x128xf32>
    %cst_32 = arith.constant 1.000000e+00 : f32
    %73 = vector.broadcast %cst_32 : f32 to vector<8x128xf32>
    %74 = arith.addf %73, %72 : vector<8x128xf32>
    %75 = arith.divf %73, %74 : vector<8x128xf32>
    %76 = arith.select %13, %70, %75 : vector<8x128xi1>, vector<8x128xf32>
    %c96_i32_33 = arith.constant 96 : i32
    %77 = tpu.dynamic_rotate %76 by %c96_i32_33 dim 1 : vector<8x128xf32>, i32 -> vector<8x128xf32>
    %c64_i32_34 = arith.constant 64 : i32
    %78 = tpu.dynamic_rotate %76 by %c64_i32_34 dim 1 : vector<8x128xf32>, i32 -> vector<8x128xf32>
    %c32_i32_35 = arith.constant 32 : i32
    %79 = tpu.dynamic_rotate %76 by %c32_i32_35 dim 1 : vector<8x128xf32>, i32 -> vector<8x128xf32>
    %80 = arith.mulf %77, %35 : vector<8x128xf32>
    %81 = arith.mulf %76, %78 : vector<8x128xf32>
    %82 = arith.addf %80, %81 : vector<8x128xf32>
    %83 = math.tanh %82 : vector<8x128xf32>
    %84 = arith.mulf %79, %83 : vector<8x128xf32>
    %85 = arith.truncf %84 : vector<8x128xf32> to vector<8x128xbf16>
    %c0_36 = arith.constant 0 : index
    %c0_37 = arith.constant 0 : index
    %86 = vector.load %arg4[%c0_36, %c0_37] : memref<128x128xbf16, #tpu.memory_space<vmem>>, vector<128x128xbf16>
    %cst_38 = arith.constant dense<0.000000e+00> : vector<8x128xf32>
    %87 = tpu.matmul %85, %86, %cst_38 {dimension_numbers = #tpu.dot_dimension_numbers<[1], [0], [0], [1], [0, 0, 1, 1], [], []>} : vector<8x128xbf16>, vector<128x128xbf16>, vector<8x128xf32> -> vector<8x128xf32>
    %88 = arith.truncf %61 : vector<8x128xf32> to vector<8x128xbf16>
    %c0_39 = arith.constant 0 : index
    %c0_40 = arith.constant 0 : index
    %89 = vector.load %arg5[%c0_39, %c0_40] : memref<128x128xbf16, #tpu.memory_space<vmem>>, vector<128x128xbf16>
    %cst_41 = arith.constant dense<0.000000e+00> : vector<8x128xf32>
    %90 = tpu.matmul %88, %89, %cst_41 {dimension_numbers = #tpu.dot_dimension_numbers<[1], [0], [0], [1], [0, 0, 1, 1], [], []>} : vector<8x128xbf16>, vector<128x128xbf16>, vector<8x128xf32> -> vector<8x128xf32>
    %91 = arith.addf %87, %90 : vector<8x128xf32>
    %92 = vector.broadcast %7 : vector<1x128xf32> to vector<8x128xf32>
    %93 = arith.addf %91, %92 : vector<8x128xf32>
    %94 = math.tanh %93 : vector<8x128xf32>
    %95 = arith.negf %93 : vector<8x128xf32>
    %96 = math.exp %95 : vector<8x128xf32>
    %cst_42 = arith.constant 1.000000e+00 : f32
    %97 = vector.broadcast %cst_42 : f32 to vector<8x128xf32>
    %98 = arith.addf %97, %96 : vector<8x128xf32>
    %99 = arith.divf %97, %98 : vector<8x128xf32>
    %100 = arith.select %13, %94, %99 : vector<8x128xi1>, vector<8x128xf32>
    %c96_i32_43 = arith.constant 96 : i32
    %101 = tpu.dynamic_rotate %100 by %c96_i32_43 dim 1 : vector<8x128xf32>, i32 -> vector<8x128xf32>
    %c64_i32_44 = arith.constant 64 : i32
    %102 = tpu.dynamic_rotate %100 by %c64_i32_44 dim 1 : vector<8x128xf32>, i32 -> vector<8x128xf32>
    %c32_i32_45 = arith.constant 32 : i32
    %103 = tpu.dynamic_rotate %100 by %c32_i32_45 dim 1 : vector<8x128xf32>, i32 -> vector<8x128xf32>
    %104 = arith.mulf %101, %59 : vector<8x128xf32>
    %105 = arith.mulf %100, %102 : vector<8x128xf32>
    %106 = arith.addf %104, %105 : vector<8x128xf32>
    %107 = math.tanh %106 : vector<8x128xf32>
    %108 = arith.mulf %103, %107 : vector<8x128xf32>
    %c2_i32 = arith.constant 2 : i32
    %c8_i32_46 = arith.constant 8 : i32
    %109 = arith.muli %c2_i32, %c8_i32_46 : i32
    %110 = tpu.assume_multiple %109, 8 : i32
    %111 = arith.index_cast %110 : i32 to index
    %c0_47 = arith.constant 0 : index
    %112 = vector.load %arg14[%111, %c0_47] : memref<240x128xf32, #tpu.memory_space<vmem>>, vector<8x128xf32>
    %113 = arith.truncf %84 : vector<8x128xf32> to vector<8x128xbf16>
    %c0_48 = arith.constant 0 : index
    %c0_49 = arith.constant 0 : index
    %114 = vector.load %arg2[%c0_48, %c0_49] : memref<128x128xbf16, #tpu.memory_space<vmem>>, vector<128x128xbf16>
    %cst_50 = arith.constant dense<0.000000e+00> : vector<8x128xf32>
    %115 = tpu.matmul %113, %114, %cst_50 {dimension_numbers = #tpu.dot_dimension_numbers<[1], [0], [0], [1], [0, 0, 1, 1], [], []>} : vector<8x128xbf16>, vector<128x128xbf16>, vector<8x128xf32> -> vector<8x128xf32>
    %116 = arith.addf %112, %115 : vector<8x128xf32>
    %117 = math.tanh %116 : vector<8x128xf32>
    %118 = arith.negf %116 : vector<8x128xf32>
    %119 = math.exp %118 : vector<8x128xf32>
    %cst_51 = arith.constant 1.000000e+00 : f32
    %120 = vector.broadcast %cst_51 : f32 to vector<8x128xf32>
    %121 = arith.addf %120, %119 : vector<8x128xf32>
    %122 = arith.divf %120, %121 : vector<8x128xf32>
    %123 = arith.select %13, %117, %122 : vector<8x128xi1>, vector<8x128xf32>
    %c96_i32_52 = arith.constant 96 : i32
    %124 = tpu.dynamic_rotate %123 by %c96_i32_52 dim 1 : vector<8x128xf32>, i32 -> vector<8x128xf32>
    %c64_i32_53 = arith.constant 64 : i32
    %125 = tpu.dynamic_rotate %123 by %c64_i32_53 dim 1 : vector<8x128xf32>, i32 -> vector<8x128xf32>
    %c32_i32_54 = arith.constant 32 : i32
    %126 = tpu.dynamic_rotate %123 by %c32_i32_54 dim 1 : vector<8x128xf32>, i32 -> vector<8x128xf32>
    %127 = arith.mulf %124, %82 : vector<8x128xf32>
    %128 = arith.mulf %123, %125 : vector<8x128xf32>
    %129 = arith.addf %127, %128 : vector<8x128xf32>
    %130 = math.tanh %129 : vector<8x128xf32>
    %131 = arith.mulf %126, %130 : vector<8x128xf32>
    %132 = arith.truncf %131 : vector<8x128xf32> to vector<8x128xbf16>
    %c0_55 = arith.constant 0 : index
    %c0_56 = arith.constant 0 : index
    %133 = vector.load %arg4[%c0_55, %c0_56] : memref<128x128xbf16, #tpu.memory_space<vmem>>, vector<128x128xbf16>
    %cst_57 = arith.constant dense<0.000000e+00> : vector<8x128xf32>
    %134 = tpu.matmul %132, %133, %cst_57 {dimension_numbers = #tpu.dot_dimension_numbers<[1], [0], [0], [1], [0, 0, 1, 1], [], []>} : vector<8x128xbf16>, vector<128x128xbf16>, vector<8x128xf32> -> vector<8x128xf32>
    %135 = arith.truncf %108 : vector<8x128xf32> to vector<8x128xbf16>
    %c0_58 = arith.constant 0 : index
    %c0_59 = arith.constant 0 : index
    %136 = vector.load %arg5[%c0_58, %c0_59] : memref<128x128xbf16, #tpu.memory_space<vmem>>, vector<128x128xbf16>
    %cst_60 = arith.constant dense<0.000000e+00> : vector<8x128xf32>
    %137 = tpu.matmul %135, %136, %cst_60 {dimension_numbers = #tpu.dot_dimension_numbers<[1], [0], [0], [1], [0, 0, 1, 1], [], []>} : vector<8x128xbf16>, vector<128x128xbf16>, vector<8x128xf32> -> vector<8x128xf32>
    %138 = arith.addf %134, %137 : vector<8x128xf32>
    %139 = vector.broadcast %7 : vector<1x128xf32> to vector<8x128xf32>
    %140 = arith.addf %138, %139 : vector<8x128xf32>
    %141 = math.tanh %140 : vector<8x128xf32>
    %142 = arith.negf %140 : vector<8x128xf32>
    %143 = math.exp %142 : vector<8x128xf32>
    %cst_61 = arith.constant 1.000000e+00 : f32
    %144 = vector.broadcast %cst_61 : f32 to vector<8x128xf32>
    %145 = arith.addf %144, %143 : vector<8x128xf32>
    %146 = arith.divf %144, %145 : vector<8x128xf32>
    %147 = arith.select %13, %141, %146 : vector<8x128xi1>, vector<8x128xf32>
    %c96_i32_62 = arith.constant 96 : i32
    %148 = tpu.dynamic_rotate %147 by %c96_i32_62 dim 1 : vector<8x128xf32>, i32 -> vector<8x128xf32>
    %c64_i32_63 = arith.constant 64 : i32
    %149 = tpu.dynamic_rotate %147 by %c64_i32_63 dim 1 : vector<8x128xf32>, i32 -> vector<8x128xf32>
    %c32_i32_64 = arith.constant 32 : i32
    %150 = tpu.dynamic_rotate %147 by %c32_i32_64 dim 1 : vector<8x128xf32>, i32 -> vector<8x128xf32>
    %151 = arith.mulf %148, %106 : vector<8x128xf32>
    %152 = arith.mulf %147, %149 : vector<8x128xf32>
    %153 = arith.addf %151, %152 : vector<8x128xf32>
    %154 = math.tanh %153 : vector<8x128xf32>
    %155 = arith.mulf %150, %154 : vector<8x128xf32>
    %c3_i32 = arith.constant 3 : i32
    %c8_i32_65 = arith.constant 8 : i32
    %156 = arith.muli %c3_i32, %c8_i32_65 : i32
    %157 = tpu.assume_multiple %156, 8 : i32
    %158 = arith.index_cast %157 : i32 to index
    %c0_66 = arith.constant 0 : index
    %159 = vector.load %arg14[%158, %c0_66] : memref<240x128xf32, #tpu.memory_space<vmem>>, vector<8x128xf32>
    %160 = arith.truncf %131 : vector<8x128xf32> to vector<8x128xbf16>
    %c0_67 = arith.constant 0 : index
    %c0_68 = arith.constant 0 : index
    %161 = vector.load %arg2[%c0_67, %c0_68] : memref<128x128xbf16, #tpu.memory_space<vmem>>, vector<128x128xbf16>
    %cst_69 = arith.constant dense<0.000000e+00> : vector<8x128xf32>
    %162 = tpu.matmul %160, %161, %cst_69 {dimension_numbers = #tpu.dot_dimension_numbers<[1], [0], [0], [1], [0, 0, 1, 1], [], []>} : vector<8x128xbf16>, vector<128x128xbf16>, vector<8x128xf32> -> vector<8x128xf32>
    %163 = arith.addf %159, %162 : vector<8x128xf32>
    %164 = math.tanh %163 : vector<8x128xf32>
    %165 = arith.negf %163 : vector<8x128xf32>
    %166 = math.exp %165 : vector<8x128xf32>
    %cst_70 = arith.constant 1.000000e+00 : f32
    %167 = vector.broadcast %cst_70 : f32 to vector<8x128xf32>
    %168 = arith.addf %167, %166 : vector<8x128xf32>
    %169 = arith.divf %167, %168 : vector<8x128xf32>
    %170 = arith.select %13, %164, %169 : vector<8x128xi1>, vector<8x128xf32>
    %c96_i32_71 = arith.constant 96 : i32
    %171 = tpu.dynamic_rotate %170 by %c96_i32_71 dim 1 : vector<8x128xf32>, i32 -> vector<8x128xf32>
    %c64_i32_72 = arith.constant 64 : i32
    %172 = tpu.dynamic_rotate %170 by %c64_i32_72 dim 1 : vector<8x128xf32>, i32 -> vector<8x128xf32>
    %c32_i32_73 = arith.constant 32 : i32
    %173 = tpu.dynamic_rotate %170 by %c32_i32_73 dim 1 : vector<8x128xf32>, i32 -> vector<8x128xf32>
    %174 = arith.mulf %171, %129 : vector<8x128xf32>
    %175 = arith.mulf %170, %172 : vector<8x128xf32>
    %176 = arith.addf %174, %175 : vector<8x128xf32>
    %177 = math.tanh %176 : vector<8x128xf32>
    %178 = arith.mulf %173, %177 : vector<8x128xf32>
    %179 = arith.truncf %178 : vector<8x128xf32> to vector<8x128xbf16>
    %c0_74 = arith.constant 0 : index
    %c0_75 = arith.constant 0 : index
    %180 = vector.load %arg4[%c0_74, %c0_75] : memref<128x128xbf16, #tpu.memory_space<vmem>>, vector<128x128xbf16>
    %cst_76 = arith.constant dense<0.000000e+00> : vector<8x128xf32>
    %181 = tpu.matmul %179, %180, %cst_76 {dimension_numbers = #tpu.dot_dimension_numbers<[1], [0], [0], [1], [0, 0, 1, 1], [], []>} : vector<8x128xbf16>, vector<128x128xbf16>, vector<8x128xf32> -> vector<8x128xf32>
    %182 = arith.truncf %155 : vector<8x128xf32> to vector<8x128xbf16>
    %c0_77 = arith.constant 0 : index
    %c0_78 = arith.constant 0 : index
    %183 = vector.load %arg5[%c0_77, %c0_78] : memref<128x128xbf16, #tpu.memory_space<vmem>>, vector<128x128xbf16>
    %cst_79 = arith.constant dense<0.000000e+00> : vector<8x128xf32>
    %184 = tpu.matmul %182, %183, %cst_79 {dimension_numbers = #tpu.dot_dimension_numbers<[1], [0], [0], [1], [0, 0, 1, 1], [], []>} : vector<8x128xbf16>, vector<128x128xbf16>, vector<8x128xf32> -> vector<8x128xf32>
    %185 = arith.addf %181, %184 : vector<8x128xf32>
    %186 = vector.broadcast %7 : vector<1x128xf32> to vector<8x128xf32>
    %187 = arith.addf %185, %186 : vector<8x128xf32>
    %188 = math.tanh %187 : vector<8x128xf32>
    %189 = arith.negf %187 : vector<8x128xf32>
    %190 = math.exp %189 : vector<8x128xf32>
    %cst_80 = arith.constant 1.000000e+00 : f32
    %191 = vector.broadcast %cst_80 : f32 to vector<8x128xf32>
    %192 = arith.addf %191, %190 : vector<8x128xf32>
    %193 = arith.divf %191, %192 : vector<8x128xf32>
    %194 = arith.select %13, %188, %193 : vector<8x128xi1>, vector<8x128xf32>
    %c96_i32_81 = arith.constant 96 : i32
    %195 = tpu.dynamic_rotate %194 by %c96_i32_81 dim 1 : vector<8x128xf32>, i32 -> vector<8x128xf32>
    %c64_i32_82 = arith.constant 64 : i32
    %196 = tpu.dynamic_rotate %194 by %c64_i32_82 dim 1 : vector<8x128xf32>, i32 -> vector<8x128xf32>
    %c32_i32_83 = arith.constant 32 : i32
    %197 = tpu.dynamic_rotate %194 by %c32_i32_83 dim 1 : vector<8x128xf32>, i32 -> vector<8x128xf32>
    %198 = arith.mulf %195, %153 : vector<8x128xf32>
    %199 = arith.mulf %194, %196 : vector<8x128xf32>
    %200 = arith.addf %198, %199 : vector<8x128xf32>
    %201 = math.tanh %200 : vector<8x128xf32>
    %202 = arith.mulf %197, %201 : vector<8x128xf32>
    %c4_i32 = arith.constant 4 : i32
    %c8_i32_84 = arith.constant 8 : i32
    %203 = arith.muli %c4_i32, %c8_i32_84 : i32
    %204 = tpu.assume_multiple %203, 8 : i32
    %205 = arith.index_cast %204 : i32 to index
    %c0_85 = arith.constant 0 : index
    %206 = vector.load %arg14[%205, %c0_85] : memref<240x128xf32, #tpu.memory_space<vmem>>, vector<8x128xf32>
    %207 = arith.truncf %178 : vector<8x128xf32> to vector<8x128xbf16>
    %c0_86 = arith.constant 0 : index
    %c0_87 = arith.constant 0 : index
    %208 = vector.load %arg2[%c0_86, %c0_87] : memref<128x128xbf16, #tpu.memory_space<vmem>>, vector<128x128xbf16>
    %cst_88 = arith.constant dense<0.000000e+00> : vector<8x128xf32>
    %209 = tpu.matmul %207, %208, %cst_88 {dimension_numbers = #tpu.dot_dimension_numbers<[1], [0], [0], [1], [0, 0, 1, 1], [], []>} : vector<8x128xbf16>, vector<128x128xbf16>, vector<8x128xf32> -> vector<8x128xf32>
    %210 = arith.addf %206, %209 : vector<8x128xf32>
    %211 = math.tanh %210 : vector<8x128xf32>
    %212 = arith.negf %210 : vector<8x128xf32>
    %213 = math.exp %212 : vector<8x128xf32>
    %cst_89 = arith.constant 1.000000e+00 : f32
    %214 = vector.broadcast %cst_89 : f32 to vector<8x128xf32>
    %215 = arith.addf %214, %213 : vector<8x128xf32>
    %216 = arith.divf %214, %215 : vector<8x128xf32>
    %217 = arith.select %13, %211, %216 : vector<8x128xi1>, vector<8x128xf32>
    %c96_i32_90 = arith.constant 96 : i32
    %218 = tpu.dynamic_rotate %217 by %c96_i32_90 dim 1 : vector<8x128xf32>, i32 -> vector<8x128xf32>
    %c64_i32_91 = arith.constant 64 : i32
    %219 = tpu.dynamic_rotate %217 by %c64_i32_91 dim 1 : vector<8x128xf32>, i32 -> vector<8x128xf32>
    %c32_i32_92 = arith.constant 32 : i32
    %220 = tpu.dynamic_rotate %217 by %c32_i32_92 dim 1 : vector<8x128xf32>, i32 -> vector<8x128xf32>
    %221 = arith.mulf %218, %176 : vector<8x128xf32>
    %222 = arith.mulf %217, %219 : vector<8x128xf32>
    %223 = arith.addf %221, %222 : vector<8x128xf32>
    %224 = math.tanh %223 : vector<8x128xf32>
    %225 = arith.mulf %220, %224 : vector<8x128xf32>
    %226 = arith.truncf %225 : vector<8x128xf32> to vector<8x128xbf16>
    %c0_93 = arith.constant 0 : index
    %c0_94 = arith.constant 0 : index
    %227 = vector.load %arg4[%c0_93, %c0_94] : memref<128x128xbf16, #tpu.memory_space<vmem>>, vector<128x128xbf16>
    %cst_95 = arith.constant dense<0.000000e+00> : vector<8x128xf32>
    %228 = tpu.matmul %226, %227, %cst_95 {dimension_numbers = #tpu.dot_dimension_numbers<[1], [0], [0], [1], [0, 0, 1, 1], [], []>} : vector<8x128xbf16>, vector<128x128xbf16>, vector<8x128xf32> -> vector<8x128xf32>
    %229 = arith.truncf %202 : vector<8x128xf32> to vector<8x128xbf16>
    %c0_96 = arith.constant 0 : index
    %c0_97 = arith.constant 0 : index
    %230 = vector.load %arg5[%c0_96, %c0_97] : memref<128x128xbf16, #tpu.memory_space<vmem>>, vector<128x128xbf16>
    %cst_98 = arith.constant dense<0.000000e+00> : vector<8x128xf32>
    %231 = tpu.matmul %229, %230, %cst_98 {dimension_numbers = #tpu.dot_dimension_numbers<[1], [0], [0], [1], [0, 0, 1, 1], [], []>} : vector<8x128xbf16>, vector<128x128xbf16>, vector<8x128xf32> -> vector<8x128xf32>
    %232 = arith.addf %228, %231 : vector<8x128xf32>
    %233 = vector.broadcast %7 : vector<1x128xf32> to vector<8x128xf32>
    %234 = arith.addf %232, %233 : vector<8x128xf32>
    %235 = math.tanh %234 : vector<8x128xf32>
    %236 = arith.negf %234 : vector<8x128xf32>
    %237 = math.exp %236 : vector<8x128xf32>
    %cst_99 = arith.constant 1.000000e+00 : f32
    %238 = vector.broadcast %cst_99 : f32 to vector<8x128xf32>
    %239 = arith.addf %238, %237 : vector<8x128xf32>
    %240 = arith.divf %238, %239 : vector<8x128xf32>
    %241 = arith.select %13, %235, %240 : vector<8x128xi1>, vector<8x128xf32>
    %c96_i32_100 = arith.constant 96 : i32
    %242 = tpu.dynamic_rotate %241 by %c96_i32_100 dim 1 : vector<8x128xf32>, i32 -> vector<8x128xf32>
    %c64_i32_101 = arith.constant 64 : i32
    %243 = tpu.dynamic_rotate %241 by %c64_i32_101 dim 1 : vector<8x128xf32>, i32 -> vector<8x128xf32>
    %c32_i32_102 = arith.constant 32 : i32
    %244 = tpu.dynamic_rotate %241 by %c32_i32_102 dim 1 : vector<8x128xf32>, i32 -> vector<8x128xf32>
    %245 = arith.mulf %242, %200 : vector<8x128xf32>
    %246 = arith.mulf %241, %243 : vector<8x128xf32>
    %247 = arith.addf %245, %246 : vector<8x128xf32>
    %248 = math.tanh %247 : vector<8x128xf32>
    %249 = arith.mulf %244, %248 : vector<8x128xf32>
    %c5_i32 = arith.constant 5 : i32
    %c8_i32_103 = arith.constant 8 : i32
    %250 = arith.muli %c5_i32, %c8_i32_103 : i32
    %251 = tpu.assume_multiple %250, 8 : i32
    %252 = arith.index_cast %251 : i32 to index
    %c0_104 = arith.constant 0 : index
    %253 = vector.load %arg14[%252, %c0_104] : memref<240x128xf32, #tpu.memory_space<vmem>>, vector<8x128xf32>
    %254 = arith.truncf %225 : vector<8x128xf32> to vector<8x128xbf16>
    %c0_105 = arith.constant 0 : index
    %c0_106 = arith.constant 0 : index
    %255 = vector.load %arg2[%c0_105, %c0_106] : memref<128x128xbf16, #tpu.memory_space<vmem>>, vector<128x128xbf16>
    %cst_107 = arith.constant dense<0.000000e+00> : vector<8x128xf32>
    %256 = tpu.matmul %254, %255, %cst_107 {dimension_numbers = #tpu.dot_dimension_numbers<[1], [0], [0], [1], [0, 0, 1, 1], [], []>} : vector<8x128xbf16>, vector<128x128xbf16>, vector<8x128xf32> -> vector<8x128xf32>
    %257 = arith.addf %253, %256 : vector<8x128xf32>
    %258 = math.tanh %257 : vector<8x128xf32>
    %259 = arith.negf %257 : vector<8x128xf32>
    %260 = math.exp %259 : vector<8x128xf32>
    %cst_108 = arith.constant 1.000000e+00 : f32
    %261 = vector.broadcast %cst_108 : f32 to vector<8x128xf32>
    %262 = arith.addf %261, %260 : vector<8x128xf32>
    %263 = arith.divf %261, %262 : vector<8x128xf32>
    %264 = arith.select %13, %258, %263 : vector<8x128xi1>, vector<8x128xf32>
    %c96_i32_109 = arith.constant 96 : i32
    %265 = tpu.dynamic_rotate %264 by %c96_i32_109 dim 1 : vector<8x128xf32>, i32 -> vector<8x128xf32>
    %c64_i32_110 = arith.constant 64 : i32
    %266 = tpu.dynamic_rotate %264 by %c64_i32_110 dim 1 : vector<8x128xf32>, i32 -> vector<8x128xf32>
    %c32_i32_111 = arith.constant 32 : i32
    %267 = tpu.dynamic_rotate %264 by %c32_i32_111 dim 1 : vector<8x128xf32>, i32 -> vector<8x128xf32>
    %268 = arith.mulf %265, %223 : vector<8x128xf32>
    %269 = arith.mulf %264, %266 : vector<8x128xf32>
    %270 = arith.addf %268, %269 : vector<8x128xf32>
    %271 = math.tanh %270 : vector<8x128xf32>
    %272 = arith.mulf %267, %271 : vector<8x128xf32>
    %273 = arith.truncf %272 : vector<8x128xf32> to vector<8x128xbf16>
    %c0_112 = arith.constant 0 : index
    %c0_113 = arith.constant 0 : index
    %274 = vector.load %arg4[%c0_112, %c0_113] : memref<128x128xbf16, #tpu.memory_space<vmem>>, vector<128x128xbf16>
    %cst_114 = arith.constant dense<0.000000e+00> : vector<8x128xf32>
    %275 = tpu.matmul %273, %274, %cst_114 {dimension_numbers = #tpu.dot_dimension_numbers<[1], [0], [0], [1], [0, 0, 1, 1], [], []>} : vector<8x128xbf16>, vector<128x128xbf16>, vector<8x128xf32> -> vector<8x128xf32>
    %276 = arith.truncf %249 : vector<8x128xf32> to vector<8x128xbf16>
    %c0_115 = arith.constant 0 : index
    %c0_116 = arith.constant 0 : index
    %277 = vector.load %arg5[%c0_115, %c0_116] : memref<128x128xbf16, #tpu.memory_space<vmem>>, vector<128x128xbf16>
    %cst_117 = arith.constant dense<0.000000e+00> : vector<8x128xf32>
    %278 = tpu.matmul %276, %277, %cst_117 {dimension_numbers = #tpu.dot_dimension_numbers<[1], [0], [0], [1], [0, 0, 1, 1], [], []>} : vector<8x128xbf16>, vector<128x128xbf16>, vector<8x128xf32> -> vector<8x128xf32>
    %279 = arith.addf %275, %278 : vector<8x128xf32>
    %280 = vector.broadcast %7 : vector<1x128xf32> to vector<8x128xf32>
    %281 = arith.addf %279, %280 : vector<8x128xf32>
    %282 = math.tanh %281 : vector<8x128xf32>
    %283 = arith.negf %281 : vector<8x128xf32>
    %284 = math.exp %283 : vector<8x128xf32>
    %cst_118 = arith.constant 1.000000e+00 : f32
    %285 = vector.broadcast %cst_118 : f32 to vector<8x128xf32>
    %286 = arith.addf %285, %284 : vector<8x128xf32>
    %287 = arith.divf %285, %286 : vector<8x128xf32>
    %288 = arith.select %13, %282, %287 : vector<8x128xi1>, vector<8x128xf32>
    %c96_i32_119 = arith.constant 96 : i32
    %289 = tpu.dynamic_rotate %288 by %c96_i32_119 dim 1 : vector<8x128xf32>, i32 -> vector<8x128xf32>
    %c64_i32_120 = arith.constant 64 : i32
    %290 = tpu.dynamic_rotate %288 by %c64_i32_120 dim 1 : vector<8x128xf32>, i32 -> vector<8x128xf32>
    %c32_i32_121 = arith.constant 32 : i32
    %291 = tpu.dynamic_rotate %288 by %c32_i32_121 dim 1 : vector<8x128xf32>, i32 -> vector<8x128xf32>
    %292 = arith.mulf %289, %247 : vector<8x128xf32>
    %293 = arith.mulf %288, %290 : vector<8x128xf32>
    %294 = arith.addf %292, %293 : vector<8x128xf32>
    %295 = math.tanh %294 : vector<8x128xf32>
    %296 = arith.mulf %291, %295 : vector<8x128xf32>
    %c6_i32 = arith.constant 6 : i32
    %c8_i32_122 = arith.constant 8 : i32
    %297 = arith.muli %c6_i32, %c8_i32_122 : i32
    %298 = tpu.assume_multiple %297, 8 : i32
    %299 = arith.index_cast %298 : i32 to index
    %c0_123 = arith.constant 0 : index
    %300 = vector.load %arg14[%299, %c0_123] : memref<240x128xf32, #tpu.memory_space<vmem>>, vector<8x128xf32>
    %301 = arith.truncf %272 : vector<8x128xf32> to vector<8x128xbf16>
    %c0_124 = arith.constant 0 : index
    %c0_125 = arith.constant 0 : index
    %302 = vector.load %arg2[%c0_124, %c0_125] : memref<128x128xbf16, #tpu.memory_space<vmem>>, vector<128x128xbf16>
    %cst_126 = arith.constant dense<0.000000e+00> : vector<8x128xf32>
    %303 = tpu.matmul %301, %302, %cst_126 {dimension_numbers = #tpu.dot_dimension_numbers<[1], [0], [0], [1], [0, 0, 1, 1], [], []>} : vector<8x128xbf16>, vector<128x128xbf16>, vector<8x128xf32> -> vector<8x128xf32>
    %304 = arith.addf %300, %303 : vector<8x128xf32>
    %305 = math.tanh %304 : vector<8x128xf32>
    %306 = arith.negf %304 : vector<8x128xf32>
    %307 = math.exp %306 : vector<8x128xf32>
    %cst_127 = arith.constant 1.000000e+00 : f32
    %308 = vector.broadcast %cst_127 : f32 to vector<8x128xf32>
    %309 = arith.addf %308, %307 : vector<8x128xf32>
    %310 = arith.divf %308, %309 : vector<8x128xf32>
    %311 = arith.select %13, %305, %310 : vector<8x128xi1>, vector<8x128xf32>
    %c96_i32_128 = arith.constant 96 : i32
    %312 = tpu.dynamic_rotate %311 by %c96_i32_128 dim 1 : vector<8x128xf32>, i32 -> vector<8x128xf32>
    %c64_i32_129 = arith.constant 64 : i32
    %313 = tpu.dynamic_rotate %311 by %c64_i32_129 dim 1 : vector<8x128xf32>, i32 -> vector<8x128xf32>
    %c32_i32_130 = arith.constant 32 : i32
    %314 = tpu.dynamic_rotate %311 by %c32_i32_130 dim 1 : vector<8x128xf32>, i32 -> vector<8x128xf32>
    %315 = arith.mulf %312, %270 : vector<8x128xf32>
    %316 = arith.mulf %311, %313 : vector<8x128xf32>
    %317 = arith.addf %315, %316 : vector<8x128xf32>
    %318 = math.tanh %317 : vector<8x128xf32>
    %319 = arith.mulf %314, %318 : vector<8x128xf32>
    %320 = arith.truncf %319 : vector<8x128xf32> to vector<8x128xbf16>
    %c0_131 = arith.constant 0 : index
    %c0_132 = arith.constant 0 : index
    %321 = vector.load %arg4[%c0_131, %c0_132] : memref<128x128xbf16, #tpu.memory_space<vmem>>, vector<128x128xbf16>
    %cst_133 = arith.constant dense<0.000000e+00> : vector<8x128xf32>
    %322 = tpu.matmul %320, %321, %cst_133 {dimension_numbers = #tpu.dot_dimension_numbers<[1], [0], [0], [1], [0, 0, 1, 1], [], []>} : vector<8x128xbf16>, vector<128x128xbf16>, vector<8x128xf32> -> vector<8x128xf32>
    %323 = arith.truncf %296 : vector<8x128xf32> to vector<8x128xbf16>
    %c0_134 = arith.constant 0 : index
    %c0_135 = arith.constant 0 : index
    %324 = vector.load %arg5[%c0_134, %c0_135] : memref<128x128xbf16, #tpu.memory_space<vmem>>, vector<128x128xbf16>
    %cst_136 = arith.constant dense<0.000000e+00> : vector<8x128xf32>
    %325 = tpu.matmul %323, %324, %cst_136 {dimension_numbers = #tpu.dot_dimension_numbers<[1], [0], [0], [1], [0, 0, 1, 1], [], []>} : vector<8x128xbf16>, vector<128x128xbf16>, vector<8x128xf32> -> vector<8x128xf32>
    %326 = arith.addf %322, %325 : vector<8x128xf32>
    %327 = vector.broadcast %7 : vector<1x128xf32> to vector<8x128xf32>
    %328 = arith.addf %326, %327 : vector<8x128xf32>
    %329 = math.tanh %328 : vector<8x128xf32>
    %330 = arith.negf %328 : vector<8x128xf32>
    %331 = math.exp %330 : vector<8x128xf32>
    %cst_137 = arith.constant 1.000000e+00 : f32
    %332 = vector.broadcast %cst_137 : f32 to vector<8x128xf32>
    %333 = arith.addf %332, %331 : vector<8x128xf32>
    %334 = arith.divf %332, %333 : vector<8x128xf32>
    %335 = arith.select %13, %329, %334 : vector<8x128xi1>, vector<8x128xf32>
    %c96_i32_138 = arith.constant 96 : i32
    %336 = tpu.dynamic_rotate %335 by %c96_i32_138 dim 1 : vector<8x128xf32>, i32 -> vector<8x128xf32>
    %c64_i32_139 = arith.constant 64 : i32
    %337 = tpu.dynamic_rotate %335 by %c64_i32_139 dim 1 : vector<8x128xf32>, i32 -> vector<8x128xf32>
    %c32_i32_140 = arith.constant 32 : i32
    %338 = tpu.dynamic_rotate %335 by %c32_i32_140 dim 1 : vector<8x128xf32>, i32 -> vector<8x128xf32>
    %339 = arith.mulf %336, %294 : vector<8x128xf32>
    %340 = arith.mulf %335, %337 : vector<8x128xf32>
    %341 = arith.addf %339, %340 : vector<8x128xf32>
    %342 = math.tanh %341 : vector<8x128xf32>
    %343 = arith.mulf %338, %342 : vector<8x128xf32>
    %c7_i32 = arith.constant 7 : i32
    %c8_i32_141 = arith.constant 8 : i32
    %344 = arith.muli %c7_i32, %c8_i32_141 : i32
    %345 = tpu.assume_multiple %344, 8 : i32
    %346 = arith.index_cast %345 : i32 to index
    %c0_142 = arith.constant 0 : index
    %347 = vector.load %arg14[%346, %c0_142] : memref<240x128xf32, #tpu.memory_space<vmem>>, vector<8x128xf32>
    %348 = arith.truncf %319 : vector<8x128xf32> to vector<8x128xbf16>
    %c0_143 = arith.constant 0 : index
    %c0_144 = arith.constant 0 : index
    %349 = vector.load %arg2[%c0_143, %c0_144] : memref<128x128xbf16, #tpu.memory_space<vmem>>, vector<128x128xbf16>
    %cst_145 = arith.constant dense<0.000000e+00> : vector<8x128xf32>
    %350 = tpu.matmul %348, %349, %cst_145 {dimension_numbers = #tpu.dot_dimension_numbers<[1], [0], [0], [1], [0, 0, 1, 1], [], []>} : vector<8x128xbf16>, vector<128x128xbf16>, vector<8x128xf32> -> vector<8x128xf32>
    %351 = arith.addf %347, %350 : vector<8x128xf32>
    %352 = math.tanh %351 : vector<8x128xf32>
    %353 = arith.negf %351 : vector<8x128xf32>
    %354 = math.exp %353 : vector<8x128xf32>
    %cst_146 = arith.constant 1.000000e+00 : f32
    %355 = vector.broadcast %cst_146 : f32 to vector<8x128xf32>
    %356 = arith.addf %355, %354 : vector<8x128xf32>
    %357 = arith.divf %355, %356 : vector<8x128xf32>
    %358 = arith.select %13, %352, %357 : vector<8x128xi1>, vector<8x128xf32>
    %c96_i32_147 = arith.constant 96 : i32
    %359 = tpu.dynamic_rotate %358 by %c96_i32_147 dim 1 : vector<8x128xf32>, i32 -> vector<8x128xf32>
    %c64_i32_148 = arith.constant 64 : i32
    %360 = tpu.dynamic_rotate %358 by %c64_i32_148 dim 1 : vector<8x128xf32>, i32 -> vector<8x128xf32>
    %c32_i32_149 = arith.constant 32 : i32
    %361 = tpu.dynamic_rotate %358 by %c32_i32_149 dim 1 : vector<8x128xf32>, i32 -> vector<8x128xf32>
    %362 = arith.mulf %359, %317 : vector<8x128xf32>
    %363 = arith.mulf %358, %360 : vector<8x128xf32>
    %364 = arith.addf %362, %363 : vector<8x128xf32>
    %365 = math.tanh %364 : vector<8x128xf32>
    %366 = arith.mulf %361, %365 : vector<8x128xf32>
    %367 = arith.truncf %366 : vector<8x128xf32> to vector<8x128xbf16>
    %c0_150 = arith.constant 0 : index
    %c0_151 = arith.constant 0 : index
    %368 = vector.load %arg4[%c0_150, %c0_151] : memref<128x128xbf16, #tpu.memory_space<vmem>>, vector<128x128xbf16>
    %cst_152 = arith.constant dense<0.000000e+00> : vector<8x128xf32>
    %369 = tpu.matmul %367, %368, %cst_152 {dimension_numbers = #tpu.dot_dimension_numbers<[1], [0], [0], [1], [0, 0, 1, 1], [], []>} : vector<8x128xbf16>, vector<128x128xbf16>, vector<8x128xf32> -> vector<8x128xf32>
    %370 = arith.truncf %343 : vector<8x128xf32> to vector<8x128xbf16>
    %c0_153 = arith.constant 0 : index
    %c0_154 = arith.constant 0 : index
    %371 = vector.load %arg5[%c0_153, %c0_154] : memref<128x128xbf16, #tpu.memory_space<vmem>>, vector<128x128xbf16>
    %cst_155 = arith.constant dense<0.000000e+00> : vector<8x128xf32>
    %372 = tpu.matmul %370, %371, %cst_155 {dimension_numbers = #tpu.dot_dimension_numbers<[1], [0], [0], [1], [0, 0, 1, 1], [], []>} : vector<8x128xbf16>, vector<128x128xbf16>, vector<8x128xf32> -> vector<8x128xf32>
    %373 = arith.addf %369, %372 : vector<8x128xf32>
    %374 = vector.broadcast %7 : vector<1x128xf32> to vector<8x128xf32>
    %375 = arith.addf %373, %374 : vector<8x128xf32>
    %376 = math.tanh %375 : vector<8x128xf32>
    %377 = arith.negf %375 : vector<8x128xf32>
    %378 = math.exp %377 : vector<8x128xf32>
    %cst_156 = arith.constant 1.000000e+00 : f32
    %379 = vector.broadcast %cst_156 : f32 to vector<8x128xf32>
    %380 = arith.addf %379, %378 : vector<8x128xf32>
    %381 = arith.divf %379, %380 : vector<8x128xf32>
    %382 = arith.select %13, %376, %381 : vector<8x128xi1>, vector<8x128xf32>
    %c96_i32_157 = arith.constant 96 : i32
    %383 = tpu.dynamic_rotate %382 by %c96_i32_157 dim 1 : vector<8x128xf32>, i32 -> vector<8x128xf32>
    %c64_i32_158 = arith.constant 64 : i32
    %384 = tpu.dynamic_rotate %382 by %c64_i32_158 dim 1 : vector<8x128xf32>, i32 -> vector<8x128xf32>
    %c32_i32_159 = arith.constant 32 : i32
    %385 = tpu.dynamic_rotate %382 by %c32_i32_159 dim 1 : vector<8x128xf32>, i32 -> vector<8x128xf32>
    %386 = arith.mulf %383, %341 : vector<8x128xf32>
    %387 = arith.mulf %382, %384 : vector<8x128xf32>
    %388 = arith.addf %386, %387 : vector<8x128xf32>
    %389 = math.tanh %388 : vector<8x128xf32>
    %390 = arith.mulf %385, %389 : vector<8x128xf32>
    %c8_i32_160 = arith.constant 8 : i32
    %c8_i32_161 = arith.constant 8 : i32
    %391 = arith.muli %c8_i32_160, %c8_i32_161 : i32
    %392 = tpu.assume_multiple %391, 8 : i32
    %393 = arith.index_cast %392 : i32 to index
    %c0_162 = arith.constant 0 : index
    %394 = vector.load %arg14[%393, %c0_162] : memref<240x128xf32, #tpu.memory_space<vmem>>, vector<8x128xf32>
    %395 = arith.truncf %366 : vector<8x128xf32> to vector<8x128xbf16>
    %c0_163 = arith.constant 0 : index
    %c0_164 = arith.constant 0 : index
    %396 = vector.load %arg2[%c0_163, %c0_164] : memref<128x128xbf16, #tpu.memory_space<vmem>>, vector<128x128xbf16>
    %cst_165 = arith.constant dense<0.000000e+00> : vector<8x128xf32>
    %397 = tpu.matmul %395, %396, %cst_165 {dimension_numbers = #tpu.dot_dimension_numbers<[1], [0], [0], [1], [0, 0, 1, 1], [], []>} : vector<8x128xbf16>, vector<128x128xbf16>, vector<8x128xf32> -> vector<8x128xf32>
    %398 = arith.addf %394, %397 : vector<8x128xf32>
    %399 = math.tanh %398 : vector<8x128xf32>
    %400 = arith.negf %398 : vector<8x128xf32>
    %401 = math.exp %400 : vector<8x128xf32>
    %cst_166 = arith.constant 1.000000e+00 : f32
    %402 = vector.broadcast %cst_166 : f32 to vector<8x128xf32>
    %403 = arith.addf %402, %401 : vector<8x128xf32>
    %404 = arith.divf %402, %403 : vector<8x128xf32>
    %405 = arith.select %13, %399, %404 : vector<8x128xi1>, vector<8x128xf32>
    %c96_i32_167 = arith.constant 96 : i32
    %406 = tpu.dynamic_rotate %405 by %c96_i32_167 dim 1 : vector<8x128xf32>, i32 -> vector<8x128xf32>
    %c64_i32_168 = arith.constant 64 : i32
    %407 = tpu.dynamic_rotate %405 by %c64_i32_168 dim 1 : vector<8x128xf32>, i32 -> vector<8x128xf32>
    %c32_i32_169 = arith.constant 32 : i32
    %408 = tpu.dynamic_rotate %405 by %c32_i32_169 dim 1 : vector<8x128xf32>, i32 -> vector<8x128xf32>
    %409 = arith.mulf %406, %364 : vector<8x128xf32>
    %410 = arith.mulf %405, %407 : vector<8x128xf32>
    %411 = arith.addf %409, %410 : vector<8x128xf32>
    %412 = math.tanh %411 : vector<8x128xf32>
    %413 = arith.mulf %408, %412 : vector<8x128xf32>
    %414 = arith.truncf %413 : vector<8x128xf32> to vector<8x128xbf16>
    %c0_170 = arith.constant 0 : index
    %c0_171 = arith.constant 0 : index
    %415 = vector.load %arg4[%c0_170, %c0_171] : memref<128x128xbf16, #tpu.memory_space<vmem>>, vector<128x128xbf16>
    %cst_172 = arith.constant dense<0.000000e+00> : vector<8x128xf32>
    %416 = tpu.matmul %414, %415, %cst_172 {dimension_numbers = #tpu.dot_dimension_numbers<[1], [0], [0], [1], [0, 0, 1, 1], [], []>} : vector<8x128xbf16>, vector<128x128xbf16>, vector<8x128xf32> -> vector<8x128xf32>
    %417 = arith.truncf %390 : vector<8x128xf32> to vector<8x128xbf16>
    %c0_173 = arith.constant 0 : index
    %c0_174 = arith.constant 0 : index
    %418 = vector.load %arg5[%c0_173, %c0_174] : memref<128x128xbf16, #tpu.memory_space<vmem>>, vector<128x128xbf16>
    %cst_175 = arith.constant dense<0.000000e+00> : vector<8x128xf32>
    %419 = tpu.matmul %417, %418, %cst_175 {dimension_numbers = #tpu.dot_dimension_numbers<[1], [0], [0], [1], [0, 0, 1, 1], [], []>} : vector<8x128xbf16>, vector<128x128xbf16>, vector<8x128xf32> -> vector<8x128xf32>
    %420 = arith.addf %416, %419 : vector<8x128xf32>
    %421 = vector.broadcast %7 : vector<1x128xf32> to vector<8x128xf32>
    %422 = arith.addf %420, %421 : vector<8x128xf32>
    %423 = math.tanh %422 : vector<8x128xf32>
    %424 = arith.negf %422 : vector<8x128xf32>
    %425 = math.exp %424 : vector<8x128xf32>
    %cst_176 = arith.constant 1.000000e+00 : f32
    %426 = vector.broadcast %cst_176 : f32 to vector<8x128xf32>
    %427 = arith.addf %426, %425 : vector<8x128xf32>
    %428 = arith.divf %426, %427 : vector<8x128xf32>
    %429 = arith.select %13, %423, %428 : vector<8x128xi1>, vector<8x128xf32>
    %c96_i32_177 = arith.constant 96 : i32
    %430 = tpu.dynamic_rotate %429 by %c96_i32_177 dim 1 : vector<8x128xf32>, i32 -> vector<8x128xf32>
    %c64_i32_178 = arith.constant 64 : i32
    %431 = tpu.dynamic_rotate %429 by %c64_i32_178 dim 1 : vector<8x128xf32>, i32 -> vector<8x128xf32>
    %c32_i32_179 = arith.constant 32 : i32
    %432 = tpu.dynamic_rotate %429 by %c32_i32_179 dim 1 : vector<8x128xf32>, i32 -> vector<8x128xf32>
    %433 = arith.mulf %430, %388 : vector<8x128xf32>
    %434 = arith.mulf %429, %431 : vector<8x128xf32>
    %435 = arith.addf %433, %434 : vector<8x128xf32>
    %436 = math.tanh %435 : vector<8x128xf32>
    %437 = arith.mulf %432, %436 : vector<8x128xf32>
    %c9_i32 = arith.constant 9 : i32
    %c8_i32_180 = arith.constant 8 : i32
    %438 = arith.muli %c9_i32, %c8_i32_180 : i32
    %439 = tpu.assume_multiple %438, 8 : i32
    %440 = arith.index_cast %439 : i32 to index
    %c0_181 = arith.constant 0 : index
    %441 = vector.load %arg14[%440, %c0_181] : memref<240x128xf32, #tpu.memory_space<vmem>>, vector<8x128xf32>
    %442 = arith.truncf %413 : vector<8x128xf32> to vector<8x128xbf16>
    %c0_182 = arith.constant 0 : index
    %c0_183 = arith.constant 0 : index
    %443 = vector.load %arg2[%c0_182, %c0_183] : memref<128x128xbf16, #tpu.memory_space<vmem>>, vector<128x128xbf16>
    %cst_184 = arith.constant dense<0.000000e+00> : vector<8x128xf32>
    %444 = tpu.matmul %442, %443, %cst_184 {dimension_numbers = #tpu.dot_dimension_numbers<[1], [0], [0], [1], [0, 0, 1, 1], [], []>} : vector<8x128xbf16>, vector<128x128xbf16>, vector<8x128xf32> -> vector<8x128xf32>
    %445 = arith.addf %441, %444 : vector<8x128xf32>
    %446 = math.tanh %445 : vector<8x128xf32>
    %447 = arith.negf %445 : vector<8x128xf32>
    %448 = math.exp %447 : vector<8x128xf32>
    %cst_185 = arith.constant 1.000000e+00 : f32
    %449 = vector.broadcast %cst_185 : f32 to vector<8x128xf32>
    %450 = arith.addf %449, %448 : vector<8x128xf32>
    %451 = arith.divf %449, %450 : vector<8x128xf32>
    %452 = arith.select %13, %446, %451 : vector<8x128xi1>, vector<8x128xf32>
    %c96_i32_186 = arith.constant 96 : i32
    %453 = tpu.dynamic_rotate %452 by %c96_i32_186 dim 1 : vector<8x128xf32>, i32 -> vector<8x128xf32>
    %c64_i32_187 = arith.constant 64 : i32
    %454 = tpu.dynamic_rotate %452 by %c64_i32_187 dim 1 : vector<8x128xf32>, i32 -> vector<8x128xf32>
    %c32_i32_188 = arith.constant 32 : i32
    %455 = tpu.dynamic_rotate %452 by %c32_i32_188 dim 1 : vector<8x128xf32>, i32 -> vector<8x128xf32>
    %456 = arith.mulf %453, %411 : vector<8x128xf32>
    %457 = arith.mulf %452, %454 : vector<8x128xf32>
    %458 = arith.addf %456, %457 : vector<8x128xf32>
    %459 = math.tanh %458 : vector<8x128xf32>
    %460 = arith.mulf %455, %459 : vector<8x128xf32>
    %461 = arith.truncf %460 : vector<8x128xf32> to vector<8x128xbf16>
    %c0_189 = arith.constant 0 : index
    %c0_190 = arith.constant 0 : index
    %462 = vector.load %arg4[%c0_189, %c0_190] : memref<128x128xbf16, #tpu.memory_space<vmem>>, vector<128x128xbf16>
    %cst_191 = arith.constant dense<0.000000e+00> : vector<8x128xf32>
    %463 = tpu.matmul %461, %462, %cst_191 {dimension_numbers = #tpu.dot_dimension_numbers<[1], [0], [0], [1], [0, 0, 1, 1], [], []>} : vector<8x128xbf16>, vector<128x128xbf16>, vector<8x128xf32> -> vector<8x128xf32>
    %464 = arith.truncf %437 : vector<8x128xf32> to vector<8x128xbf16>
    %c0_192 = arith.constant 0 : index
    %c0_193 = arith.constant 0 : index
    %465 = vector.load %arg5[%c0_192, %c0_193] : memref<128x128xbf16, #tpu.memory_space<vmem>>, vector<128x128xbf16>
    %cst_194 = arith.constant dense<0.000000e+00> : vector<8x128xf32>
    %466 = tpu.matmul %464, %465, %cst_194 {dimension_numbers = #tpu.dot_dimension_numbers<[1], [0], [0], [1], [0, 0, 1, 1], [], []>} : vector<8x128xbf16>, vector<128x128xbf16>, vector<8x128xf32> -> vector<8x128xf32>
    %467 = arith.addf %463, %466 : vector<8x128xf32>
    %468 = vector.broadcast %7 : vector<1x128xf32> to vector<8x128xf32>
    %469 = arith.addf %467, %468 : vector<8x128xf32>
    %470 = math.tanh %469 : vector<8x128xf32>
    %471 = arith.negf %469 : vector<8x128xf32>
    %472 = math.exp %471 : vector<8x128xf32>
    %cst_195 = arith.constant 1.000000e+00 : f32
    %473 = vector.broadcast %cst_195 : f32 to vector<8x128xf32>
    %474 = arith.addf %473, %472 : vector<8x128xf32>
    %475 = arith.divf %473, %474 : vector<8x128xf32>
    %476 = arith.select %13, %470, %475 : vector<8x128xi1>, vector<8x128xf32>
    %c96_i32_196 = arith.constant 96 : i32
    %477 = tpu.dynamic_rotate %476 by %c96_i32_196 dim 1 : vector<8x128xf32>, i32 -> vector<8x128xf32>
    %c64_i32_197 = arith.constant 64 : i32
    %478 = tpu.dynamic_rotate %476 by %c64_i32_197 dim 1 : vector<8x128xf32>, i32 -> vector<8x128xf32>
    %c32_i32_198 = arith.constant 32 : i32
    %479 = tpu.dynamic_rotate %476 by %c32_i32_198 dim 1 : vector<8x128xf32>, i32 -> vector<8x128xf32>
    %480 = arith.mulf %477, %435 : vector<8x128xf32>
    %481 = arith.mulf %476, %478 : vector<8x128xf32>
    %482 = arith.addf %480, %481 : vector<8x128xf32>
    %483 = math.tanh %482 : vector<8x128xf32>
    %484 = arith.mulf %479, %483 : vector<8x128xf32>
    %c10_i32 = arith.constant 10 : i32
    %c8_i32_199 = arith.constant 8 : i32
    %485 = arith.muli %c10_i32, %c8_i32_199 : i32
    %486 = tpu.assume_multiple %485, 8 : i32
    %487 = arith.index_cast %486 : i32 to index
    %c0_200 = arith.constant 0 : index
    %488 = vector.load %arg14[%487, %c0_200] : memref<240x128xf32, #tpu.memory_space<vmem>>, vector<8x128xf32>
    %489 = arith.truncf %460 : vector<8x128xf32> to vector<8x128xbf16>
    %c0_201 = arith.constant 0 : index
    %c0_202 = arith.constant 0 : index
    %490 = vector.load %arg2[%c0_201, %c0_202] : memref<128x128xbf16, #tpu.memory_space<vmem>>, vector<128x128xbf16>
    %cst_203 = arith.constant dense<0.000000e+00> : vector<8x128xf32>
    %491 = tpu.matmul %489, %490, %cst_203 {dimension_numbers = #tpu.dot_dimension_numbers<[1], [0], [0], [1], [0, 0, 1, 1], [], []>} : vector<8x128xbf16>, vector<128x128xbf16>, vector<8x128xf32> -> vector<8x128xf32>
    %492 = arith.addf %488, %491 : vector<8x128xf32>
    %493 = math.tanh %492 : vector<8x128xf32>
    %494 = arith.negf %492 : vector<8x128xf32>
    %495 = math.exp %494 : vector<8x128xf32>
    %cst_204 = arith.constant 1.000000e+00 : f32
    %496 = vector.broadcast %cst_204 : f32 to vector<8x128xf32>
    %497 = arith.addf %496, %495 : vector<8x128xf32>
    %498 = arith.divf %496, %497 : vector<8x128xf32>
    %499 = arith.select %13, %493, %498 : vector<8x128xi1>, vector<8x128xf32>
    %c96_i32_205 = arith.constant 96 : i32
    %500 = tpu.dynamic_rotate %499 by %c96_i32_205 dim 1 : vector<8x128xf32>, i32 -> vector<8x128xf32>
    %c64_i32_206 = arith.constant 64 : i32
    %501 = tpu.dynamic_rotate %499 by %c64_i32_206 dim 1 : vector<8x128xf32>, i32 -> vector<8x128xf32>
    %c32_i32_207 = arith.constant 32 : i32
    %502 = tpu.dynamic_rotate %499 by %c32_i32_207 dim 1 : vector<8x128xf32>, i32 -> vector<8x128xf32>
    %503 = arith.mulf %500, %458 : vector<8x128xf32>
    %504 = arith.mulf %499, %501 : vector<8x128xf32>
    %505 = arith.addf %503, %504 : vector<8x128xf32>
    %506 = math.tanh %505 : vector<8x128xf32>
    %507 = arith.mulf %502, %506 : vector<8x128xf32>
    %508 = arith.truncf %507 : vector<8x128xf32> to vector<8x128xbf16>
    %c0_208 = arith.constant 0 : index
    %c0_209 = arith.constant 0 : index
    %509 = vector.load %arg4[%c0_208, %c0_209] : memref<128x128xbf16, #tpu.memory_space<vmem>>, vector<128x128xbf16>
    %cst_210 = arith.constant dense<0.000000e+00> : vector<8x128xf32>
    %510 = tpu.matmul %508, %509, %cst_210 {dimension_numbers = #tpu.dot_dimension_numbers<[1], [0], [0], [1], [0, 0, 1, 1], [], []>} : vector<8x128xbf16>, vector<128x128xbf16>, vector<8x128xf32> -> vector<8x128xf32>
    %511 = arith.truncf %484 : vector<8x128xf32> to vector<8x128xbf16>
    %c0_211 = arith.constant 0 : index
    %c0_212 = arith.constant 0 : index
    %512 = vector.load %arg5[%c0_211, %c0_212] : memref<128x128xbf16, #tpu.memory_space<vmem>>, vector<128x128xbf16>
    %cst_213 = arith.constant dense<0.000000e+00> : vector<8x128xf32>
    %513 = tpu.matmul %511, %512, %cst_213 {dimension_numbers = #tpu.dot_dimension_numbers<[1], [0], [0], [1], [0, 0, 1, 1], [], []>} : vector<8x128xbf16>, vector<128x128xbf16>, vector<8x128xf32> -> vector<8x128xf32>
    %514 = arith.addf %510, %513 : vector<8x128xf32>
    %515 = vector.broadcast %7 : vector<1x128xf32> to vector<8x128xf32>
    %516 = arith.addf %514, %515 : vector<8x128xf32>
    %517 = math.tanh %516 : vector<8x128xf32>
    %518 = arith.negf %516 : vector<8x128xf32>
    %519 = math.exp %518 : vector<8x128xf32>
    %cst_214 = arith.constant 1.000000e+00 : f32
    %520 = vector.broadcast %cst_214 : f32 to vector<8x128xf32>
    %521 = arith.addf %520, %519 : vector<8x128xf32>
    %522 = arith.divf %520, %521 : vector<8x128xf32>
    %523 = arith.select %13, %517, %522 : vector<8x128xi1>, vector<8x128xf32>
    %c96_i32_215 = arith.constant 96 : i32
    %524 = tpu.dynamic_rotate %523 by %c96_i32_215 dim 1 : vector<8x128xf32>, i32 -> vector<8x128xf32>
    %c64_i32_216 = arith.constant 64 : i32
    %525 = tpu.dynamic_rotate %523 by %c64_i32_216 dim 1 : vector<8x128xf32>, i32 -> vector<8x128xf32>
    %c32_i32_217 = arith.constant 32 : i32
    %526 = tpu.dynamic_rotate %523 by %c32_i32_217 dim 1 : vector<8x128xf32>, i32 -> vector<8x128xf32>
    %527 = arith.mulf %524, %482 : vector<8x128xf32>
    %528 = arith.mulf %523, %525 : vector<8x128xf32>
    %529 = arith.addf %527, %528 : vector<8x128xf32>
    %530 = math.tanh %529 : vector<8x128xf32>
    %531 = arith.mulf %526, %530 : vector<8x128xf32>
    %c11_i32 = arith.constant 11 : i32
    %c8_i32_218 = arith.constant 8 : i32
    %532 = arith.muli %c11_i32, %c8_i32_218 : i32
    %533 = tpu.assume_multiple %532, 8 : i32
    %534 = arith.index_cast %533 : i32 to index
    %c0_219 = arith.constant 0 : index
    %535 = vector.load %arg14[%534, %c0_219] : memref<240x128xf32, #tpu.memory_space<vmem>>, vector<8x128xf32>
    %536 = arith.truncf %507 : vector<8x128xf32> to vector<8x128xbf16>
    %c0_220 = arith.constant 0 : index
    %c0_221 = arith.constant 0 : index
    %537 = vector.load %arg2[%c0_220, %c0_221] : memref<128x128xbf16, #tpu.memory_space<vmem>>, vector<128x128xbf16>
    %cst_222 = arith.constant dense<0.000000e+00> : vector<8x128xf32>
    %538 = tpu.matmul %536, %537, %cst_222 {dimension_numbers = #tpu.dot_dimension_numbers<[1], [0], [0], [1], [0, 0, 1, 1], [], []>} : vector<8x128xbf16>, vector<128x128xbf16>, vector<8x128xf32> -> vector<8x128xf32>
    %539 = arith.addf %535, %538 : vector<8x128xf32>
    %540 = math.tanh %539 : vector<8x128xf32>
    %541 = arith.negf %539 : vector<8x128xf32>
    %542 = math.exp %541 : vector<8x128xf32>
    %cst_223 = arith.constant 1.000000e+00 : f32
    %543 = vector.broadcast %cst_223 : f32 to vector<8x128xf32>
    %544 = arith.addf %543, %542 : vector<8x128xf32>
    %545 = arith.divf %543, %544 : vector<8x128xf32>
    %546 = arith.select %13, %540, %545 : vector<8x128xi1>, vector<8x128xf32>
    %c96_i32_224 = arith.constant 96 : i32
    %547 = tpu.dynamic_rotate %546 by %c96_i32_224 dim 1 : vector<8x128xf32>, i32 -> vector<8x128xf32>
    %c64_i32_225 = arith.constant 64 : i32
    %548 = tpu.dynamic_rotate %546 by %c64_i32_225 dim 1 : vector<8x128xf32>, i32 -> vector<8x128xf32>
    %c32_i32_226 = arith.constant 32 : i32
    %549 = tpu.dynamic_rotate %546 by %c32_i32_226 dim 1 : vector<8x128xf32>, i32 -> vector<8x128xf32>
    %550 = arith.mulf %547, %505 : vector<8x128xf32>
    %551 = arith.mulf %546, %548 : vector<8x128xf32>
    %552 = arith.addf %550, %551 : vector<8x128xf32>
    %553 = math.tanh %552 : vector<8x128xf32>
    %554 = arith.mulf %549, %553 : vector<8x128xf32>
    %555 = arith.truncf %554 : vector<8x128xf32> to vector<8x128xbf16>
    %c0_227 = arith.constant 0 : index
    %c0_228 = arith.constant 0 : index
    %556 = vector.load %arg4[%c0_227, %c0_228] : memref<128x128xbf16, #tpu.memory_space<vmem>>, vector<128x128xbf16>
    %cst_229 = arith.constant dense<0.000000e+00> : vector<8x128xf32>
    %557 = tpu.matmul %555, %556, %cst_229 {dimension_numbers = #tpu.dot_dimension_numbers<[1], [0], [0], [1], [0, 0, 1, 1], [], []>} : vector<8x128xbf16>, vector<128x128xbf16>, vector<8x128xf32> -> vector<8x128xf32>
    %558 = arith.truncf %531 : vector<8x128xf32> to vector<8x128xbf16>
    %c0_230 = arith.constant 0 : index
    %c0_231 = arith.constant 0 : index
    %559 = vector.load %arg5[%c0_230, %c0_231] : memref<128x128xbf16, #tpu.memory_space<vmem>>, vector<128x128xbf16>
    %cst_232 = arith.constant dense<0.000000e+00> : vector<8x128xf32>
    %560 = tpu.matmul %558, %559, %cst_232 {dimension_numbers = #tpu.dot_dimension_numbers<[1], [0], [0], [1], [0, 0, 1, 1], [], []>} : vector<8x128xbf16>, vector<128x128xbf16>, vector<8x128xf32> -> vector<8x128xf32>
    %561 = arith.addf %557, %560 : vector<8x128xf32>
    %562 = vector.broadcast %7 : vector<1x128xf32> to vector<8x128xf32>
    %563 = arith.addf %561, %562 : vector<8x128xf32>
    %564 = math.tanh %563 : vector<8x128xf32>
    %565 = arith.negf %563 : vector<8x128xf32>
    %566 = math.exp %565 : vector<8x128xf32>
    %cst_233 = arith.constant 1.000000e+00 : f32
    %567 = vector.broadcast %cst_233 : f32 to vector<8x128xf32>
    %568 = arith.addf %567, %566 : vector<8x128xf32>
    %569 = arith.divf %567, %568 : vector<8x128xf32>
    %570 = arith.select %13, %564, %569 : vector<8x128xi1>, vector<8x128xf32>
    %c96_i32_234 = arith.constant 96 : i32
    %571 = tpu.dynamic_rotate %570 by %c96_i32_234 dim 1 : vector<8x128xf32>, i32 -> vector<8x128xf32>
    %c64_i32_235 = arith.constant 64 : i32
    %572 = tpu.dynamic_rotate %570 by %c64_i32_235 dim 1 : vector<8x128xf32>, i32 -> vector<8x128xf32>
    %c32_i32_236 = arith.constant 32 : i32
    %573 = tpu.dynamic_rotate %570 by %c32_i32_236 dim 1 : vector<8x128xf32>, i32 -> vector<8x128xf32>
    %574 = arith.mulf %571, %529 : vector<8x128xf32>
    %575 = arith.mulf %570, %572 : vector<8x128xf32>
    %576 = arith.addf %574, %575 : vector<8x128xf32>
    %577 = math.tanh %576 : vector<8x128xf32>
    %578 = arith.mulf %573, %577 : vector<8x128xf32>
    %c12_i32 = arith.constant 12 : i32
    %c8_i32_237 = arith.constant 8 : i32
    %579 = arith.muli %c12_i32, %c8_i32_237 : i32
    %580 = tpu.assume_multiple %579, 8 : i32
    %581 = arith.index_cast %580 : i32 to index
    %c0_238 = arith.constant 0 : index
    %582 = vector.load %arg14[%581, %c0_238] : memref<240x128xf32, #tpu.memory_space<vmem>>, vector<8x128xf32>
    %583 = arith.truncf %554 : vector<8x128xf32> to vector<8x128xbf16>
    %c0_239 = arith.constant 0 : index
    %c0_240 = arith.constant 0 : index
    %584 = vector.load %arg2[%c0_239, %c0_240] : memref<128x128xbf16, #tpu.memory_space<vmem>>, vector<128x128xbf16>
    %cst_241 = arith.constant dense<0.000000e+00> : vector<8x128xf32>
    %585 = tpu.matmul %583, %584, %cst_241 {dimension_numbers = #tpu.dot_dimension_numbers<[1], [0], [0], [1], [0, 0, 1, 1], [], []>} : vector<8x128xbf16>, vector<128x128xbf16>, vector<8x128xf32> -> vector<8x128xf32>
    %586 = arith.addf %582, %585 : vector<8x128xf32>
    %587 = math.tanh %586 : vector<8x128xf32>
    %588 = arith.negf %586 : vector<8x128xf32>
    %589 = math.exp %588 : vector<8x128xf32>
    %cst_242 = arith.constant 1.000000e+00 : f32
    %590 = vector.broadcast %cst_242 : f32 to vector<8x128xf32>
    %591 = arith.addf %590, %589 : vector<8x128xf32>
    %592 = arith.divf %590, %591 : vector<8x128xf32>
    %593 = arith.select %13, %587, %592 : vector<8x128xi1>, vector<8x128xf32>
    %c96_i32_243 = arith.constant 96 : i32
    %594 = tpu.dynamic_rotate %593 by %c96_i32_243 dim 1 : vector<8x128xf32>, i32 -> vector<8x128xf32>
    %c64_i32_244 = arith.constant 64 : i32
    %595 = tpu.dynamic_rotate %593 by %c64_i32_244 dim 1 : vector<8x128xf32>, i32 -> vector<8x128xf32>
    %c32_i32_245 = arith.constant 32 : i32
    %596 = tpu.dynamic_rotate %593 by %c32_i32_245 dim 1 : vector<8x128xf32>, i32 -> vector<8x128xf32>
    %597 = arith.mulf %594, %552 : vector<8x128xf32>
    %598 = arith.mulf %593, %595 : vector<8x128xf32>
    %599 = arith.addf %597, %598 : vector<8x128xf32>
    %600 = math.tanh %599 : vector<8x128xf32>
    %601 = arith.mulf %596, %600 : vector<8x128xf32>
    %602 = arith.truncf %601 : vector<8x128xf32> to vector<8x128xbf16>
    %c0_246 = arith.constant 0 : index
    %c0_247 = arith.constant 0 : index
    %603 = vector.load %arg4[%c0_246, %c0_247] : memref<128x128xbf16, #tpu.memory_space<vmem>>, vector<128x128xbf16>
    %cst_248 = arith.constant dense<0.000000e+00> : vector<8x128xf32>
    %604 = tpu.matmul %602, %603, %cst_248 {dimension_numbers = #tpu.dot_dimension_numbers<[1], [0], [0], [1], [0, 0, 1, 1], [], []>} : vector<8x128xbf16>, vector<128x128xbf16>, vector<8x128xf32> -> vector<8x128xf32>
    %605 = arith.truncf %578 : vector<8x128xf32> to vector<8x128xbf16>
    %c0_249 = arith.constant 0 : index
    %c0_250 = arith.constant 0 : index
    %606 = vector.load %arg5[%c0_249, %c0_250] : memref<128x128xbf16, #tpu.memory_space<vmem>>, vector<128x128xbf16>
    %cst_251 = arith.constant dense<0.000000e+00> : vector<8x128xf32>
    %607 = tpu.matmul %605, %606, %cst_251 {dimension_numbers = #tpu.dot_dimension_numbers<[1], [0], [0], [1], [0, 0, 1, 1], [], []>} : vector<8x128xbf16>, vector<128x128xbf16>, vector<8x128xf32> -> vector<8x128xf32>
    %608 = arith.addf %604, %607 : vector<8x128xf32>
    %609 = vector.broadcast %7 : vector<1x128xf32> to vector<8x128xf32>
    %610 = arith.addf %608, %609 : vector<8x128xf32>
    %611 = math.tanh %610 : vector<8x128xf32>
    %612 = arith.negf %610 : vector<8x128xf32>
    %613 = math.exp %612 : vector<8x128xf32>
    %cst_252 = arith.constant 1.000000e+00 : f32
    %614 = vector.broadcast %cst_252 : f32 to vector<8x128xf32>
    %615 = arith.addf %614, %613 : vector<8x128xf32>
    %616 = arith.divf %614, %615 : vector<8x128xf32>
    %617 = arith.select %13, %611, %616 : vector<8x128xi1>, vector<8x128xf32>
    %c96_i32_253 = arith.constant 96 : i32
    %618 = tpu.dynamic_rotate %617 by %c96_i32_253 dim 1 : vector<8x128xf32>, i32 -> vector<8x128xf32>
    %c64_i32_254 = arith.constant 64 : i32
    %619 = tpu.dynamic_rotate %617 by %c64_i32_254 dim 1 : vector<8x128xf32>, i32 -> vector<8x128xf32>
    %c32_i32_255 = arith.constant 32 : i32
    %620 = tpu.dynamic_rotate %617 by %c32_i32_255 dim 1 : vector<8x128xf32>, i32 -> vector<8x128xf32>
    %621 = arith.mulf %618, %576 : vector<8x128xf32>
    %622 = arith.mulf %617, %619 : vector<8x128xf32>
    %623 = arith.addf %621, %622 : vector<8x128xf32>
    %624 = math.tanh %623 : vector<8x128xf32>
    %625 = arith.mulf %620, %624 : vector<8x128xf32>
    %c13_i32 = arith.constant 13 : i32
    %c8_i32_256 = arith.constant 8 : i32
    %626 = arith.muli %c13_i32, %c8_i32_256 : i32
    %627 = tpu.assume_multiple %626, 8 : i32
    %628 = arith.index_cast %627 : i32 to index
    %c0_257 = arith.constant 0 : index
    %629 = vector.load %arg14[%628, %c0_257] : memref<240x128xf32, #tpu.memory_space<vmem>>, vector<8x128xf32>
    %630 = arith.truncf %601 : vector<8x128xf32> to vector<8x128xbf16>
    %c0_258 = arith.constant 0 : index
    %c0_259 = arith.constant 0 : index
    %631 = vector.load %arg2[%c0_258, %c0_259] : memref<128x128xbf16, #tpu.memory_space<vmem>>, vector<128x128xbf16>
    %cst_260 = arith.constant dense<0.000000e+00> : vector<8x128xf32>
    %632 = tpu.matmul %630, %631, %cst_260 {dimension_numbers = #tpu.dot_dimension_numbers<[1], [0], [0], [1], [0, 0, 1, 1], [], []>} : vector<8x128xbf16>, vector<128x128xbf16>, vector<8x128xf32> -> vector<8x128xf32>
    %633 = arith.addf %629, %632 : vector<8x128xf32>
    %634 = math.tanh %633 : vector<8x128xf32>
    %635 = arith.negf %633 : vector<8x128xf32>
    %636 = math.exp %635 : vector<8x128xf32>
    %cst_261 = arith.constant 1.000000e+00 : f32
    %637 = vector.broadcast %cst_261 : f32 to vector<8x128xf32>
    %638 = arith.addf %637, %636 : vector<8x128xf32>
    %639 = arith.divf %637, %638 : vector<8x128xf32>
    %640 = arith.select %13, %634, %639 : vector<8x128xi1>, vector<8x128xf32>
    %c96_i32_262 = arith.constant 96 : i32
    %641 = tpu.dynamic_rotate %640 by %c96_i32_262 dim 1 : vector<8x128xf32>, i32 -> vector<8x128xf32>
    %c64_i32_263 = arith.constant 64 : i32
    %642 = tpu.dynamic_rotate %640 by %c64_i32_263 dim 1 : vector<8x128xf32>, i32 -> vector<8x128xf32>
    %c32_i32_264 = arith.constant 32 : i32
    %643 = tpu.dynamic_rotate %640 by %c32_i32_264 dim 1 : vector<8x128xf32>, i32 -> vector<8x128xf32>
    %644 = arith.mulf %641, %599 : vector<8x128xf32>
    %645 = arith.mulf %640, %642 : vector<8x128xf32>
    %646 = arith.addf %644, %645 : vector<8x128xf32>
    %647 = math.tanh %646 : vector<8x128xf32>
    %648 = arith.mulf %643, %647 : vector<8x128xf32>
    %649 = arith.truncf %648 : vector<8x128xf32> to vector<8x128xbf16>
    %c0_265 = arith.constant 0 : index
    %c0_266 = arith.constant 0 : index
    %650 = vector.load %arg4[%c0_265, %c0_266] : memref<128x128xbf16, #tpu.memory_space<vmem>>, vector<128x128xbf16>
    %cst_267 = arith.constant dense<0.000000e+00> : vector<8x128xf32>
    %651 = tpu.matmul %649, %650, %cst_267 {dimension_numbers = #tpu.dot_dimension_numbers<[1], [0], [0], [1], [0, 0, 1, 1], [], []>} : vector<8x128xbf16>, vector<128x128xbf16>, vector<8x128xf32> -> vector<8x128xf32>
    %652 = arith.truncf %625 : vector<8x128xf32> to vector<8x128xbf16>
    %c0_268 = arith.constant 0 : index
    %c0_269 = arith.constant 0 : index
    %653 = vector.load %arg5[%c0_268, %c0_269] : memref<128x128xbf16, #tpu.memory_space<vmem>>, vector<128x128xbf16>
    %cst_270 = arith.constant dense<0.000000e+00> : vector<8x128xf32>
    %654 = tpu.matmul %652, %653, %cst_270 {dimension_numbers = #tpu.dot_dimension_numbers<[1], [0], [0], [1], [0, 0, 1, 1], [], []>} : vector<8x128xbf16>, vector<128x128xbf16>, vector<8x128xf32> -> vector<8x128xf32>
    %655 = arith.addf %651, %654 : vector<8x128xf32>
    %656 = vector.broadcast %7 : vector<1x128xf32> to vector<8x128xf32>
    %657 = arith.addf %655, %656 : vector<8x128xf32>
    %658 = math.tanh %657 : vector<8x128xf32>
    %659 = arith.negf %657 : vector<8x128xf32>
    %660 = math.exp %659 : vector<8x128xf32>
    %cst_271 = arith.constant 1.000000e+00 : f32
    %661 = vector.broadcast %cst_271 : f32 to vector<8x128xf32>
    %662 = arith.addf %661, %660 : vector<8x128xf32>
    %663 = arith.divf %661, %662 : vector<8x128xf32>
    %664 = arith.select %13, %658, %663 : vector<8x128xi1>, vector<8x128xf32>
    %c96_i32_272 = arith.constant 96 : i32
    %665 = tpu.dynamic_rotate %664 by %c96_i32_272 dim 1 : vector<8x128xf32>, i32 -> vector<8x128xf32>
    %c64_i32_273 = arith.constant 64 : i32
    %666 = tpu.dynamic_rotate %664 by %c64_i32_273 dim 1 : vector<8x128xf32>, i32 -> vector<8x128xf32>
    %c32_i32_274 = arith.constant 32 : i32
    %667 = tpu.dynamic_rotate %664 by %c32_i32_274 dim 1 : vector<8x128xf32>, i32 -> vector<8x128xf32>
    %668 = arith.mulf %665, %623 : vector<8x128xf32>
    %669 = arith.mulf %664, %666 : vector<8x128xf32>
    %670 = arith.addf %668, %669 : vector<8x128xf32>
    %671 = math.tanh %670 : vector<8x128xf32>
    %672 = arith.mulf %667, %671 : vector<8x128xf32>
    %c14_i32 = arith.constant 14 : i32
    %c8_i32_275 = arith.constant 8 : i32
    %673 = arith.muli %c14_i32, %c8_i32_275 : i32
    %674 = tpu.assume_multiple %673, 8 : i32
    %675 = arith.index_cast %674 : i32 to index
    %c0_276 = arith.constant 0 : index
    %676 = vector.load %arg14[%675, %c0_276] : memref<240x128xf32, #tpu.memory_space<vmem>>, vector<8x128xf32>
    %677 = arith.truncf %648 : vector<8x128xf32> to vector<8x128xbf16>
    %c0_277 = arith.constant 0 : index
    %c0_278 = arith.constant 0 : index
    %678 = vector.load %arg2[%c0_277, %c0_278] : memref<128x128xbf16, #tpu.memory_space<vmem>>, vector<128x128xbf16>
    %cst_279 = arith.constant dense<0.000000e+00> : vector<8x128xf32>
    %679 = tpu.matmul %677, %678, %cst_279 {dimension_numbers = #tpu.dot_dimension_numbers<[1], [0], [0], [1], [0, 0, 1, 1], [], []>} : vector<8x128xbf16>, vector<128x128xbf16>, vector<8x128xf32> -> vector<8x128xf32>
    %680 = arith.addf %676, %679 : vector<8x128xf32>
    %681 = math.tanh %680 : vector<8x128xf32>
    %682 = arith.negf %680 : vector<8x128xf32>
    %683 = math.exp %682 : vector<8x128xf32>
    %cst_280 = arith.constant 1.000000e+00 : f32
    %684 = vector.broadcast %cst_280 : f32 to vector<8x128xf32>
    %685 = arith.addf %684, %683 : vector<8x128xf32>
    %686 = arith.divf %684, %685 : vector<8x128xf32>
    %687 = arith.select %13, %681, %686 : vector<8x128xi1>, vector<8x128xf32>
    %c96_i32_281 = arith.constant 96 : i32
    %688 = tpu.dynamic_rotate %687 by %c96_i32_281 dim 1 : vector<8x128xf32>, i32 -> vector<8x128xf32>
    %c64_i32_282 = arith.constant 64 : i32
    %689 = tpu.dynamic_rotate %687 by %c64_i32_282 dim 1 : vector<8x128xf32>, i32 -> vector<8x128xf32>
    %c32_i32_283 = arith.constant 32 : i32
    %690 = tpu.dynamic_rotate %687 by %c32_i32_283 dim 1 : vector<8x128xf32>, i32 -> vector<8x128xf32>
    %691 = arith.mulf %688, %646 : vector<8x128xf32>
    %692 = arith.mulf %687, %689 : vector<8x128xf32>
    %693 = arith.addf %691, %692 : vector<8x128xf32>
    %694 = math.tanh %693 : vector<8x128xf32>
    %695 = arith.mulf %690, %694 : vector<8x128xf32>
    %696 = arith.truncf %695 : vector<8x128xf32> to vector<8x128xbf16>
    %c0_284 = arith.constant 0 : index
    %c0_285 = arith.constant 0 : index
    %697 = vector.load %arg4[%c0_284, %c0_285] : memref<128x128xbf16, #tpu.memory_space<vmem>>, vector<128x128xbf16>
    %cst_286 = arith.constant dense<0.000000e+00> : vector<8x128xf32>
    %698 = tpu.matmul %696, %697, %cst_286 {dimension_numbers = #tpu.dot_dimension_numbers<[1], [0], [0], [1], [0, 0, 1, 1], [], []>} : vector<8x128xbf16>, vector<128x128xbf16>, vector<8x128xf32> -> vector<8x128xf32>
    %699 = arith.truncf %672 : vector<8x128xf32> to vector<8x128xbf16>
    %c0_287 = arith.constant 0 : index
    %c0_288 = arith.constant 0 : index
    %700 = vector.load %arg5[%c0_287, %c0_288] : memref<128x128xbf16, #tpu.memory_space<vmem>>, vector<128x128xbf16>
    %cst_289 = arith.constant dense<0.000000e+00> : vector<8x128xf32>
    %701 = tpu.matmul %699, %700, %cst_289 {dimension_numbers = #tpu.dot_dimension_numbers<[1], [0], [0], [1], [0, 0, 1, 1], [], []>} : vector<8x128xbf16>, vector<128x128xbf16>, vector<8x128xf32> -> vector<8x128xf32>
    %702 = arith.addf %698, %701 : vector<8x128xf32>
    %703 = vector.broadcast %7 : vector<1x128xf32> to vector<8x128xf32>
    %704 = arith.addf %702, %703 : vector<8x128xf32>
    %705 = math.tanh %704 : vector<8x128xf32>
    %706 = arith.negf %704 : vector<8x128xf32>
    %707 = math.exp %706 : vector<8x128xf32>
    %cst_290 = arith.constant 1.000000e+00 : f32
    %708 = vector.broadcast %cst_290 : f32 to vector<8x128xf32>
    %709 = arith.addf %708, %707 : vector<8x128xf32>
    %710 = arith.divf %708, %709 : vector<8x128xf32>
    %711 = arith.select %13, %705, %710 : vector<8x128xi1>, vector<8x128xf32>
    %c96_i32_291 = arith.constant 96 : i32
    %712 = tpu.dynamic_rotate %711 by %c96_i32_291 dim 1 : vector<8x128xf32>, i32 -> vector<8x128xf32>
    %c64_i32_292 = arith.constant 64 : i32
    %713 = tpu.dynamic_rotate %711 by %c64_i32_292 dim 1 : vector<8x128xf32>, i32 -> vector<8x128xf32>
    %c32_i32_293 = arith.constant 32 : i32
    %714 = tpu.dynamic_rotate %711 by %c32_i32_293 dim 1 : vector<8x128xf32>, i32 -> vector<8x128xf32>
    %715 = arith.mulf %712, %670 : vector<8x128xf32>
    %716 = arith.mulf %711, %713 : vector<8x128xf32>
    %717 = arith.addf %715, %716 : vector<8x128xf32>
    %718 = math.tanh %717 : vector<8x128xf32>
    %719 = arith.mulf %714, %718 : vector<8x128xf32>
    %c15_i32 = arith.constant 15 : i32
    %c8_i32_294 = arith.constant 8 : i32
    %720 = arith.muli %c15_i32, %c8_i32_294 : i32
    %721 = tpu.assume_multiple %720, 8 : i32
    %722 = arith.index_cast %721 : i32 to index
    %c0_295 = arith.constant 0 : index
    %723 = vector.load %arg14[%722, %c0_295] : memref<240x128xf32, #tpu.memory_space<vmem>>, vector<8x128xf32>
    %724 = arith.truncf %695 : vector<8x128xf32> to vector<8x128xbf16>
    %c0_296 = arith.constant 0 : index
    %c0_297 = arith.constant 0 : index
    %725 = vector.load %arg2[%c0_296, %c0_297] : memref<128x128xbf16, #tpu.memory_space<vmem>>, vector<128x128xbf16>
    %cst_298 = arith.constant dense<0.000000e+00> : vector<8x128xf32>
    %726 = tpu.matmul %724, %725, %cst_298 {dimension_numbers = #tpu.dot_dimension_numbers<[1], [0], [0], [1], [0, 0, 1, 1], [], []>} : vector<8x128xbf16>, vector<128x128xbf16>, vector<8x128xf32> -> vector<8x128xf32>
    %727 = arith.addf %723, %726 : vector<8x128xf32>
    %728 = math.tanh %727 : vector<8x128xf32>
    %729 = arith.negf %727 : vector<8x128xf32>
    %730 = math.exp %729 : vector<8x128xf32>
    %cst_299 = arith.constant 1.000000e+00 : f32
    %731 = vector.broadcast %cst_299 : f32 to vector<8x128xf32>
    %732 = arith.addf %731, %730 : vector<8x128xf32>
    %733 = arith.divf %731, %732 : vector<8x128xf32>
    %734 = arith.select %13, %728, %733 : vector<8x128xi1>, vector<8x128xf32>
    %c96_i32_300 = arith.constant 96 : i32
    %735 = tpu.dynamic_rotate %734 by %c96_i32_300 dim 1 : vector<8x128xf32>, i32 -> vector<8x128xf32>
    %c64_i32_301 = arith.constant 64 : i32
    %736 = tpu.dynamic_rotate %734 by %c64_i32_301 dim 1 : vector<8x128xf32>, i32 -> vector<8x128xf32>
    %c32_i32_302 = arith.constant 32 : i32
    %737 = tpu.dynamic_rotate %734 by %c32_i32_302 dim 1 : vector<8x128xf32>, i32 -> vector<8x128xf32>
    %738 = arith.mulf %735, %693 : vector<8x128xf32>
    %739 = arith.mulf %734, %736 : vector<8x128xf32>
    %740 = arith.addf %738, %739 : vector<8x128xf32>
    %741 = math.tanh %740 : vector<8x128xf32>
    %742 = arith.mulf %737, %741 : vector<8x128xf32>
    %743 = arith.truncf %742 : vector<8x128xf32> to vector<8x128xbf16>
    %c0_303 = arith.constant 0 : index
    %c0_304 = arith.constant 0 : index
    %744 = vector.load %arg4[%c0_303, %c0_304] : memref<128x128xbf16, #tpu.memory_space<vmem>>, vector<128x128xbf16>
    %cst_305 = arith.constant dense<0.000000e+00> : vector<8x128xf32>
    %745 = tpu.matmul %743, %744, %cst_305 {dimension_numbers = #tpu.dot_dimension_numbers<[1], [0], [0], [1], [0, 0, 1, 1], [], []>} : vector<8x128xbf16>, vector<128x128xbf16>, vector<8x128xf32> -> vector<8x128xf32>
    %746 = arith.truncf %719 : vector<8x128xf32> to vector<8x128xbf16>
    %c0_306 = arith.constant 0 : index
    %c0_307 = arith.constant 0 : index
    %747 = vector.load %arg5[%c0_306, %c0_307] : memref<128x128xbf16, #tpu.memory_space<vmem>>, vector<128x128xbf16>
    %cst_308 = arith.constant dense<0.000000e+00> : vector<8x128xf32>
    %748 = tpu.matmul %746, %747, %cst_308 {dimension_numbers = #tpu.dot_dimension_numbers<[1], [0], [0], [1], [0, 0, 1, 1], [], []>} : vector<8x128xbf16>, vector<128x128xbf16>, vector<8x128xf32> -> vector<8x128xf32>
    %749 = arith.addf %745, %748 : vector<8x128xf32>
    %750 = vector.broadcast %7 : vector<1x128xf32> to vector<8x128xf32>
    %751 = arith.addf %749, %750 : vector<8x128xf32>
    %752 = math.tanh %751 : vector<8x128xf32>
    %753 = arith.negf %751 : vector<8x128xf32>
    %754 = math.exp %753 : vector<8x128xf32>
    %cst_309 = arith.constant 1.000000e+00 : f32
    %755 = vector.broadcast %cst_309 : f32 to vector<8x128xf32>
    %756 = arith.addf %755, %754 : vector<8x128xf32>
    %757 = arith.divf %755, %756 : vector<8x128xf32>
    %758 = arith.select %13, %752, %757 : vector<8x128xi1>, vector<8x128xf32>
    %c96_i32_310 = arith.constant 96 : i32
    %759 = tpu.dynamic_rotate %758 by %c96_i32_310 dim 1 : vector<8x128xf32>, i32 -> vector<8x128xf32>
    %c64_i32_311 = arith.constant 64 : i32
    %760 = tpu.dynamic_rotate %758 by %c64_i32_311 dim 1 : vector<8x128xf32>, i32 -> vector<8x128xf32>
    %c32_i32_312 = arith.constant 32 : i32
    %761 = tpu.dynamic_rotate %758 by %c32_i32_312 dim 1 : vector<8x128xf32>, i32 -> vector<8x128xf32>
    %762 = arith.mulf %759, %717 : vector<8x128xf32>
    %763 = arith.mulf %758, %760 : vector<8x128xf32>
    %764 = arith.addf %762, %763 : vector<8x128xf32>
    %765 = math.tanh %764 : vector<8x128xf32>
    %766 = arith.mulf %761, %765 : vector<8x128xf32>
    %c16_i32 = arith.constant 16 : i32
    %c8_i32_313 = arith.constant 8 : i32
    %767 = arith.muli %c16_i32, %c8_i32_313 : i32
    %768 = tpu.assume_multiple %767, 8 : i32
    %769 = arith.index_cast %768 : i32 to index
    %c0_314 = arith.constant 0 : index
    %770 = vector.load %arg14[%769, %c0_314] : memref<240x128xf32, #tpu.memory_space<vmem>>, vector<8x128xf32>
    %771 = arith.truncf %742 : vector<8x128xf32> to vector<8x128xbf16>
    %c0_315 = arith.constant 0 : index
    %c0_316 = arith.constant 0 : index
    %772 = vector.load %arg2[%c0_315, %c0_316] : memref<128x128xbf16, #tpu.memory_space<vmem>>, vector<128x128xbf16>
    %cst_317 = arith.constant dense<0.000000e+00> : vector<8x128xf32>
    %773 = tpu.matmul %771, %772, %cst_317 {dimension_numbers = #tpu.dot_dimension_numbers<[1], [0], [0], [1], [0, 0, 1, 1], [], []>} : vector<8x128xbf16>, vector<128x128xbf16>, vector<8x128xf32> -> vector<8x128xf32>
    %774 = arith.addf %770, %773 : vector<8x128xf32>
    %775 = math.tanh %774 : vector<8x128xf32>
    %776 = arith.negf %774 : vector<8x128xf32>
    %777 = math.exp %776 : vector<8x128xf32>
    %cst_318 = arith.constant 1.000000e+00 : f32
    %778 = vector.broadcast %cst_318 : f32 to vector<8x128xf32>
    %779 = arith.addf %778, %777 : vector<8x128xf32>
    %780 = arith.divf %778, %779 : vector<8x128xf32>
    %781 = arith.select %13, %775, %780 : vector<8x128xi1>, vector<8x128xf32>
    %c96_i32_319 = arith.constant 96 : i32
    %782 = tpu.dynamic_rotate %781 by %c96_i32_319 dim 1 : vector<8x128xf32>, i32 -> vector<8x128xf32>
    %c64_i32_320 = arith.constant 64 : i32
    %783 = tpu.dynamic_rotate %781 by %c64_i32_320 dim 1 : vector<8x128xf32>, i32 -> vector<8x128xf32>
    %c32_i32_321 = arith.constant 32 : i32
    %784 = tpu.dynamic_rotate %781 by %c32_i32_321 dim 1 : vector<8x128xf32>, i32 -> vector<8x128xf32>
    %785 = arith.mulf %782, %740 : vector<8x128xf32>
    %786 = arith.mulf %781, %783 : vector<8x128xf32>
    %787 = arith.addf %785, %786 : vector<8x128xf32>
    %788 = math.tanh %787 : vector<8x128xf32>
    %789 = arith.mulf %784, %788 : vector<8x128xf32>
    %790 = arith.truncf %789 : vector<8x128xf32> to vector<8x128xbf16>
    %c0_322 = arith.constant 0 : index
    %c0_323 = arith.constant 0 : index
    %791 = vector.load %arg4[%c0_322, %c0_323] : memref<128x128xbf16, #tpu.memory_space<vmem>>, vector<128x128xbf16>
    %cst_324 = arith.constant dense<0.000000e+00> : vector<8x128xf32>
    %792 = tpu.matmul %790, %791, %cst_324 {dimension_numbers = #tpu.dot_dimension_numbers<[1], [0], [0], [1], [0, 0, 1, 1], [], []>} : vector<8x128xbf16>, vector<128x128xbf16>, vector<8x128xf32> -> vector<8x128xf32>
    %793 = arith.truncf %766 : vector<8x128xf32> to vector<8x128xbf16>
    %c0_325 = arith.constant 0 : index
    %c0_326 = arith.constant 0 : index
    %794 = vector.load %arg5[%c0_325, %c0_326] : memref<128x128xbf16, #tpu.memory_space<vmem>>, vector<128x128xbf16>
    %cst_327 = arith.constant dense<0.000000e+00> : vector<8x128xf32>
    %795 = tpu.matmul %793, %794, %cst_327 {dimension_numbers = #tpu.dot_dimension_numbers<[1], [0], [0], [1], [0, 0, 1, 1], [], []>} : vector<8x128xbf16>, vector<128x128xbf16>, vector<8x128xf32> -> vector<8x128xf32>
    %796 = arith.addf %792, %795 : vector<8x128xf32>
    %797 = vector.broadcast %7 : vector<1x128xf32> to vector<8x128xf32>
    %798 = arith.addf %796, %797 : vector<8x128xf32>
    %799 = math.tanh %798 : vector<8x128xf32>
    %800 = arith.negf %798 : vector<8x128xf32>
    %801 = math.exp %800 : vector<8x128xf32>
    %cst_328 = arith.constant 1.000000e+00 : f32
    %802 = vector.broadcast %cst_328 : f32 to vector<8x128xf32>
    %803 = arith.addf %802, %801 : vector<8x128xf32>
    %804 = arith.divf %802, %803 : vector<8x128xf32>
    %805 = arith.select %13, %799, %804 : vector<8x128xi1>, vector<8x128xf32>
    %c96_i32_329 = arith.constant 96 : i32
    %806 = tpu.dynamic_rotate %805 by %c96_i32_329 dim 1 : vector<8x128xf32>, i32 -> vector<8x128xf32>
    %c64_i32_330 = arith.constant 64 : i32
    %807 = tpu.dynamic_rotate %805 by %c64_i32_330 dim 1 : vector<8x128xf32>, i32 -> vector<8x128xf32>
    %c32_i32_331 = arith.constant 32 : i32
    %808 = tpu.dynamic_rotate %805 by %c32_i32_331 dim 1 : vector<8x128xf32>, i32 -> vector<8x128xf32>
    %809 = arith.mulf %806, %764 : vector<8x128xf32>
    %810 = arith.mulf %805, %807 : vector<8x128xf32>
    %811 = arith.addf %809, %810 : vector<8x128xf32>
    %812 = math.tanh %811 : vector<8x128xf32>
    %813 = arith.mulf %808, %812 : vector<8x128xf32>
    %c17_i32 = arith.constant 17 : i32
    %c8_i32_332 = arith.constant 8 : i32
    %814 = arith.muli %c17_i32, %c8_i32_332 : i32
    %815 = tpu.assume_multiple %814, 8 : i32
    %816 = arith.index_cast %815 : i32 to index
    %c0_333 = arith.constant 0 : index
    %817 = vector.load %arg14[%816, %c0_333] : memref<240x128xf32, #tpu.memory_space<vmem>>, vector<8x128xf32>
    %818 = arith.truncf %789 : vector<8x128xf32> to vector<8x128xbf16>
    %c0_334 = arith.constant 0 : index
    %c0_335 = arith.constant 0 : index
    %819 = vector.load %arg2[%c0_334, %c0_335] : memref<128x128xbf16, #tpu.memory_space<vmem>>, vector<128x128xbf16>
    %cst_336 = arith.constant dense<0.000000e+00> : vector<8x128xf32>
    %820 = tpu.matmul %818, %819, %cst_336 {dimension_numbers = #tpu.dot_dimension_numbers<[1], [0], [0], [1], [0, 0, 1, 1], [], []>} : vector<8x128xbf16>, vector<128x128xbf16>, vector<8x128xf32> -> vector<8x128xf32>
    %821 = arith.addf %817, %820 : vector<8x128xf32>
    %822 = math.tanh %821 : vector<8x128xf32>
    %823 = arith.negf %821 : vector<8x128xf32>
    %824 = math.exp %823 : vector<8x128xf32>
    %cst_337 = arith.constant 1.000000e+00 : f32
    %825 = vector.broadcast %cst_337 : f32 to vector<8x128xf32>
    %826 = arith.addf %825, %824 : vector<8x128xf32>
    %827 = arith.divf %825, %826 : vector<8x128xf32>
    %828 = arith.select %13, %822, %827 : vector<8x128xi1>, vector<8x128xf32>
    %c96_i32_338 = arith.constant 96 : i32
    %829 = tpu.dynamic_rotate %828 by %c96_i32_338 dim 1 : vector<8x128xf32>, i32 -> vector<8x128xf32>
    %c64_i32_339 = arith.constant 64 : i32
    %830 = tpu.dynamic_rotate %828 by %c64_i32_339 dim 1 : vector<8x128xf32>, i32 -> vector<8x128xf32>
    %c32_i32_340 = arith.constant 32 : i32
    %831 = tpu.dynamic_rotate %828 by %c32_i32_340 dim 1 : vector<8x128xf32>, i32 -> vector<8x128xf32>
    %832 = arith.mulf %829, %787 : vector<8x128xf32>
    %833 = arith.mulf %828, %830 : vector<8x128xf32>
    %834 = arith.addf %832, %833 : vector<8x128xf32>
    %835 = math.tanh %834 : vector<8x128xf32>
    %836 = arith.mulf %831, %835 : vector<8x128xf32>
    %837 = arith.truncf %836 : vector<8x128xf32> to vector<8x128xbf16>
    %c0_341 = arith.constant 0 : index
    %c0_342 = arith.constant 0 : index
    %838 = vector.load %arg4[%c0_341, %c0_342] : memref<128x128xbf16, #tpu.memory_space<vmem>>, vector<128x128xbf16>
    %cst_343 = arith.constant dense<0.000000e+00> : vector<8x128xf32>
    %839 = tpu.matmul %837, %838, %cst_343 {dimension_numbers = #tpu.dot_dimension_numbers<[1], [0], [0], [1], [0, 0, 1, 1], [], []>} : vector<8x128xbf16>, vector<128x128xbf16>, vector<8x128xf32> -> vector<8x128xf32>
    %840 = arith.truncf %813 : vector<8x128xf32> to vector<8x128xbf16>
    %c0_344 = arith.constant 0 : index
    %c0_345 = arith.constant 0 : index
    %841 = vector.load %arg5[%c0_344, %c0_345] : memref<128x128xbf16, #tpu.memory_space<vmem>>, vector<128x128xbf16>
    %cst_346 = arith.constant dense<0.000000e+00> : vector<8x128xf32>
    %842 = tpu.matmul %840, %841, %cst_346 {dimension_numbers = #tpu.dot_dimension_numbers<[1], [0], [0], [1], [0, 0, 1, 1], [], []>} : vector<8x128xbf16>, vector<128x128xbf16>, vector<8x128xf32> -> vector<8x128xf32>
    %843 = arith.addf %839, %842 : vector<8x128xf32>
    %844 = vector.broadcast %7 : vector<1x128xf32> to vector<8x128xf32>
    %845 = arith.addf %843, %844 : vector<8x128xf32>
    %846 = math.tanh %845 : vector<8x128xf32>
    %847 = arith.negf %845 : vector<8x128xf32>
    %848 = math.exp %847 : vector<8x128xf32>
    %cst_347 = arith.constant 1.000000e+00 : f32
    %849 = vector.broadcast %cst_347 : f32 to vector<8x128xf32>
    %850 = arith.addf %849, %848 : vector<8x128xf32>
    %851 = arith.divf %849, %850 : vector<8x128xf32>
    %852 = arith.select %13, %846, %851 : vector<8x128xi1>, vector<8x128xf32>
    %c96_i32_348 = arith.constant 96 : i32
    %853 = tpu.dynamic_rotate %852 by %c96_i32_348 dim 1 : vector<8x128xf32>, i32 -> vector<8x128xf32>
    %c64_i32_349 = arith.constant 64 : i32
    %854 = tpu.dynamic_rotate %852 by %c64_i32_349 dim 1 : vector<8x128xf32>, i32 -> vector<8x128xf32>
    %c32_i32_350 = arith.constant 32 : i32
    %855 = tpu.dynamic_rotate %852 by %c32_i32_350 dim 1 : vector<8x128xf32>, i32 -> vector<8x128xf32>
    %856 = arith.mulf %853, %811 : vector<8x128xf32>
    %857 = arith.mulf %852, %854 : vector<8x128xf32>
    %858 = arith.addf %856, %857 : vector<8x128xf32>
    %859 = math.tanh %858 : vector<8x128xf32>
    %860 = arith.mulf %855, %859 : vector<8x128xf32>
    %c18_i32 = arith.constant 18 : i32
    %c8_i32_351 = arith.constant 8 : i32
    %861 = arith.muli %c18_i32, %c8_i32_351 : i32
    %862 = tpu.assume_multiple %861, 8 : i32
    %863 = arith.index_cast %862 : i32 to index
    %c0_352 = arith.constant 0 : index
    %864 = vector.load %arg14[%863, %c0_352] : memref<240x128xf32, #tpu.memory_space<vmem>>, vector<8x128xf32>
    %865 = arith.truncf %836 : vector<8x128xf32> to vector<8x128xbf16>
    %c0_353 = arith.constant 0 : index
    %c0_354 = arith.constant 0 : index
    %866 = vector.load %arg2[%c0_353, %c0_354] : memref<128x128xbf16, #tpu.memory_space<vmem>>, vector<128x128xbf16>
    %cst_355 = arith.constant dense<0.000000e+00> : vector<8x128xf32>
    %867 = tpu.matmul %865, %866, %cst_355 {dimension_numbers = #tpu.dot_dimension_numbers<[1], [0], [0], [1], [0, 0, 1, 1], [], []>} : vector<8x128xbf16>, vector<128x128xbf16>, vector<8x128xf32> -> vector<8x128xf32>
    %868 = arith.addf %864, %867 : vector<8x128xf32>
    %869 = math.tanh %868 : vector<8x128xf32>
    %870 = arith.negf %868 : vector<8x128xf32>
    %871 = math.exp %870 : vector<8x128xf32>
    %cst_356 = arith.constant 1.000000e+00 : f32
    %872 = vector.broadcast %cst_356 : f32 to vector<8x128xf32>
    %873 = arith.addf %872, %871 : vector<8x128xf32>
    %874 = arith.divf %872, %873 : vector<8x128xf32>
    %875 = arith.select %13, %869, %874 : vector<8x128xi1>, vector<8x128xf32>
    %c96_i32_357 = arith.constant 96 : i32
    %876 = tpu.dynamic_rotate %875 by %c96_i32_357 dim 1 : vector<8x128xf32>, i32 -> vector<8x128xf32>
    %c64_i32_358 = arith.constant 64 : i32
    %877 = tpu.dynamic_rotate %875 by %c64_i32_358 dim 1 : vector<8x128xf32>, i32 -> vector<8x128xf32>
    %c32_i32_359 = arith.constant 32 : i32
    %878 = tpu.dynamic_rotate %875 by %c32_i32_359 dim 1 : vector<8x128xf32>, i32 -> vector<8x128xf32>
    %879 = arith.mulf %876, %834 : vector<8x128xf32>
    %880 = arith.mulf %875, %877 : vector<8x128xf32>
    %881 = arith.addf %879, %880 : vector<8x128xf32>
    %882 = math.tanh %881 : vector<8x128xf32>
    %883 = arith.mulf %878, %882 : vector<8x128xf32>
    %884 = arith.truncf %883 : vector<8x128xf32> to vector<8x128xbf16>
    %c0_360 = arith.constant 0 : index
    %c0_361 = arith.constant 0 : index
    %885 = vector.load %arg4[%c0_360, %c0_361] : memref<128x128xbf16, #tpu.memory_space<vmem>>, vector<128x128xbf16>
    %cst_362 = arith.constant dense<0.000000e+00> : vector<8x128xf32>
    %886 = tpu.matmul %884, %885, %cst_362 {dimension_numbers = #tpu.dot_dimension_numbers<[1], [0], [0], [1], [0, 0, 1, 1], [], []>} : vector<8x128xbf16>, vector<128x128xbf16>, vector<8x128xf32> -> vector<8x128xf32>
    %887 = arith.truncf %860 : vector<8x128xf32> to vector<8x128xbf16>
    %c0_363 = arith.constant 0 : index
    %c0_364 = arith.constant 0 : index
    %888 = vector.load %arg5[%c0_363, %c0_364] : memref<128x128xbf16, #tpu.memory_space<vmem>>, vector<128x128xbf16>
    %cst_365 = arith.constant dense<0.000000e+00> : vector<8x128xf32>
    %889 = tpu.matmul %887, %888, %cst_365 {dimension_numbers = #tpu.dot_dimension_numbers<[1], [0], [0], [1], [0, 0, 1, 1], [], []>} : vector<8x128xbf16>, vector<128x128xbf16>, vector<8x128xf32> -> vector<8x128xf32>
    %890 = arith.addf %886, %889 : vector<8x128xf32>
    %891 = vector.broadcast %7 : vector<1x128xf32> to vector<8x128xf32>
    %892 = arith.addf %890, %891 : vector<8x128xf32>
    %893 = math.tanh %892 : vector<8x128xf32>
    %894 = arith.negf %892 : vector<8x128xf32>
    %895 = math.exp %894 : vector<8x128xf32>
    %cst_366 = arith.constant 1.000000e+00 : f32
    %896 = vector.broadcast %cst_366 : f32 to vector<8x128xf32>
    %897 = arith.addf %896, %895 : vector<8x128xf32>
    %898 = arith.divf %896, %897 : vector<8x128xf32>
    %899 = arith.select %13, %893, %898 : vector<8x128xi1>, vector<8x128xf32>
    %c96_i32_367 = arith.constant 96 : i32
    %900 = tpu.dynamic_rotate %899 by %c96_i32_367 dim 1 : vector<8x128xf32>, i32 -> vector<8x128xf32>
    %c64_i32_368 = arith.constant 64 : i32
    %901 = tpu.dynamic_rotate %899 by %c64_i32_368 dim 1 : vector<8x128xf32>, i32 -> vector<8x128xf32>
    %c32_i32_369 = arith.constant 32 : i32
    %902 = tpu.dynamic_rotate %899 by %c32_i32_369 dim 1 : vector<8x128xf32>, i32 -> vector<8x128xf32>
    %903 = arith.mulf %900, %858 : vector<8x128xf32>
    %904 = arith.mulf %899, %901 : vector<8x128xf32>
    %905 = arith.addf %903, %904 : vector<8x128xf32>
    %906 = math.tanh %905 : vector<8x128xf32>
    %907 = arith.mulf %902, %906 : vector<8x128xf32>
    %c19_i32 = arith.constant 19 : i32
    %c8_i32_370 = arith.constant 8 : i32
    %908 = arith.muli %c19_i32, %c8_i32_370 : i32
    %909 = tpu.assume_multiple %908, 8 : i32
    %910 = arith.index_cast %909 : i32 to index
    %c0_371 = arith.constant 0 : index
    %911 = vector.load %arg14[%910, %c0_371] : memref<240x128xf32, #tpu.memory_space<vmem>>, vector<8x128xf32>
    %912 = arith.truncf %883 : vector<8x128xf32> to vector<8x128xbf16>
    %c0_372 = arith.constant 0 : index
    %c0_373 = arith.constant 0 : index
    %913 = vector.load %arg2[%c0_372, %c0_373] : memref<128x128xbf16, #tpu.memory_space<vmem>>, vector<128x128xbf16>
    %cst_374 = arith.constant dense<0.000000e+00> : vector<8x128xf32>
    %914 = tpu.matmul %912, %913, %cst_374 {dimension_numbers = #tpu.dot_dimension_numbers<[1], [0], [0], [1], [0, 0, 1, 1], [], []>} : vector<8x128xbf16>, vector<128x128xbf16>, vector<8x128xf32> -> vector<8x128xf32>
    %915 = arith.addf %911, %914 : vector<8x128xf32>
    %916 = math.tanh %915 : vector<8x128xf32>
    %917 = arith.negf %915 : vector<8x128xf32>
    %918 = math.exp %917 : vector<8x128xf32>
    %cst_375 = arith.constant 1.000000e+00 : f32
    %919 = vector.broadcast %cst_375 : f32 to vector<8x128xf32>
    %920 = arith.addf %919, %918 : vector<8x128xf32>
    %921 = arith.divf %919, %920 : vector<8x128xf32>
    %922 = arith.select %13, %916, %921 : vector<8x128xi1>, vector<8x128xf32>
    %c96_i32_376 = arith.constant 96 : i32
    %923 = tpu.dynamic_rotate %922 by %c96_i32_376 dim 1 : vector<8x128xf32>, i32 -> vector<8x128xf32>
    %c64_i32_377 = arith.constant 64 : i32
    %924 = tpu.dynamic_rotate %922 by %c64_i32_377 dim 1 : vector<8x128xf32>, i32 -> vector<8x128xf32>
    %c32_i32_378 = arith.constant 32 : i32
    %925 = tpu.dynamic_rotate %922 by %c32_i32_378 dim 1 : vector<8x128xf32>, i32 -> vector<8x128xf32>
    %926 = arith.mulf %923, %881 : vector<8x128xf32>
    %927 = arith.mulf %922, %924 : vector<8x128xf32>
    %928 = arith.addf %926, %927 : vector<8x128xf32>
    %929 = math.tanh %928 : vector<8x128xf32>
    %930 = arith.mulf %925, %929 : vector<8x128xf32>
    %931 = arith.truncf %930 : vector<8x128xf32> to vector<8x128xbf16>
    %c0_379 = arith.constant 0 : index
    %c0_380 = arith.constant 0 : index
    %932 = vector.load %arg4[%c0_379, %c0_380] : memref<128x128xbf16, #tpu.memory_space<vmem>>, vector<128x128xbf16>
    %cst_381 = arith.constant dense<0.000000e+00> : vector<8x128xf32>
    %933 = tpu.matmul %931, %932, %cst_381 {dimension_numbers = #tpu.dot_dimension_numbers<[1], [0], [0], [1], [0, 0, 1, 1], [], []>} : vector<8x128xbf16>, vector<128x128xbf16>, vector<8x128xf32> -> vector<8x128xf32>
    %934 = arith.truncf %907 : vector<8x128xf32> to vector<8x128xbf16>
    %c0_382 = arith.constant 0 : index
    %c0_383 = arith.constant 0 : index
    %935 = vector.load %arg5[%c0_382, %c0_383] : memref<128x128xbf16, #tpu.memory_space<vmem>>, vector<128x128xbf16>
    %cst_384 = arith.constant dense<0.000000e+00> : vector<8x128xf32>
    %936 = tpu.matmul %934, %935, %cst_384 {dimension_numbers = #tpu.dot_dimension_numbers<[1], [0], [0], [1], [0, 0, 1, 1], [], []>} : vector<8x128xbf16>, vector<128x128xbf16>, vector<8x128xf32> -> vector<8x128xf32>
    %937 = arith.addf %933, %936 : vector<8x128xf32>
    %938 = vector.broadcast %7 : vector<1x128xf32> to vector<8x128xf32>
    %939 = arith.addf %937, %938 : vector<8x128xf32>
    %940 = math.tanh %939 : vector<8x128xf32>
    %941 = arith.negf %939 : vector<8x128xf32>
    %942 = math.exp %941 : vector<8x128xf32>
    %cst_385 = arith.constant 1.000000e+00 : f32
    %943 = vector.broadcast %cst_385 : f32 to vector<8x128xf32>
    %944 = arith.addf %943, %942 : vector<8x128xf32>
    %945 = arith.divf %943, %944 : vector<8x128xf32>
    %946 = arith.select %13, %940, %945 : vector<8x128xi1>, vector<8x128xf32>
    %c96_i32_386 = arith.constant 96 : i32
    %947 = tpu.dynamic_rotate %946 by %c96_i32_386 dim 1 : vector<8x128xf32>, i32 -> vector<8x128xf32>
    %c64_i32_387 = arith.constant 64 : i32
    %948 = tpu.dynamic_rotate %946 by %c64_i32_387 dim 1 : vector<8x128xf32>, i32 -> vector<8x128xf32>
    %c32_i32_388 = arith.constant 32 : i32
    %949 = tpu.dynamic_rotate %946 by %c32_i32_388 dim 1 : vector<8x128xf32>, i32 -> vector<8x128xf32>
    %950 = arith.mulf %947, %905 : vector<8x128xf32>
    %951 = arith.mulf %946, %948 : vector<8x128xf32>
    %952 = arith.addf %950, %951 : vector<8x128xf32>
    %953 = math.tanh %952 : vector<8x128xf32>
    %954 = arith.mulf %949, %953 : vector<8x128xf32>
    %c20_i32 = arith.constant 20 : i32
    %c8_i32_389 = arith.constant 8 : i32
    %955 = arith.muli %c20_i32, %c8_i32_389 : i32
    %956 = tpu.assume_multiple %955, 8 : i32
    %957 = arith.index_cast %956 : i32 to index
    %c0_390 = arith.constant 0 : index
    %958 = vector.load %arg14[%957, %c0_390] : memref<240x128xf32, #tpu.memory_space<vmem>>, vector<8x128xf32>
    %959 = arith.truncf %930 : vector<8x128xf32> to vector<8x128xbf16>
    %c0_391 = arith.constant 0 : index
    %c0_392 = arith.constant 0 : index
    %960 = vector.load %arg2[%c0_391, %c0_392] : memref<128x128xbf16, #tpu.memory_space<vmem>>, vector<128x128xbf16>
    %cst_393 = arith.constant dense<0.000000e+00> : vector<8x128xf32>
    %961 = tpu.matmul %959, %960, %cst_393 {dimension_numbers = #tpu.dot_dimension_numbers<[1], [0], [0], [1], [0, 0, 1, 1], [], []>} : vector<8x128xbf16>, vector<128x128xbf16>, vector<8x128xf32> -> vector<8x128xf32>
    %962 = arith.addf %958, %961 : vector<8x128xf32>
    %963 = math.tanh %962 : vector<8x128xf32>
    %964 = arith.negf %962 : vector<8x128xf32>
    %965 = math.exp %964 : vector<8x128xf32>
    %cst_394 = arith.constant 1.000000e+00 : f32
    %966 = vector.broadcast %cst_394 : f32 to vector<8x128xf32>
    %967 = arith.addf %966, %965 : vector<8x128xf32>
    %968 = arith.divf %966, %967 : vector<8x128xf32>
    %969 = arith.select %13, %963, %968 : vector<8x128xi1>, vector<8x128xf32>
    %c96_i32_395 = arith.constant 96 : i32
    %970 = tpu.dynamic_rotate %969 by %c96_i32_395 dim 1 : vector<8x128xf32>, i32 -> vector<8x128xf32>
    %c64_i32_396 = arith.constant 64 : i32
    %971 = tpu.dynamic_rotate %969 by %c64_i32_396 dim 1 : vector<8x128xf32>, i32 -> vector<8x128xf32>
    %c32_i32_397 = arith.constant 32 : i32
    %972 = tpu.dynamic_rotate %969 by %c32_i32_397 dim 1 : vector<8x128xf32>, i32 -> vector<8x128xf32>
    %973 = arith.mulf %970, %928 : vector<8x128xf32>
    %974 = arith.mulf %969, %971 : vector<8x128xf32>
    %975 = arith.addf %973, %974 : vector<8x128xf32>
    %976 = math.tanh %975 : vector<8x128xf32>
    %977 = arith.mulf %972, %976 : vector<8x128xf32>
    %978 = arith.truncf %977 : vector<8x128xf32> to vector<8x128xbf16>
    %c0_398 = arith.constant 0 : index
    %c0_399 = arith.constant 0 : index
    %979 = vector.load %arg4[%c0_398, %c0_399] : memref<128x128xbf16, #tpu.memory_space<vmem>>, vector<128x128xbf16>
    %cst_400 = arith.constant dense<0.000000e+00> : vector<8x128xf32>
    %980 = tpu.matmul %978, %979, %cst_400 {dimension_numbers = #tpu.dot_dimension_numbers<[1], [0], [0], [1], [0, 0, 1, 1], [], []>} : vector<8x128xbf16>, vector<128x128xbf16>, vector<8x128xf32> -> vector<8x128xf32>
    %981 = arith.truncf %954 : vector<8x128xf32> to vector<8x128xbf16>
    %c0_401 = arith.constant 0 : index
    %c0_402 = arith.constant 0 : index
    %982 = vector.load %arg5[%c0_401, %c0_402] : memref<128x128xbf16, #tpu.memory_space<vmem>>, vector<128x128xbf16>
    %cst_403 = arith.constant dense<0.000000e+00> : vector<8x128xf32>
    %983 = tpu.matmul %981, %982, %cst_403 {dimension_numbers = #tpu.dot_dimension_numbers<[1], [0], [0], [1], [0, 0, 1, 1], [], []>} : vector<8x128xbf16>, vector<128x128xbf16>, vector<8x128xf32> -> vector<8x128xf32>
    %984 = arith.addf %980, %983 : vector<8x128xf32>
    %985 = vector.broadcast %7 : vector<1x128xf32> to vector<8x128xf32>
    %986 = arith.addf %984, %985 : vector<8x128xf32>
    %987 = math.tanh %986 : vector<8x128xf32>
    %988 = arith.negf %986 : vector<8x128xf32>
    %989 = math.exp %988 : vector<8x128xf32>
    %cst_404 = arith.constant 1.000000e+00 : f32
    %990 = vector.broadcast %cst_404 : f32 to vector<8x128xf32>
    %991 = arith.addf %990, %989 : vector<8x128xf32>
    %992 = arith.divf %990, %991 : vector<8x128xf32>
    %993 = arith.select %13, %987, %992 : vector<8x128xi1>, vector<8x128xf32>
    %c96_i32_405 = arith.constant 96 : i32
    %994 = tpu.dynamic_rotate %993 by %c96_i32_405 dim 1 : vector<8x128xf32>, i32 -> vector<8x128xf32>
    %c64_i32_406 = arith.constant 64 : i32
    %995 = tpu.dynamic_rotate %993 by %c64_i32_406 dim 1 : vector<8x128xf32>, i32 -> vector<8x128xf32>
    %c32_i32_407 = arith.constant 32 : i32
    %996 = tpu.dynamic_rotate %993 by %c32_i32_407 dim 1 : vector<8x128xf32>, i32 -> vector<8x128xf32>
    %997 = arith.mulf %994, %952 : vector<8x128xf32>
    %998 = arith.mulf %993, %995 : vector<8x128xf32>
    %999 = arith.addf %997, %998 : vector<8x128xf32>
    %1000 = math.tanh %999 : vector<8x128xf32>
    %1001 = arith.mulf %996, %1000 : vector<8x128xf32>
    %c21_i32 = arith.constant 21 : i32
    %c8_i32_408 = arith.constant 8 : i32
    %1002 = arith.muli %c21_i32, %c8_i32_408 : i32
    %1003 = tpu.assume_multiple %1002, 8 : i32
    %1004 = arith.index_cast %1003 : i32 to index
    %c0_409 = arith.constant 0 : index
    %1005 = vector.load %arg14[%1004, %c0_409] : memref<240x128xf32, #tpu.memory_space<vmem>>, vector<8x128xf32>
    %1006 = arith.truncf %977 : vector<8x128xf32> to vector<8x128xbf16>
    %c0_410 = arith.constant 0 : index
    %c0_411 = arith.constant 0 : index
    %1007 = vector.load %arg2[%c0_410, %c0_411] : memref<128x128xbf16, #tpu.memory_space<vmem>>, vector<128x128xbf16>
    %cst_412 = arith.constant dense<0.000000e+00> : vector<8x128xf32>
    %1008 = tpu.matmul %1006, %1007, %cst_412 {dimension_numbers = #tpu.dot_dimension_numbers<[1], [0], [0], [1], [0, 0, 1, 1], [], []>} : vector<8x128xbf16>, vector<128x128xbf16>, vector<8x128xf32> -> vector<8x128xf32>
    %1009 = arith.addf %1005, %1008 : vector<8x128xf32>
    %1010 = math.tanh %1009 : vector<8x128xf32>
    %1011 = arith.negf %1009 : vector<8x128xf32>
    %1012 = math.exp %1011 : vector<8x128xf32>
    %cst_413 = arith.constant 1.000000e+00 : f32
    %1013 = vector.broadcast %cst_413 : f32 to vector<8x128xf32>
    %1014 = arith.addf %1013, %1012 : vector<8x128xf32>
    %1015 = arith.divf %1013, %1014 : vector<8x128xf32>
    %1016 = arith.select %13, %1010, %1015 : vector<8x128xi1>, vector<8x128xf32>
    %c96_i32_414 = arith.constant 96 : i32
    %1017 = tpu.dynamic_rotate %1016 by %c96_i32_414 dim 1 : vector<8x128xf32>, i32 -> vector<8x128xf32>
    %c64_i32_415 = arith.constant 64 : i32
    %1018 = tpu.dynamic_rotate %1016 by %c64_i32_415 dim 1 : vector<8x128xf32>, i32 -> vector<8x128xf32>
    %c32_i32_416 = arith.constant 32 : i32
    %1019 = tpu.dynamic_rotate %1016 by %c32_i32_416 dim 1 : vector<8x128xf32>, i32 -> vector<8x128xf32>
    %1020 = arith.mulf %1017, %975 : vector<8x128xf32>
    %1021 = arith.mulf %1016, %1018 : vector<8x128xf32>
    %1022 = arith.addf %1020, %1021 : vector<8x128xf32>
    %1023 = math.tanh %1022 : vector<8x128xf32>
    %1024 = arith.mulf %1019, %1023 : vector<8x128xf32>
    %1025 = arith.truncf %1024 : vector<8x128xf32> to vector<8x128xbf16>
    %c0_417 = arith.constant 0 : index
    %c0_418 = arith.constant 0 : index
    %1026 = vector.load %arg4[%c0_417, %c0_418] : memref<128x128xbf16, #tpu.memory_space<vmem>>, vector<128x128xbf16>
    %cst_419 = arith.constant dense<0.000000e+00> : vector<8x128xf32>
    %1027 = tpu.matmul %1025, %1026, %cst_419 {dimension_numbers = #tpu.dot_dimension_numbers<[1], [0], [0], [1], [0, 0, 1, 1], [], []>} : vector<8x128xbf16>, vector<128x128xbf16>, vector<8x128xf32> -> vector<8x128xf32>
    %1028 = arith.truncf %1001 : vector<8x128xf32> to vector<8x128xbf16>
    %c0_420 = arith.constant 0 : index
    %c0_421 = arith.constant 0 : index
    %1029 = vector.load %arg5[%c0_420, %c0_421] : memref<128x128xbf16, #tpu.memory_space<vmem>>, vector<128x128xbf16>
    %cst_422 = arith.constant dense<0.000000e+00> : vector<8x128xf32>
    %1030 = tpu.matmul %1028, %1029, %cst_422 {dimension_numbers = #tpu.dot_dimension_numbers<[1], [0], [0], [1], [0, 0, 1, 1], [], []>} : vector<8x128xbf16>, vector<128x128xbf16>, vector<8x128xf32> -> vector<8x128xf32>
    %1031 = arith.addf %1027, %1030 : vector<8x128xf32>
    %1032 = vector.broadcast %7 : vector<1x128xf32> to vector<8x128xf32>
    %1033 = arith.addf %1031, %1032 : vector<8x128xf32>
    %1034 = math.tanh %1033 : vector<8x128xf32>
    %1035 = arith.negf %1033 : vector<8x128xf32>
    %1036 = math.exp %1035 : vector<8x128xf32>
    %cst_423 = arith.constant 1.000000e+00 : f32
    %1037 = vector.broadcast %cst_423 : f32 to vector<8x128xf32>
    %1038 = arith.addf %1037, %1036 : vector<8x128xf32>
    %1039 = arith.divf %1037, %1038 : vector<8x128xf32>
    %1040 = arith.select %13, %1034, %1039 : vector<8x128xi1>, vector<8x128xf32>
    %c96_i32_424 = arith.constant 96 : i32
    %1041 = tpu.dynamic_rotate %1040 by %c96_i32_424 dim 1 : vector<8x128xf32>, i32 -> vector<8x128xf32>
    %c64_i32_425 = arith.constant 64 : i32
    %1042 = tpu.dynamic_rotate %1040 by %c64_i32_425 dim 1 : vector<8x128xf32>, i32 -> vector<8x128xf32>
    %c32_i32_426 = arith.constant 32 : i32
    %1043 = tpu.dynamic_rotate %1040 by %c32_i32_426 dim 1 : vector<8x128xf32>, i32 -> vector<8x128xf32>
    %1044 = arith.mulf %1041, %999 : vector<8x128xf32>
    %1045 = arith.mulf %1040, %1042 : vector<8x128xf32>
    %1046 = arith.addf %1044, %1045 : vector<8x128xf32>
    %1047 = math.tanh %1046 : vector<8x128xf32>
    %1048 = arith.mulf %1043, %1047 : vector<8x128xf32>
    %c22_i32 = arith.constant 22 : i32
    %c8_i32_427 = arith.constant 8 : i32
    %1049 = arith.muli %c22_i32, %c8_i32_427 : i32
    %1050 = tpu.assume_multiple %1049, 8 : i32
    %1051 = arith.index_cast %1050 : i32 to index
    %c0_428 = arith.constant 0 : index
    %1052 = vector.load %arg14[%1051, %c0_428] : memref<240x128xf32, #tpu.memory_space<vmem>>, vector<8x128xf32>
    %1053 = arith.truncf %1024 : vector<8x128xf32> to vector<8x128xbf16>
    %c0_429 = arith.constant 0 : index
    %c0_430 = arith.constant 0 : index
    %1054 = vector.load %arg2[%c0_429, %c0_430] : memref<128x128xbf16, #tpu.memory_space<vmem>>, vector<128x128xbf16>
    %cst_431 = arith.constant dense<0.000000e+00> : vector<8x128xf32>
    %1055 = tpu.matmul %1053, %1054, %cst_431 {dimension_numbers = #tpu.dot_dimension_numbers<[1], [0], [0], [1], [0, 0, 1, 1], [], []>} : vector<8x128xbf16>, vector<128x128xbf16>, vector<8x128xf32> -> vector<8x128xf32>
    %1056 = arith.addf %1052, %1055 : vector<8x128xf32>
    %1057 = math.tanh %1056 : vector<8x128xf32>
    %1058 = arith.negf %1056 : vector<8x128xf32>
    %1059 = math.exp %1058 : vector<8x128xf32>
    %cst_432 = arith.constant 1.000000e+00 : f32
    %1060 = vector.broadcast %cst_432 : f32 to vector<8x128xf32>
    %1061 = arith.addf %1060, %1059 : vector<8x128xf32>
    %1062 = arith.divf %1060, %1061 : vector<8x128xf32>
    %1063 = arith.select %13, %1057, %1062 : vector<8x128xi1>, vector<8x128xf32>
    %c96_i32_433 = arith.constant 96 : i32
    %1064 = tpu.dynamic_rotate %1063 by %c96_i32_433 dim 1 : vector<8x128xf32>, i32 -> vector<8x128xf32>
    %c64_i32_434 = arith.constant 64 : i32
    %1065 = tpu.dynamic_rotate %1063 by %c64_i32_434 dim 1 : vector<8x128xf32>, i32 -> vector<8x128xf32>
    %c32_i32_435 = arith.constant 32 : i32
    %1066 = tpu.dynamic_rotate %1063 by %c32_i32_435 dim 1 : vector<8x128xf32>, i32 -> vector<8x128xf32>
    %1067 = arith.mulf %1064, %1022 : vector<8x128xf32>
    %1068 = arith.mulf %1063, %1065 : vector<8x128xf32>
    %1069 = arith.addf %1067, %1068 : vector<8x128xf32>
    %1070 = math.tanh %1069 : vector<8x128xf32>
    %1071 = arith.mulf %1066, %1070 : vector<8x128xf32>
    %1072 = arith.truncf %1071 : vector<8x128xf32> to vector<8x128xbf16>
    %c0_436 = arith.constant 0 : index
    %c0_437 = arith.constant 0 : index
    %1073 = vector.load %arg4[%c0_436, %c0_437] : memref<128x128xbf16, #tpu.memory_space<vmem>>, vector<128x128xbf16>
    %cst_438 = arith.constant dense<0.000000e+00> : vector<8x128xf32>
    %1074 = tpu.matmul %1072, %1073, %cst_438 {dimension_numbers = #tpu.dot_dimension_numbers<[1], [0], [0], [1], [0, 0, 1, 1], [], []>} : vector<8x128xbf16>, vector<128x128xbf16>, vector<8x128xf32> -> vector<8x128xf32>
    %1075 = arith.truncf %1048 : vector<8x128xf32> to vector<8x128xbf16>
    %c0_439 = arith.constant 0 : index
    %c0_440 = arith.constant 0 : index
    %1076 = vector.load %arg5[%c0_439, %c0_440] : memref<128x128xbf16, #tpu.memory_space<vmem>>, vector<128x128xbf16>
    %cst_441 = arith.constant dense<0.000000e+00> : vector<8x128xf32>
    %1077 = tpu.matmul %1075, %1076, %cst_441 {dimension_numbers = #tpu.dot_dimension_numbers<[1], [0], [0], [1], [0, 0, 1, 1], [], []>} : vector<8x128xbf16>, vector<128x128xbf16>, vector<8x128xf32> -> vector<8x128xf32>
    %1078 = arith.addf %1074, %1077 : vector<8x128xf32>
    %1079 = vector.broadcast %7 : vector<1x128xf32> to vector<8x128xf32>
    %1080 = arith.addf %1078, %1079 : vector<8x128xf32>
    %1081 = math.tanh %1080 : vector<8x128xf32>
    %1082 = arith.negf %1080 : vector<8x128xf32>
    %1083 = math.exp %1082 : vector<8x128xf32>
    %cst_442 = arith.constant 1.000000e+00 : f32
    %1084 = vector.broadcast %cst_442 : f32 to vector<8x128xf32>
    %1085 = arith.addf %1084, %1083 : vector<8x128xf32>
    %1086 = arith.divf %1084, %1085 : vector<8x128xf32>
    %1087 = arith.select %13, %1081, %1086 : vector<8x128xi1>, vector<8x128xf32>
    %c96_i32_443 = arith.constant 96 : i32
    %1088 = tpu.dynamic_rotate %1087 by %c96_i32_443 dim 1 : vector<8x128xf32>, i32 -> vector<8x128xf32>
    %c64_i32_444 = arith.constant 64 : i32
    %1089 = tpu.dynamic_rotate %1087 by %c64_i32_444 dim 1 : vector<8x128xf32>, i32 -> vector<8x128xf32>
    %c32_i32_445 = arith.constant 32 : i32
    %1090 = tpu.dynamic_rotate %1087 by %c32_i32_445 dim 1 : vector<8x128xf32>, i32 -> vector<8x128xf32>
    %1091 = arith.mulf %1088, %1046 : vector<8x128xf32>
    %1092 = arith.mulf %1087, %1089 : vector<8x128xf32>
    %1093 = arith.addf %1091, %1092 : vector<8x128xf32>
    %1094 = math.tanh %1093 : vector<8x128xf32>
    %1095 = arith.mulf %1090, %1094 : vector<8x128xf32>
    %c23_i32 = arith.constant 23 : i32
    %c8_i32_446 = arith.constant 8 : i32
    %1096 = arith.muli %c23_i32, %c8_i32_446 : i32
    %1097 = tpu.assume_multiple %1096, 8 : i32
    %1098 = arith.index_cast %1097 : i32 to index
    %c0_447 = arith.constant 0 : index
    %1099 = vector.load %arg14[%1098, %c0_447] : memref<240x128xf32, #tpu.memory_space<vmem>>, vector<8x128xf32>
    %1100 = arith.truncf %1071 : vector<8x128xf32> to vector<8x128xbf16>
    %c0_448 = arith.constant 0 : index
    %c0_449 = arith.constant 0 : index
    %1101 = vector.load %arg2[%c0_448, %c0_449] : memref<128x128xbf16, #tpu.memory_space<vmem>>, vector<128x128xbf16>
    %cst_450 = arith.constant dense<0.000000e+00> : vector<8x128xf32>
    %1102 = tpu.matmul %1100, %1101, %cst_450 {dimension_numbers = #tpu.dot_dimension_numbers<[1], [0], [0], [1], [0, 0, 1, 1], [], []>} : vector<8x128xbf16>, vector<128x128xbf16>, vector<8x128xf32> -> vector<8x128xf32>
    %1103 = arith.addf %1099, %1102 : vector<8x128xf32>
    %1104 = math.tanh %1103 : vector<8x128xf32>
    %1105 = arith.negf %1103 : vector<8x128xf32>
    %1106 = math.exp %1105 : vector<8x128xf32>
    %cst_451 = arith.constant 1.000000e+00 : f32
    %1107 = vector.broadcast %cst_451 : f32 to vector<8x128xf32>
    %1108 = arith.addf %1107, %1106 : vector<8x128xf32>
    %1109 = arith.divf %1107, %1108 : vector<8x128xf32>
    %1110 = arith.select %13, %1104, %1109 : vector<8x128xi1>, vector<8x128xf32>
    %c96_i32_452 = arith.constant 96 : i32
    %1111 = tpu.dynamic_rotate %1110 by %c96_i32_452 dim 1 : vector<8x128xf32>, i32 -> vector<8x128xf32>
    %c64_i32_453 = arith.constant 64 : i32
    %1112 = tpu.dynamic_rotate %1110 by %c64_i32_453 dim 1 : vector<8x128xf32>, i32 -> vector<8x128xf32>
    %c32_i32_454 = arith.constant 32 : i32
    %1113 = tpu.dynamic_rotate %1110 by %c32_i32_454 dim 1 : vector<8x128xf32>, i32 -> vector<8x128xf32>
    %1114 = arith.mulf %1111, %1069 : vector<8x128xf32>
    %1115 = arith.mulf %1110, %1112 : vector<8x128xf32>
    %1116 = arith.addf %1114, %1115 : vector<8x128xf32>
    %1117 = math.tanh %1116 : vector<8x128xf32>
    %1118 = arith.mulf %1113, %1117 : vector<8x128xf32>
    %1119 = arith.truncf %1118 : vector<8x128xf32> to vector<8x128xbf16>
    %c0_455 = arith.constant 0 : index
    %c0_456 = arith.constant 0 : index
    %1120 = vector.load %arg4[%c0_455, %c0_456] : memref<128x128xbf16, #tpu.memory_space<vmem>>, vector<128x128xbf16>
    %cst_457 = arith.constant dense<0.000000e+00> : vector<8x128xf32>
    %1121 = tpu.matmul %1119, %1120, %cst_457 {dimension_numbers = #tpu.dot_dimension_numbers<[1], [0], [0], [1], [0, 0, 1, 1], [], []>} : vector<8x128xbf16>, vector<128x128xbf16>, vector<8x128xf32> -> vector<8x128xf32>
    %1122 = arith.truncf %1095 : vector<8x128xf32> to vector<8x128xbf16>
    %c0_458 = arith.constant 0 : index
    %c0_459 = arith.constant 0 : index
    %1123 = vector.load %arg5[%c0_458, %c0_459] : memref<128x128xbf16, #tpu.memory_space<vmem>>, vector<128x128xbf16>
    %cst_460 = arith.constant dense<0.000000e+00> : vector<8x128xf32>
    %1124 = tpu.matmul %1122, %1123, %cst_460 {dimension_numbers = #tpu.dot_dimension_numbers<[1], [0], [0], [1], [0, 0, 1, 1], [], []>} : vector<8x128xbf16>, vector<128x128xbf16>, vector<8x128xf32> -> vector<8x128xf32>
    %1125 = arith.addf %1121, %1124 : vector<8x128xf32>
    %1126 = vector.broadcast %7 : vector<1x128xf32> to vector<8x128xf32>
    %1127 = arith.addf %1125, %1126 : vector<8x128xf32>
    %1128 = math.tanh %1127 : vector<8x128xf32>
    %1129 = arith.negf %1127 : vector<8x128xf32>
    %1130 = math.exp %1129 : vector<8x128xf32>
    %cst_461 = arith.constant 1.000000e+00 : f32
    %1131 = vector.broadcast %cst_461 : f32 to vector<8x128xf32>
    %1132 = arith.addf %1131, %1130 : vector<8x128xf32>
    %1133 = arith.divf %1131, %1132 : vector<8x128xf32>
    %1134 = arith.select %13, %1128, %1133 : vector<8x128xi1>, vector<8x128xf32>
    %c96_i32_462 = arith.constant 96 : i32
    %1135 = tpu.dynamic_rotate %1134 by %c96_i32_462 dim 1 : vector<8x128xf32>, i32 -> vector<8x128xf32>
    %c64_i32_463 = arith.constant 64 : i32
    %1136 = tpu.dynamic_rotate %1134 by %c64_i32_463 dim 1 : vector<8x128xf32>, i32 -> vector<8x128xf32>
    %c32_i32_464 = arith.constant 32 : i32
    %1137 = tpu.dynamic_rotate %1134 by %c32_i32_464 dim 1 : vector<8x128xf32>, i32 -> vector<8x128xf32>
    %1138 = arith.mulf %1135, %1093 : vector<8x128xf32>
    %1139 = arith.mulf %1134, %1136 : vector<8x128xf32>
    %1140 = arith.addf %1138, %1139 : vector<8x128xf32>
    %1141 = math.tanh %1140 : vector<8x128xf32>
    %1142 = arith.mulf %1137, %1141 : vector<8x128xf32>
    %c24_i32 = arith.constant 24 : i32
    %c8_i32_465 = arith.constant 8 : i32
    %1143 = arith.muli %c24_i32, %c8_i32_465 : i32
    %1144 = tpu.assume_multiple %1143, 8 : i32
    %1145 = arith.index_cast %1144 : i32 to index
    %c0_466 = arith.constant 0 : index
    %1146 = vector.load %arg14[%1145, %c0_466] : memref<240x128xf32, #tpu.memory_space<vmem>>, vector<8x128xf32>
    %1147 = arith.truncf %1118 : vector<8x128xf32> to vector<8x128xbf16>
    %c0_467 = arith.constant 0 : index
    %c0_468 = arith.constant 0 : index
    %1148 = vector.load %arg2[%c0_467, %c0_468] : memref<128x128xbf16, #tpu.memory_space<vmem>>, vector<128x128xbf16>
    %cst_469 = arith.constant dense<0.000000e+00> : vector<8x128xf32>
    %1149 = tpu.matmul %1147, %1148, %cst_469 {dimension_numbers = #tpu.dot_dimension_numbers<[1], [0], [0], [1], [0, 0, 1, 1], [], []>} : vector<8x128xbf16>, vector<128x128xbf16>, vector<8x128xf32> -> vector<8x128xf32>
    %1150 = arith.addf %1146, %1149 : vector<8x128xf32>
    %1151 = math.tanh %1150 : vector<8x128xf32>
    %1152 = arith.negf %1150 : vector<8x128xf32>
    %1153 = math.exp %1152 : vector<8x128xf32>
    %cst_470 = arith.constant 1.000000e+00 : f32
    %1154 = vector.broadcast %cst_470 : f32 to vector<8x128xf32>
    %1155 = arith.addf %1154, %1153 : vector<8x128xf32>
    %1156 = arith.divf %1154, %1155 : vector<8x128xf32>
    %1157 = arith.select %13, %1151, %1156 : vector<8x128xi1>, vector<8x128xf32>
    %c96_i32_471 = arith.constant 96 : i32
    %1158 = tpu.dynamic_rotate %1157 by %c96_i32_471 dim 1 : vector<8x128xf32>, i32 -> vector<8x128xf32>
    %c64_i32_472 = arith.constant 64 : i32
    %1159 = tpu.dynamic_rotate %1157 by %c64_i32_472 dim 1 : vector<8x128xf32>, i32 -> vector<8x128xf32>
    %c32_i32_473 = arith.constant 32 : i32
    %1160 = tpu.dynamic_rotate %1157 by %c32_i32_473 dim 1 : vector<8x128xf32>, i32 -> vector<8x128xf32>
    %1161 = arith.mulf %1158, %1116 : vector<8x128xf32>
    %1162 = arith.mulf %1157, %1159 : vector<8x128xf32>
    %1163 = arith.addf %1161, %1162 : vector<8x128xf32>
    %1164 = math.tanh %1163 : vector<8x128xf32>
    %1165 = arith.mulf %1160, %1164 : vector<8x128xf32>
    %1166 = arith.truncf %1165 : vector<8x128xf32> to vector<8x128xbf16>
    %c0_474 = arith.constant 0 : index
    %c0_475 = arith.constant 0 : index
    %1167 = vector.load %arg4[%c0_474, %c0_475] : memref<128x128xbf16, #tpu.memory_space<vmem>>, vector<128x128xbf16>
    %cst_476 = arith.constant dense<0.000000e+00> : vector<8x128xf32>
    %1168 = tpu.matmul %1166, %1167, %cst_476 {dimension_numbers = #tpu.dot_dimension_numbers<[1], [0], [0], [1], [0, 0, 1, 1], [], []>} : vector<8x128xbf16>, vector<128x128xbf16>, vector<8x128xf32> -> vector<8x128xf32>
    %1169 = arith.truncf %1142 : vector<8x128xf32> to vector<8x128xbf16>
    %c0_477 = arith.constant 0 : index
    %c0_478 = arith.constant 0 : index
    %1170 = vector.load %arg5[%c0_477, %c0_478] : memref<128x128xbf16, #tpu.memory_space<vmem>>, vector<128x128xbf16>
    %cst_479 = arith.constant dense<0.000000e+00> : vector<8x128xf32>
    %1171 = tpu.matmul %1169, %1170, %cst_479 {dimension_numbers = #tpu.dot_dimension_numbers<[1], [0], [0], [1], [0, 0, 1, 1], [], []>} : vector<8x128xbf16>, vector<128x128xbf16>, vector<8x128xf32> -> vector<8x128xf32>
    %1172 = arith.addf %1168, %1171 : vector<8x128xf32>
    %1173 = vector.broadcast %7 : vector<1x128xf32> to vector<8x128xf32>
    %1174 = arith.addf %1172, %1173 : vector<8x128xf32>
    %1175 = math.tanh %1174 : vector<8x128xf32>
    %1176 = arith.negf %1174 : vector<8x128xf32>
    %1177 = math.exp %1176 : vector<8x128xf32>
    %cst_480 = arith.constant 1.000000e+00 : f32
    %1178 = vector.broadcast %cst_480 : f32 to vector<8x128xf32>
    %1179 = arith.addf %1178, %1177 : vector<8x128xf32>
    %1180 = arith.divf %1178, %1179 : vector<8x128xf32>
    %1181 = arith.select %13, %1175, %1180 : vector<8x128xi1>, vector<8x128xf32>
    %c96_i32_481 = arith.constant 96 : i32
    %1182 = tpu.dynamic_rotate %1181 by %c96_i32_481 dim 1 : vector<8x128xf32>, i32 -> vector<8x128xf32>
    %c64_i32_482 = arith.constant 64 : i32
    %1183 = tpu.dynamic_rotate %1181 by %c64_i32_482 dim 1 : vector<8x128xf32>, i32 -> vector<8x128xf32>
    %c32_i32_483 = arith.constant 32 : i32
    %1184 = tpu.dynamic_rotate %1181 by %c32_i32_483 dim 1 : vector<8x128xf32>, i32 -> vector<8x128xf32>
    %1185 = arith.mulf %1182, %1140 : vector<8x128xf32>
    %1186 = arith.mulf %1181, %1183 : vector<8x128xf32>
    %1187 = arith.addf %1185, %1186 : vector<8x128xf32>
    %1188 = math.tanh %1187 : vector<8x128xf32>
    %1189 = arith.mulf %1184, %1188 : vector<8x128xf32>
    %c25_i32 = arith.constant 25 : i32
    %c8_i32_484 = arith.constant 8 : i32
    %1190 = arith.muli %c25_i32, %c8_i32_484 : i32
    %1191 = tpu.assume_multiple %1190, 8 : i32
    %1192 = arith.index_cast %1191 : i32 to index
    %c0_485 = arith.constant 0 : index
    %1193 = vector.load %arg14[%1192, %c0_485] : memref<240x128xf32, #tpu.memory_space<vmem>>, vector<8x128xf32>
    %1194 = arith.truncf %1165 : vector<8x128xf32> to vector<8x128xbf16>
    %c0_486 = arith.constant 0 : index
    %c0_487 = arith.constant 0 : index
    %1195 = vector.load %arg2[%c0_486, %c0_487] : memref<128x128xbf16, #tpu.memory_space<vmem>>, vector<128x128xbf16>
    %cst_488 = arith.constant dense<0.000000e+00> : vector<8x128xf32>
    %1196 = tpu.matmul %1194, %1195, %cst_488 {dimension_numbers = #tpu.dot_dimension_numbers<[1], [0], [0], [1], [0, 0, 1, 1], [], []>} : vector<8x128xbf16>, vector<128x128xbf16>, vector<8x128xf32> -> vector<8x128xf32>
    %1197 = arith.addf %1193, %1196 : vector<8x128xf32>
    %1198 = math.tanh %1197 : vector<8x128xf32>
    %1199 = arith.negf %1197 : vector<8x128xf32>
    %1200 = math.exp %1199 : vector<8x128xf32>
    %cst_489 = arith.constant 1.000000e+00 : f32
    %1201 = vector.broadcast %cst_489 : f32 to vector<8x128xf32>
    %1202 = arith.addf %1201, %1200 : vector<8x128xf32>
    %1203 = arith.divf %1201, %1202 : vector<8x128xf32>
    %1204 = arith.select %13, %1198, %1203 : vector<8x128xi1>, vector<8x128xf32>
    %c96_i32_490 = arith.constant 96 : i32
    %1205 = tpu.dynamic_rotate %1204 by %c96_i32_490 dim 1 : vector<8x128xf32>, i32 -> vector<8x128xf32>
    %c64_i32_491 = arith.constant 64 : i32
    %1206 = tpu.dynamic_rotate %1204 by %c64_i32_491 dim 1 : vector<8x128xf32>, i32 -> vector<8x128xf32>
    %c32_i32_492 = arith.constant 32 : i32
    %1207 = tpu.dynamic_rotate %1204 by %c32_i32_492 dim 1 : vector<8x128xf32>, i32 -> vector<8x128xf32>
    %1208 = arith.mulf %1205, %1163 : vector<8x128xf32>
    %1209 = arith.mulf %1204, %1206 : vector<8x128xf32>
    %1210 = arith.addf %1208, %1209 : vector<8x128xf32>
    %1211 = math.tanh %1210 : vector<8x128xf32>
    %1212 = arith.mulf %1207, %1211 : vector<8x128xf32>
    %1213 = arith.truncf %1212 : vector<8x128xf32> to vector<8x128xbf16>
    %c0_493 = arith.constant 0 : index
    %c0_494 = arith.constant 0 : index
    %1214 = vector.load %arg4[%c0_493, %c0_494] : memref<128x128xbf16, #tpu.memory_space<vmem>>, vector<128x128xbf16>
    %cst_495 = arith.constant dense<0.000000e+00> : vector<8x128xf32>
    %1215 = tpu.matmul %1213, %1214, %cst_495 {dimension_numbers = #tpu.dot_dimension_numbers<[1], [0], [0], [1], [0, 0, 1, 1], [], []>} : vector<8x128xbf16>, vector<128x128xbf16>, vector<8x128xf32> -> vector<8x128xf32>
    %1216 = arith.truncf %1189 : vector<8x128xf32> to vector<8x128xbf16>
    %c0_496 = arith.constant 0 : index
    %c0_497 = arith.constant 0 : index
    %1217 = vector.load %arg5[%c0_496, %c0_497] : memref<128x128xbf16, #tpu.memory_space<vmem>>, vector<128x128xbf16>
    %cst_498 = arith.constant dense<0.000000e+00> : vector<8x128xf32>
    %1218 = tpu.matmul %1216, %1217, %cst_498 {dimension_numbers = #tpu.dot_dimension_numbers<[1], [0], [0], [1], [0, 0, 1, 1], [], []>} : vector<8x128xbf16>, vector<128x128xbf16>, vector<8x128xf32> -> vector<8x128xf32>
    %1219 = arith.addf %1215, %1218 : vector<8x128xf32>
    %1220 = vector.broadcast %7 : vector<1x128xf32> to vector<8x128xf32>
    %1221 = arith.addf %1219, %1220 : vector<8x128xf32>
    %1222 = math.tanh %1221 : vector<8x128xf32>
    %1223 = arith.negf %1221 : vector<8x128xf32>
    %1224 = math.exp %1223 : vector<8x128xf32>
    %cst_499 = arith.constant 1.000000e+00 : f32
    %1225 = vector.broadcast %cst_499 : f32 to vector<8x128xf32>
    %1226 = arith.addf %1225, %1224 : vector<8x128xf32>
    %1227 = arith.divf %1225, %1226 : vector<8x128xf32>
    %1228 = arith.select %13, %1222, %1227 : vector<8x128xi1>, vector<8x128xf32>
    %c96_i32_500 = arith.constant 96 : i32
    %1229 = tpu.dynamic_rotate %1228 by %c96_i32_500 dim 1 : vector<8x128xf32>, i32 -> vector<8x128xf32>
    %c64_i32_501 = arith.constant 64 : i32
    %1230 = tpu.dynamic_rotate %1228 by %c64_i32_501 dim 1 : vector<8x128xf32>, i32 -> vector<8x128xf32>
    %c32_i32_502 = arith.constant 32 : i32
    %1231 = tpu.dynamic_rotate %1228 by %c32_i32_502 dim 1 : vector<8x128xf32>, i32 -> vector<8x128xf32>
    %1232 = arith.mulf %1229, %1187 : vector<8x128xf32>
    %1233 = arith.mulf %1228, %1230 : vector<8x128xf32>
    %1234 = arith.addf %1232, %1233 : vector<8x128xf32>
    %1235 = math.tanh %1234 : vector<8x128xf32>
    %1236 = arith.mulf %1231, %1235 : vector<8x128xf32>
    %c26_i32 = arith.constant 26 : i32
    %c8_i32_503 = arith.constant 8 : i32
    %1237 = arith.muli %c26_i32, %c8_i32_503 : i32
    %1238 = tpu.assume_multiple %1237, 8 : i32
    %1239 = arith.index_cast %1238 : i32 to index
    %c0_504 = arith.constant 0 : index
    %1240 = vector.load %arg14[%1239, %c0_504] : memref<240x128xf32, #tpu.memory_space<vmem>>, vector<8x128xf32>
    %1241 = arith.truncf %1212 : vector<8x128xf32> to vector<8x128xbf16>
    %c0_505 = arith.constant 0 : index
    %c0_506 = arith.constant 0 : index
    %1242 = vector.load %arg2[%c0_505, %c0_506] : memref<128x128xbf16, #tpu.memory_space<vmem>>, vector<128x128xbf16>
    %cst_507 = arith.constant dense<0.000000e+00> : vector<8x128xf32>
    %1243 = tpu.matmul %1241, %1242, %cst_507 {dimension_numbers = #tpu.dot_dimension_numbers<[1], [0], [0], [1], [0, 0, 1, 1], [], []>} : vector<8x128xbf16>, vector<128x128xbf16>, vector<8x128xf32> -> vector<8x128xf32>
    %1244 = arith.addf %1240, %1243 : vector<8x128xf32>
    %1245 = math.tanh %1244 : vector<8x128xf32>
    %1246 = arith.negf %1244 : vector<8x128xf32>
    %1247 = math.exp %1246 : vector<8x128xf32>
    %cst_508 = arith.constant 1.000000e+00 : f32
    %1248 = vector.broadcast %cst_508 : f32 to vector<8x128xf32>
    %1249 = arith.addf %1248, %1247 : vector<8x128xf32>
    %1250 = arith.divf %1248, %1249 : vector<8x128xf32>
    %1251 = arith.select %13, %1245, %1250 : vector<8x128xi1>, vector<8x128xf32>
    %c96_i32_509 = arith.constant 96 : i32
    %1252 = tpu.dynamic_rotate %1251 by %c96_i32_509 dim 1 : vector<8x128xf32>, i32 -> vector<8x128xf32>
    %c64_i32_510 = arith.constant 64 : i32
    %1253 = tpu.dynamic_rotate %1251 by %c64_i32_510 dim 1 : vector<8x128xf32>, i32 -> vector<8x128xf32>
    %c32_i32_511 = arith.constant 32 : i32
    %1254 = tpu.dynamic_rotate %1251 by %c32_i32_511 dim 1 : vector<8x128xf32>, i32 -> vector<8x128xf32>
    %1255 = arith.mulf %1252, %1210 : vector<8x128xf32>
    %1256 = arith.mulf %1251, %1253 : vector<8x128xf32>
    %1257 = arith.addf %1255, %1256 : vector<8x128xf32>
    %1258 = math.tanh %1257 : vector<8x128xf32>
    %1259 = arith.mulf %1254, %1258 : vector<8x128xf32>
    %1260 = arith.truncf %1259 : vector<8x128xf32> to vector<8x128xbf16>
    %c0_512 = arith.constant 0 : index
    %c0_513 = arith.constant 0 : index
    %1261 = vector.load %arg4[%c0_512, %c0_513] : memref<128x128xbf16, #tpu.memory_space<vmem>>, vector<128x128xbf16>
    %cst_514 = arith.constant dense<0.000000e+00> : vector<8x128xf32>
    %1262 = tpu.matmul %1260, %1261, %cst_514 {dimension_numbers = #tpu.dot_dimension_numbers<[1], [0], [0], [1], [0, 0, 1, 1], [], []>} : vector<8x128xbf16>, vector<128x128xbf16>, vector<8x128xf32> -> vector<8x128xf32>
    %1263 = arith.truncf %1236 : vector<8x128xf32> to vector<8x128xbf16>
    %c0_515 = arith.constant 0 : index
    %c0_516 = arith.constant 0 : index
    %1264 = vector.load %arg5[%c0_515, %c0_516] : memref<128x128xbf16, #tpu.memory_space<vmem>>, vector<128x128xbf16>
    %cst_517 = arith.constant dense<0.000000e+00> : vector<8x128xf32>
    %1265 = tpu.matmul %1263, %1264, %cst_517 {dimension_numbers = #tpu.dot_dimension_numbers<[1], [0], [0], [1], [0, 0, 1, 1], [], []>} : vector<8x128xbf16>, vector<128x128xbf16>, vector<8x128xf32> -> vector<8x128xf32>
    %1266 = arith.addf %1262, %1265 : vector<8x128xf32>
    %1267 = vector.broadcast %7 : vector<1x128xf32> to vector<8x128xf32>
    %1268 = arith.addf %1266, %1267 : vector<8x128xf32>
    %1269 = math.tanh %1268 : vector<8x128xf32>
    %1270 = arith.negf %1268 : vector<8x128xf32>
    %1271 = math.exp %1270 : vector<8x128xf32>
    %cst_518 = arith.constant 1.000000e+00 : f32
    %1272 = vector.broadcast %cst_518 : f32 to vector<8x128xf32>
    %1273 = arith.addf %1272, %1271 : vector<8x128xf32>
    %1274 = arith.divf %1272, %1273 : vector<8x128xf32>
    %1275 = arith.select %13, %1269, %1274 : vector<8x128xi1>, vector<8x128xf32>
    %c96_i32_519 = arith.constant 96 : i32
    %1276 = tpu.dynamic_rotate %1275 by %c96_i32_519 dim 1 : vector<8x128xf32>, i32 -> vector<8x128xf32>
    %c64_i32_520 = arith.constant 64 : i32
    %1277 = tpu.dynamic_rotate %1275 by %c64_i32_520 dim 1 : vector<8x128xf32>, i32 -> vector<8x128xf32>
    %c32_i32_521 = arith.constant 32 : i32
    %1278 = tpu.dynamic_rotate %1275 by %c32_i32_521 dim 1 : vector<8x128xf32>, i32 -> vector<8x128xf32>
    %1279 = arith.mulf %1276, %1234 : vector<8x128xf32>
    %1280 = arith.mulf %1275, %1277 : vector<8x128xf32>
    %1281 = arith.addf %1279, %1280 : vector<8x128xf32>
    %1282 = math.tanh %1281 : vector<8x128xf32>
    %1283 = arith.mulf %1278, %1282 : vector<8x128xf32>
    %c27_i32 = arith.constant 27 : i32
    %c8_i32_522 = arith.constant 8 : i32
    %1284 = arith.muli %c27_i32, %c8_i32_522 : i32
    %1285 = tpu.assume_multiple %1284, 8 : i32
    %1286 = arith.index_cast %1285 : i32 to index
    %c0_523 = arith.constant 0 : index
    %1287 = vector.load %arg14[%1286, %c0_523] : memref<240x128xf32, #tpu.memory_space<vmem>>, vector<8x128xf32>
    %1288 = arith.truncf %1259 : vector<8x128xf32> to vector<8x128xbf16>
    %c0_524 = arith.constant 0 : index
    %c0_525 = arith.constant 0 : index
    %1289 = vector.load %arg2[%c0_524, %c0_525] : memref<128x128xbf16, #tpu.memory_space<vmem>>, vector<128x128xbf16>
    %cst_526 = arith.constant dense<0.000000e+00> : vector<8x128xf32>
    %1290 = tpu.matmul %1288, %1289, %cst_526 {dimension_numbers = #tpu.dot_dimension_numbers<[1], [0], [0], [1], [0, 0, 1, 1], [], []>} : vector<8x128xbf16>, vector<128x128xbf16>, vector<8x128xf32> -> vector<8x128xf32>
    %1291 = arith.addf %1287, %1290 : vector<8x128xf32>
    %1292 = math.tanh %1291 : vector<8x128xf32>
    %1293 = arith.negf %1291 : vector<8x128xf32>
    %1294 = math.exp %1293 : vector<8x128xf32>
    %cst_527 = arith.constant 1.000000e+00 : f32
    %1295 = vector.broadcast %cst_527 : f32 to vector<8x128xf32>
    %1296 = arith.addf %1295, %1294 : vector<8x128xf32>
    %1297 = arith.divf %1295, %1296 : vector<8x128xf32>
    %1298 = arith.select %13, %1292, %1297 : vector<8x128xi1>, vector<8x128xf32>
    %c96_i32_528 = arith.constant 96 : i32
    %1299 = tpu.dynamic_rotate %1298 by %c96_i32_528 dim 1 : vector<8x128xf32>, i32 -> vector<8x128xf32>
    %c64_i32_529 = arith.constant 64 : i32
    %1300 = tpu.dynamic_rotate %1298 by %c64_i32_529 dim 1 : vector<8x128xf32>, i32 -> vector<8x128xf32>
    %c32_i32_530 = arith.constant 32 : i32
    %1301 = tpu.dynamic_rotate %1298 by %c32_i32_530 dim 1 : vector<8x128xf32>, i32 -> vector<8x128xf32>
    %1302 = arith.mulf %1299, %1257 : vector<8x128xf32>
    %1303 = arith.mulf %1298, %1300 : vector<8x128xf32>
    %1304 = arith.addf %1302, %1303 : vector<8x128xf32>
    %1305 = math.tanh %1304 : vector<8x128xf32>
    %1306 = arith.mulf %1301, %1305 : vector<8x128xf32>
    %1307 = arith.truncf %1306 : vector<8x128xf32> to vector<8x128xbf16>
    %c0_531 = arith.constant 0 : index
    %c0_532 = arith.constant 0 : index
    %1308 = vector.load %arg4[%c0_531, %c0_532] : memref<128x128xbf16, #tpu.memory_space<vmem>>, vector<128x128xbf16>
    %cst_533 = arith.constant dense<0.000000e+00> : vector<8x128xf32>
    %1309 = tpu.matmul %1307, %1308, %cst_533 {dimension_numbers = #tpu.dot_dimension_numbers<[1], [0], [0], [1], [0, 0, 1, 1], [], []>} : vector<8x128xbf16>, vector<128x128xbf16>, vector<8x128xf32> -> vector<8x128xf32>
    %1310 = arith.truncf %1283 : vector<8x128xf32> to vector<8x128xbf16>
    %c0_534 = arith.constant 0 : index
    %c0_535 = arith.constant 0 : index
    %1311 = vector.load %arg5[%c0_534, %c0_535] : memref<128x128xbf16, #tpu.memory_space<vmem>>, vector<128x128xbf16>
    %cst_536 = arith.constant dense<0.000000e+00> : vector<8x128xf32>
    %1312 = tpu.matmul %1310, %1311, %cst_536 {dimension_numbers = #tpu.dot_dimension_numbers<[1], [0], [0], [1], [0, 0, 1, 1], [], []>} : vector<8x128xbf16>, vector<128x128xbf16>, vector<8x128xf32> -> vector<8x128xf32>
    %1313 = arith.addf %1309, %1312 : vector<8x128xf32>
    %1314 = vector.broadcast %7 : vector<1x128xf32> to vector<8x128xf32>
    %1315 = arith.addf %1313, %1314 : vector<8x128xf32>
    %1316 = math.tanh %1315 : vector<8x128xf32>
    %1317 = arith.negf %1315 : vector<8x128xf32>
    %1318 = math.exp %1317 : vector<8x128xf32>
    %cst_537 = arith.constant 1.000000e+00 : f32
    %1319 = vector.broadcast %cst_537 : f32 to vector<8x128xf32>
    %1320 = arith.addf %1319, %1318 : vector<8x128xf32>
    %1321 = arith.divf %1319, %1320 : vector<8x128xf32>
    %1322 = arith.select %13, %1316, %1321 : vector<8x128xi1>, vector<8x128xf32>
    %c96_i32_538 = arith.constant 96 : i32
    %1323 = tpu.dynamic_rotate %1322 by %c96_i32_538 dim 1 : vector<8x128xf32>, i32 -> vector<8x128xf32>
    %c64_i32_539 = arith.constant 64 : i32
    %1324 = tpu.dynamic_rotate %1322 by %c64_i32_539 dim 1 : vector<8x128xf32>, i32 -> vector<8x128xf32>
    %c32_i32_540 = arith.constant 32 : i32
    %1325 = tpu.dynamic_rotate %1322 by %c32_i32_540 dim 1 : vector<8x128xf32>, i32 -> vector<8x128xf32>
    %1326 = arith.mulf %1323, %1281 : vector<8x128xf32>
    %1327 = arith.mulf %1322, %1324 : vector<8x128xf32>
    %1328 = arith.addf %1326, %1327 : vector<8x128xf32>
    %1329 = math.tanh %1328 : vector<8x128xf32>
    %1330 = arith.mulf %1325, %1329 : vector<8x128xf32>
    %c28_i32 = arith.constant 28 : i32
    %c8_i32_541 = arith.constant 8 : i32
    %1331 = arith.muli %c28_i32, %c8_i32_541 : i32
    %1332 = tpu.assume_multiple %1331, 8 : i32
    %1333 = arith.index_cast %1332 : i32 to index
    %c0_542 = arith.constant 0 : index
    %1334 = vector.load %arg14[%1333, %c0_542] : memref<240x128xf32, #tpu.memory_space<vmem>>, vector<8x128xf32>
    %1335 = arith.truncf %1306 : vector<8x128xf32> to vector<8x128xbf16>
    %c0_543 = arith.constant 0 : index
    %c0_544 = arith.constant 0 : index
    %1336 = vector.load %arg2[%c0_543, %c0_544] : memref<128x128xbf16, #tpu.memory_space<vmem>>, vector<128x128xbf16>
    %cst_545 = arith.constant dense<0.000000e+00> : vector<8x128xf32>
    %1337 = tpu.matmul %1335, %1336, %cst_545 {dimension_numbers = #tpu.dot_dimension_numbers<[1], [0], [0], [1], [0, 0, 1, 1], [], []>} : vector<8x128xbf16>, vector<128x128xbf16>, vector<8x128xf32> -> vector<8x128xf32>
    %1338 = arith.addf %1334, %1337 : vector<8x128xf32>
    %1339 = math.tanh %1338 : vector<8x128xf32>
    %1340 = arith.negf %1338 : vector<8x128xf32>
    %1341 = math.exp %1340 : vector<8x128xf32>
    %cst_546 = arith.constant 1.000000e+00 : f32
    %1342 = vector.broadcast %cst_546 : f32 to vector<8x128xf32>
    %1343 = arith.addf %1342, %1341 : vector<8x128xf32>
    %1344 = arith.divf %1342, %1343 : vector<8x128xf32>
    %1345 = arith.select %13, %1339, %1344 : vector<8x128xi1>, vector<8x128xf32>
    %c96_i32_547 = arith.constant 96 : i32
    %1346 = tpu.dynamic_rotate %1345 by %c96_i32_547 dim 1 : vector<8x128xf32>, i32 -> vector<8x128xf32>
    %c64_i32_548 = arith.constant 64 : i32
    %1347 = tpu.dynamic_rotate %1345 by %c64_i32_548 dim 1 : vector<8x128xf32>, i32 -> vector<8x128xf32>
    %c32_i32_549 = arith.constant 32 : i32
    %1348 = tpu.dynamic_rotate %1345 by %c32_i32_549 dim 1 : vector<8x128xf32>, i32 -> vector<8x128xf32>
    %1349 = arith.mulf %1346, %1304 : vector<8x128xf32>
    %1350 = arith.mulf %1345, %1347 : vector<8x128xf32>
    %1351 = arith.addf %1349, %1350 : vector<8x128xf32>
    %1352 = math.tanh %1351 : vector<8x128xf32>
    %1353 = arith.mulf %1348, %1352 : vector<8x128xf32>
    %1354 = arith.truncf %1353 : vector<8x128xf32> to vector<8x128xbf16>
    %c0_550 = arith.constant 0 : index
    %c0_551 = arith.constant 0 : index
    %1355 = vector.load %arg4[%c0_550, %c0_551] : memref<128x128xbf16, #tpu.memory_space<vmem>>, vector<128x128xbf16>
    %cst_552 = arith.constant dense<0.000000e+00> : vector<8x128xf32>
    %1356 = tpu.matmul %1354, %1355, %cst_552 {dimension_numbers = #tpu.dot_dimension_numbers<[1], [0], [0], [1], [0, 0, 1, 1], [], []>} : vector<8x128xbf16>, vector<128x128xbf16>, vector<8x128xf32> -> vector<8x128xf32>
    %1357 = arith.truncf %1330 : vector<8x128xf32> to vector<8x128xbf16>
    %c0_553 = arith.constant 0 : index
    %c0_554 = arith.constant 0 : index
    %1358 = vector.load %arg5[%c0_553, %c0_554] : memref<128x128xbf16, #tpu.memory_space<vmem>>, vector<128x128xbf16>
    %cst_555 = arith.constant dense<0.000000e+00> : vector<8x128xf32>
    %1359 = tpu.matmul %1357, %1358, %cst_555 {dimension_numbers = #tpu.dot_dimension_numbers<[1], [0], [0], [1], [0, 0, 1, 1], [], []>} : vector<8x128xbf16>, vector<128x128xbf16>, vector<8x128xf32> -> vector<8x128xf32>
    %1360 = arith.addf %1356, %1359 : vector<8x128xf32>
    %1361 = vector.broadcast %7 : vector<1x128xf32> to vector<8x128xf32>
    %1362 = arith.addf %1360, %1361 : vector<8x128xf32>
    %1363 = math.tanh %1362 : vector<8x128xf32>
    %1364 = arith.negf %1362 : vector<8x128xf32>
    %1365 = math.exp %1364 : vector<8x128xf32>
    %cst_556 = arith.constant 1.000000e+00 : f32
    %1366 = vector.broadcast %cst_556 : f32 to vector<8x128xf32>
    %1367 = arith.addf %1366, %1365 : vector<8x128xf32>
    %1368 = arith.divf %1366, %1367 : vector<8x128xf32>
    %1369 = arith.select %13, %1363, %1368 : vector<8x128xi1>, vector<8x128xf32>
    %c96_i32_557 = arith.constant 96 : i32
    %1370 = tpu.dynamic_rotate %1369 by %c96_i32_557 dim 1 : vector<8x128xf32>, i32 -> vector<8x128xf32>
    %c64_i32_558 = arith.constant 64 : i32
    %1371 = tpu.dynamic_rotate %1369 by %c64_i32_558 dim 1 : vector<8x128xf32>, i32 -> vector<8x128xf32>
    %c32_i32_559 = arith.constant 32 : i32
    %1372 = tpu.dynamic_rotate %1369 by %c32_i32_559 dim 1 : vector<8x128xf32>, i32 -> vector<8x128xf32>
    %1373 = arith.mulf %1370, %1328 : vector<8x128xf32>
    %1374 = arith.mulf %1369, %1371 : vector<8x128xf32>
    %1375 = arith.addf %1373, %1374 : vector<8x128xf32>
    %1376 = math.tanh %1375 : vector<8x128xf32>
    %1377 = arith.mulf %1372, %1376 : vector<8x128xf32>
    %c29_i32 = arith.constant 29 : i32
    %c8_i32_560 = arith.constant 8 : i32
    %1378 = arith.muli %c29_i32, %c8_i32_560 : i32
    %1379 = tpu.assume_multiple %1378, 8 : i32
    %1380 = arith.index_cast %1379 : i32 to index
    %c0_561 = arith.constant 0 : index
    %1381 = vector.load %arg14[%1380, %c0_561] : memref<240x128xf32, #tpu.memory_space<vmem>>, vector<8x128xf32>
    %1382 = arith.truncf %1353 : vector<8x128xf32> to vector<8x128xbf16>
    %c0_562 = arith.constant 0 : index
    %c0_563 = arith.constant 0 : index
    %1383 = vector.load %arg2[%c0_562, %c0_563] : memref<128x128xbf16, #tpu.memory_space<vmem>>, vector<128x128xbf16>
    %cst_564 = arith.constant dense<0.000000e+00> : vector<8x128xf32>
    %1384 = tpu.matmul %1382, %1383, %cst_564 {dimension_numbers = #tpu.dot_dimension_numbers<[1], [0], [0], [1], [0, 0, 1, 1], [], []>} : vector<8x128xbf16>, vector<128x128xbf16>, vector<8x128xf32> -> vector<8x128xf32>
    %1385 = arith.addf %1381, %1384 : vector<8x128xf32>
    %1386 = math.tanh %1385 : vector<8x128xf32>
    %1387 = arith.negf %1385 : vector<8x128xf32>
    %1388 = math.exp %1387 : vector<8x128xf32>
    %cst_565 = arith.constant 1.000000e+00 : f32
    %1389 = vector.broadcast %cst_565 : f32 to vector<8x128xf32>
    %1390 = arith.addf %1389, %1388 : vector<8x128xf32>
    %1391 = arith.divf %1389, %1390 : vector<8x128xf32>
    %1392 = arith.select %13, %1386, %1391 : vector<8x128xi1>, vector<8x128xf32>
    %c96_i32_566 = arith.constant 96 : i32
    %1393 = tpu.dynamic_rotate %1392 by %c96_i32_566 dim 1 : vector<8x128xf32>, i32 -> vector<8x128xf32>
    %c64_i32_567 = arith.constant 64 : i32
    %1394 = tpu.dynamic_rotate %1392 by %c64_i32_567 dim 1 : vector<8x128xf32>, i32 -> vector<8x128xf32>
    %c32_i32_568 = arith.constant 32 : i32
    %1395 = tpu.dynamic_rotate %1392 by %c32_i32_568 dim 1 : vector<8x128xf32>, i32 -> vector<8x128xf32>
    %1396 = arith.mulf %1393, %1351 : vector<8x128xf32>
    %1397 = arith.mulf %1392, %1394 : vector<8x128xf32>
    %1398 = arith.addf %1396, %1397 : vector<8x128xf32>
    %1399 = math.tanh %1398 : vector<8x128xf32>
    %1400 = arith.mulf %1395, %1399 : vector<8x128xf32>
    %1401 = arith.truncf %1400 : vector<8x128xf32> to vector<8x128xbf16>
    %c0_569 = arith.constant 0 : index
    %c0_570 = arith.constant 0 : index
    %1402 = vector.load %arg4[%c0_569, %c0_570] : memref<128x128xbf16, #tpu.memory_space<vmem>>, vector<128x128xbf16>
    %cst_571 = arith.constant dense<0.000000e+00> : vector<8x128xf32>
    %1403 = tpu.matmul %1401, %1402, %cst_571 {dimension_numbers = #tpu.dot_dimension_numbers<[1], [0], [0], [1], [0, 0, 1, 1], [], []>} : vector<8x128xbf16>, vector<128x128xbf16>, vector<8x128xf32> -> vector<8x128xf32>
    %1404 = arith.truncf %1377 : vector<8x128xf32> to vector<8x128xbf16>
    %c0_572 = arith.constant 0 : index
    %c0_573 = arith.constant 0 : index
    %1405 = vector.load %arg5[%c0_572, %c0_573] : memref<128x128xbf16, #tpu.memory_space<vmem>>, vector<128x128xbf16>
    %cst_574 = arith.constant dense<0.000000e+00> : vector<8x128xf32>
    %1406 = tpu.matmul %1404, %1405, %cst_574 {dimension_numbers = #tpu.dot_dimension_numbers<[1], [0], [0], [1], [0, 0, 1, 1], [], []>} : vector<8x128xbf16>, vector<128x128xbf16>, vector<8x128xf32> -> vector<8x128xf32>
    %1407 = arith.addf %1403, %1406 : vector<8x128xf32>
    %1408 = vector.broadcast %7 : vector<1x128xf32> to vector<8x128xf32>
    %1409 = arith.addf %1407, %1408 : vector<8x128xf32>
    %1410 = math.tanh %1409 : vector<8x128xf32>
    %1411 = arith.negf %1409 : vector<8x128xf32>
    %1412 = math.exp %1411 : vector<8x128xf32>
    %cst_575 = arith.constant 1.000000e+00 : f32
    %1413 = vector.broadcast %cst_575 : f32 to vector<8x128xf32>
    %1414 = arith.addf %1413, %1412 : vector<8x128xf32>
    %1415 = arith.divf %1413, %1414 : vector<8x128xf32>
    %1416 = arith.select %13, %1410, %1415 : vector<8x128xi1>, vector<8x128xf32>
    %c96_i32_576 = arith.constant 96 : i32
    %1417 = tpu.dynamic_rotate %1416 by %c96_i32_576 dim 1 : vector<8x128xf32>, i32 -> vector<8x128xf32>
    %c64_i32_577 = arith.constant 64 : i32
    %1418 = tpu.dynamic_rotate %1416 by %c64_i32_577 dim 1 : vector<8x128xf32>, i32 -> vector<8x128xf32>
    %c32_i32_578 = arith.constant 32 : i32
    %1419 = tpu.dynamic_rotate %1416 by %c32_i32_578 dim 1 : vector<8x128xf32>, i32 -> vector<8x128xf32>
    %1420 = arith.mulf %1417, %1375 : vector<8x128xf32>
    %1421 = arith.mulf %1416, %1418 : vector<8x128xf32>
    %1422 = arith.addf %1420, %1421 : vector<8x128xf32>
    %1423 = math.tanh %1422 : vector<8x128xf32>
    %1424 = arith.mulf %1419, %1423 : vector<8x128xf32>
    %c30_i32 = arith.constant 30 : i32
    %1425 = arith.truncf %1424 : vector<8x128xf32> to vector<8x128xbf16>
    %c0_579 = arith.constant 0 : index
    %c0_580 = arith.constant 0 : index
    %1426 = vector.load %arg7[%c0_579, %c0_580] : memref<128x128xbf16, #tpu.memory_space<vmem>>, vector<128x128xbf16>
    %cst_581 = arith.constant dense<0.000000e+00> : vector<8x128xf32>
    %1427 = tpu.matmul %1425, %1426, %cst_581 {dimension_numbers = #tpu.dot_dimension_numbers<[1], [0], [0], [1], [0, 0, 1, 1], [], []>} : vector<8x128xbf16>, vector<128x128xbf16>, vector<8x128xf32> -> vector<8x128xf32>
    %c0_582 = arith.constant 0 : index
    %c0_583 = arith.constant 0 : index
    %1428 = vector.load %arg8[%c0_582, %c0_583] : memref<1x128xf32, #tpu.memory_space<vmem>>, vector<1x128xf32>
    %1429 = vector.broadcast %1428 : vector<1x128xf32> to vector<8x128xf32>
    %1430 = arith.addf %1427, %1429 : vector<8x128xf32>
    %1431 = arith.negf %1430 : vector<8x128xf32>
    %1432 = math.exp %1431 : vector<8x128xf32>
    %cst_584 = arith.constant 1.000000e+00 : f32
    %1433 = vector.broadcast %cst_584 : f32 to vector<8x128xf32>
    %1434 = arith.addf %1433, %1432 : vector<8x128xf32>
    %1435 = arith.divf %1433, %1434 : vector<8x128xf32>
    %1436 = arith.mulf %1430, %1435 : vector<8x128xf32>
    %1437 = arith.truncf %1436 : vector<8x128xf32> to vector<8x128xbf16>
    %c0_585 = arith.constant 0 : index
    %c0_586 = arith.constant 0 : index
    %1438 = vector.load %arg9[%c0_585, %c0_586] : memref<128x128xbf16, #tpu.memory_space<vmem>>, vector<128x128xbf16>
    %cst_587 = arith.constant dense<0.000000e+00> : vector<8x128xf32>
    %1439 = tpu.matmul %1437, %1438, %cst_587 {dimension_numbers = #tpu.dot_dimension_numbers<[1], [0], [0], [1], [0, 0, 1, 1], [], []>} : vector<8x128xbf16>, vector<128x128xbf16>, vector<8x128xf32> -> vector<8x128xf32>
    %c0_588 = arith.constant 0 : index
    %c0_589 = arith.constant 0 : index
    %1440 = vector.load %arg10[%c0_588, %c0_589] : memref<1x128xf32, #tpu.memory_space<vmem>>, vector<1x128xf32>
    %1441 = vector.broadcast %1440 : vector<1x128xf32> to vector<8x128xf32>
    %1442 = arith.addf %1439, %1441 : vector<8x128xf32>
    %1443 = arith.negf %1442 : vector<8x128xf32>
    %1444 = math.exp %1443 : vector<8x128xf32>
    %cst_590 = arith.constant 1.000000e+00 : f32
    %1445 = vector.broadcast %cst_590 : f32 to vector<8x128xf32>
    %1446 = arith.addf %1445, %1444 : vector<8x128xf32>
    %1447 = arith.divf %1445, %1446 : vector<8x128xf32>
    %1448 = arith.mulf %1442, %1447 : vector<8x128xf32>
    %1449 = arith.truncf %1448 : vector<8x128xf32> to vector<8x128xbf16>
    %c0_591 = arith.constant 0 : index
    %c0_592 = arith.constant 0 : index
    %1450 = vector.load %arg11[%c0_591, %c0_592] : memref<128x2xbf16, #tpu.memory_space<vmem>>, vector<128x2xbf16>
    %cst_593 = arith.constant dense<0.000000e+00> : vector<8x2xf32>
    %1451 = tpu.matmul %1449, %1450, %cst_593 {dimension_numbers = #tpu.dot_dimension_numbers<[1], [0], [0], [1], [0, 0, 1, 1], [], []>} : vector<8x128xbf16>, vector<128x2xbf16>, vector<8x2xf32> -> vector<8x2xf32>
    %c0_594 = arith.constant 0 : index
    %c0_595 = arith.constant 0 : index
    %1452 = vector.load %arg12[%c0_594, %c0_595] : memref<1x2xf32, #tpu.memory_space<vmem>>, vector<1x2xf32>
    %1453 = vector.broadcast %1452 : vector<1x2xf32> to vector<8x2xf32>
    %1454 = arith.addf %1451, %1453 : vector<8x2xf32>
    %cst_596 = arith.constant dense<0xFF800000> : vector<8xf32>
    %1455 = vector.multi_reduction <maximumf>, %1454, %cst_596 [1] : vector<8x2xf32> to vector<8xf32>
    %1456 = vector.shape_cast %1455 : vector<8xf32> to vector<8x1xf32>
    %1457 = vector.broadcast %1456 : vector<8x1xf32> to vector<8x2xf32>
    %1458 = arith.subf %1454, %1457 : vector<8x2xf32>
    %1459 = math.exp %1458 : vector<8x2xf32>
    %cst_597 = arith.constant dense<0.000000e+00> : vector<8xf32>
    %1460 = vector.multi_reduction <add>, %1459, %cst_597 [1] : vector<8x2xf32> to vector<8xf32>
    %1461 = vector.shape_cast %1460 : vector<8xf32> to vector<8x1xf32>
    %1462 = tpu.reciprocal %1461 {approx = true} : vector<8x1xf32> -> vector<8x1xf32>
    %1463 = vector.broadcast %1462 : vector<8x1xf32> to vector<8x2xf32>
    %1464 = arith.mulf %1459, %1463 : vector<8x2xf32>
    %1465 = vector.extract_strided_slice %1464 {offsets = [0, 0], sizes = [2, 2], strides = [1, 1]} : vector<8x2xf32> to vector<2x2xf32>
    %c0_598 = arith.constant 0 : index
    %c0_599 = arith.constant 0 : index
    %1466 = vector.load %arg13[%c0_598, %c0_599] : memref<2x2xf32, #tpu.memory_space<vmem>>, vector<2x2xf32>
    tpu.vector_store %arg13[%c0_598, %c0_599], %1465 {strides = array<i32>} : memref<2x2xf32, #tpu.memory_space<vmem>>, vector<2x2xf32>,
    return
  }
}

</mosaic_0001>

<llo_original>
// kernel: model_forward.1
$region0: #{model_forward.1}
  #allocation0 [shape = 'u32[]', space=smem, size = 0x4, offset = 0x4, fixed_abs, tag = 'smem constant byte address 0x4 - core index']
  #allocation1 [shape = 'u32[72,128]{1,0:T(1,128)}', space=vmem, size = 0x9000, scoped, tag = 'internal scratch']
  #allocation2 [shape = 'f32[240,128]{1,0:T(8,128)}', space=vmem, size = 0x1e000, scoped, tag = 'scratch operand']
  %s0 = inlined_call_operand.vmem [shape: bf16[240,128], index: 0, kind: input, shape index: {}]
  %s1 = inlined_call_operand.vmem [shape: bf16[128,128], index: 1, kind: input, shape index: {}]
  %s2 = inlined_call_operand.vmem [shape: bf16[128,128], index: 2, kind: input, shape index: {}]
  %s3 = inlined_call_operand.vmem [shape: f32[1,128], index: 3, kind: input, shape index: {}]
  %s4 = inlined_call_operand.vmem [shape: bf16[128,128], index: 4, kind: input, shape index: {}]
  %s5 = inlined_call_operand.vmem [shape: bf16[128,128], index: 5, kind: input, shape index: {}]
  %s6 = inlined_call_operand.vmem [shape: f32[1,128], index: 6, kind: input, shape index: {}]
  %s7 = inlined_call_operand.hbm [shape: bf16[128,128], index: 7, kind: input, shape index: {}]
  %s8 = inlined_call_operand.vmem [shape: f32[1,128], index: 8, kind: input, shape index: {}]
  %s9 = inlined_call_operand.hbm [shape: bf16[128,128], index: 9, kind: input, shape index: {}]
  %s10 = inlined_call_operand.vmem [shape: f32[1,128], index: 10, kind: input, shape index: {}]
  %s11 = inlined_call_operand.vmem [shape: bf16[128,2], index: 11, kind: input, shape index: {}]
  %s12 = inlined_call_operand.vmem [shape: f32[1,2], index: 12, kind: input, shape index: {}]
  %s13 = inlined_call_operand.hbm [shape: f32[2,2], index: 13, kind: output, shape index: {}]
  %s14 = sld [smem:[#allocation0]]
  $region70: #{model_forward.1} parent=0
    _
  %s16 = ssub.s32 1, %s14
  %s17 = scalar_select 0, %s16, %s14
  $region1: #{model_forward.1} parent=0
    #allocation3 [shape = 'u8[32768]{0}', space=vmem, size = 0x8000, scoped, tag = 'input window, operand 7, single buffered']
    #allocation4 [shape = 's32[1]{0}', space=sflag, size = 0x4, scoped, tag = 'scoped memory for model_forward.1']
    #allocation5 [shape = 's32[1]{0}', space=sflag, size = 0x4, scoped, tag = 'scoped memory for model_forward.1']
    #allocation6 [shape = 'u8[32768]{0}', space=vmem, size = 0x8000, scoped, tag = 'input window, operand 9, single buffered']
    #allocation7 [shape = 's32[1]{0}', space=sflag, size = 0x4, scoped, tag = 'scoped memory for model_forward.1']
    #allocation8 [shape = 'u8[1024]{0}', space=vmem, size = 0x400, scoped, tag = 'output window, operand 0, single buffered']
    %18 = vsyncpa [#allocation4], 0
    %19 = vsyncpa [#allocation7], 0
    %20 = vsyncpa [#allocation5], 0
    // Predicated region
    $region2: #{model_forward.1} parent=1 // pred_check
      _
    $region3: #{model_forward.1} parent=1 // pred_check_branch
      %22 = sbr.rel (0) target = $region5
    $region4: #{model_forward.1} parent=1 // pred_region
      _
    $region5: #{model_forward.1} parent=1 // pred_fallthru
      _
    // Predicated region
    $region6: #{model_forward.1} parent=1 // pred_check
      _
    $region7: #{model_forward.1} parent=1 // pred_check_branch
      %24 = sbr.rel (0) target = $region9
    $region8: #{model_forward.1} parent=1 // pred_region
      _
    $region9: #{model_forward.1} parent=1 // pred_fallthru
      _
    // Predicated region
    $region10: #{model_forward.1} parent=1 // pred_check
      _
    $region11: #{model_forward.1} parent=1 // pred_check_branch
      %26 = sbr.rel (0) target = $region13
    $region12: #{model_forward.1} parent=1 // pred_region
      _
    $region13: #{model_forward.1} parent=1 // pred_fallthru
      _
    // Predicated region
    $region14: #{model_forward.1} parent=1 // pred_check
      _
    $region15: #{model_forward.1} parent=1 // pred_check_branch
      %28 = sbr.rel (0) target = $region17
    $region16: #{model_forward.1} parent=1 // pred_region
      _
    $region17: #{model_forward.1} parent=1 // pred_fallthru
      _
    // Predicated region
    $region18: #{model_forward.1} parent=1 // pred_check
      _
    $region19: #{model_forward.1} parent=1 // pred_check_branch
      %30 = sbr.rel (0) target = $region21
    $region20: #{model_forward.1} parent=1 // pred_region
      _
    $region21: #{model_forward.1} parent=1 // pred_fallthru
      _
    // Predicated region
    $region22: #{model_forward.1} parent=1 // pred_check
      _
    $region23: #{model_forward.1} parent=1 // pred_check_branch
      %32 = sbr.rel (0) target = $region25
    $region24: #{model_forward.1} parent=1 // pred_region
      _
    $region25: #{model_forward.1} parent=1 // pred_fallthru
      _
    // Predicated region
    $region26: #{model_forward.1} parent=1 // pred_check
      _
    $region27: #{model_forward.1} parent=1 // pred_check_branch
      %34 = sbr.rel (0) target = $region29
    $region28: #{model_forward.1} parent=1 // pred_region
      _
    $region29: #{model_forward.1} parent=1 // pred_fallthru
      _
    // Predicated region
    $region30: #{model_forward.1} parent=1 // pred_check
      _
    $region31: #{model_forward.1} parent=1 // pred_check_branch
      %36 = sbr.rel (0) target = $region33
    $region32: #{model_forward.1} parent=1 // pred_region
      %38 = vsyncadd [#allocation4], 0
      %s39 = sshll.u32 %s7, 4
      %s40 = int_to_ptr.hbm [resolvable:$true] %s39
      %s41 = sshll.u32 [#allocation3], 4
      %s42 = int_to_ptr.vmem [resolvable:$true] %s41
      %47 = dma.hbm_to_vmem [thread:$0]  %s40, 1024, %s42, [#allocation4], 64, 64, 4
    $region33: #{model_forward.1} parent=1 // pred_fallthru
      _
    // Predicated region
    $region34: #{model_forward.1} parent=1 // pred_check
      _
    $region35: #{model_forward.1} parent=1 // pred_check_branch
      %49 = sbr.rel (0) target = $region37
    $region36: #{model_forward.1} parent=1 // pred_region
      _
    $region37: #{model_forward.1} parent=1 // pred_fallthru
      _
    // Predicated region
    $region38: #{model_forward.1} parent=1 // pred_check
      _
    $region39: #{model_forward.1} parent=1 // pred_check_branch
      %51 = sbr.rel (0) target = $region41
    $region40: #{model_forward.1} parent=1 // pred_region
      %53 = vsyncadd [#allocation7], 0
      %s54 = sshll.u32 %s9, 4
      %s55 = int_to_ptr.hbm [resolvable:$true] %s54
      %s56 = sshll.u32 [#allocation6], 4
      %s57 = int_to_ptr.vmem [resolvable:$true] %s56
      %62 = dma.hbm_to_vmem [thread:$0]  %s55, 1024, %s57, [#allocation7], 64, 64, 4
    $region41: #{model_forward.1} parent=1 // pred_fallthru
      _
    // Predicated region
    $region42: #{model_forward.1} parent=1 // pred_check
      _
    $region43: #{model_forward.1} parent=1 // pred_check_branch
      %64 = sbr.rel (0) target = $region45
    $region44: #{model_forward.1} parent=1 // pred_region
      _
    $region45: #{model_forward.1} parent=1 // pred_fallthru
      _
    // Predicated region
    $region46: #{model_forward.1} parent=1 // pred_check
      _
    $region47: #{model_forward.1} parent=1 // pred_check_branch
      %66 = sbr.rel (0) target = $region49
    $region48: #{model_forward.1} parent=1 // pred_region
      _
    $region49: #{model_forward.1} parent=1 // pred_fallthru
      _
    // Predicated region
    $region50: #{model_forward.1} parent=1 // pred_check
      _
    $region51: #{model_forward.1} parent=1 // pred_check_branch
      %68 = sbr.rel (0) target = $region53
    $region52: #{model_forward.1} parent=1 // pred_region
      _
    $region53: #{model_forward.1} parent=1 // pred_fallthru
      _
    // Predicated region
    $region54: #{model_forward.1} parent=1 // pred_check
      _
    $region55: #{model_forward.1} parent=1 // pred_check_branch
      %70 = sbr.rel (0) target = $region57
    $region56: #{model_forward.1} parent=1 // pred_region
      %72 = dma.done [#allocation4], 1024
    $region57: #{model_forward.1} parent=1 // pred_fallthru
      _
    // Predicated region
    $region58: #{model_forward.1} parent=1 // pred_check
      _
    $region59: #{model_forward.1} parent=1 // pred_check_branch
      %74 = sbr.rel (0) target = $region61
    $region60: #{model_forward.1} parent=1 // pred_region
      %76 = dma.done [#allocation7], 1024
    $region61: #{model_forward.1} parent=1 // pred_fallthru
      _
    %v78 = vld [vmem:[%s0] sm:$0xf]
    %v79 = vld [vmem:[%s0 + $0x4] sm:$0xf]
    %v80 = vld [vmem:[%s0 + $0x8] sm:$0xf]
    %v81 = vld [vmem:[%s0 + $0xc] sm:$0xf]
    %v82 = vld [vmem:[%s0 + $0x10] sm:$0xf]
    %v83 = vld [vmem:[%s0 + $0x14] sm:$0xf]
    %v84 = vld [vmem:[%s0 + $0x18] sm:$0xf]
    %v85 = vld [vmem:[%s0 + $0x1c] sm:$0xf]
    %v86 = vld [vmem:[%s0 + $0x20] sm:$0xf]
    %v87 = vld [vmem:[%s0 + $0x24] sm:$0xf]
    %v88 = vld [vmem:[%s0 + $0x28] sm:$0xf]
    %v89 = vld [vmem:[%s0 + $0x2c] sm:$0xf]
    %v90 = vld [vmem:[%s0 + $0x30] sm:$0xf]
    %v91 = vld [vmem:[%s0 + $0x34] sm:$0xf]
    %v92 = vld [vmem:[%s0 + $0x38] sm:$0xf]
    %v93 = vld [vmem:[%s0 + $0x3c] sm:$0xf]
    %v94 = vld [vmem:[%s0 + $0x40] sm:$0xf]
    %v95 = vld [vmem:[%s0 + $0x44] sm:$0xf]
    %v96 = vld [vmem:[%s0 + $0x48] sm:$0xf]
    %v97 = vld [vmem:[%s0 + $0x4c] sm:$0xf]
    %v98 = vld [vmem:[%s0 + $0x50] sm:$0xf]
    %v99 = vld [vmem:[%s0 + $0x54] sm:$0xf]
    %v100 = vld [vmem:[%s0 + $0x58] sm:$0xf]
    %v101 = vld [vmem:[%s0 + $0x5c] sm:$0xf]
    %v102 = vld [vmem:[%s0 + $0x60] sm:$0xf]
    %v103 = vld [vmem:[%s0 + $0x64] sm:$0xf]
    %v104 = vld [vmem:[%s0 + $0x68] sm:$0xf]
    %v105 = vld [vmem:[%s0 + $0x6c] sm:$0xf]
    %v106 = vld [vmem:[%s0 + $0x70] sm:$0xf]
    %v107 = vld [vmem:[%s0 + $0x74] sm:$0xf]
    %v108 = vld [vmem:[%s1] sm:$0xf]
    %v109 = vld [vmem:[%s1 + $0x4] sm:$0xf]
    %v110 = vld [vmem:[%s1 + $0x8] sm:$0xf]
    %v111 = vld [vmem:[%s1 + $0xc] sm:$0xf]
    %v112 = vld [vmem:[%s1 + $0x10] sm:$0xf]
    %v113 = vld [vmem:[%s1 + $0x14] sm:$0xf]
    %v114 = vld [vmem:[%s1 + $0x18] sm:$0xf]
    %v115 = vld [vmem:[%s1 + $0x1c] sm:$0xf]
    %v116 = vld [vmem:[%s1 + $0x20] sm:$0xf]
    %v117 = vld [vmem:[%s1 + $0x24] sm:$0xf]
    %v118 = vld [vmem:[%s1 + $0x28] sm:$0xf]
    %v119 = vld [vmem:[%s1 + $0x2c] sm:$0xf]
    %v120 = vld [vmem:[%s1 + $0x30] sm:$0xf]
    %v121 = vld [vmem:[%s1 + $0x34] sm:$0xf]
    %v122 = vld [vmem:[%s1 + $0x38] sm:$0xf]
    %v123 = vld [vmem:[%s1 + $0x3c] sm:$0xf]
    %v124 = vld [vmem:[%s3] sm:$0x1]
    %v126 = vperm.slane %v124, 0
    %v158 = vunpack.c.l.b16 %v78
    %v159 = vunpack.c.l.b16 %v79
    %v160 = vunpack.c.l.b16 %v80
    %v161 = vunpack.c.l.b16 %v81
    %v162 = vunpack.c.l.b16 %v82
    %v163 = vunpack.c.l.b16 %v83
    %v164 = vunpack.c.l.b16 %v84
    %v165 = vunpack.c.l.b16 %v85
    %v166 = vunpack.c.l.b16 %v86
    %v167 = vunpack.c.l.b16 %v87
    %v168 = vunpack.c.l.b16 %v88
    %v169 = vunpack.c.l.b16 %v89
    %v170 = vunpack.c.l.b16 %v90
    %v171 = vunpack.c.l.b16 %v91
    %v172 = vunpack.c.l.b16 %v92
    %v173 = vunpack.c.l.b16 %v93
    %v174 = vunpack.c.l.b16 %v94
    %v175 = vunpack.c.l.b16 %v95
    %v176 = vunpack.c.l.b16 %v96
    %v177 = vunpack.c.l.b16 %v97
    %v178 = vunpack.c.l.b16 %v98
    %v179 = vunpack.c.l.b16 %v99
    %v180 = vunpack.c.l.b16 %v100
    %v181 = vunpack.c.l.b16 %v101
    %v182 = vunpack.c.l.b16 %v102
    %v183 = vunpack.c.l.b16 %v103
    %v184 = vunpack.c.l.b16 %v104
    %v185 = vunpack.c.l.b16 %v105
    %v186 = vunpack.c.l.b16 %v106
    %v187 = vunpack.c.l.b16 %v107
    %v188 = vpack.c.b16 %v159, %v158
    %v189 = vpack.c.b16 %v161, %v160
    %v190 = vpack.c.b16 %v163, %v162
    %v191 = vpack.c.b16 %v165, %v164
    %v192 = vpack.c.b16 %v167, %v166
    %v193 = vpack.c.b16 %v169, %v168
    %v194 = vpack.c.b16 %v171, %v170
    %v195 = vpack.c.b16 %v173, %v172
    %v196 = vpack.c.b16 %v175, %v174
    %v197 = vpack.c.b16 %v177, %v176
    %v198 = vpack.c.b16 %v179, %v178
    %v199 = vpack.c.b16 %v181, %v180
    %v200 = vpack.c.b16 %v183, %v182
    %v201 = vpack.c.b16 %v185, %v184
    %v202 = vpack.c.b16 %v187, %v186
    %v234 = vunpack.c.l.b16 %v108
    %v235 = vunpack.c.l.b16 %v109
    %v236 = vunpack.c.l.b16 %v110
    %v237 = vunpack.c.l.b16 %v111
    %v238 = vunpack.c.l.b16 %v112
    %v239 = vunpack.c.l.b16 %v113
    %v240 = vunpack.c.l.b16 %v114
    %v241 = vunpack.c.l.b16 %v115
    %v242 = vunpack.c.l.b16 %v116
    %v243 = vunpack.c.l.b16 %v117
    %v244 = vunpack.c.l.b16 %v118
    %v245 = vunpack.c.l.b16 %v119
    %v246 = vunpack.c.l.b16 %v120
    %v247 = vunpack.c.l.b16 %v121
    %v248 = vunpack.c.l.b16 %v122
    %v249 = vunpack.c.l.b16 %v123
    %v250 = vpack.c.b16 %v235, %v234
    %v251 = vpack.c.b16 %v237, %v236
    %v252 = vpack.c.b16 %v239, %v238
    %v253 = vpack.c.b16 %v241, %v240
    %v254 = vpack.c.b16 %v243, %v242
    %v255 = vpack.c.b16 %v245, %v244
    %v256 = vpack.c.b16 %v247, %v246
    %v257 = vpack.c.b16 %v249, %v248
    %266 = vmatpush.bf16.msra.mxu0 %v257
    %267 = vmatpush.bf16.msra.mxu0 %v256
    %268 = vmatpush.bf16.msra.mxu0 %v255
    %269 = vmatpush.bf16.msra.mxu0 %v254
    %270 = vmatpush.bf16.msra.mxu0 %v253
    %271 = vmatpush.bf16.msra.mxu0 %v252
    %272 = vmatpush.bf16.msra.mxu0 %v251
    %273 = vmatpush.bf16.msra.mxu0 %v250
    %274 = vmatmul.bf16.gmra.mxu0 %v188
    %v275 = vpop.f32.mrf.mxu0
    %v276 = vadd.f32 %v126, %v275
    %v277 = vpop.f32.mrf.mxu0
    %v278 = vadd.f32 %v126, %v277
    %279 = vmatmul.bf16.gmra.mxu0 %v189
    %v280 = vpop.f32.mrf.mxu0
    %v281 = vadd.f32 %v126, %v280
    %v282 = vpop.f32.mrf.mxu0
    %v283 = vadd.f32 %v126, %v282
    %284 = vmatmul.bf16.gmra.mxu0 %v190
    %v285 = vpop.f32.mrf.mxu0
    %v286 = vadd.f32 %v126, %v285
    %v287 = vpop.f32.mrf.mxu0
    %v288 = vadd.f32 %v126, %v287
    %289 = vmatmul.bf16.gmra.mxu0 %v191
    %v290 = vpop.f32.mrf.mxu0
    %v291 = vadd.f32 %v126, %v290
    %v292 = vpop.f32.mrf.mxu0
    %v293 = vadd.f32 %v126, %v292
    %294 = vmatmul.bf16.gmra.mxu0 %v192
    %v295 = vpop.f32.mrf.mxu0
    %v296 = vadd.f32 %v126, %v295
    %v297 = vpop.f32.mrf.mxu0
    %v298 = vadd.f32 %v126, %v297
    %299 = vmatmul.bf16.gmra.mxu0 %v193
    %v300 = vpop.f32.mrf.mxu0
    %v301 = vadd.f32 %v126, %v300
    %v302 = vpop.f32.mrf.mxu0
    %v303 = vadd.f32 %v126, %v302
    %304 = vmatmul.bf16.gmra.mxu0 %v194
    %v305 = vpop.f32.mrf.mxu0
    %v306 = vadd.f32 %v126, %v305
    %v307 = vpop.f32.mrf.mxu0
    %v308 = vadd.f32 %v126, %v307
    %309 = vmatmul.bf16.gmra.mxu0 %v195
    %v310 = vpop.f32.mrf.mxu0
    %v311 = vadd.f32 %v126, %v310
    %v312 = vpop.f32.mrf.mxu0
    %v313 = vadd.f32 %v126, %v312
    %314 = vmatmul.bf16.gmra.mxu0 %v196
    %v315 = vpop.f32.mrf.mxu0
    %v316 = vadd.f32 %v126, %v315
    %v317 = vpop.f32.mrf.mxu0
    %v318 = vadd.f32 %v126, %v317
    %319 = vmatmul.bf16.gmra.mxu0 %v197
    %v320 = vpop.f32.mrf.mxu0
    %v321 = vadd.f32 %v126, %v320
    %v322 = vpop.f32.mrf.mxu0
    %v323 = vadd.f32 %v126, %v322
    %324 = vmatmul.bf16.gmra.mxu0 %v198
    %v325 = vpop.f32.mrf.mxu0
    %v326 = vadd.f32 %v126, %v325
    %v327 = vpop.f32.mrf.mxu0
    %v328 = vadd.f32 %v126, %v327
    %329 = vmatmul.bf16.gmra.mxu0 %v199
    %v330 = vpop.f32.mrf.mxu0
    %v331 = vadd.f32 %v126, %v330
    %v332 = vpop.f32.mrf.mxu0
    %v333 = vadd.f32 %v126, %v332
    %334 = vmatmul.bf16.gmra.mxu0 %v200
    %v335 = vpop.f32.mrf.mxu0
    %v336 = vadd.f32 %v126, %v335
    %v337 = vpop.f32.mrf.mxu0
    %v338 = vadd.f32 %v126, %v337
    %339 = vmatmul.bf16.gmra.mxu0 %v201
    %v340 = vpop.f32.mrf.mxu0
    %v341 = vadd.f32 %v126, %v340
    %v342 = vpop.f32.mrf.mxu0
    %v343 = vadd.f32 %v126, %v342
    %344 = vmatmul.bf16.gmra.mxu0 %v202
    %v345 = vpop.f32.mrf.mxu0
    %v346 = vadd.f32 %v126, %v345
    %v347 = vpop.f32.mrf.mxu0
    %v348 = vadd.f32 %v126, %v347
    %349 = vdwg.mxu0
    %350 = vst [vmem:[#allocation2] sm:$0xff] %v276
    %351 = vst [vmem:[#allocation2 + $0x8] sm:$0xff] %v278
    %352 = vst [vmem:[#allocation2 + $0x10] sm:$0xff] %v281
    %353 = vst [vmem:[#allocation2 + $0x18] sm:$0xff] %v283
    %354 = vst [vmem:[#allocation2 + $0x20] sm:$0xff] %v286
    %355 = vst [vmem:[#allocation2 + $0x28] sm:$0xff] %v288
    %356 = vst [vmem:[#allocation2 + $0x30] sm:$0xff] %v291
    %357 = vst [vmem:[#allocation2 + $0x38] sm:$0xff] %v293
    %358 = vst [vmem:[#allocation2 + $0x40] sm:$0xff] %v296
    %359 = vst [vmem:[#allocation2 + $0x48] sm:$0xff] %v298
    %360 = vst [vmem:[#allocation2 + $0x50] sm:$0xff] %v301
    %361 = vst [vmem:[#allocation2 + $0x58] sm:$0xff] %v303
    %362 = vst [vmem:[#allocation2 + $0x60] sm:$0xff] %v306
    %363 = vst [vmem:[#allocation2 + $0x68] sm:$0xff] %v308
    %364 = vst [vmem:[#allocation2 + $0x70] sm:$0xff] %v311
    %365 = vst [vmem:[#allocation2 + $0x78] sm:$0xff] %v313
    %366 = vst [vmem:[#allocation2 + $0x80] sm:$0xff] %v316
    %367 = vst [vmem:[#allocation2 + $0x88] sm:$0xff] %v318
    %368 = vst [vmem:[#allocation2 + $0x90] sm:$0xff] %v321
    %369 = vst [vmem:[#allocation2 + $0x98] sm:$0xff] %v323
    %370 = vst [vmem:[#allocation2 + $0xa0] sm:$0xff] %v326
    %371 = vst [vmem:[#allocation2 + $0xa8] sm:$0xff] %v328
    %372 = vst [vmem:[#allocation2 + $0xb0] sm:$0xff] %v331
    %373 = vst [vmem:[#allocation2 + $0xb8] sm:$0xff] %v333
    %374 = vst [vmem:[#allocation2 + $0xc0] sm:$0xff] %v336
    %375 = vst [vmem:[#allocation2 + $0xc8] sm:$0xff] %v338
    %376 = vst [vmem:[#allocation2 + $0xd0] sm:$0xff] %v341
    %377 = vst [vmem:[#allocation2 + $0xd8] sm:$0xff] %v343
    %378 = vst [vmem:[#allocation2 + $0xe0] sm:$0xff] %v346
    %379 = vst [vmem:[#allocation2 + $0xe8] sm:$0xff] %v348
    %v380 = vld [vmem:[%s6] sm:$0x1]
    %v381 = vlaneseq
    %v382 = vand.u32 %v381, 127
    %vm383 = vcmp.ge.s32.totalorder %v382, 64
    %vm384 = vcmp.lt.s32.totalorder %v382, 96
    %vm385 = vmand %vm383, %vm384
    %v386 = vld [vmem:[#allocation2] sm:$0xff]
    %v387 = vld [vmem:[%s2] sm:$0xf]
    %v388 = vld [vmem:[%s2 + $0x4] sm:$0xf]
    %v389 = vld [vmem:[%s2 + $0x8] sm:$0xf]
    %v390 = vld [vmem:[%s2 + $0xc] sm:$0xf]
    %v391 = vld [vmem:[%s2 + $0x10] sm:$0xf]
    %v392 = vld [vmem:[%s2 + $0x14] sm:$0xf]
    %v393 = vld [vmem:[%s2 + $0x18] sm:$0xf]
    %v394 = vld [vmem:[%s2 + $0x1c] sm:$0xf]
    %v395 = vld [vmem:[%s2 + $0x20] sm:$0xf]
    %v396 = vld [vmem:[%s2 + $0x24] sm:$0xf]
    %v397 = vld [vmem:[%s2 + $0x28] sm:$0xf]
    %v398 = vld [vmem:[%s2 + $0x2c] sm:$0xf]
    %v399 = vld [vmem:[%s2 + $0x30] sm:$0xf]
    %v400 = vld [vmem:[%s2 + $0x34] sm:$0xf]
    %v401 = vld [vmem:[%s2 + $0x38] sm:$0xf]
    %v402 = vld [vmem:[%s2 + $0x3c] sm:$0xf]
    %v419 = vunpack.c.l.b16 %v387
    %v420 = vunpack.c.l.b16 %v388
    %v421 = vunpack.c.l.b16 %v389
    %v422 = vunpack.c.l.b16 %v390
    %v423 = vunpack.c.l.b16 %v391
    %v424 = vunpack.c.l.b16 %v392
    %v425 = vunpack.c.l.b16 %v393
    %v426 = vunpack.c.l.b16 %v394
    %v427 = vunpack.c.l.b16 %v395
    %v428 = vunpack.c.l.b16 %v396
    %v429 = vunpack.c.l.b16 %v397
    %v430 = vunpack.c.l.b16 %v398
    %v431 = vunpack.c.l.b16 %v399
    %v432 = vunpack.c.l.b16 %v400
    %v433 = vunpack.c.l.b16 %v401
    %v434 = vunpack.c.l.b16 %v402
    %v435 = vpack.c.b16 %v420, %v419
    %v436 = vpack.c.b16 %v422, %v421
    %v437 = vpack.c.b16 %v424, %v423
    %v438 = vpack.c.b16 %v426, %v425
    %v439 = vpack.c.b16 %v428, %v427
    %v440 = vpack.c.b16 %v430, %v429
    %v441 = vpack.c.b16 %v432, %v431
    %v442 = vpack.c.b16 %v434, %v433
    %451 = vmatpush.bf16.msra.mxu0 %v442
    %452 = vmatpush.bf16.msra.mxu0 %v441
    %453 = vmatpush.bf16.msra.mxu0 %v440
    %454 = vmatpush.bf16.msra.mxu0 %v439
    %455 = vmatpush.bf16.msra.mxu0 %v438
    %456 = vmatpush.bf16.msra.mxu0 %v437
    %457 = vmatpush.bf16.msra.mxu0 %v436
    %458 = vmatpush.bf16.msra.mxu0 %v435
    %459 = vmatmul.bf16.gmra.mxu0 0
    %v460 = vpop.f32.mrf.mxu0
    %v461 = vadd.f32 0.0, %v460
    %v462 = vpop.f32.mrf.mxu0
    %463 = vdwg.mxu0
    %v464 = vadd.f32 %v386, %v461
    %v465 = vtanh.pop %v464
    %v466 = vxor.u32 %v464, 2147483648
    %v467 = vmul.f32 %v466, 1.442695
    %v468 = vpow.pop %v467
    %v469 = vadd.f32 %v468, 1.0
    %v470 = vrcp.pop %v469
    %v471 = vmul.f32 %v469, %v470
    %v472 = vsub.f32 1.0, %v471
    %v473 = vmul.f32 %v470, %v472
    %v474 = vadd.f32 %v470, %v473
    %vm475 = vweird.f32 %v469
    %vm476 = vweird.f32 %v470
    %vm477 = vmor %vm475, %vm476
    %v478 = vsel %vm477, %v470, %v474
    %v479 = vand.u32 2147483647, %v469
    %vm480 = vcmp.eq.f32.partialorder %v479, 8.507059e+37
    %v481 = vand.u32 %v469, 2147483648
    %v482 = vor.u32 1.1754944e-38, %v481
    %v483 = vsel %vm480, %v482, %v478
    %v484 = vmul.f32 1.0, %v483
    %v485 = vsel %vm385, %v465, %v484
    %486 = vrot.lane.b32.xlu0 %v485, 96
    %v487 = vpop.permute.xlu0 %486
    %488 = vrot.lane.b32.xlu0 %v485, 64
    %v489 = vpop.permute.xlu0 %488
    %490 = vrot.lane.b32.xlu0 %v485, 32
    %v491 = vpop.permute.xlu0 %490
    %v492 = vmul.f32 %v487, 0.0
    %v493 = vmul.f32 %v485, %v489
    %v494 = vadd.f32 %v492, %v493
    %v495 = vtanh.pop %v494
    %v496 = vmul.f32 %v491, %v495
    %v497 = vpack.c.bf16 %v496, %v496
    %v498 = vld [vmem:[%s4] sm:$0xf]
    %v499 = vld [vmem:[%s4 + $0x4] sm:$0xf]
    %v500 = vld [vmem:[%s4 + $0x8] sm:$0xf]
    %v501 = vld [vmem:[%s4 + $0xc] sm:$0xf]
    %v502 = vld [vmem:[%s4 + $0x10] sm:$0xf]
    %v503 = vld [vmem:[%s4 + $0x14] sm:$0xf]
    %v504 = vld [vmem:[%s4 + $0x18] sm:$0xf]
    %v505 = vld [vmem:[%s4 + $0x1c] sm:$0xf]
    %v506 = vld [vmem:[%s4 + $0x20] sm:$0xf]
    %v507 = vld [vmem:[%s4 + $0x24] sm:$0xf]
    %v508 = vld [vmem:[%s4 + $0x28] sm:$0xf]
    %v509 = vld [vmem:[%s4 + $0x2c] sm:$0xf]
    %v510 = vld [vmem:[%s4 + $0x30] sm:$0xf]
    %v511 = vld [vmem:[%s4 + $0x34] sm:$0xf]
    %v512 = vld [vmem:[%s4 + $0x38] sm:$0xf]
    %v513 = vld [vmem:[%s4 + $0x3c] sm:$0xf]
    %v514 = vld [vmem:[%s5] sm:$0xf]
    %v515 = vld [vmem:[%s5 + $0x4] sm:$0xf]
    %v516 = vld [vmem:[%s5 + $0x8] sm:$0xf]
    %v517 = vld [vmem:[%s5 + $0xc] sm:$0xf]
    %v518 = vld [vmem:[%s5 + $0x10] sm:$0xf]
    %v519 = vld [vmem:[%s5 + $0x14] sm:$0xf]
    %v520 = vld [vmem:[%s5 + $0x18] sm:$0xf]
    %v521 = vld [vmem:[%s5 + $0x1c] sm:$0xf]
    %v522 = vld [vmem:[%s5 + $0x20] sm:$0xf]
    %v523 = vld [vmem:[%s5 + $0x24] sm:$0xf]
    %v524 = vld [vmem:[%s5 + $0x28] sm:$0xf]
    %v525 = vld [vmem:[%s5 + $0x2c] sm:$0xf]
    %v526 = vld [vmem:[%s5 + $0x30] sm:$0xf]
    %v527 = vld [vmem:[%s5 + $0x34] sm:$0xf]
    %v528 = vld [vmem:[%s5 + $0x38] sm:$0xf]
    %v529 = vld [vmem:[%s5 + $0x3c] sm:$0xf]
    %v546 = vunpack.c.l.b16 %v514
    %v547 = vunpack.c.l.b16 %v515
    %v548 = vunpack.c.l.b16 %v516
    %v549 = vunpack.c.l.b16 %v517
    %v550 = vunpack.c.l.b16 %v518
    %v551 = vunpack.c.l.b16 %v519
    %v552 = vunpack.c.l.b16 %v520
    %v553 = vunpack.c.l.b16 %v521
    %v554 = vunpack.c.l.b16 %v522
    %v555 = vunpack.c.l.b16 %v523
    %v556 = vunpack.c.l.b16 %v524
    %v557 = vunpack.c.l.b16 %v525
    %v558 = vunpack.c.l.b16 %v526
    %v559 = vunpack.c.l.b16 %v527
    %v560 = vunpack.c.l.b16 %v528
    %v561 = vunpack.c.l.b16 %v529
    %v562 = vpack.c.b16 %v547, %v546
    %v563 = vpack.c.b16 %v549, %v548
    %v564 = vpack.c.b16 %v551, %v550
    %v565 = vpack.c.b16 %v553, %v552
    %v566 = vpack.c.b16 %v555, %v554
    %v567 = vpack.c.b16 %v557, %v556
    %v568 = vpack.c.b16 %v559, %v558
    %v569 = vpack.c.b16 %v561, %v560
    %578 = vmatpush.bf16.msra.mxu0 %v569
    %579 = vmatpush.bf16.msra.mxu0 %v568
    %580 = vmatpush.bf16.msra.mxu0 %v567
    %581 = vmatpush.bf16.msra.mxu0 %v566
    %582 = vmatpush.bf16.msra.mxu0 %v565
    %583 = vmatpush.bf16.msra.mxu0 %v564
    %584 = vmatpush.bf16.msra.mxu0 %v563
    %585 = vmatpush.bf16.msra.mxu0 %v562
    %586 = vmatmul.bf16.gmra.mxu0 0
    %v587 = vpop.f32.mrf.mxu0
    %v588 = vadd.f32 0.0, %v587
    %v589 = vpop.f32.mrf.mxu0
    %590 = vdwg.mxu0
    %v607 = vunpack.c.l.b16 %v498
    %v608 = vunpack.c.l.b16 %v499
    %v609 = vunpack.c.l.b16 %v500
    %v610 = vunpack.c.l.b16 %v501
    %v611 = vunpack.c.l.b16 %v502
    %v612 = vunpack.c.l.b16 %v503
    %v613 = vunpack.c.l.b16 %v504
    %v614 = vunpack.c.l.b16 %v505
    %v615 = vunpack.c.l.b16 %v506
    %v616 = vunpack.c.l.b16 %v507
    %v617 = vunpack.c.l.b16 %v508
    %v618 = vunpack.c.l.b16 %v509
    %v619 = vunpack.c.l.b16 %v510
    %v620 = vunpack.c.l.b16 %v511
    %v621 = vunpack.c.l.b16 %v512
    %v622 = vunpack.c.l.b16 %v513
    %v623 = vpack.c.b16 %v608, %v607
    %v624 = vpack.c.b16 %v610, %v609
    %v625 = vpack.c.b16 %v612, %v611
    %v626 = vpack.c.b16 %v614, %v613
    %v627 = vpack.c.b16 %v616, %v615
    %v628 = vpack.c.b16 %v618, %v617
    %v629 = vpack.c.b16 %v620, %v619
    %v630 = vpack.c.b16 %v622, %v621
    %639 = vmatpush.bf16.msra.mxu0 %v630
    %640 = vmatpush.bf16.msra.mxu0 %v629
    %641 = vmatpush.bf16.msra.mxu0 %v628
    %642 = vmatpush.bf16.msra.mxu0 %v627
    %643 = vmatpush.bf16.msra.mxu0 %v626
    %644 = vmatpush.bf16.msra.mxu0 %v625
    %645 = vmatpush.bf16.msra.mxu0 %v624
    %646 = vmatpush.bf16.msra.mxu0 %v623
    %647 = vmatmul.bf16.gmra.mxu0 %v497
    %v648 = vpop.f32.mrf.mxu0
    %v649 = vadd.f32 %v588, %v648
    %v650 = vpop.f32.mrf.mxu0
    %651 = vdwg.mxu0
    %v653 = vperm.slane %v380, 0
    %v655 = vadd.f32 %v649, %v653
    %v656 = vtanh.pop %v655
    %v657 = vxor.u32 %v655, 2147483648
    %v658 = vmul.f32 %v657, 1.442695
    %v659 = vpow.pop %v658
    %v660 = vadd.f32 %v659, 1.0
    %v661 = vrcp.pop %v660
    %v662 = vmul.f32 %v660, %v661
    %v663 = vsub.f32 1.0, %v662
    %v664 = vmul.f32 %v661, %v663
    %v665 = vadd.f32 %v661, %v664
    %vm666 = vweird.f32 %v660
    %vm667 = vweird.f32 %v661
    %vm668 = vmor %vm666, %vm667
    %v669 = vsel %vm668, %v661, %v665
    %v670 = vand.u32 2147483647, %v660
    %vm671 = vcmp.eq.f32.partialorder %v670, 8.507059e+37
    %v672 = vand.u32 %v660, 2147483648
    %v673 = vor.u32 1.1754944e-38, %v672
    %v674 = vsel %vm671, %v673, %v669
    %v675 = vmul.f32 1.0, %v674
    %v676 = vsel %vm385, %v656, %v675
    %677 = vrot.lane.b32.xlu0 %v676, 96
    %v678 = vpop.permute.xlu0 %677
    %679 = vrot.lane.b32.xlu0 %v676, 64
    %v680 = vpop.permute.xlu0 %679
    %681 = vrot.lane.b32.xlu0 %v676, 32
    %v682 = vpop.permute.xlu0 %681
    %v683 = vmul.f32 %v678, 0.0
    %v684 = vmul.f32 %v676, %v680
    %v685 = vadd.f32 %v683, %v684
    %v686 = vtanh.pop %v685
    %v687 = vmul.f32 %v682, %v686
    %s688 = scalar_lea.vmem [#allocation2], 8
    %v689 = vld [vmem:[%s688] sm:$0xff]
    %690 = vmatpush.bf16.msra.mxu0 %v442
    %691 = vmatpush.bf16.msra.mxu0 %v441
    %692 = vmatpush.bf16.msra.mxu0 %v440
    %693 = vmatpush.bf16.msra.mxu0 %v439
    %694 = vmatpush.bf16.msra.mxu0 %v438
    %695 = vmatpush.bf16.msra.mxu0 %v437
    %696 = vmatpush.bf16.msra.mxu0 %v436
    %697 = vmatpush.bf16.msra.mxu0 %v435
    %698 = vmatmul.bf16.gmra.mxu0 %v497
    %v699 = vpop.f32.mrf.mxu0
    %v700 = vadd.f32 0.0, %v699
    %v701 = vpop.f32.mrf.mxu0
    %702 = vdwg.mxu0
    %v703 = vadd.f32 %v689, %v700
    %v704 = vtanh.pop %v703
    %v705 = vxor.u32 %v703, 2147483648
    %v706 = vmul.f32 %v705, 1.442695
    %v707 = vpow.pop %v706
    %v708 = vadd.f32 %v707, 1.0
    %v709 = vrcp.pop %v708
    %v710 = vmul.f32 %v708, %v709
    %v711 = vsub.f32 1.0, %v710
    %v712 = vmul.f32 %v709, %v711
    %v713 = vadd.f32 %v709, %v712
    %vm714 = vweird.f32 %v708
    %vm715 = vweird.f32 %v709
    %vm716 = vmor %vm714, %vm715
    %v717 = vsel %vm716, %v709, %v713
    %v718 = vand.u32 2147483647, %v708
    %vm719 = vcmp.eq.f32.partialorder %v718, 8.507059e+37
    %v720 = vand.u32 %v708, 2147483648
    %v721 = vor.u32 1.1754944e-38, %v720
    %v722 = vsel %vm719, %v721, %v717
    %v723 = vmul.f32 1.0, %v722
    %v724 = vsel %vm385, %v704, %v723
    %725 = vrot.lane.b32.xlu0 %v724, 96
    %v726 = vpop.permute.xlu0 %725
    %727 = vrot.lane.b32.xlu0 %v724, 64
    %v728 = vpop.permute.xlu0 %727
    %729 = vrot.lane.b32.xlu0 %v724, 32
    %v730 = vpop.permute.xlu0 %729
    %v731 = vmul.f32 %v726, %v494
    %v732 = vmul.f32 %v724, %v728
    %v733 = vadd.f32 %v731, %v732
    %v734 = vtanh.pop %v733
    %v735 = vmul.f32 %v730, %v734
    %v736 = vpack.c.bf16 %v735, %v735
    %v737 = vpack.c.bf16 %v687, %v687
    %738 = vmatpush.bf16.msra.mxu0 %v569
    %739 = vmatpush.bf16.msra.mxu0 %v568
    %740 = vmatpush.bf16.msra.mxu0 %v567
    %741 = vmatpush.bf16.msra.mxu0 %v566
    %742 = vmatpush.bf16.msra.mxu0 %v565
    %743 = vmatpush.bf16.msra.mxu0 %v564
    %744 = vmatpush.bf16.msra.mxu0 %v563
    %745 = vmatpush.bf16.msra.mxu0 %v562
    %746 = vmatmul.bf16.gmra.mxu0 %v737
    %v747 = vpop.f32.mrf.mxu0
    %v748 = vadd.f32 0.0, %v747
    %v749 = vpop.f32.mrf.mxu0
    %750 = vdwg.mxu0
    %751 = vmatpush.bf16.msra.mxu0 %v630
    %752 = vmatpush.bf16.msra.mxu0 %v629
    %753 = vmatpush.bf16.msra.mxu0 %v628
    %754 = vmatpush.bf16.msra.mxu0 %v627
    %755 = vmatpush.bf16.msra.mxu0 %v626
    %756 = vmatpush.bf16.msra.mxu0 %v625
    %757 = vmatpush.bf16.msra.mxu0 %v624
    %758 = vmatpush.bf16.msra.mxu0 %v623
    %759 = vmatmul.bf16.gmra.mxu0 %v736
    %v760 = vpop.f32.mrf.mxu0
    %v761 = vadd.f32 %v748, %v760
    %v762 = vpop.f32.mrf.mxu0
    %763 = vdwg.mxu0
    %v764 = vadd.f32 %v761, %v653
    %v765 = vtanh.pop %v764
    %v766 = vxor.u32 %v764, 2147483648
    %v767 = vmul.f32 %v766, 1.442695
    %v768 = vpow.pop %v767
    %v769 = vadd.f32 %v768, 1.0
    %v770 = vrcp.pop %v769
    %v771 = vmul.f32 %v769, %v770
    %v772 = vsub.f32 1.0, %v771
    %v773 = vmul.f32 %v770, %v772
    %v774 = vadd.f32 %v770, %v773
    %vm775 = vweird.f32 %v769
    %vm776 = vweird.f32 %v770
    %vm777 = vmor %vm775, %vm776
    %v778 = vsel %vm777, %v770, %v774
    %v779 = vand.u32 2147483647, %v769
    %vm780 = vcmp.eq.f32.partialorder %v779, 8.507059e+37
    %v781 = vand.u32 %v769, 2147483648
    %v782 = vor.u32 1.1754944e-38, %v781
    %v783 = vsel %vm780, %v782, %v778
    %v784 = vmul.f32 1.0, %v783
    %v785 = vsel %vm385, %v765, %v784
    %786 = vrot.lane.b32.xlu0 %v785, 96
    %v787 = vpop.permute.xlu0 %786
    %788 = vrot.lane.b32.xlu0 %v785, 64
    %v789 = vpop.permute.xlu0 %788
    %790 = vrot.lane.b32.xlu0 %v785, 32
    %v791 = vpop.permute.xlu0 %790
    %v792 = vmul.f32 %v787, %v685
    %v793 = vmul.f32 %v785, %v789
    %v794 = vadd.f32 %v792, %v793
    %v795 = vtanh.pop %v794
    %v796 = vmul.f32 %v791, %v795
    %s797 = scalar_lea.vmem [#allocation2], 16
    %v798 = vld [vmem:[%s797] sm:$0xff]
    %799 = vmatpush.bf16.msra.mxu0 %v442
    %800 = vmatpush.bf16.msra.mxu0 %v441
    %801 = vmatpush.bf16.msra.mxu0 %v440
    %802 = vmatpush.bf16.msra.mxu0 %v439
    %803 = vmatpush.bf16.msra.mxu0 %v438
    %804 = vmatpush.bf16.msra.mxu0 %v437
    %805 = vmatpush.bf16.msra.mxu0 %v436
    %806 = vmatpush.bf16.msra.mxu0 %v435
    %807 = vmatmul.bf16.gmra.mxu0 %v736
    %v808 = vpop.f32.mrf.mxu0
    %v809 = vadd.f32 0.0, %v808
    %v810 = vpop.f32.mrf.mxu0
    %811 = vdwg.mxu0
    %v812 = vadd.f32 %v798, %v809
    %v813 = vtanh.pop %v812
    %v814 = vxor.u32 %v812, 2147483648
    %v815 = vmul.f32 %v814, 1.442695
    %v816 = vpow.pop %v815
    %v817 = vadd.f32 %v816, 1.0
    %v818 = vrcp.pop %v817
    %v819 = vmul.f32 %v817, %v818
    %v820 = vsub.f32 1.0, %v819
    %v821 = vmul.f32 %v818, %v820
    %v822 = vadd.f32 %v818, %v821
    %vm823 = vweird.f32 %v817
    %vm824 = vweird.f32 %v818
    %vm825 = vmor %vm823, %vm824
    %v826 = vsel %vm825, %v818, %v822
    %v827 = vand.u32 2147483647, %v817
    %vm828 = vcmp.eq.f32.partialorder %v827, 8.507059e+37
    %v829 = vand.u32 %v817, 2147483648
    %v830 = vor.u32 1.1754944e-38, %v829
    %v831 = vsel %vm828, %v830, %v826
    %v832 = vmul.f32 1.0, %v831
    %v833 = vsel %vm385, %v813, %v832
    %834 = vrot.lane.b32.xlu0 %v833, 96
    %v835 = vpop.permute.xlu0 %834
    %836 = vrot.lane.b32.xlu0 %v833, 64
    %v837 = vpop.permute.xlu0 %836
    %838 = vrot.lane.b32.xlu0 %v833, 32
    %v839 = vpop.permute.xlu0 %838
    %v840 = vmul.f32 %v835, %v733
    %v841 = vmul.f32 %v833, %v837
    %v842 = vadd.f32 %v840, %v841
    %v843 = vtanh.pop %v842
    %v844 = vmul.f32 %v839, %v843
    %v845 = vpack.c.bf16 %v844, %v844
    %v846 = vpack.c.bf16 %v796, %v796
    %847 = vmatpush.bf16.msra.mxu0 %v569
    %848 = vmatpush.bf16.msra.mxu0 %v568
    %849 = vmatpush.bf16.msra.mxu0 %v567
    %850 = vmatpush.bf16.msra.mxu0 %v566
    %851 = vmatpush.bf16.msra.mxu0 %v565
    %852 = vmatpush.bf16.msra.mxu0 %v564
    %853 = vmatpush.bf16.msra.mxu0 %v563
    %854 = vmatpush.bf16.msra.mxu0 %v562
    %855 = vmatmul.bf16.gmra.mxu0 %v846
    %v856 = vpop.f32.mrf.mxu0
    %v857 = vadd.f32 0.0, %v856
    %v858 = vpop.f32.mrf.mxu0
    %859 = vdwg.mxu0
    %860 = vmatpush.bf16.msra.mxu0 %v630
    %861 = vmatpush.bf16.msra.mxu0 %v629
    %862 = vmatpush.bf16.msra.mxu0 %v628
    %863 = vmatpush.bf16.msra.mxu0 %v627
    %864 = vmatpush.bf16.msra.mxu0 %v626
    %865 = vmatpush.bf16.msra.mxu0 %v625
    %866 = vmatpush.bf16.msra.mxu0 %v624
    %867 = vmatpush.bf16.msra.mxu0 %v623
    %868 = vmatmul.bf16.gmra.mxu0 %v845
    %v869 = vpop.f32.mrf.mxu0
    %v870 = vadd.f32 %v857, %v869
    %v871 = vpop.f32.mrf.mxu0
    %872 = vdwg.mxu0
    %v873 = vadd.f32 %v870, %v653
    %v874 = vtanh.pop %v873
    %v875 = vxor.u32 %v873, 2147483648
    %v876 = vmul.f32 %v875, 1.442695
    %v877 = vpow.pop %v876
    %v878 = vadd.f32 %v877, 1.0
    %v879 = vrcp.pop %v878
    %v880 = vmul.f32 %v878, %v879
    %v881 = vsub.f32 1.0, %v880
    %v882 = vmul.f32 %v879, %v881
    %v883 = vadd.f32 %v879, %v882
    %vm884 = vweird.f32 %v878
    %vm885 = vweird.f32 %v879
    %vm886 = vmor %vm884, %vm885
    %v887 = vsel %vm886, %v879, %v883
    %v888 = vand.u32 2147483647, %v878
    %vm889 = vcmp.eq.f32.partialorder %v888, 8.507059e+37
    %v890 = vand.u32 %v878, 2147483648
    %v891 = vor.u32 1.1754944e-38, %v890
    %v892 = vsel %vm889, %v891, %v887
    %v893 = vmul.f32 1.0, %v892
    %v894 = vsel %vm385, %v874, %v893
    %895 = vrot.lane.b32.xlu0 %v894, 96
    %v896 = vpop.permute.xlu0 %895
    %897 = vrot.lane.b32.xlu0 %v894, 64
    %v898 = vpop.permute.xlu0 %897
    %899 = vrot.lane.b32.xlu0 %v894, 32
    %v900 = vpop.permute.xlu0 %899
    %v901 = vmul.f32 %v896, %v794
    %v902 = vmul.f32 %v894, %v898
    %v903 = vadd.f32 %v901, %v902
    %v904 = vtanh.pop %v903
    %v905 = vmul.f32 %v900, %v904
    %s906 = scalar_lea.vmem [#allocation2], 24
    %v907 = vld [vmem:[%s906] sm:$0xff]
    %908 = vmatpush.bf16.msra.mxu0 %v442
    %909 = vmatpush.bf16.msra.mxu0 %v441
    %910 = vmatpush.bf16.msra.mxu0 %v440
    %911 = vmatpush.bf16.msra.mxu0 %v439
    %912 = vmatpush.bf16.msra.mxu0 %v438
    %913 = vmatpush.bf16.msra.mxu0 %v437
    %914 = vmatpush.bf16.msra.mxu0 %v436
    %915 = vmatpush.bf16.msra.mxu0 %v435
    %916 = vmatmul.bf16.gmra.mxu0 %v845
    %v917 = vpop.f32.mrf.mxu0
    %v918 = vadd.f32 0.0, %v917
    %v919 = vpop.f32.mrf.mxu0
    %920 = vdwg.mxu0
    %v921 = vadd.f32 %v907, %v918
    %v922 = vtanh.pop %v921
    %v923 = vxor.u32 %v921, 2147483648
    %v924 = vmul.f32 %v923, 1.442695
    %v925 = vpow.pop %v924
    %v926 = vadd.f32 %v925, 1.0
    %v927 = vrcp.pop %v926
    %v928 = vmul.f32 %v926, %v927
    %v929 = vsub.f32 1.0, %v928
    %v930 = vmul.f32 %v927, %v929
    %v931 = vadd.f32 %v927, %v930
    %vm932 = vweird.f32 %v926
    %vm933 = vweird.f32 %v927
    %vm934 = vmor %vm932, %vm933
    %v935 = vsel %vm934, %v927, %v931
    %v936 = vand.u32 2147483647, %v926
    %vm937 = vcmp.eq.f32.partialorder %v936, 8.507059e+37
    %v938 = vand.u32 %v926, 2147483648
    %v939 = vor.u32 1.1754944e-38, %v938
    %v940 = vsel %vm937, %v939, %v935
    %v941 = vmul.f32 1.0, %v940
    %v942 = vsel %vm385, %v922, %v941
    %943 = vrot.lane.b32.xlu0 %v942, 96
    %v944 = vpop.permute.xlu0 %943
    %945 = vrot.lane.b32.xlu0 %v942, 64
    %v946 = vpop.permute.xlu0 %945
    %947 = vrot.lane.b32.xlu0 %v942, 32
    %v948 = vpop.permute.xlu0 %947
    %v949 = vmul.f32 %v944, %v842
    %v950 = vmul.f32 %v942, %v946
    %v951 = vadd.f32 %v949, %v950
    %v952 = vtanh.pop %v951
    %v953 = vmul.f32 %v948, %v952
    %v954 = vpack.c.bf16 %v953, %v953
    %v955 = vpack.c.bf16 %v905, %v905
    %956 = vmatpush.bf16.msra.mxu0 %v569
    %957 = vmatpush.bf16.msra.mxu0 %v568
    %958 = vmatpush.bf16.msra.mxu0 %v567
    %959 = vmatpush.bf16.msra.mxu0 %v566
    %960 = vmatpush.bf16.msra.mxu0 %v565
    %961 = vmatpush.bf16.msra.mxu0 %v564
    %962 = vmatpush.bf16.msra.mxu0 %v563
    %963 = vmatpush.bf16.msra.mxu0 %v562
    %964 = vmatmul.bf16.gmra.mxu0 %v955
    %v965 = vpop.f32.mrf.mxu0
    %v966 = vadd.f32 0.0, %v965
    %v967 = vpop.f32.mrf.mxu0
    %968 = vdwg.mxu0
    %969 = vmatpush.bf16.msra.mxu0 %v630
    %970 = vmatpush.bf16.msra.mxu0 %v629
    %971 = vmatpush.bf16.msra.mxu0 %v628
    %972 = vmatpush.bf16.msra.mxu0 %v627
    %973 = vmatpush.bf16.msra.mxu0 %v626
    %974 = vmatpush.bf16.msra.mxu0 %v625
    %975 = vmatpush.bf16.msra.mxu0 %v624
    %976 = vmatpush.bf16.msra.mxu0 %v623
    %977 = vmatmul.bf16.gmra.mxu0 %v954
    %v978 = vpop.f32.mrf.mxu0
    %v979 = vadd.f32 %v966, %v978
    %v980 = vpop.f32.mrf.mxu0
    %981 = vdwg.mxu0
    %v982 = vadd.f32 %v979, %v653
    %v983 = vtanh.pop %v982
    %v984 = vxor.u32 %v982, 2147483648
    %v985 = vmul.f32 %v984, 1.442695
    %v986 = vpow.pop %v985
    %v987 = vadd.f32 %v986, 1.0
    %v988 = vrcp.pop %v987
    %v989 = vmul.f32 %v987, %v988
    %v990 = vsub.f32 1.0, %v989
    %v991 = vmul.f32 %v988, %v990
    %v992 = vadd.f32 %v988, %v991
    %vm993 = vweird.f32 %v987
    %vm994 = vweird.f32 %v988
    %vm995 = vmor %vm993, %vm994
    %v996 = vsel %vm995, %v988, %v992
    %v997 = vand.u32 2147483647, %v987
    %vm998 = vcmp.eq.f32.partialorder %v997, 8.507059e+37
    %v999 = vand.u32 %v987, 2147483648
    %v1000 = vor.u32 1.1754944e-38, %v999
    %v1001 = vsel %vm998, %v1000, %v996
    %v1002 = vmul.f32 1.0, %v1001
    %v1003 = vsel %vm385, %v983, %v1002
    %1004 = vrot.lane.b32.xlu0 %v1003, 96
    %v1005 = vpop.permute.xlu0 %1004
    %1006 = vrot.lane.b32.xlu0 %v1003, 64
    %v1007 = vpop.permute.xlu0 %1006
    %1008 = vrot.lane.b32.xlu0 %v1003, 32
    %v1009 = vpop.permute.xlu0 %1008
    %v1010 = vmul.f32 %v1005, %v903
    %v1011 = vmul.f32 %v1003, %v1007
    %v1012 = vadd.f32 %v1010, %v1011
    %v1013 = vtanh.pop %v1012
    %v1014 = vmul.f32 %v1009, %v1013
    %s1015 = scalar_lea.vmem [#allocation2], 32
    %v1016 = vld [vmem:[%s1015] sm:$0xff]
    %1017 = vmatpush.bf16.msra.mxu0 %v442
    %1018 = vmatpush.bf16.msra.mxu0 %v441
    %1019 = vmatpush.bf16.msra.mxu0 %v440
    %1020 = vmatpush.bf16.msra.mxu0 %v439
    %1021 = vmatpush.bf16.msra.mxu0 %v438
    %1022 = vmatpush.bf16.msra.mxu0 %v437
    %1023 = vmatpush.bf16.msra.mxu0 %v436
    %1024 = vmatpush.bf16.msra.mxu0 %v435
    %1025 = vmatmul.bf16.gmra.mxu0 %v954
    %v1026 = vpop.f32.mrf.mxu0
    %v1027 = vadd.f32 0.0, %v1026
    %v1028 = vpop.f32.mrf.mxu0
    %1029 = vdwg.mxu0
    %v1030 = vadd.f32 %v1016, %v1027
    %v1031 = vtanh.pop %v1030
    %v1032 = vxor.u32 %v1030, 2147483648
    %v1033 = vmul.f32 %v1032, 1.442695
    %v1034 = vpow.pop %v1033
    %v1035 = vadd.f32 %v1034, 1.0
    %v1036 = vrcp.pop %v1035
    %v1037 = vmul.f32 %v1035, %v1036
    %v1038 = vsub.f32 1.0, %v1037
    %v1039 = vmul.f32 %v1036, %v1038
    %v1040 = vadd.f32 %v1036, %v1039
    %vm1041 = vweird.f32 %v1035
    %vm1042 = vweird.f32 %v1036
    %vm1043 = vmor %vm1041, %vm1042
    %v1044 = vsel %vm1043, %v1036, %v1040
    %v1045 = vand.u32 2147483647, %v1035
    %vm1046 = vcmp.eq.f32.partialorder %v1045, 8.507059e+37
    %v1047 = vand.u32 %v1035, 2147483648
    %v1048 = vor.u32 1.1754944e-38, %v1047
    %v1049 = vsel %vm1046, %v1048, %v1044
    %v1050 = vmul.f32 1.0, %v1049
    %v1051 = vsel %vm385, %v1031, %v1050
    %1052 = vrot.lane.b32.xlu0 %v1051, 96
    %v1053 = vpop.permute.xlu0 %1052
    %1054 = vrot.lane.b32.xlu0 %v1051, 64
    %v1055 = vpop.permute.xlu0 %1054
    %1056 = vrot.lane.b32.xlu0 %v1051, 32
    %v1057 = vpop.permute.xlu0 %1056
    %v1058 = vmul.f32 %v1053, %v951
    %v1059 = vmul.f32 %v1051, %v1055
    %v1060 = vadd.f32 %v1058, %v1059
    %v1061 = vtanh.pop %v1060
    %v1062 = vmul.f32 %v1057, %v1061
    %v1063 = vpack.c.bf16 %v1062, %v1062
    %v1064 = vpack.c.bf16 %v1014, %v1014
    %1065 = vmatpush.bf16.msra.mxu0 %v569
    %1066 = vmatpush.bf16.msra.mxu0 %v568
    %1067 = vmatpush.bf16.msra.mxu0 %v567
    %1068 = vmatpush.bf16.msra.mxu0 %v566
    %1069 = vmatpush.bf16.msra.mxu0 %v565
    %1070 = vmatpush.bf16.msra.mxu0 %v564
    %1071 = vmatpush.bf16.msra.mxu0 %v563
    %1072 = vmatpush.bf16.msra.mxu0 %v562
    %1073 = vmatmul.bf16.gmra.mxu0 %v1064
    %v1074 = vpop.f32.mrf.mxu0
    %v1075 = vadd.f32 0.0, %v1074
    %v1076 = vpop.f32.mrf.mxu0
    %1077 = vdwg.mxu0
    %1078 = vmatpush.bf16.msra.mxu0 %v630
    %1079 = vmatpush.bf16.msra.mxu0 %v629
    %1080 = vmatpush.bf16.msra.mxu0 %v628
    %1081 = vmatpush.bf16.msra.mxu0 %v627
    %1082 = vmatpush.bf16.msra.mxu0 %v626
    %1083 = vmatpush.bf16.msra.mxu0 %v625
    %1084 = vmatpush.bf16.msra.mxu0 %v624
    %1085 = vmatpush.bf16.msra.mxu0 %v623
    %1086 = vmatmul.bf16.gmra.mxu0 %v1063
    %v1087 = vpop.f32.mrf.mxu0
    %v1088 = vadd.f32 %v1075, %v1087
    %v1089 = vpop.f32.mrf.mxu0
    %1090 = vdwg.mxu0
    %v1091 = vadd.f32 %v1088, %v653
    %v1092 = vtanh.pop %v1091
    %v1093 = vxor.u32 %v1091, 2147483648
    %v1094 = vmul.f32 %v1093, 1.442695
    %v1095 = vpow.pop %v1094
    %v1096 = vadd.f32 %v1095, 1.0
    %v1097 = vrcp.pop %v1096
    %v1098 = vmul.f32 %v1096, %v1097
    %v1099 = vsub.f32 1.0, %v1098
    %v1100 = vmul.f32 %v1097, %v1099
    %v1101 = vadd.f32 %v1097, %v1100
    %vm1102 = vweird.f32 %v1096
    %vm1103 = vweird.f32 %v1097
    %vm1104 = vmor %vm1102, %vm1103
    %v1105 = vsel %vm1104, %v1097, %v1101
    %v1106 = vand.u32 2147483647, %v1096
    %vm1107 = vcmp.eq.f32.partialorder %v1106, 8.507059e+37
    %v1108 = vand.u32 %v1096, 2147483648
    %v1109 = vor.u32 1.1754944e-38, %v1108
    %v1110 = vsel %vm1107, %v1109, %v1105
    %v1111 = vmul.f32 1.0, %v1110
    %v1112 = vsel %vm385, %v1092, %v1111
    %1113 = vrot.lane.b32.xlu0 %v1112, 96
    %v1114 = vpop.permute.xlu0 %1113
    %1115 = vrot.lane.b32.xlu0 %v1112, 64
    %v1116 = vpop.permute.xlu0 %1115
    %1117 = vrot.lane.b32.xlu0 %v1112, 32
    %v1118 = vpop.permute.xlu0 %1117
    %v1119 = vmul.f32 %v1114, %v1012
    %v1120 = vmul.f32 %v1112, %v1116
    %v1121 = vadd.f32 %v1119, %v1120
    %v1122 = vtanh.pop %v1121
    %v1123 = vmul.f32 %v1118, %v1122
    %s1124 = scalar_lea.vmem [#allocation2], 40
    %v1125 = vld [vmem:[%s1124] sm:$0xff]
    %1126 = vmatpush.bf16.msra.mxu0 %v442
    %1127 = vmatpush.bf16.msra.mxu0 %v441
    %1128 = vmatpush.bf16.msra.mxu0 %v440
    %1129 = vmatpush.bf16.msra.mxu0 %v439
    %1130 = vmatpush.bf16.msra.mxu0 %v438
    %1131 = vmatpush.bf16.msra.mxu0 %v437
    %1132 = vmatpush.bf16.msra.mxu0 %v436
    %1133 = vmatpush.bf16.msra.mxu0 %v435
    %1134 = vmatmul.bf16.gmra.mxu0 %v1063
    %v1135 = vpop.f32.mrf.mxu0
    %v1136 = vadd.f32 0.0, %v1135
    %v1137 = vpop.f32.mrf.mxu0
    %1138 = vdwg.mxu0
    %v1139 = vadd.f32 %v1125, %v1136
    %v1140 = vtanh.pop %v1139
    %v1141 = vxor.u32 %v1139, 2147483648
    %v1142 = vmul.f32 %v1141, 1.442695
    %v1143 = vpow.pop %v1142
    %v1144 = vadd.f32 %v1143, 1.0
    %v1145 = vrcp.pop %v1144
    %v1146 = vmul.f32 %v1144, %v1145
    %v1147 = vsub.f32 1.0, %v1146
    %v1148 = vmul.f32 %v1145, %v1147
    %v1149 = vadd.f32 %v1145, %v1148
    %vm1150 = vweird.f32 %v1144
    %vm1151 = vweird.f32 %v1145
    %vm1152 = vmor %vm1150, %vm1151
    %v1153 = vsel %vm1152, %v1145, %v1149
    %v1154 = vand.u32 2147483647, %v1144
    %vm1155 = vcmp.eq.f32.partialorder %v1154, 8.507059e+37
    %v1156 = vand.u32 %v1144, 2147483648
    %v1157 = vor.u32 1.1754944e-38, %v1156
    %v1158 = vsel %vm1155, %v1157, %v1153
    %v1159 = vmul.f32 1.0, %v1158
    %v1160 = vsel %vm385, %v1140, %v1159
    %1161 = vrot.lane.b32.xlu0 %v1160, 96
    %v1162 = vpop.permute.xlu0 %1161
    %1163 = vrot.lane.b32.xlu0 %v1160, 64
    %v1164 = vpop.permute.xlu0 %1163
    %1165 = vrot.lane.b32.xlu0 %v1160, 32
    %v1166 = vpop.permute.xlu0 %1165
    %v1167 = vmul.f32 %v1162, %v1060
    %v1168 = vmul.f32 %v1160, %v1164
    %v1169 = vadd.f32 %v1167, %v1168
    %v1170 = vtanh.pop %v1169
    %v1171 = vmul.f32 %v1166, %v1170
    %v1172 = vpack.c.bf16 %v1171, %v1171
    %v1173 = vpack.c.bf16 %v1123, %v1123
    %1174 = vmatpush.bf16.msra.mxu0 %v569
    %1175 = vmatpush.bf16.msra.mxu0 %v568
    %1176 = vmatpush.bf16.msra.mxu0 %v567
    %1177 = vmatpush.bf16.msra.mxu0 %v566
    %1178 = vmatpush.bf16.msra.mxu0 %v565
    %1179 = vmatpush.bf16.msra.mxu0 %v564
    %1180 = vmatpush.bf16.msra.mxu0 %v563
    %1181 = vmatpush.bf16.msra.mxu0 %v562
    %1182 = vmatmul.bf16.gmra.mxu0 %v1173
    %v1183 = vpop.f32.mrf.mxu0
    %v1184 = vadd.f32 0.0, %v1183
    %v1185 = vpop.f32.mrf.mxu0
    %1186 = vdwg.mxu0
    %1187 = vmatpush.bf16.msra.mxu0 %v630
    %1188 = vmatpush.bf16.msra.mxu0 %v629
    %1189 = vmatpush.bf16.msra.mxu0 %v628
    %1190 = vmatpush.bf16.msra.mxu0 %v627
    %1191 = vmatpush.bf16.msra.mxu0 %v626
    %1192 = vmatpush.bf16.msra.mxu0 %v625
    %1193 = vmatpush.bf16.msra.mxu0 %v624
    %1194 = vmatpush.bf16.msra.mxu0 %v623
    %1195 = vmatmul.bf16.gmra.mxu0 %v1172
    %v1196 = vpop.f32.mrf.mxu0
    %v1197 = vadd.f32 %v1184, %v1196
    %v1198 = vpop.f32.mrf.mxu0
    %1199 = vdwg.mxu0
    %v1200 = vadd.f32 %v1197, %v653
    %v1201 = vtanh.pop %v1200
    %v1202 = vxor.u32 %v1200, 2147483648
    %v1203 = vmul.f32 %v1202, 1.442695
    %v1204 = vpow.pop %v1203
    %v1205 = vadd.f32 %v1204, 1.0
    %v1206 = vrcp.pop %v1205
    %v1207 = vmul.f32 %v1205, %v1206
    %v1208 = vsub.f32 1.0, %v1207
    %v1209 = vmul.f32 %v1206, %v1208
    %v1210 = vadd.f32 %v1206, %v1209
    %vm1211 = vweird.f32 %v1205
    %vm1212 = vweird.f32 %v1206
    %vm1213 = vmor %vm1211, %vm1212
    %v1214 = vsel %vm1213, %v1206, %v1210
    %v1215 = vand.u32 2147483647, %v1205
    %vm1216 = vcmp.eq.f32.partialorder %v1215, 8.507059e+37
    %v1217 = vand.u32 %v1205, 2147483648
    %v1218 = vor.u32 1.1754944e-38, %v1217
    %v1219 = vsel %vm1216, %v1218, %v1214
    %v1220 = vmul.f32 1.0, %v1219
    %v1221 = vsel %vm385, %v1201, %v1220
    %1222 = vrot.lane.b32.xlu0 %v1221, 96
    %v1223 = vpop.permute.xlu0 %1222
    %1224 = vrot.lane.b32.xlu0 %v1221, 64
    %v1225 = vpop.permute.xlu0 %1224
    %1226 = vrot.lane.b32.xlu0 %v1221, 32
    %v1227 = vpop.permute.xlu0 %1226
    %v1228 = vmul.f32 %v1223, %v1121
    %v1229 = vmul.f32 %v1221, %v1225
    %v1230 = vadd.f32 %v1228, %v1229
    %v1231 = vtanh.pop %v1230
    %v1232 = vmul.f32 %v1227, %v1231
    %s1233 = scalar_lea.vmem [#allocation2], 48
    %v1234 = vld [vmem:[%s1233] sm:$0xff]
    %1235 = vmatpush.bf16.msra.mxu0 %v442
    %1236 = vmatpush.bf16.msra.mxu0 %v441
    %1237 = vmatpush.bf16.msra.mxu0 %v440
    %1238 = vmatpush.bf16.msra.mxu0 %v439
    %1239 = vmatpush.bf16.msra.mxu0 %v438
    %1240 = vmatpush.bf16.msra.mxu0 %v437
    %1241 = vmatpush.bf16.msra.mxu0 %v436
    %1242 = vmatpush.bf16.msra.mxu0 %v435
    %1243 = vmatmul.bf16.gmra.mxu0 %v1172
    %v1244 = vpop.f32.mrf.mxu0
    %v1245 = vadd.f32 0.0, %v1244
    %v1246 = vpop.f32.mrf.mxu0
    %1247 = vdwg.mxu0
    %v1248 = vadd.f32 %v1234, %v1245
    %v1249 = vtanh.pop %v1248
    %v1250 = vxor.u32 %v1248, 2147483648
    %v1251 = vmul.f32 %v1250, 1.442695
    %v1252 = vpow.pop %v1251
    %v1253 = vadd.f32 %v1252, 1.0
    %v1254 = vrcp.pop %v1253
    %v1255 = vmul.f32 %v1253, %v1254
    %v1256 = vsub.f32 1.0, %v1255
    %v1257 = vmul.f32 %v1254, %v1256
    %v1258 = vadd.f32 %v1254, %v1257
    %vm1259 = vweird.f32 %v1253
    %vm1260 = vweird.f32 %v1254
    %vm1261 = vmor %vm1259, %vm1260
    %v1262 = vsel %vm1261, %v1254, %v1258
    %v1263 = vand.u32 2147483647, %v1253
    %vm1264 = vcmp.eq.f32.partialorder %v1263, 8.507059e+37
    %v1265 = vand.u32 %v1253, 2147483648
    %v1266 = vor.u32 1.1754944e-38, %v1265
    %v1267 = vsel %vm1264, %v1266, %v1262
    %v1268 = vmul.f32 1.0, %v1267
    %v1269 = vsel %vm385, %v1249, %v1268
    %1270 = vrot.lane.b32.xlu0 %v1269, 96
    %v1271 = vpop.permute.xlu0 %1270
    %1272 = vrot.lane.b32.xlu0 %v1269, 64
    %v1273 = vpop.permute.xlu0 %1272
    %1274 = vrot.lane.b32.xlu0 %v1269, 32
    %v1275 = vpop.permute.xlu0 %1274
    %v1276 = vmul.f32 %v1271, %v1169
    %v1277 = vmul.f32 %v1269, %v1273
    %v1278 = vadd.f32 %v1276, %v1277
    %v1279 = vtanh.pop %v1278
    %v1280 = vmul.f32 %v1275, %v1279
    %v1281 = vpack.c.bf16 %v1280, %v1280
    %v1282 = vpack.c.bf16 %v1232, %v1232
    %1283 = vmatpush.bf16.msra.mxu0 %v569
    %1284 = vmatpush.bf16.msra.mxu0 %v568
    %1285 = vmatpush.bf16.msra.mxu0 %v567
    %1286 = vmatpush.bf16.msra.mxu0 %v566
    %1287 = vmatpush.bf16.msra.mxu0 %v565
    %1288 = vmatpush.bf16.msra.mxu0 %v564
    %1289 = vmatpush.bf16.msra.mxu0 %v563
    %1290 = vmatpush.bf16.msra.mxu0 %v562
    %1291 = vmatmul.bf16.gmra.mxu0 %v1282
    %v1292 = vpop.f32.mrf.mxu0
    %v1293 = vadd.f32 0.0, %v1292
    %v1294 = vpop.f32.mrf.mxu0
    %1295 = vdwg.mxu0
    %1296 = vmatpush.bf16.msra.mxu0 %v630
    %1297 = vmatpush.bf16.msra.mxu0 %v629
    %1298 = vmatpush.bf16.msra.mxu0 %v628
    %1299 = vmatpush.bf16.msra.mxu0 %v627
    %1300 = vmatpush.bf16.msra.mxu0 %v626
    %1301 = vmatpush.bf16.msra.mxu0 %v625
    %1302 = vmatpush.bf16.msra.mxu0 %v624
    %1303 = vmatpush.bf16.msra.mxu0 %v623
    %1304 = vmatmul.bf16.gmra.mxu0 %v1281
    %v1305 = vpop.f32.mrf.mxu0
    %v1306 = vadd.f32 %v1293, %v1305
    %v1307 = vpop.f32.mrf.mxu0
    %1308 = vdwg.mxu0
    %v1309 = vadd.f32 %v1306, %v653
    %v1310 = vtanh.pop %v1309
    %v1311 = vxor.u32 %v1309, 2147483648
    %v1312 = vmul.f32 %v1311, 1.442695
    %v1313 = vpow.pop %v1312
    %v1314 = vadd.f32 %v1313, 1.0
    %v1315 = vrcp.pop %v1314
    %v1316 = vmul.f32 %v1314, %v1315
    %v1317 = vsub.f32 1.0, %v1316
    %v1318 = vmul.f32 %v1315, %v1317
    %v1319 = vadd.f32 %v1315, %v1318
    %vm1320 = vweird.f32 %v1314
    %vm1321 = vweird.f32 %v1315
    %vm1322 = vmor %vm1320, %vm1321
    %v1323 = vsel %vm1322, %v1315, %v1319
    %v1324 = vand.u32 2147483647, %v1314
    %vm1325 = vcmp.eq.f32.partialorder %v1324, 8.507059e+37
    %v1326 = vand.u32 %v1314, 2147483648
    %v1327 = vor.u32 1.1754944e-38, %v1326
    %v1328 = vsel %vm1325, %v1327, %v1323
    %v1329 = vmul.f32 1.0, %v1328
    %v1330 = vsel %vm385, %v1310, %v1329
    %1331 = vrot.lane.b32.xlu0 %v1330, 96
    %v1332 = vpop.permute.xlu0 %1331
    %1333 = vrot.lane.b32.xlu0 %v1330, 64
    %v1334 = vpop.permute.xlu0 %1333
    %1335 = vrot.lane.b32.xlu0 %v1330, 32
    %v1336 = vpop.permute.xlu0 %1335
    %v1337 = vmul.f32 %v1332, %v1230
    %v1338 = vmul.f32 %v1330, %v1334
    %v1339 = vadd.f32 %v1337, %v1338
    %v1340 = vtanh.pop %v1339
    %v1341 = vmul.f32 %v1336, %v1340
    %s1342 = scalar_lea.vmem [#allocation2], 56
    %v1343 = vld [vmem:[%s1342] sm:$0xff]
    %1344 = vmatpush.bf16.msra.mxu0 %v442
    %1345 = vmatpush.bf16.msra.mxu0 %v441
    %1346 = vmatpush.bf16.msra.mxu0 %v440
    %1347 = vmatpush.bf16.msra.mxu0 %v439
    %1348 = vmatpush.bf16.msra.mxu0 %v438
    %1349 = vmatpush.bf16.msra.mxu0 %v437
    %1350 = vmatpush.bf16.msra.mxu0 %v436
    %1351 = vmatpush.bf16.msra.mxu0 %v435
    %1352 = vmatmul.bf16.gmra.mxu0 %v1281
    %v1353 = vpop.f32.mrf.mxu0
    %v1354 = vadd.f32 0.0, %v1353
    %v1355 = vpop.f32.mrf.mxu0
    %1356 = vdwg.mxu0
    %v1357 = vadd.f32 %v1343, %v1354
    %v1358 = vtanh.pop %v1357
    %v1359 = vxor.u32 %v1357, 2147483648
    %v1360 = vmul.f32 %v1359, 1.442695
    %v1361 = vpow.pop %v1360
    %v1362 = vadd.f32 %v1361, 1.0
    %v1363 = vrcp.pop %v1362
    %v1364 = vmul.f32 %v1362, %v1363
    %v1365 = vsub.f32 1.0, %v1364
    %v1366 = vmul.f32 %v1363, %v1365
    %v1367 = vadd.f32 %v1363, %v1366
    %vm1368 = vweird.f32 %v1362
    %vm1369 = vweird.f32 %v1363
    %vm1370 = vmor %vm1368, %vm1369
    %v1371 = vsel %vm1370, %v1363, %v1367
    %v1372 = vand.u32 2147483647, %v1362
    %vm1373 = vcmp.eq.f32.partialorder %v1372, 8.507059e+37
    %v1374 = vand.u32 %v1362, 2147483648
    %v1375 = vor.u32 1.1754944e-38, %v1374
    %v1376 = vsel %vm1373, %v1375, %v1371
    %v1377 = vmul.f32 1.0, %v1376
    %v1378 = vsel %vm385, %v1358, %v1377
    %1379 = vrot.lane.b32.xlu0 %v1378, 96
    %v1380 = vpop.permute.xlu0 %1379
    %1381 = vrot.lane.b32.xlu0 %v1378, 64
    %v1382 = vpop.permute.xlu0 %1381
    %1383 = vrot.lane.b32.xlu0 %v1378, 32
    %v1384 = vpop.permute.xlu0 %1383
    %v1385 = vmul.f32 %v1380, %v1278
    %v1386 = vmul.f32 %v1378, %v1382
    %v1387 = vadd.f32 %v1385, %v1386
    %v1388 = vtanh.pop %v1387
    %v1389 = vmul.f32 %v1384, %v1388
    %v1390 = vpack.c.bf16 %v1389, %v1389
    %v1391 = vpack.c.bf16 %v1341, %v1341
    %1392 = vmatpush.bf16.msra.mxu0 %v569
    %1393 = vmatpush.bf16.msra.mxu0 %v568
    %1394 = vmatpush.bf16.msra.mxu0 %v567
    %1395 = vmatpush.bf16.msra.mxu0 %v566
    %1396 = vmatpush.bf16.msra.mxu0 %v565
    %1397 = vmatpush.bf16.msra.mxu0 %v564
    %1398 = vmatpush.bf16.msra.mxu0 %v563
    %1399 = vmatpush.bf16.msra.mxu0 %v562
    %1400 = vmatmul.bf16.gmra.mxu0 %v1391
    %v1401 = vpop.f32.mrf.mxu0
    %v1402 = vadd.f32 0.0, %v1401
    %v1403 = vpop.f32.mrf.mxu0
    %1404 = vdwg.mxu0
    %1405 = vmatpush.bf16.msra.mxu0 %v630
    %1406 = vmatpush.bf16.msra.mxu0 %v629
    %1407 = vmatpush.bf16.msra.mxu0 %v628
    %1408 = vmatpush.bf16.msra.mxu0 %v627
    %1409 = vmatpush.bf16.msra.mxu0 %v626
    %1410 = vmatpush.bf16.msra.mxu0 %v625
    %1411 = vmatpush.bf16.msra.mxu0 %v624
    %1412 = vmatpush.bf16.msra.mxu0 %v623
    %1413 = vmatmul.bf16.gmra.mxu0 %v1390
    %v1414 = vpop.f32.mrf.mxu0
    %v1415 = vadd.f32 %v1402, %v1414
    %v1416 = vpop.f32.mrf.mxu0
    %1417 = vdwg.mxu0
    %v1418 = vadd.f32 %v1415, %v653
    %v1419 = vtanh.pop %v1418
    %v1420 = vxor.u32 %v1418, 2147483648
    %v1421 = vmul.f32 %v1420, 1.442695
    %v1422 = vpow.pop %v1421
    %v1423 = vadd.f32 %v1422, 1.0
    %v1424 = vrcp.pop %v1423
    %v1425 = vmul.f32 %v1423, %v1424
    %v1426 = vsub.f32 1.0, %v1425
    %v1427 = vmul.f32 %v1424, %v1426
    %v1428 = vadd.f32 %v1424, %v1427
    %vm1429 = vweird.f32 %v1423
    %vm1430 = vweird.f32 %v1424
    %vm1431 = vmor %vm1429, %vm1430
    %v1432 = vsel %vm1431, %v1424, %v1428
    %v1433 = vand.u32 2147483647, %v1423
    %vm1434 = vcmp.eq.f32.partialorder %v1433, 8.507059e+37
    %v1435 = vand.u32 %v1423, 2147483648
    %v1436 = vor.u32 1.1754944e-38, %v1435
    %v1437 = vsel %vm1434, %v1436, %v1432
    %v1438 = vmul.f32 1.0, %v1437
    %v1439 = vsel %vm385, %v1419, %v1438
    %1440 = vrot.lane.b32.xlu0 %v1439, 96
    %v1441 = vpop.permute.xlu0 %1440
    %1442 = vrot.lane.b32.xlu0 %v1439, 64
    %v1443 = vpop.permute.xlu0 %1442
    %1444 = vrot.lane.b32.xlu0 %v1439, 32
    %v1445 = vpop.permute.xlu0 %1444
    %v1446 = vmul.f32 %v1441, %v1339
    %v1447 = vmul.f32 %v1439, %v1443
    %v1448 = vadd.f32 %v1446, %v1447
    %v1449 = vtanh.pop %v1448
    %v1450 = vmul.f32 %v1445, %v1449
    %s1451 = scalar_lea.vmem [#allocation2], 64
    %v1452 = vld [vmem:[%s1451] sm:$0xff]
    %1453 = vmatpush.bf16.msra.mxu0 %v442
    %1454 = vmatpush.bf16.msra.mxu0 %v441
    %1455 = vmatpush.bf16.msra.mxu0 %v440
    %1456 = vmatpush.bf16.msra.mxu0 %v439
    %1457 = vmatpush.bf16.msra.mxu0 %v438
    %1458 = vmatpush.bf16.msra.mxu0 %v437
    %1459 = vmatpush.bf16.msra.mxu0 %v436
    %1460 = vmatpush.bf16.msra.mxu0 %v435
    %1461 = vmatmul.bf16.gmra.mxu0 %v1390
    %v1462 = vpop.f32.mrf.mxu0
    %v1463 = vadd.f32 0.0, %v1462
    %v1464 = vpop.f32.mrf.mxu0
    %1465 = vdwg.mxu0
    %v1466 = vadd.f32 %v1452, %v1463
    %v1467 = vtanh.pop %v1466
    %v1468 = vxor.u32 %v1466, 2147483648
    %v1469 = vmul.f32 %v1468, 1.442695
    %v1470 = vpow.pop %v1469
    %v1471 = vadd.f32 %v1470, 1.0
    %v1472 = vrcp.pop %v1471
    %v1473 = vmul.f32 %v1471, %v1472
    %v1474 = vsub.f32 1.0, %v1473
    %v1475 = vmul.f32 %v1472, %v1474
    %v1476 = vadd.f32 %v1472, %v1475
    %vm1477 = vweird.f32 %v1471
    %vm1478 = vweird.f32 %v1472
    %vm1479 = vmor %vm1477, %vm1478
    %v1480 = vsel %vm1479, %v1472, %v1476
    %v1481 = vand.u32 2147483647, %v1471
    %vm1482 = vcmp.eq.f32.partialorder %v1481, 8.507059e+37
    %v1483 = vand.u32 %v1471, 2147483648
    %v1484 = vor.u32 1.1754944e-38, %v1483
    %v1485 = vsel %vm1482, %v1484, %v1480
    %v1486 = vmul.f32 1.0, %v1485
    %v1487 = vsel %vm385, %v1467, %v1486
    %1488 = vrot.lane.b32.xlu0 %v1487, 96
    %v1489 = vpop.permute.xlu0 %1488
    %1490 = vrot.lane.b32.xlu0 %v1487, 64
    %v1491 = vpop.permute.xlu0 %1490
    %1492 = vrot.lane.b32.xlu0 %v1487, 32
    %v1493 = vpop.permute.xlu0 %1492
    %v1494 = vmul.f32 %v1489, %v1387
    %v1495 = vmul.f32 %v1487, %v1491
    %v1496 = vadd.f32 %v1494, %v1495
    %v1497 = vtanh.pop %v1496
    %v1498 = vmul.f32 %v1493, %v1497
    %v1499 = vpack.c.bf16 %v1498, %v1498
    %v1500 = vpack.c.bf16 %v1450, %v1450
    %1501 = vmatpush.bf16.msra.mxu0 %v569
    %1502 = vmatpush.bf16.msra.mxu0 %v568
    %1503 = vmatpush.bf16.msra.mxu0 %v567
    %1504 = vmatpush.bf16.msra.mxu0 %v566
    %1505 = vmatpush.bf16.msra.mxu0 %v565
    %1506 = vmatpush.bf16.msra.mxu0 %v564
    %1507 = vmatpush.bf16.msra.mxu0 %v563
    %1508 = vmatpush.bf16.msra.mxu0 %v562
    %1509 = vmatmul.bf16.gmra.mxu0 %v1500
    %v1510 = vpop.f32.mrf.mxu0
    %v1511 = vadd.f32 0.0, %v1510
    %v1512 = vpop.f32.mrf.mxu0
    %1513 = vdwg.mxu0
    %1514 = vmatpush.bf16.msra.mxu0 %v630
    %1515 = vmatpush.bf16.msra.mxu0 %v629
    %1516 = vmatpush.bf16.msra.mxu0 %v628
    %1517 = vmatpush.bf16.msra.mxu0 %v627
    %1518 = vmatpush.bf16.msra.mxu0 %v626
    %1519 = vmatpush.bf16.msra.mxu0 %v625
    %1520 = vmatpush.bf16.msra.mxu0 %v624
    %1521 = vmatpush.bf16.msra.mxu0 %v623
    %1522 = vmatmul.bf16.gmra.mxu0 %v1499
    %v1523 = vpop.f32.mrf.mxu0
    %v1524 = vadd.f32 %v1511, %v1523
    %v1525 = vpop.f32.mrf.mxu0
    %1526 = vdwg.mxu0
    %v1527 = vadd.f32 %v1524, %v653
    %v1528 = vtanh.pop %v1527
    %v1529 = vxor.u32 %v1527, 2147483648
    %v1530 = vmul.f32 %v1529, 1.442695
    %v1531 = vpow.pop %v1530
    %v1532 = vadd.f32 %v1531, 1.0
    %v1533 = vrcp.pop %v1532
    %v1534 = vmul.f32 %v1532, %v1533
    %v1535 = vsub.f32 1.0, %v1534
    %v1536 = vmul.f32 %v1533, %v1535
    %v1537 = vadd.f32 %v1533, %v1536
    %vm1538 = vweird.f32 %v1532
    %vm1539 = vweird.f32 %v1533
    %vm1540 = vmor %vm1538, %vm1539
    %v1541 = vsel %vm1540, %v1533, %v1537
    %v1542 = vand.u32 2147483647, %v1532
    %vm1543 = vcmp.eq.f32.partialorder %v1542, 8.507059e+37
    %v1544 = vand.u32 %v1532, 2147483648
    %v1545 = vor.u32 1.1754944e-38, %v1544
    %v1546 = vsel %vm1543, %v1545, %v1541
    %v1547 = vmul.f32 1.0, %v1546
    %v1548 = vsel %vm385, %v1528, %v1547
    %1549 = vrot.lane.b32.xlu0 %v1548, 96
    %v1550 = vpop.permute.xlu0 %1549
    %1551 = vrot.lane.b32.xlu0 %v1548, 64
    %v1552 = vpop.permute.xlu0 %1551
    %1553 = vrot.lane.b32.xlu0 %v1548, 32
    %v1554 = vpop.permute.xlu0 %1553
    %v1555 = vmul.f32 %v1550, %v1448
    %v1556 = vmul.f32 %v1548, %v1552
    %v1557 = vadd.f32 %v1555, %v1556
    %v1558 = vtanh.pop %v1557
    %v1559 = vmul.f32 %v1554, %v1558
    %s1560 = scalar_lea.vmem [#allocation2], 72
    %v1561 = vld [vmem:[%s1560] sm:$0xff]
    %1562 = vmatpush.bf16.msra.mxu0 %v442
    %1563 = vmatpush.bf16.msra.mxu0 %v441
    %1564 = vmatpush.bf16.msra.mxu0 %v440
    %1565 = vmatpush.bf16.msra.mxu0 %v439
    %1566 = vmatpush.bf16.msra.mxu0 %v438
    %1567 = vmatpush.bf16.msra.mxu0 %v437
    %1568 = vmatpush.bf16.msra.mxu0 %v436
    %1569 = vmatpush.bf16.msra.mxu0 %v435
    %1570 = vmatmul.bf16.gmra.mxu0 %v1499
    %v1571 = vpop.f32.mrf.mxu0
    %v1572 = vadd.f32 0.0, %v1571
    %v1573 = vpop.f32.mrf.mxu0
    %1574 = vdwg.mxu0
    %v1575 = vadd.f32 %v1561, %v1572
    %v1576 = vtanh.pop %v1575
    %v1577 = vxor.u32 %v1575, 2147483648
    %v1578 = vmul.f32 %v1577, 1.442695
    %v1579 = vpow.pop %v1578
    %v1580 = vadd.f32 %v1579, 1.0
    %v1581 = vrcp.pop %v1580
    %v1582 = vmul.f32 %v1580, %v1581
    %v1583 = vsub.f32 1.0, %v1582
    %v1584 = vmul.f32 %v1581, %v1583
    %v1585 = vadd.f32 %v1581, %v1584
    %vm1586 = vweird.f32 %v1580
    %vm1587 = vweird.f32 %v1581
    %vm1588 = vmor %vm1586, %vm1587
    %v1589 = vsel %vm1588, %v1581, %v1585
    %v1590 = vand.u32 2147483647, %v1580
    %vm1591 = vcmp.eq.f32.partialorder %v1590, 8.507059e+37
    %v1592 = vand.u32 %v1580, 2147483648
    %v1593 = vor.u32 1.1754944e-38, %v1592
    %v1594 = vsel %vm1591, %v1593, %v1589
    %v1595 = vmul.f32 1.0, %v1594
    %v1596 = vsel %vm385, %v1576, %v1595
    %1597 = vrot.lane.b32.xlu0 %v1596, 96
    %v1598 = vpop.permute.xlu0 %1597
    %1599 = vrot.lane.b32.xlu0 %v1596, 64
    %v1600 = vpop.permute.xlu0 %1599
    %1601 = vrot.lane.b32.xlu0 %v1596, 32
    %v1602 = vpop.permute.xlu0 %1601
    %v1603 = vmul.f32 %v1598, %v1496
    %v1604 = vmul.f32 %v1596, %v1600
    %v1605 = vadd.f32 %v1603, %v1604
    %v1606 = vtanh.pop %v1605
    %v1607 = vmul.f32 %v1602, %v1606
    %v1608 = vpack.c.bf16 %v1607, %v1607
    %v1609 = vpack.c.bf16 %v1559, %v1559
    %1610 = vmatpush.bf16.msra.mxu0 %v569
    %1611 = vmatpush.bf16.msra.mxu0 %v568
    %1612 = vmatpush.bf16.msra.mxu0 %v567
    %1613 = vmatpush.bf16.msra.mxu0 %v566
    %1614 = vmatpush.bf16.msra.mxu0 %v565
    %1615 = vmatpush.bf16.msra.mxu0 %v564
    %1616 = vmatpush.bf16.msra.mxu0 %v563
    %1617 = vmatpush.bf16.msra.mxu0 %v562
    %1618 = vmatmul.bf16.gmra.mxu0 %v1609
    %v1619 = vpop.f32.mrf.mxu0
    %v1620 = vadd.f32 0.0, %v1619
    %v1621 = vpop.f32.mrf.mxu0
    %1622 = vdwg.mxu0
    %1623 = vmatpush.bf16.msra.mxu0 %v630
    %1624 = vmatpush.bf16.msra.mxu0 %v629
    %1625 = vmatpush.bf16.msra.mxu0 %v628
    %1626 = vmatpush.bf16.msra.mxu0 %v627
    %1627 = vmatpush.bf16.msra.mxu0 %v626
    %1628 = vmatpush.bf16.msra.mxu0 %v625
    %1629 = vmatpush.bf16.msra.mxu0 %v624
    %1630 = vmatpush.bf16.msra.mxu0 %v623
    %1631 = vmatmul.bf16.gmra.mxu0 %v1608
    %v1632 = vpop.f32.mrf.mxu0
    %v1633 = vadd.f32 %v1620, %v1632
    %v1634 = vpop.f32.mrf.mxu0
    %1635 = vdwg.mxu0
    %v1636 = vadd.f32 %v1633, %v653
    %v1637 = vtanh.pop %v1636
    %v1638 = vxor.u32 %v1636, 2147483648
    %v1639 = vmul.f32 %v1638, 1.442695
    %v1640 = vpow.pop %v1639
    %v1641 = vadd.f32 %v1640, 1.0
    %v1642 = vrcp.pop %v1641
    %v1643 = vmul.f32 %v1641, %v1642
    %v1644 = vsub.f32 1.0, %v1643
    %v1645 = vmul.f32 %v1642, %v1644
    %v1646 = vadd.f32 %v1642, %v1645
    %vm1647 = vweird.f32 %v1641
    %vm1648 = vweird.f32 %v1642
    %vm1649 = vmor %vm1647, %vm1648
    %v1650 = vsel %vm1649, %v1642, %v1646
    %v1651 = vand.u32 2147483647, %v1641
    %vm1652 = vcmp.eq.f32.partialorder %v1651, 8.507059e+37
    %v1653 = vand.u32 %v1641, 2147483648
    %v1654 = vor.u32 1.1754944e-38, %v1653
    %v1655 = vsel %vm1652, %v1654, %v1650
    %v1656 = vmul.f32 1.0, %v1655
    %v1657 = vsel %vm385, %v1637, %v1656
    %1658 = vrot.lane.b32.xlu0 %v1657, 96
    %v1659 = vpop.permute.xlu0 %1658
    %1660 = vrot.lane.b32.xlu0 %v1657, 64
    %v1661 = vpop.permute.xlu0 %1660
    %1662 = vrot.lane.b32.xlu0 %v1657, 32
    %v1663 = vpop.permute.xlu0 %1662
    %v1664 = vmul.f32 %v1659, %v1557
    %v1665 = vmul.f32 %v1657, %v1661
    %v1666 = vadd.f32 %v1664, %v1665
    %v1667 = vtanh.pop %v1666
    %v1668 = vmul.f32 %v1663, %v1667
    %s1669 = scalar_lea.vmem [#allocation2], 80
    %v1670 = vld [vmem:[%s1669] sm:$0xff]
    %1671 = vmatpush.bf16.msra.mxu0 %v442
    %1672 = vmatpush.bf16.msra.mxu0 %v441
    %1673 = vmatpush.bf16.msra.mxu0 %v440
    %1674 = vmatpush.bf16.msra.mxu0 %v439
    %1675 = vmatpush.bf16.msra.mxu0 %v438
    %1676 = vmatpush.bf16.msra.mxu0 %v437
    %1677 = vmatpush.bf16.msra.mxu0 %v436
    %1678 = vmatpush.bf16.msra.mxu0 %v435
    %1679 = vmatmul.bf16.gmra.mxu0 %v1608
    %v1680 = vpop.f32.mrf.mxu0
    %v1681 = vadd.f32 0.0, %v1680
    %v1682 = vpop.f32.mrf.mxu0
    %1683 = vdwg.mxu0
    %v1684 = vadd.f32 %v1670, %v1681
    %v1685 = vtanh.pop %v1684
    %v1686 = vxor.u32 %v1684, 2147483648
    %v1687 = vmul.f32 %v1686, 1.442695
    %v1688 = vpow.pop %v1687
    %v1689 = vadd.f32 %v1688, 1.0
    %v1690 = vrcp.pop %v1689
    %v1691 = vmul.f32 %v1689, %v1690
    %v1692 = vsub.f32 1.0, %v1691
    %v1693 = vmul.f32 %v1690, %v1692
    %v1694 = vadd.f32 %v1690, %v1693
    %vm1695 = vweird.f32 %v1689
    %vm1696 = vweird.f32 %v1690
    %vm1697 = vmor %vm1695, %vm1696
    %v1698 = vsel %vm1697, %v1690, %v1694
    %v1699 = vand.u32 2147483647, %v1689
    %vm1700 = vcmp.eq.f32.partialorder %v1699, 8.507059e+37
    %v1701 = vand.u32 %v1689, 2147483648
    %v1702 = vor.u32 1.1754944e-38, %v1701
    %v1703 = vsel %vm1700, %v1702, %v1698
    %v1704 = vmul.f32 1.0, %v1703
    %v1705 = vsel %vm385, %v1685, %v1704
    %1706 = vrot.lane.b32.xlu0 %v1705, 96
    %v1707 = vpop.permute.xlu0 %1706
    %1708 = vrot.lane.b32.xlu0 %v1705, 64
    %v1709 = vpop.permute.xlu0 %1708
    %1710 = vrot.lane.b32.xlu0 %v1705, 32
    %v1711 = vpop.permute.xlu0 %1710
    %v1712 = vmul.f32 %v1707, %v1605
    %v1713 = vmul.f32 %v1705, %v1709
    %v1714 = vadd.f32 %v1712, %v1713
    %v1715 = vtanh.pop %v1714
    %v1716 = vmul.f32 %v1711, %v1715
    %v1717 = vpack.c.bf16 %v1716, %v1716
    %v1718 = vpack.c.bf16 %v1668, %v1668
    %1719 = vmatpush.bf16.msra.mxu0 %v569
    %1720 = vmatpush.bf16.msra.mxu0 %v568
    %1721 = vmatpush.bf16.msra.mxu0 %v567
    %1722 = vmatpush.bf16.msra.mxu0 %v566
    %1723 = vmatpush.bf16.msra.mxu0 %v565
    %1724 = vmatpush.bf16.msra.mxu0 %v564
    %1725 = vmatpush.bf16.msra.mxu0 %v563
    %1726 = vmatpush.bf16.msra.mxu0 %v562
    %1727 = vmatmul.bf16.gmra.mxu0 %v1718
    %v1728 = vpop.f32.mrf.mxu0
    %v1729 = vadd.f32 0.0, %v1728
    %v1730 = vpop.f32.mrf.mxu0
    %1731 = vdwg.mxu0
    %1732 = vmatpush.bf16.msra.mxu0 %v630
    %1733 = vmatpush.bf16.msra.mxu0 %v629
    %1734 = vmatpush.bf16.msra.mxu0 %v628
    %1735 = vmatpush.bf16.msra.mxu0 %v627
    %1736 = vmatpush.bf16.msra.mxu0 %v626
    %1737 = vmatpush.bf16.msra.mxu0 %v625
    %1738 = vmatpush.bf16.msra.mxu0 %v624
    %1739 = vmatpush.bf16.msra.mxu0 %v623
    %1740 = vmatmul.bf16.gmra.mxu0 %v1717
    %v1741 = vpop.f32.mrf.mxu0
    %v1742 = vadd.f32 %v1729, %v1741
    %v1743 = vpop.f32.mrf.mxu0
    %1744 = vdwg.mxu0
    %v1745 = vadd.f32 %v1742, %v653
    %v1746 = vtanh.pop %v1745
    %v1747 = vxor.u32 %v1745, 2147483648
    %v1748 = vmul.f32 %v1747, 1.442695
    %v1749 = vpow.pop %v1748
    %v1750 = vadd.f32 %v1749, 1.0
    %v1751 = vrcp.pop %v1750
    %v1752 = vmul.f32 %v1750, %v1751
    %v1753 = vsub.f32 1.0, %v1752
    %v1754 = vmul.f32 %v1751, %v1753
    %v1755 = vadd.f32 %v1751, %v1754
    %vm1756 = vweird.f32 %v1750
    %vm1757 = vweird.f32 %v1751
    %vm1758 = vmor %vm1756, %vm1757
    %v1759 = vsel %vm1758, %v1751, %v1755
    %v1760 = vand.u32 2147483647, %v1750
    %vm1761 = vcmp.eq.f32.partialorder %v1760, 8.507059e+37
    %v1762 = vand.u32 %v1750, 2147483648
    %v1763 = vor.u32 1.1754944e-38, %v1762
    %v1764 = vsel %vm1761, %v1763, %v1759
    %v1765 = vmul.f32 1.0, %v1764
    %v1766 = vsel %vm385, %v1746, %v1765
    %1767 = vrot.lane.b32.xlu0 %v1766, 96
    %v1768 = vpop.permute.xlu0 %1767
    %1769 = vrot.lane.b32.xlu0 %v1766, 64
    %v1770 = vpop.permute.xlu0 %1769
    %1771 = vrot.lane.b32.xlu0 %v1766, 32
    %v1772 = vpop.permute.xlu0 %1771
    %v1773 = vmul.f32 %v1768, %v1666
    %v1774 = vmul.f32 %v1766, %v1770
    %v1775 = vadd.f32 %v1773, %v1774
    %v1776 = vtanh.pop %v1775
    %v1777 = vmul.f32 %v1772, %v1776
    %s1778 = scalar_lea.vmem [#allocation2], 88
    %v1779 = vld [vmem:[%s1778] sm:$0xff]
    %1780 = vmatpush.bf16.msra.mxu0 %v442
    %1781 = vmatpush.bf16.msra.mxu0 %v441
    %1782 = vmatpush.bf16.msra.mxu0 %v440
    %1783 = vmatpush.bf16.msra.mxu0 %v439
    %1784 = vmatpush.bf16.msra.mxu0 %v438
    %1785 = vmatpush.bf16.msra.mxu0 %v437
    %1786 = vmatpush.bf16.msra.mxu0 %v436
    %1787 = vmatpush.bf16.msra.mxu0 %v435
    %1788 = vmatmul.bf16.gmra.mxu0 %v1717
    %v1789 = vpop.f32.mrf.mxu0
    %v1790 = vadd.f32 0.0, %v1789
    %v1791 = vpop.f32.mrf.mxu0
    %1792 = vdwg.mxu0
    %v1793 = vadd.f32 %v1779, %v1790
    %v1794 = vtanh.pop %v1793
    %v1795 = vxor.u32 %v1793, 2147483648
    %v1796 = vmul.f32 %v1795, 1.442695
    %v1797 = vpow.pop %v1796
    %v1798 = vadd.f32 %v1797, 1.0
    %v1799 = vrcp.pop %v1798
    %v1800 = vmul.f32 %v1798, %v1799
    %v1801 = vsub.f32 1.0, %v1800
    %v1802 = vmul.f32 %v1799, %v1801
    %v1803 = vadd.f32 %v1799, %v1802
    %vm1804 = vweird.f32 %v1798
    %vm1805 = vweird.f32 %v1799
    %vm1806 = vmor %vm1804, %vm1805
    %v1807 = vsel %vm1806, %v1799, %v1803
    %v1808 = vand.u32 2147483647, %v1798
    %vm1809 = vcmp.eq.f32.partialorder %v1808, 8.507059e+37
    %v1810 = vand.u32 %v1798, 2147483648
    %v1811 = vor.u32 1.1754944e-38, %v1810
    %v1812 = vsel %vm1809, %v1811, %v1807
    %v1813 = vmul.f32 1.0, %v1812
    %v1814 = vsel %vm385, %v1794, %v1813
    %1815 = vrot.lane.b32.xlu0 %v1814, 96
    %v1816 = vpop.permute.xlu0 %1815
    %1817 = vrot.lane.b32.xlu0 %v1814, 64
    %v1818 = vpop.permute.xlu0 %1817
    %1819 = vrot.lane.b32.xlu0 %v1814, 32
    %v1820 = vpop.permute.xlu0 %1819
    %v1821 = vmul.f32 %v1816, %v1714
    %v1822 = vmul.f32 %v1814, %v1818
    %v1823 = vadd.f32 %v1821, %v1822
    %v1824 = vtanh.pop %v1823
    %v1825 = vmul.f32 %v1820, %v1824
    %v1826 = vpack.c.bf16 %v1825, %v1825
    %v1827 = vpack.c.bf16 %v1777, %v1777
    %1828 = vmatpush.bf16.msra.mxu0 %v569
    %1829 = vmatpush.bf16.msra.mxu0 %v568
    %1830 = vmatpush.bf16.msra.mxu0 %v567
    %1831 = vmatpush.bf16.msra.mxu0 %v566
    %1832 = vmatpush.bf16.msra.mxu0 %v565
    %1833 = vmatpush.bf16.msra.mxu0 %v564
    %1834 = vmatpush.bf16.msra.mxu0 %v563
    %1835 = vmatpush.bf16.msra.mxu0 %v562
    %1836 = vmatmul.bf16.gmra.mxu0 %v1827
    %v1837 = vpop.f32.mrf.mxu0
    %v1838 = vadd.f32 0.0, %v1837
    %v1839 = vpop.f32.mrf.mxu0
    %1840 = vdwg.mxu0
    %1841 = vmatpush.bf16.msra.mxu0 %v630
    %1842 = vmatpush.bf16.msra.mxu0 %v629
    %1843 = vmatpush.bf16.msra.mxu0 %v628
    %1844 = vmatpush.bf16.msra.mxu0 %v627
    %1845 = vmatpush.bf16.msra.mxu0 %v626
    %1846 = vmatpush.bf16.msra.mxu0 %v625
    %1847 = vmatpush.bf16.msra.mxu0 %v624
    %1848 = vmatpush.bf16.msra.mxu0 %v623
    %1849 = vmatmul.bf16.gmra.mxu0 %v1826
    %v1850 = vpop.f32.mrf.mxu0
    %v1851 = vadd.f32 %v1838, %v1850
    %v1852 = vpop.f32.mrf.mxu0
    %1853 = vdwg.mxu0
    %v1854 = vadd.f32 %v1851, %v653
    %v1855 = vtanh.pop %v1854
    %v1856 = vxor.u32 %v1854, 2147483648
    %v1857 = vmul.f32 %v1856, 1.442695
    %v1858 = vpow.pop %v1857
    %v1859 = vadd.f32 %v1858, 1.0
    %v1860 = vrcp.pop %v1859
    %v1861 = vmul.f32 %v1859, %v1860
    %v1862 = vsub.f32 1.0, %v1861
    %v1863 = vmul.f32 %v1860, %v1862
    %v1864 = vadd.f32 %v1860, %v1863
    %vm1865 = vweird.f32 %v1859
    %vm1866 = vweird.f32 %v1860
    %vm1867 = vmor %vm1865, %vm1866
    %v1868 = vsel %vm1867, %v1860, %v1864
    %v1869 = vand.u32 2147483647, %v1859
    %vm1870 = vcmp.eq.f32.partialorder %v1869, 8.507059e+37
    %v1871 = vand.u32 %v1859, 2147483648
    %v1872 = vor.u32 1.1754944e-38, %v1871
    %v1873 = vsel %vm1870, %v1872, %v1868
    %v1874 = vmul.f32 1.0, %v1873
    %v1875 = vsel %vm385, %v1855, %v1874
    %1876 = vrot.lane.b32.xlu0 %v1875, 96
    %v1877 = vpop.permute.xlu0 %1876
    %1878 = vrot.lane.b32.xlu0 %v1875, 64
    %v1879 = vpop.permute.xlu0 %1878
    %1880 = vrot.lane.b32.xlu0 %v1875, 32
    %v1881 = vpop.permute.xlu0 %1880
    %v1882 = vmul.f32 %v1877, %v1775
    %v1883 = vmul.f32 %v1875, %v1879
    %v1884 = vadd.f32 %v1882, %v1883
    %v1885 = vtanh.pop %v1884
    %v1886 = vmul.f32 %v1881, %v1885
    %s1887 = scalar_lea.vmem [#allocation2], 96
    %v1888 = vld [vmem:[%s1887] sm:$0xff]
    %1889 = vmatpush.bf16.msra.mxu0 %v442
    %1890 = vmatpush.bf16.msra.mxu0 %v441
    %1891 = vmatpush.bf16.msra.mxu0 %v440
    %1892 = vmatpush.bf16.msra.mxu0 %v439
    %1893 = vmatpush.bf16.msra.mxu0 %v438
    %1894 = vmatpush.bf16.msra.mxu0 %v437
    %1895 = vmatpush.bf16.msra.mxu0 %v436
    %1896 = vmatpush.bf16.msra.mxu0 %v435
    %1897 = vmatmul.bf16.gmra.mxu0 %v1826
    %v1898 = vpop.f32.mrf.mxu0
    %v1899 = vadd.f32 0.0, %v1898
    %v1900 = vpop.f32.mrf.mxu0
    %1901 = vdwg.mxu0
    %v1902 = vadd.f32 %v1888, %v1899
    %v1903 = vtanh.pop %v1902
    %v1904 = vxor.u32 %v1902, 2147483648
    %v1905 = vmul.f32 %v1904, 1.442695
    %v1906 = vpow.pop %v1905
    %v1907 = vadd.f32 %v1906, 1.0
    %v1908 = vrcp.pop %v1907
    %v1909 = vmul.f32 %v1907, %v1908
    %v1910 = vsub.f32 1.0, %v1909
    %v1911 = vmul.f32 %v1908, %v1910
    %v1912 = vadd.f32 %v1908, %v1911
    %vm1913 = vweird.f32 %v1907
    %vm1914 = vweird.f32 %v1908
    %vm1915 = vmor %vm1913, %vm1914
    %v1916 = vsel %vm1915, %v1908, %v1912
    %v1917 = vand.u32 2147483647, %v1907
    %vm1918 = vcmp.eq.f32.partialorder %v1917, 8.507059e+37
    %v1919 = vand.u32 %v1907, 2147483648
    %v1920 = vor.u32 1.1754944e-38, %v1919
    %v1921 = vsel %vm1918, %v1920, %v1916
    %v1922 = vmul.f32 1.0, %v1921
    %v1923 = vsel %vm385, %v1903, %v1922
    %1924 = vrot.lane.b32.xlu0 %v1923, 96
    %v1925 = vpop.permute.xlu0 %1924
    %1926 = vrot.lane.b32.xlu0 %v1923, 64
    %v1927 = vpop.permute.xlu0 %1926
    %1928 = vrot.lane.b32.xlu0 %v1923, 32
    %v1929 = vpop.permute.xlu0 %1928
    %v1930 = vmul.f32 %v1925, %v1823
    %v1931 = vmul.f32 %v1923, %v1927
    %v1932 = vadd.f32 %v1930, %v1931
    %v1933 = vtanh.pop %v1932
    %v1934 = vmul.f32 %v1929, %v1933
    %v1935 = vpack.c.bf16 %v1934, %v1934
    %v1936 = vpack.c.bf16 %v1886, %v1886
    %1937 = vmatpush.bf16.msra.mxu0 %v569
    %1938 = vmatpush.bf16.msra.mxu0 %v568
    %1939 = vmatpush.bf16.msra.mxu0 %v567
    %1940 = vmatpush.bf16.msra.mxu0 %v566
    %1941 = vmatpush.bf16.msra.mxu0 %v565
    %1942 = vmatpush.bf16.msra.mxu0 %v564
    %1943 = vmatpush.bf16.msra.mxu0 %v563
    %1944 = vmatpush.bf16.msra.mxu0 %v562
    %1945 = vmatmul.bf16.gmra.mxu0 %v1936
    %v1946 = vpop.f32.mrf.mxu0
    %v1947 = vadd.f32 0.0, %v1946
    %v1948 = vpop.f32.mrf.mxu0
    %1949 = vdwg.mxu0
    %1950 = vmatpush.bf16.msra.mxu0 %v630
    %1951 = vmatpush.bf16.msra.mxu0 %v629
    %1952 = vmatpush.bf16.msra.mxu0 %v628
    %1953 = vmatpush.bf16.msra.mxu0 %v627
    %1954 = vmatpush.bf16.msra.mxu0 %v626
    %1955 = vmatpush.bf16.msra.mxu0 %v625
    %1956 = vmatpush.bf16.msra.mxu0 %v624
    %1957 = vmatpush.bf16.msra.mxu0 %v623
    %1958 = vmatmul.bf16.gmra.mxu0 %v1935
    %v1959 = vpop.f32.mrf.mxu0
    %v1960 = vadd.f32 %v1947, %v1959
    %v1961 = vpop.f32.mrf.mxu0
    %1962 = vdwg.mxu0
    %v1963 = vadd.f32 %v1960, %v653
    %v1964 = vtanh.pop %v1963
    %v1965 = vxor.u32 %v1963, 2147483648
    %v1966 = vmul.f32 %v1965, 1.442695
    %v1967 = vpow.pop %v1966
    %v1968 = vadd.f32 %v1967, 1.0
    %v1969 = vrcp.pop %v1968
    %v1970 = vmul.f32 %v1968, %v1969
    %v1971 = vsub.f32 1.0, %v1970
    %v1972 = vmul.f32 %v1969, %v1971
    %v1973 = vadd.f32 %v1969, %v1972
    %vm1974 = vweird.f32 %v1968
    %vm1975 = vweird.f32 %v1969
    %vm1976 = vmor %vm1974, %vm1975
    %v1977 = vsel %vm1976, %v1969, %v1973
    %v1978 = vand.u32 2147483647, %v1968
    %vm1979 = vcmp.eq.f32.partialorder %v1978, 8.507059e+37
    %v1980 = vand.u32 %v1968, 2147483648
    %v1981 = vor.u32 1.1754944e-38, %v1980
    %v1982 = vsel %vm1979, %v1981, %v1977
    %v1983 = vmul.f32 1.0, %v1982
    %v1984 = vsel %vm385, %v1964, %v1983
    %1985 = vrot.lane.b32.xlu0 %v1984, 96
    %v1986 = vpop.permute.xlu0 %1985
    %1987 = vrot.lane.b32.xlu0 %v1984, 64
    %v1988 = vpop.permute.xlu0 %1987
    %1989 = vrot.lane.b32.xlu0 %v1984, 32
    %v1990 = vpop.permute.xlu0 %1989
    %v1991 = vmul.f32 %v1986, %v1884
    %v1992 = vmul.f32 %v1984, %v1988
    %v1993 = vadd.f32 %v1991, %v1992
    %v1994 = vtanh.pop %v1993
    %v1995 = vmul.f32 %v1990, %v1994
    %s1996 = scalar_lea.vmem [#allocation2], 104
    %v1997 = vld [vmem:[%s1996] sm:$0xff]
    %1998 = vmatpush.bf16.msra.mxu0 %v442
    %1999 = vmatpush.bf16.msra.mxu0 %v441
    %2000 = vmatpush.bf16.msra.mxu0 %v440
    %2001 = vmatpush.bf16.msra.mxu0 %v439
    %2002 = vmatpush.bf16.msra.mxu0 %v438
    %2003 = vmatpush.bf16.msra.mxu0 %v437
    %2004 = vmatpush.bf16.msra.mxu0 %v436
    %2005 = vmatpush.bf16.msra.mxu0 %v435
    %2006 = vmatmul.bf16.gmra.mxu0 %v1935
    %v2007 = vpop.f32.mrf.mxu0
    %v2008 = vadd.f32 0.0, %v2007
    %v2009 = vpop.f32.mrf.mxu0
    %2010 = vdwg.mxu0
    %v2011 = vadd.f32 %v1997, %v2008
    %v2012 = vtanh.pop %v2011
    %v2013 = vxor.u32 %v2011, 2147483648
    %v2014 = vmul.f32 %v2013, 1.442695
    %v2015 = vpow.pop %v2014
    %v2016 = vadd.f32 %v2015, 1.0
    %v2017 = vrcp.pop %v2016
    %v2018 = vmul.f32 %v2016, %v2017
    %v2019 = vsub.f32 1.0, %v2018
    %v2020 = vmul.f32 %v2017, %v2019
    %v2021 = vadd.f32 %v2017, %v2020
    %vm2022 = vweird.f32 %v2016
    %vm2023 = vweird.f32 %v2017
    %vm2024 = vmor %vm2022, %vm2023
    %v2025 = vsel %vm2024, %v2017, %v2021
    %v2026 = vand.u32 2147483647, %v2016
    %vm2027 = vcmp.eq.f32.partialorder %v2026, 8.507059e+37
    %v2028 = vand.u32 %v2016, 2147483648
    %v2029 = vor.u32 1.1754944e-38, %v2028
    %v2030 = vsel %vm2027, %v2029, %v2025
    %v2031 = vmul.f32 1.0, %v2030
    %v2032 = vsel %vm385, %v2012, %v2031
    %2033 = vrot.lane.b32.xlu0 %v2032, 96
    %v2034 = vpop.permute.xlu0 %2033
    %2035 = vrot.lane.b32.xlu0 %v2032, 64
    %v2036 = vpop.permute.xlu0 %2035
    %2037 = vrot.lane.b32.xlu0 %v2032, 32
    %v2038 = vpop.permute.xlu0 %2037
    %v2039 = vmul.f32 %v2034, %v1932
    %v2040 = vmul.f32 %v2032, %v2036
    %v2041 = vadd.f32 %v2039, %v2040
    %v2042 = vtanh.pop %v2041
    %v2043 = vmul.f32 %v2038, %v2042
    %v2044 = vpack.c.bf16 %v2043, %v2043
    %v2045 = vpack.c.bf16 %v1995, %v1995
    %2046 = vmatpush.bf16.msra.mxu0 %v569
    %2047 = vmatpush.bf16.msra.mxu0 %v568
    %2048 = vmatpush.bf16.msra.mxu0 %v567
    %2049 = vmatpush.bf16.msra.mxu0 %v566
    %2050 = vmatpush.bf16.msra.mxu0 %v565
    %2051 = vmatpush.bf16.msra.mxu0 %v564
    %2052 = vmatpush.bf16.msra.mxu0 %v563
    %2053 = vmatpush.bf16.msra.mxu0 %v562
    %2054 = vmatmul.bf16.gmra.mxu0 %v2045
    %v2055 = vpop.f32.mrf.mxu0
    %v2056 = vadd.f32 0.0, %v2055
    %v2057 = vpop.f32.mrf.mxu0
    %2058 = vdwg.mxu0
    %2059 = vmatpush.bf16.msra.mxu0 %v630
    %2060 = vmatpush.bf16.msra.mxu0 %v629
    %2061 = vmatpush.bf16.msra.mxu0 %v628
    %2062 = vmatpush.bf16.msra.mxu0 %v627
    %2063 = vmatpush.bf16.msra.mxu0 %v626
    %2064 = vmatpush.bf16.msra.mxu0 %v625
    %2065 = vmatpush.bf16.msra.mxu0 %v624
    %2066 = vmatpush.bf16.msra.mxu0 %v623
    %2067 = vmatmul.bf16.gmra.mxu0 %v2044
    %v2068 = vpop.f32.mrf.mxu0
    %v2069 = vadd.f32 %v2056, %v2068
    %v2070 = vpop.f32.mrf.mxu0
    %2071 = vdwg.mxu0
    %v2072 = vadd.f32 %v2069, %v653
    %v2073 = vtanh.pop %v2072
    %v2074 = vxor.u32 %v2072, 2147483648
    %v2075 = vmul.f32 %v2074, 1.442695
    %v2076 = vpow.pop %v2075
    %v2077 = vadd.f32 %v2076, 1.0
    %v2078 = vrcp.pop %v2077
    %v2079 = vmul.f32 %v2077, %v2078
    %v2080 = vsub.f32 1.0, %v2079
    %v2081 = vmul.f32 %v2078, %v2080
    %v2082 = vadd.f32 %v2078, %v2081
    %vm2083 = vweird.f32 %v2077
    %vm2084 = vweird.f32 %v2078
    %vm2085 = vmor %vm2083, %vm2084
    %v2086 = vsel %vm2085, %v2078, %v2082
    %v2087 = vand.u32 2147483647, %v2077
    %vm2088 = vcmp.eq.f32.partialorder %v2087, 8.507059e+37
    %v2089 = vand.u32 %v2077, 2147483648
    %v2090 = vor.u32 1.1754944e-38, %v2089
    %v2091 = vsel %vm2088, %v2090, %v2086
    %v2092 = vmul.f32 1.0, %v2091
    %v2093 = vsel %vm385, %v2073, %v2092
    %2094 = vrot.lane.b32.xlu0 %v2093, 96
    %v2095 = vpop.permute.xlu0 %2094
    %2096 = vrot.lane.b32.xlu0 %v2093, 64
    %v2097 = vpop.permute.xlu0 %2096
    %2098 = vrot.lane.b32.xlu0 %v2093, 32
    %v2099 = vpop.permute.xlu0 %2098
    %v2100 = vmul.f32 %v2095, %v1993
    %v2101 = vmul.f32 %v2093, %v2097
    %v2102 = vadd.f32 %v2100, %v2101
    %v2103 = vtanh.pop %v2102
    %v2104 = vmul.f32 %v2099, %v2103
    %s2105 = scalar_lea.vmem [#allocation2], 112
    %v2106 = vld [vmem:[%s2105] sm:$0xff]
    %2107 = vmatpush.bf16.msra.mxu0 %v442
    %2108 = vmatpush.bf16.msra.mxu0 %v441
    %2109 = vmatpush.bf16.msra.mxu0 %v440
    %2110 = vmatpush.bf16.msra.mxu0 %v439
    %2111 = vmatpush.bf16.msra.mxu0 %v438
    %2112 = vmatpush.bf16.msra.mxu0 %v437
    %2113 = vmatpush.bf16.msra.mxu0 %v436
    %2114 = vmatpush.bf16.msra.mxu0 %v435
    %2115 = vmatmul.bf16.gmra.mxu0 %v2044
    %v2116 = vpop.f32.mrf.mxu0
    %v2117 = vadd.f32 0.0, %v2116
    %v2118 = vpop.f32.mrf.mxu0
    %2119 = vdwg.mxu0
    %v2120 = vadd.f32 %v2106, %v2117
    %v2121 = vtanh.pop %v2120
    %v2122 = vxor.u32 %v2120, 2147483648
    %v2123 = vmul.f32 %v2122, 1.442695
    %v2124 = vpow.pop %v2123
    %v2125 = vadd.f32 %v2124, 1.0
    %v2126 = vrcp.pop %v2125
    %v2127 = vmul.f32 %v2125, %v2126
    %v2128 = vsub.f32 1.0, %v2127
    %v2129 = vmul.f32 %v2126, %v2128
    %v2130 = vadd.f32 %v2126, %v2129
    %vm2131 = vweird.f32 %v2125
    %vm2132 = vweird.f32 %v2126
    %vm2133 = vmor %vm2131, %vm2132
    %v2134 = vsel %vm2133, %v2126, %v2130
    %v2135 = vand.u32 2147483647, %v2125
    %vm2136 = vcmp.eq.f32.partialorder %v2135, 8.507059e+37
    %v2137 = vand.u32 %v2125, 2147483648
    %v2138 = vor.u32 1.1754944e-38, %v2137
    %v2139 = vsel %vm2136, %v2138, %v2134
    %v2140 = vmul.f32 1.0, %v2139
    %v2141 = vsel %vm385, %v2121, %v2140
    %2142 = vrot.lane.b32.xlu0 %v2141, 96
    %v2143 = vpop.permute.xlu0 %2142
    %2144 = vrot.lane.b32.xlu0 %v2141, 64
    %v2145 = vpop.permute.xlu0 %2144
    %2146 = vrot.lane.b32.xlu0 %v2141, 32
    %v2147 = vpop.permute.xlu0 %2146
    %v2148 = vmul.f32 %v2143, %v2041
    %v2149 = vmul.f32 %v2141, %v2145
    %v2150 = vadd.f32 %v2148, %v2149
    %v2151 = vtanh.pop %v2150
    %v2152 = vmul.f32 %v2147, %v2151
    %v2153 = vpack.c.bf16 %v2152, %v2152
    %v2154 = vpack.c.bf16 %v2104, %v2104
    %2155 = vmatpush.bf16.msra.mxu0 %v569
    %2156 = vmatpush.bf16.msra.mxu0 %v568
    %2157 = vmatpush.bf16.msra.mxu0 %v567
    %2158 = vmatpush.bf16.msra.mxu0 %v566
    %2159 = vmatpush.bf16.msra.mxu0 %v565
    %2160 = vmatpush.bf16.msra.mxu0 %v564
    %2161 = vmatpush.bf16.msra.mxu0 %v563
    %2162 = vmatpush.bf16.msra.mxu0 %v562
    %2163 = vmatmul.bf16.gmra.mxu0 %v2154
    %v2164 = vpop.f32.mrf.mxu0
    %v2165 = vadd.f32 0.0, %v2164
    %v2166 = vpop.f32.mrf.mxu0
    %2167 = vdwg.mxu0
    %2168 = vmatpush.bf16.msra.mxu0 %v630
    %2169 = vmatpush.bf16.msra.mxu0 %v629
    %2170 = vmatpush.bf16.msra.mxu0 %v628
    %2171 = vmatpush.bf16.msra.mxu0 %v627
    %2172 = vmatpush.bf16.msra.mxu0 %v626
    %2173 = vmatpush.bf16.msra.mxu0 %v625
    %2174 = vmatpush.bf16.msra.mxu0 %v624
    %2175 = vmatpush.bf16.msra.mxu0 %v623
    %2176 = vmatmul.bf16.gmra.mxu0 %v2153
    %v2177 = vpop.f32.mrf.mxu0
    %v2178 = vadd.f32 %v2165, %v2177
    %v2179 = vpop.f32.mrf.mxu0
    %2180 = vdwg.mxu0
    %v2181 = vadd.f32 %v2178, %v653
    %v2182 = vtanh.pop %v2181
    %v2183 = vxor.u32 %v2181, 2147483648
    %v2184 = vmul.f32 %v2183, 1.442695
    %v2185 = vpow.pop %v2184
    %v2186 = vadd.f32 %v2185, 1.0
    %v2187 = vrcp.pop %v2186
    %v2188 = vmul.f32 %v2186, %v2187
    %v2189 = vsub.f32 1.0, %v2188
    %v2190 = vmul.f32 %v2187, %v2189
    %v2191 = vadd.f32 %v2187, %v2190
    %vm2192 = vweird.f32 %v2186
    %vm2193 = vweird.f32 %v2187
    %vm2194 = vmor %vm2192, %vm2193
    %v2195 = vsel %vm2194, %v2187, %v2191
    %v2196 = vand.u32 2147483647, %v2186
    %vm2197 = vcmp.eq.f32.partialorder %v2196, 8.507059e+37
    %v2198 = vand.u32 %v2186, 2147483648
    %v2199 = vor.u32 1.1754944e-38, %v2198
    %v2200 = vsel %vm2197, %v2199, %v2195
    %v2201 = vmul.f32 1.0, %v2200
    %v2202 = vsel %vm385, %v2182, %v2201
    %2203 = vrot.lane.b32.xlu0 %v2202, 96
    %v2204 = vpop.permute.xlu0 %2203
    %2205 = vrot.lane.b32.xlu0 %v2202, 64
    %v2206 = vpop.permute.xlu0 %2205
    %2207 = vrot.lane.b32.xlu0 %v2202, 32
    %v2208 = vpop.permute.xlu0 %2207
    %v2209 = vmul.f32 %v2204, %v2102
    %v2210 = vmul.f32 %v2202, %v2206
    %v2211 = vadd.f32 %v2209, %v2210
    %v2212 = vtanh.pop %v2211
    %v2213 = vmul.f32 %v2208, %v2212
    %s2214 = scalar_lea.vmem [#allocation2], 120
    %v2215 = vld [vmem:[%s2214] sm:$0xff]
    %2216 = vmatpush.bf16.msra.mxu0 %v442
    %2217 = vmatpush.bf16.msra.mxu0 %v441
    %2218 = vmatpush.bf16.msra.mxu0 %v440
    %2219 = vmatpush.bf16.msra.mxu0 %v439
    %2220 = vmatpush.bf16.msra.mxu0 %v438
    %2221 = vmatpush.bf16.msra.mxu0 %v437
    %2222 = vmatpush.bf16.msra.mxu0 %v436
    %2223 = vmatpush.bf16.msra.mxu0 %v435
    %2224 = vmatmul.bf16.gmra.mxu0 %v2153
    %v2225 = vpop.f32.mrf.mxu0
    %v2226 = vadd.f32 0.0, %v2225
    %v2227 = vpop.f32.mrf.mxu0
    %2228 = vdwg.mxu0
    %v2229 = vadd.f32 %v2215, %v2226
    %v2230 = vtanh.pop %v2229
    %v2231 = vxor.u32 %v2229, 2147483648
    %v2232 = vmul.f32 %v2231, 1.442695
    %v2233 = vpow.pop %v2232
    %v2234 = vadd.f32 %v2233, 1.0
    %v2235 = vrcp.pop %v2234
    %v2236 = vmul.f32 %v2234, %v2235
    %v2237 = vsub.f32 1.0, %v2236
    %v2238 = vmul.f32 %v2235, %v2237
    %v2239 = vadd.f32 %v2235, %v2238
    %vm2240 = vweird.f32 %v2234
    %vm2241 = vweird.f32 %v2235
    %vm2242 = vmor %vm2240, %vm2241
    %v2243 = vsel %vm2242, %v2235, %v2239
    %v2244 = vand.u32 2147483647, %v2234
    %vm2245 = vcmp.eq.f32.partialorder %v2244, 8.507059e+37
    %v2246 = vand.u32 %v2234, 2147483648
    %v2247 = vor.u32 1.1754944e-38, %v2246
    %v2248 = vsel %vm2245, %v2247, %v2243
    %v2249 = vmul.f32 1.0, %v2248
    %v2250 = vsel %vm385, %v2230, %v2249
    %2251 = vrot.lane.b32.xlu0 %v2250, 96
    %v2252 = vpop.permute.xlu0 %2251
    %2253 = vrot.lane.b32.xlu0 %v2250, 64
    %v2254 = vpop.permute.xlu0 %2253
    %2255 = vrot.lane.b32.xlu0 %v2250, 32
    %v2256 = vpop.permute.xlu0 %2255
    %v2257 = vmul.f32 %v2252, %v2150
    %v2258 = vmul.f32 %v2250, %v2254
    %v2259 = vadd.f32 %v2257, %v2258
    %v2260 = vtanh.pop %v2259
    %v2261 = vmul.f32 %v2256, %v2260
    %v2262 = vpack.c.bf16 %v2261, %v2261
    %v2263 = vpack.c.bf16 %v2213, %v2213
    %2264 = vmatpush.bf16.msra.mxu0 %v569
    %2265 = vmatpush.bf16.msra.mxu0 %v568
    %2266 = vmatpush.bf16.msra.mxu0 %v567
    %2267 = vmatpush.bf16.msra.mxu0 %v566
    %2268 = vmatpush.bf16.msra.mxu0 %v565
    %2269 = vmatpush.bf16.msra.mxu0 %v564
    %2270 = vmatpush.bf16.msra.mxu0 %v563
    %2271 = vmatpush.bf16.msra.mxu0 %v562
    %2272 = vmatmul.bf16.gmra.mxu0 %v2263
    %v2273 = vpop.f32.mrf.mxu0
    %v2274 = vadd.f32 0.0, %v2273
    %v2275 = vpop.f32.mrf.mxu0
    %2276 = vdwg.mxu0
    %2277 = vmatpush.bf16.msra.mxu0 %v630
    %2278 = vmatpush.bf16.msra.mxu0 %v629
    %2279 = vmatpush.bf16.msra.mxu0 %v628
    %2280 = vmatpush.bf16.msra.mxu0 %v627
    %2281 = vmatpush.bf16.msra.mxu0 %v626
    %2282 = vmatpush.bf16.msra.mxu0 %v625
    %2283 = vmatpush.bf16.msra.mxu0 %v624
    %2284 = vmatpush.bf16.msra.mxu0 %v623
    %2285 = vmatmul.bf16.gmra.mxu0 %v2262
    %v2286 = vpop.f32.mrf.mxu0
    %v2287 = vadd.f32 %v2274, %v2286
    %v2288 = vpop.f32.mrf.mxu0
    %2289 = vdwg.mxu0
    %v2290 = vadd.f32 %v2287, %v653
    %v2291 = vtanh.pop %v2290
    %v2292 = vxor.u32 %v2290, 2147483648
    %v2293 = vmul.f32 %v2292, 1.442695
    %v2294 = vpow.pop %v2293
    %v2295 = vadd.f32 %v2294, 1.0
    %v2296 = vrcp.pop %v2295
    %v2297 = vmul.f32 %v2295, %v2296
    %v2298 = vsub.f32 1.0, %v2297
    %v2299 = vmul.f32 %v2296, %v2298
    %v2300 = vadd.f32 %v2296, %v2299
    %vm2301 = vweird.f32 %v2295
    %vm2302 = vweird.f32 %v2296
    %vm2303 = vmor %vm2301, %vm2302
    %v2304 = vsel %vm2303, %v2296, %v2300
    %v2305 = vand.u32 2147483647, %v2295
    %vm2306 = vcmp.eq.f32.partialorder %v2305, 8.507059e+37
    %v2307 = vand.u32 %v2295, 2147483648
    %v2308 = vor.u32 1.1754944e-38, %v2307
    %v2309 = vsel %vm2306, %v2308, %v2304
    %v2310 = vmul.f32 1.0, %v2309
    %v2311 = vsel %vm385, %v2291, %v2310
    %2312 = vrot.lane.b32.xlu0 %v2311, 96
    %v2313 = vpop.permute.xlu0 %2312
    %2314 = vrot.lane.b32.xlu0 %v2311, 64
    %v2315 = vpop.permute.xlu0 %2314
    %2316 = vrot.lane.b32.xlu0 %v2311, 32
    %v2317 = vpop.permute.xlu0 %2316
    %v2318 = vmul.f32 %v2313, %v2211
    %v2319 = vmul.f32 %v2311, %v2315
    %v2320 = vadd.f32 %v2318, %v2319
    %v2321 = vtanh.pop %v2320
    %v2322 = vmul.f32 %v2317, %v2321
    %s2323 = scalar_lea.vmem [#allocation2], 128
    %v2324 = vld [vmem:[%s2323] sm:$0xff]
    %2325 = vmatpush.bf16.msra.mxu0 %v442
    %2326 = vmatpush.bf16.msra.mxu0 %v441
    %2327 = vmatpush.bf16.msra.mxu0 %v440
    %2328 = vmatpush.bf16.msra.mxu0 %v439
    %2329 = vmatpush.bf16.msra.mxu0 %v438
    %2330 = vmatpush.bf16.msra.mxu0 %v437
    %2331 = vmatpush.bf16.msra.mxu0 %v436
    %2332 = vmatpush.bf16.msra.mxu0 %v435
    %2333 = vmatmul.bf16.gmra.mxu0 %v2262
    %v2334 = vpop.f32.mrf.mxu0
    %v2335 = vadd.f32 0.0, %v2334
    %v2336 = vpop.f32.mrf.mxu0
    %2337 = vdwg.mxu0
    %v2338 = vadd.f32 %v2324, %v2335
    %v2339 = vtanh.pop %v2338
    %v2340 = vxor.u32 %v2338, 2147483648
    %v2341 = vmul.f32 %v2340, 1.442695
    %v2342 = vpow.pop %v2341
    %v2343 = vadd.f32 %v2342, 1.0
    %v2344 = vrcp.pop %v2343
    %v2345 = vmul.f32 %v2343, %v2344
    %v2346 = vsub.f32 1.0, %v2345
    %v2347 = vmul.f32 %v2344, %v2346
    %v2348 = vadd.f32 %v2344, %v2347
    %vm2349 = vweird.f32 %v2343
    %vm2350 = vweird.f32 %v2344
    %vm2351 = vmor %vm2349, %vm2350
    %v2352 = vsel %vm2351, %v2344, %v2348
    %v2353 = vand.u32 2147483647, %v2343
    %vm2354 = vcmp.eq.f32.partialorder %v2353, 8.507059e+37
    %v2355 = vand.u32 %v2343, 2147483648
    %v2356 = vor.u32 1.1754944e-38, %v2355
    %v2357 = vsel %vm2354, %v2356, %v2352
    %v2358 = vmul.f32 1.0, %v2357
    %v2359 = vsel %vm385, %v2339, %v2358
    %2360 = vrot.lane.b32.xlu0 %v2359, 96
    %v2361 = vpop.permute.xlu0 %2360
    %2362 = vrot.lane.b32.xlu0 %v2359, 64
    %v2363 = vpop.permute.xlu0 %2362
    %2364 = vrot.lane.b32.xlu0 %v2359, 32
    %v2365 = vpop.permute.xlu0 %2364
    %v2366 = vmul.f32 %v2361, %v2259
    %v2367 = vmul.f32 %v2359, %v2363
    %v2368 = vadd.f32 %v2366, %v2367
    %v2369 = vtanh.pop %v2368
    %v2370 = vmul.f32 %v2365, %v2369
    %v2371 = vpack.c.bf16 %v2370, %v2370
    %v2372 = vpack.c.bf16 %v2322, %v2322
    %2373 = vmatpush.bf16.msra.mxu0 %v569
    %2374 = vmatpush.bf16.msra.mxu0 %v568
    %2375 = vmatpush.bf16.msra.mxu0 %v567
    %2376 = vmatpush.bf16.msra.mxu0 %v566
    %2377 = vmatpush.bf16.msra.mxu0 %v565
    %2378 = vmatpush.bf16.msra.mxu0 %v564
    %2379 = vmatpush.bf16.msra.mxu0 %v563
    %2380 = vmatpush.bf16.msra.mxu0 %v562
    %2381 = vmatmul.bf16.gmra.mxu0 %v2372
    %v2382 = vpop.f32.mrf.mxu0
    %v2383 = vadd.f32 0.0, %v2382
    %v2384 = vpop.f32.mrf.mxu0
    %2385 = vdwg.mxu0
    %2386 = vmatpush.bf16.msra.mxu0 %v630
    %2387 = vmatpush.bf16.msra.mxu0 %v629
    %2388 = vmatpush.bf16.msra.mxu0 %v628
    %2389 = vmatpush.bf16.msra.mxu0 %v627
    %2390 = vmatpush.bf16.msra.mxu0 %v626
    %2391 = vmatpush.bf16.msra.mxu0 %v625
    %2392 = vmatpush.bf16.msra.mxu0 %v624
    %2393 = vmatpush.bf16.msra.mxu0 %v623
    %2394 = vmatmul.bf16.gmra.mxu0 %v2371
    %v2395 = vpop.f32.mrf.mxu0
    %v2396 = vadd.f32 %v2383, %v2395
    %v2397 = vpop.f32.mrf.mxu0
    %2398 = vdwg.mxu0
    %v2399 = vadd.f32 %v2396, %v653
    %v2400 = vtanh.pop %v2399
    %v2401 = vxor.u32 %v2399, 2147483648
    %v2402 = vmul.f32 %v2401, 1.442695
    %v2403 = vpow.pop %v2402
    %v2404 = vadd.f32 %v2403, 1.0
    %v2405 = vrcp.pop %v2404
    %v2406 = vmul.f32 %v2404, %v2405
    %v2407 = vsub.f32 1.0, %v2406
    %v2408 = vmul.f32 %v2405, %v2407
    %v2409 = vadd.f32 %v2405, %v2408
    %vm2410 = vweird.f32 %v2404
    %vm2411 = vweird.f32 %v2405
    %vm2412 = vmor %vm2410, %vm2411
    %v2413 = vsel %vm2412, %v2405, %v2409
    %v2414 = vand.u32 2147483647, %v2404
    %vm2415 = vcmp.eq.f32.partialorder %v2414, 8.507059e+37
    %v2416 = vand.u32 %v2404, 2147483648
    %v2417 = vor.u32 1.1754944e-38, %v2416
    %v2418 = vsel %vm2415, %v2417, %v2413
    %v2419 = vmul.f32 1.0, %v2418
    %v2420 = vsel %vm385, %v2400, %v2419
    %2421 = vrot.lane.b32.xlu0 %v2420, 96
    %v2422 = vpop.permute.xlu0 %2421
    %2423 = vrot.lane.b32.xlu0 %v2420, 64
    %v2424 = vpop.permute.xlu0 %2423
    %2425 = vrot.lane.b32.xlu0 %v2420, 32
    %v2426 = vpop.permute.xlu0 %2425
    %v2427 = vmul.f32 %v2422, %v2320
    %v2428 = vmul.f32 %v2420, %v2424
    %v2429 = vadd.f32 %v2427, %v2428
    %v2430 = vtanh.pop %v2429
    %v2431 = vmul.f32 %v2426, %v2430
    %s2432 = scalar_lea.vmem [#allocation2], 136
    %v2433 = vld [vmem:[%s2432] sm:$0xff]
    %2434 = vmatpush.bf16.msra.mxu0 %v442
    %2435 = vmatpush.bf16.msra.mxu0 %v441
    %2436 = vmatpush.bf16.msra.mxu0 %v440
    %2437 = vmatpush.bf16.msra.mxu0 %v439
    %2438 = vmatpush.bf16.msra.mxu0 %v438
    %2439 = vmatpush.bf16.msra.mxu0 %v437
    %2440 = vmatpush.bf16.msra.mxu0 %v436
    %2441 = vmatpush.bf16.msra.mxu0 %v435
    %2442 = vmatmul.bf16.gmra.mxu0 %v2371
    %v2443 = vpop.f32.mrf.mxu0
    %v2444 = vadd.f32 0.0, %v2443
    %v2445 = vpop.f32.mrf.mxu0
    %2446 = vdwg.mxu0
    %v2447 = vadd.f32 %v2433, %v2444
    %v2448 = vtanh.pop %v2447
    %v2449 = vxor.u32 %v2447, 2147483648
    %v2450 = vmul.f32 %v2449, 1.442695
    %v2451 = vpow.pop %v2450
    %v2452 = vadd.f32 %v2451, 1.0
    %v2453 = vrcp.pop %v2452
    %v2454 = vmul.f32 %v2452, %v2453
    %v2455 = vsub.f32 1.0, %v2454
    %v2456 = vmul.f32 %v2453, %v2455
    %v2457 = vadd.f32 %v2453, %v2456
    %vm2458 = vweird.f32 %v2452
    %vm2459 = vweird.f32 %v2453
    %vm2460 = vmor %vm2458, %vm2459
    %v2461 = vsel %vm2460, %v2453, %v2457
    %v2462 = vand.u32 2147483647, %v2452
    %vm2463 = vcmp.eq.f32.partialorder %v2462, 8.507059e+37
    %v2464 = vand.u32 %v2452, 2147483648
    %v2465 = vor.u32 1.1754944e-38, %v2464
    %v2466 = vsel %vm2463, %v2465, %v2461
    %v2467 = vmul.f32 1.0, %v2466
    %v2468 = vsel %vm385, %v2448, %v2467
    %2469 = vrot.lane.b32.xlu0 %v2468, 96
    %v2470 = vpop.permute.xlu0 %2469
    %2471 = vrot.lane.b32.xlu0 %v2468, 64
    %v2472 = vpop.permute.xlu0 %2471
    %2473 = vrot.lane.b32.xlu0 %v2468, 32
    %v2474 = vpop.permute.xlu0 %2473
    %v2475 = vmul.f32 %v2470, %v2368
    %v2476 = vmul.f32 %v2468, %v2472
    %v2477 = vadd.f32 %v2475, %v2476
    %v2478 = vtanh.pop %v2477
    %v2479 = vmul.f32 %v2474, %v2478
    %v2480 = vpack.c.bf16 %v2479, %v2479
    %v2481 = vpack.c.bf16 %v2431, %v2431
    %2482 = vmatpush.bf16.msra.mxu0 %v569
    %2483 = vmatpush.bf16.msra.mxu0 %v568
    %2484 = vmatpush.bf16.msra.mxu0 %v567
    %2485 = vmatpush.bf16.msra.mxu0 %v566
    %2486 = vmatpush.bf16.msra.mxu0 %v565
    %2487 = vmatpush.bf16.msra.mxu0 %v564
    %2488 = vmatpush.bf16.msra.mxu0 %v563
    %2489 = vmatpush.bf16.msra.mxu0 %v562
    %2490 = vmatmul.bf16.gmra.mxu0 %v2481
    %v2491 = vpop.f32.mrf.mxu0
    %v2492 = vadd.f32 0.0, %v2491
    %v2493 = vpop.f32.mrf.mxu0
    %2494 = vdwg.mxu0
    %2495 = vmatpush.bf16.msra.mxu0 %v630
    %2496 = vmatpush.bf16.msra.mxu0 %v629
    %2497 = vmatpush.bf16.msra.mxu0 %v628
    %2498 = vmatpush.bf16.msra.mxu0 %v627
    %2499 = vmatpush.bf16.msra.mxu0 %v626
    %2500 = vmatpush.bf16.msra.mxu0 %v625
    %2501 = vmatpush.bf16.msra.mxu0 %v624
    %2502 = vmatpush.bf16.msra.mxu0 %v623
    %2503 = vmatmul.bf16.gmra.mxu0 %v2480
    %v2504 = vpop.f32.mrf.mxu0
    %v2505 = vadd.f32 %v2492, %v2504
    %v2506 = vpop.f32.mrf.mxu0
    %2507 = vdwg.mxu0
    %v2508 = vadd.f32 %v2505, %v653
    %v2509 = vtanh.pop %v2508
    %v2510 = vxor.u32 %v2508, 2147483648
    %v2511 = vmul.f32 %v2510, 1.442695
    %v2512 = vpow.pop %v2511
    %v2513 = vadd.f32 %v2512, 1.0
    %v2514 = vrcp.pop %v2513
    %v2515 = vmul.f32 %v2513, %v2514
    %v2516 = vsub.f32 1.0, %v2515
    %v2517 = vmul.f32 %v2514, %v2516
    %v2518 = vadd.f32 %v2514, %v2517
    %vm2519 = vweird.f32 %v2513
    %vm2520 = vweird.f32 %v2514
    %vm2521 = vmor %vm2519, %vm2520
    %v2522 = vsel %vm2521, %v2514, %v2518
    %v2523 = vand.u32 2147483647, %v2513
    %vm2524 = vcmp.eq.f32.partialorder %v2523, 8.507059e+37
    %v2525 = vand.u32 %v2513, 2147483648
    %v2526 = vor.u32 1.1754944e-38, %v2525
    %v2527 = vsel %vm2524, %v2526, %v2522
    %v2528 = vmul.f32 1.0, %v2527
    %v2529 = vsel %vm385, %v2509, %v2528
    %2530 = vrot.lane.b32.xlu0 %v2529, 96
    %v2531 = vpop.permute.xlu0 %2530
    %2532 = vrot.lane.b32.xlu0 %v2529, 64
    %v2533 = vpop.permute.xlu0 %2532
    %2534 = vrot.lane.b32.xlu0 %v2529, 32
    %v2535 = vpop.permute.xlu0 %2534
    %v2536 = vmul.f32 %v2531, %v2429
    %v2537 = vmul.f32 %v2529, %v2533
    %v2538 = vadd.f32 %v2536, %v2537
    %v2539 = vtanh.pop %v2538
    %v2540 = vmul.f32 %v2535, %v2539
    %s2541 = scalar_lea.vmem [#allocation2], 144
    %v2542 = vld [vmem:[%s2541] sm:$0xff]
    %2543 = vmatpush.bf16.msra.mxu0 %v442
    %2544 = vmatpush.bf16.msra.mxu0 %v441
    %2545 = vmatpush.bf16.msra.mxu0 %v440
    %2546 = vmatpush.bf16.msra.mxu0 %v439
    %2547 = vmatpush.bf16.msra.mxu0 %v438
    %2548 = vmatpush.bf16.msra.mxu0 %v437
    %2549 = vmatpush.bf16.msra.mxu0 %v436
    %2550 = vmatpush.bf16.msra.mxu0 %v435
    %2551 = vmatmul.bf16.gmra.mxu0 %v2480
    %v2552 = vpop.f32.mrf.mxu0
    %v2553 = vadd.f32 0.0, %v2552
    %v2554 = vpop.f32.mrf.mxu0
    %2555 = vdwg.mxu0
    %v2556 = vadd.f32 %v2542, %v2553
    %v2557 = vtanh.pop %v2556
    %v2558 = vxor.u32 %v2556, 2147483648
    %v2559 = vmul.f32 %v2558, 1.442695
    %v2560 = vpow.pop %v2559
    %v2561 = vadd.f32 %v2560, 1.0
    %v2562 = vrcp.pop %v2561
    %v2563 = vmul.f32 %v2561, %v2562
    %v2564 = vsub.f32 1.0, %v2563
    %v2565 = vmul.f32 %v2562, %v2564
    %v2566 = vadd.f32 %v2562, %v2565
    %vm2567 = vweird.f32 %v2561
    %vm2568 = vweird.f32 %v2562
    %vm2569 = vmor %vm2567, %vm2568
    %v2570 = vsel %vm2569, %v2562, %v2566
    %v2571 = vand.u32 2147483647, %v2561
    %vm2572 = vcmp.eq.f32.partialorder %v2571, 8.507059e+37
    %v2573 = vand.u32 %v2561, 2147483648
    %v2574 = vor.u32 1.1754944e-38, %v2573
    %v2575 = vsel %vm2572, %v2574, %v2570
    %v2576 = vmul.f32 1.0, %v2575
    %v2577 = vsel %vm385, %v2557, %v2576
    %2578 = vrot.lane.b32.xlu0 %v2577, 96
    %v2579 = vpop.permute.xlu0 %2578
    %2580 = vrot.lane.b32.xlu0 %v2577, 64
    %v2581 = vpop.permute.xlu0 %2580
    %2582 = vrot.lane.b32.xlu0 %v2577, 32
    %v2583 = vpop.permute.xlu0 %2582
    %v2584 = vmul.f32 %v2579, %v2477
    %v2585 = vmul.f32 %v2577, %v2581
    %v2586 = vadd.f32 %v2584, %v2585
    %v2587 = vtanh.pop %v2586
    %v2588 = vmul.f32 %v2583, %v2587
    %v2589 = vpack.c.bf16 %v2588, %v2588
    %v2590 = vpack.c.bf16 %v2540, %v2540
    %2591 = vmatpush.bf16.msra.mxu0 %v569
    %2592 = vmatpush.bf16.msra.mxu0 %v568
    %2593 = vmatpush.bf16.msra.mxu0 %v567
    %2594 = vmatpush.bf16.msra.mxu0 %v566
    %2595 = vmatpush.bf16.msra.mxu0 %v565
    %2596 = vmatpush.bf16.msra.mxu0 %v564
    %2597 = vmatpush.bf16.msra.mxu0 %v563
    %2598 = vmatpush.bf16.msra.mxu0 %v562
    %2599 = vmatmul.bf16.gmra.mxu0 %v2590
    %v2600 = vpop.f32.mrf.mxu0
    %v2601 = vadd.f32 0.0, %v2600
    %v2602 = vpop.f32.mrf.mxu0
    %2603 = vdwg.mxu0
    %2604 = vmatpush.bf16.msra.mxu0 %v630
    %2605 = vmatpush.bf16.msra.mxu0 %v629
    %2606 = vmatpush.bf16.msra.mxu0 %v628
    %2607 = vmatpush.bf16.msra.mxu0 %v627
    %2608 = vmatpush.bf16.msra.mxu0 %v626
    %2609 = vmatpush.bf16.msra.mxu0 %v625
    %2610 = vmatpush.bf16.msra.mxu0 %v624
    %2611 = vmatpush.bf16.msra.mxu0 %v623
    %2612 = vmatmul.bf16.gmra.mxu0 %v2589
    %v2613 = vpop.f32.mrf.mxu0
    %v2614 = vadd.f32 %v2601, %v2613
    %v2615 = vpop.f32.mrf.mxu0
    %2616 = vdwg.mxu0
    %v2617 = vadd.f32 %v2614, %v653
    %v2618 = vtanh.pop %v2617
    %v2619 = vxor.u32 %v2617, 2147483648
    %v2620 = vmul.f32 %v2619, 1.442695
    %v2621 = vpow.pop %v2620
    %v2622 = vadd.f32 %v2621, 1.0
    %v2623 = vrcp.pop %v2622
    %v2624 = vmul.f32 %v2622, %v2623
    %v2625 = vsub.f32 1.0, %v2624
    %v2626 = vmul.f32 %v2623, %v2625
    %v2627 = vadd.f32 %v2623, %v2626
    %vm2628 = vweird.f32 %v2622
    %vm2629 = vweird.f32 %v2623
    %vm2630 = vmor %vm2628, %vm2629
    %v2631 = vsel %vm2630, %v2623, %v2627
    %v2632 = vand.u32 2147483647, %v2622
    %vm2633 = vcmp.eq.f32.partialorder %v2632, 8.507059e+37
    %v2634 = vand.u32 %v2622, 2147483648
    %v2635 = vor.u32 1.1754944e-38, %v2634
    %v2636 = vsel %vm2633, %v2635, %v2631
    %v2637 = vmul.f32 1.0, %v2636
    %v2638 = vsel %vm385, %v2618, %v2637
    %2639 = vrot.lane.b32.xlu0 %v2638, 96
    %v2640 = vpop.permute.xlu0 %2639
    %2641 = vrot.lane.b32.xlu0 %v2638, 64
    %v2642 = vpop.permute.xlu0 %2641
    %2643 = vrot.lane.b32.xlu0 %v2638, 32
    %v2644 = vpop.permute.xlu0 %2643
    %v2645 = vmul.f32 %v2640, %v2538
    %v2646 = vmul.f32 %v2638, %v2642
    %v2647 = vadd.f32 %v2645, %v2646
    %v2648 = vtanh.pop %v2647
    %v2649 = vmul.f32 %v2644, %v2648
    %s2650 = scalar_lea.vmem [#allocation2], 152
    %v2651 = vld [vmem:[%s2650] sm:$0xff]
    %2652 = vmatpush.bf16.msra.mxu0 %v442
    %2653 = vmatpush.bf16.msra.mxu0 %v441
    %2654 = vmatpush.bf16.msra.mxu0 %v440
    %2655 = vmatpush.bf16.msra.mxu0 %v439
    %2656 = vmatpush.bf16.msra.mxu0 %v438
    %2657 = vmatpush.bf16.msra.mxu0 %v437
    %2658 = vmatpush.bf16.msra.mxu0 %v436
    %2659 = vmatpush.bf16.msra.mxu0 %v435
    %2660 = vmatmul.bf16.gmra.mxu0 %v2589
    %v2661 = vpop.f32.mrf.mxu0
    %v2662 = vadd.f32 0.0, %v2661
    %v2663 = vpop.f32.mrf.mxu0
    %2664 = vdwg.mxu0
    %v2665 = vadd.f32 %v2651, %v2662
    %v2666 = vtanh.pop %v2665
    %v2667 = vxor.u32 %v2665, 2147483648
    %v2668 = vmul.f32 %v2667, 1.442695
    %v2669 = vpow.pop %v2668
    %v2670 = vadd.f32 %v2669, 1.0
    %v2671 = vrcp.pop %v2670
    %v2672 = vmul.f32 %v2670, %v2671
    %v2673 = vsub.f32 1.0, %v2672
    %v2674 = vmul.f32 %v2671, %v2673
    %v2675 = vadd.f32 %v2671, %v2674
    %vm2676 = vweird.f32 %v2670
    %vm2677 = vweird.f32 %v2671
    %vm2678 = vmor %vm2676, %vm2677
    %v2679 = vsel %vm2678, %v2671, %v2675
    %v2680 = vand.u32 2147483647, %v2670
    %vm2681 = vcmp.eq.f32.partialorder %v2680, 8.507059e+37
    %v2682 = vand.u32 %v2670, 2147483648
    %v2683 = vor.u32 1.1754944e-38, %v2682
    %v2684 = vsel %vm2681, %v2683, %v2679
    %v2685 = vmul.f32 1.0, %v2684
    %v2686 = vsel %vm385, %v2666, %v2685
    %2687 = vrot.lane.b32.xlu0 %v2686, 96
    %v2688 = vpop.permute.xlu0 %2687
    %2689 = vrot.lane.b32.xlu0 %v2686, 64
    %v2690 = vpop.permute.xlu0 %2689
    %2691 = vrot.lane.b32.xlu0 %v2686, 32
    %v2692 = vpop.permute.xlu0 %2691
    %v2693 = vmul.f32 %v2688, %v2586
    %v2694 = vmul.f32 %v2686, %v2690
    %v2695 = vadd.f32 %v2693, %v2694
    %v2696 = vtanh.pop %v2695
    %v2697 = vmul.f32 %v2692, %v2696
    %v2698 = vpack.c.bf16 %v2697, %v2697
    %v2699 = vpack.c.bf16 %v2649, %v2649
    %2700 = vmatpush.bf16.msra.mxu0 %v569
    %2701 = vmatpush.bf16.msra.mxu0 %v568
    %2702 = vmatpush.bf16.msra.mxu0 %v567
    %2703 = vmatpush.bf16.msra.mxu0 %v566
    %2704 = vmatpush.bf16.msra.mxu0 %v565
    %2705 = vmatpush.bf16.msra.mxu0 %v564
    %2706 = vmatpush.bf16.msra.mxu0 %v563
    %2707 = vmatpush.bf16.msra.mxu0 %v562
    %2708 = vmatmul.bf16.gmra.mxu0 %v2699
    %v2709 = vpop.f32.mrf.mxu0
    %v2710 = vadd.f32 0.0, %v2709
    %v2711 = vpop.f32.mrf.mxu0
    %2712 = vdwg.mxu0
    %2713 = vmatpush.bf16.msra.mxu0 %v630
    %2714 = vmatpush.bf16.msra.mxu0 %v629
    %2715 = vmatpush.bf16.msra.mxu0 %v628
    %2716 = vmatpush.bf16.msra.mxu0 %v627
    %2717 = vmatpush.bf16.msra.mxu0 %v626
    %2718 = vmatpush.bf16.msra.mxu0 %v625
    %2719 = vmatpush.bf16.msra.mxu0 %v624
    %2720 = vmatpush.bf16.msra.mxu0 %v623
    %2721 = vmatmul.bf16.gmra.mxu0 %v2698
    %v2722 = vpop.f32.mrf.mxu0
    %v2723 = vadd.f32 %v2710, %v2722
    %v2724 = vpop.f32.mrf.mxu0
    %2725 = vdwg.mxu0
    %v2726 = vadd.f32 %v2723, %v653
    %v2727 = vtanh.pop %v2726
    %v2728 = vxor.u32 %v2726, 2147483648
    %v2729 = vmul.f32 %v2728, 1.442695
    %v2730 = vpow.pop %v2729
    %v2731 = vadd.f32 %v2730, 1.0
    %v2732 = vrcp.pop %v2731
    %v2733 = vmul.f32 %v2731, %v2732
    %v2734 = vsub.f32 1.0, %v2733
    %v2735 = vmul.f32 %v2732, %v2734
    %v2736 = vadd.f32 %v2732, %v2735
    %vm2737 = vweird.f32 %v2731
    %vm2738 = vweird.f32 %v2732
    %vm2739 = vmor %vm2737, %vm2738
    %v2740 = vsel %vm2739, %v2732, %v2736
    %v2741 = vand.u32 2147483647, %v2731
    %vm2742 = vcmp.eq.f32.partialorder %v2741, 8.507059e+37
    %v2743 = vand.u32 %v2731, 2147483648
    %v2744 = vor.u32 1.1754944e-38, %v2743
    %v2745 = vsel %vm2742, %v2744, %v2740
    %v2746 = vmul.f32 1.0, %v2745
    %v2747 = vsel %vm385, %v2727, %v2746
    %2748 = vrot.lane.b32.xlu0 %v2747, 96
    %v2749 = vpop.permute.xlu0 %2748
    %2750 = vrot.lane.b32.xlu0 %v2747, 64
    %v2751 = vpop.permute.xlu0 %2750
    %2752 = vrot.lane.b32.xlu0 %v2747, 32
    %v2753 = vpop.permute.xlu0 %2752
    %v2754 = vmul.f32 %v2749, %v2647
    %v2755 = vmul.f32 %v2747, %v2751
    %v2756 = vadd.f32 %v2754, %v2755
    %v2757 = vtanh.pop %v2756
    %v2758 = vmul.f32 %v2753, %v2757
    %s2759 = scalar_lea.vmem [#allocation2], 160
    %v2760 = vld [vmem:[%s2759] sm:$0xff]
    %2761 = vmatpush.bf16.msra.mxu0 %v442
    %2762 = vmatpush.bf16.msra.mxu0 %v441
    %2763 = vmatpush.bf16.msra.mxu0 %v440
    %2764 = vmatpush.bf16.msra.mxu0 %v439
    %2765 = vmatpush.bf16.msra.mxu0 %v438
    %2766 = vmatpush.bf16.msra.mxu0 %v437
    %2767 = vmatpush.bf16.msra.mxu0 %v436
    %2768 = vmatpush.bf16.msra.mxu0 %v435
    %2769 = vmatmul.bf16.gmra.mxu0 %v2698
    %v2770 = vpop.f32.mrf.mxu0
    %v2771 = vadd.f32 0.0, %v2770
    %v2772 = vpop.f32.mrf.mxu0
    %2773 = vdwg.mxu0
    %v2774 = vadd.f32 %v2760, %v2771
    %v2775 = vtanh.pop %v2774
    %v2776 = vxor.u32 %v2774, 2147483648
    %v2777 = vmul.f32 %v2776, 1.442695
    %v2778 = vpow.pop %v2777
    %v2779 = vadd.f32 %v2778, 1.0
    %v2780 = vrcp.pop %v2779
    %v2781 = vmul.f32 %v2779, %v2780
    %v2782 = vsub.f32 1.0, %v2781
    %v2783 = vmul.f32 %v2780, %v2782
    %v2784 = vadd.f32 %v2780, %v2783
    %vm2785 = vweird.f32 %v2779
    %vm2786 = vweird.f32 %v2780
    %vm2787 = vmor %vm2785, %vm2786
    %v2788 = vsel %vm2787, %v2780, %v2784
    %v2789 = vand.u32 2147483647, %v2779
    %vm2790 = vcmp.eq.f32.partialorder %v2789, 8.507059e+37
    %v2791 = vand.u32 %v2779, 2147483648
    %v2792 = vor.u32 1.1754944e-38, %v2791
    %v2793 = vsel %vm2790, %v2792, %v2788
    %v2794 = vmul.f32 1.0, %v2793
    %v2795 = vsel %vm385, %v2775, %v2794
    %2796 = vrot.lane.b32.xlu0 %v2795, 96
    %v2797 = vpop.permute.xlu0 %2796
    %2798 = vrot.lane.b32.xlu0 %v2795, 64
    %v2799 = vpop.permute.xlu0 %2798
    %2800 = vrot.lane.b32.xlu0 %v2795, 32
    %v2801 = vpop.permute.xlu0 %2800
    %v2802 = vmul.f32 %v2797, %v2695
    %v2803 = vmul.f32 %v2795, %v2799
    %v2804 = vadd.f32 %v2802, %v2803
    %v2805 = vtanh.pop %v2804
    %v2806 = vmul.f32 %v2801, %v2805
    %v2807 = vpack.c.bf16 %v2806, %v2806
    %v2808 = vpack.c.bf16 %v2758, %v2758
    %2809 = vmatpush.bf16.msra.mxu0 %v569
    %2810 = vmatpush.bf16.msra.mxu0 %v568
    %2811 = vmatpush.bf16.msra.mxu0 %v567
    %2812 = vmatpush.bf16.msra.mxu0 %v566
    %2813 = vmatpush.bf16.msra.mxu0 %v565
    %2814 = vmatpush.bf16.msra.mxu0 %v564
    %2815 = vmatpush.bf16.msra.mxu0 %v563
    %2816 = vmatpush.bf16.msra.mxu0 %v562
    %2817 = vmatmul.bf16.gmra.mxu0 %v2808
    %v2818 = vpop.f32.mrf.mxu0
    %v2819 = vadd.f32 0.0, %v2818
    %v2820 = vpop.f32.mrf.mxu0
    %2821 = vdwg.mxu0
    %2822 = vmatpush.bf16.msra.mxu0 %v630
    %2823 = vmatpush.bf16.msra.mxu0 %v629
    %2824 = vmatpush.bf16.msra.mxu0 %v628
    %2825 = vmatpush.bf16.msra.mxu0 %v627
    %2826 = vmatpush.bf16.msra.mxu0 %v626
    %2827 = vmatpush.bf16.msra.mxu0 %v625
    %2828 = vmatpush.bf16.msra.mxu0 %v624
    %2829 = vmatpush.bf16.msra.mxu0 %v623
    %2830 = vmatmul.bf16.gmra.mxu0 %v2807
    %v2831 = vpop.f32.mrf.mxu0
    %v2832 = vadd.f32 %v2819, %v2831
    %v2833 = vpop.f32.mrf.mxu0
    %2834 = vdwg.mxu0
    %v2835 = vadd.f32 %v2832, %v653
    %v2836 = vtanh.pop %v2835
    %v2837 = vxor.u32 %v2835, 2147483648
    %v2838 = vmul.f32 %v2837, 1.442695
    %v2839 = vpow.pop %v2838
    %v2840 = vadd.f32 %v2839, 1.0
    %v2841 = vrcp.pop %v2840
    %v2842 = vmul.f32 %v2840, %v2841
    %v2843 = vsub.f32 1.0, %v2842
    %v2844 = vmul.f32 %v2841, %v2843
    %v2845 = vadd.f32 %v2841, %v2844
    %vm2846 = vweird.f32 %v2840
    %vm2847 = vweird.f32 %v2841
    %vm2848 = vmor %vm2846, %vm2847
    %v2849 = vsel %vm2848, %v2841, %v2845
    %v2850 = vand.u32 2147483647, %v2840
    %vm2851 = vcmp.eq.f32.partialorder %v2850, 8.507059e+37
    %v2852 = vand.u32 %v2840, 2147483648
    %v2853 = vor.u32 1.1754944e-38, %v2852
    %v2854 = vsel %vm2851, %v2853, %v2849
    %v2855 = vmul.f32 1.0, %v2854
    %v2856 = vsel %vm385, %v2836, %v2855
    %2857 = vrot.lane.b32.xlu0 %v2856, 96
    %v2858 = vpop.permute.xlu0 %2857
    %2859 = vrot.lane.b32.xlu0 %v2856, 64
    %v2860 = vpop.permute.xlu0 %2859
    %2861 = vrot.lane.b32.xlu0 %v2856, 32
    %v2862 = vpop.permute.xlu0 %2861
    %v2863 = vmul.f32 %v2858, %v2756
    %v2864 = vmul.f32 %v2856, %v2860
    %v2865 = vadd.f32 %v2863, %v2864
    %v2866 = vtanh.pop %v2865
    %v2867 = vmul.f32 %v2862, %v2866
    %s2868 = scalar_lea.vmem [#allocation2], 168
    %v2869 = vld [vmem:[%s2868] sm:$0xff]
    %2870 = vmatpush.bf16.msra.mxu0 %v442
    %2871 = vmatpush.bf16.msra.mxu0 %v441
    %2872 = vmatpush.bf16.msra.mxu0 %v440
    %2873 = vmatpush.bf16.msra.mxu0 %v439
    %2874 = vmatpush.bf16.msra.mxu0 %v438
    %2875 = vmatpush.bf16.msra.mxu0 %v437
    %2876 = vmatpush.bf16.msra.mxu0 %v436
    %2877 = vmatpush.bf16.msra.mxu0 %v435
    %2878 = vmatmul.bf16.gmra.mxu0 %v2807
    %v2879 = vpop.f32.mrf.mxu0
    %v2880 = vadd.f32 0.0, %v2879
    %v2881 = vpop.f32.mrf.mxu0
    %2882 = vdwg.mxu0
    %v2883 = vadd.f32 %v2869, %v2880
    %v2884 = vtanh.pop %v2883
    %v2885 = vxor.u32 %v2883, 2147483648
    %v2886 = vmul.f32 %v2885, 1.442695
    %v2887 = vpow.pop %v2886
    %v2888 = vadd.f32 %v2887, 1.0
    %v2889 = vrcp.pop %v2888
    %v2890 = vmul.f32 %v2888, %v2889
    %v2891 = vsub.f32 1.0, %v2890
    %v2892 = vmul.f32 %v2889, %v2891
    %v2893 = vadd.f32 %v2889, %v2892
    %vm2894 = vweird.f32 %v2888
    %vm2895 = vweird.f32 %v2889
    %vm2896 = vmor %vm2894, %vm2895
    %v2897 = vsel %vm2896, %v2889, %v2893
    %v2898 = vand.u32 2147483647, %v2888
    %vm2899 = vcmp.eq.f32.partialorder %v2898, 8.507059e+37
    %v2900 = vand.u32 %v2888, 2147483648
    %v2901 = vor.u32 1.1754944e-38, %v2900
    %v2902 = vsel %vm2899, %v2901, %v2897
    %v2903 = vmul.f32 1.0, %v2902
    %v2904 = vsel %vm385, %v2884, %v2903
    %2905 = vrot.lane.b32.xlu0 %v2904, 96
    %v2906 = vpop.permute.xlu0 %2905
    %2907 = vrot.lane.b32.xlu0 %v2904, 64
    %v2908 = vpop.permute.xlu0 %2907
    %2909 = vrot.lane.b32.xlu0 %v2904, 32
    %v2910 = vpop.permute.xlu0 %2909
    %v2911 = vmul.f32 %v2906, %v2804
    %v2912 = vmul.f32 %v2904, %v2908
    %v2913 = vadd.f32 %v2911, %v2912
    %v2914 = vtanh.pop %v2913
    %v2915 = vmul.f32 %v2910, %v2914
    %v2916 = vpack.c.bf16 %v2915, %v2915
    %v2917 = vpack.c.bf16 %v2867, %v2867
    %2918 = vmatpush.bf16.msra.mxu0 %v569
    %2919 = vmatpush.bf16.msra.mxu0 %v568
    %2920 = vmatpush.bf16.msra.mxu0 %v567
    %2921 = vmatpush.bf16.msra.mxu0 %v566
    %2922 = vmatpush.bf16.msra.mxu0 %v565
    %2923 = vmatpush.bf16.msra.mxu0 %v564
    %2924 = vmatpush.bf16.msra.mxu0 %v563
    %2925 = vmatpush.bf16.msra.mxu0 %v562
    %2926 = vmatmul.bf16.gmra.mxu0 %v2917
    %v2927 = vpop.f32.mrf.mxu0
    %v2928 = vadd.f32 0.0, %v2927
    %v2929 = vpop.f32.mrf.mxu0
    %2930 = vdwg.mxu0
    %2931 = vmatpush.bf16.msra.mxu0 %v630
    %2932 = vmatpush.bf16.msra.mxu0 %v629
    %2933 = vmatpush.bf16.msra.mxu0 %v628
    %2934 = vmatpush.bf16.msra.mxu0 %v627
    %2935 = vmatpush.bf16.msra.mxu0 %v626
    %2936 = vmatpush.bf16.msra.mxu0 %v625
    %2937 = vmatpush.bf16.msra.mxu0 %v624
    %2938 = vmatpush.bf16.msra.mxu0 %v623
    %2939 = vmatmul.bf16.gmra.mxu0 %v2916
    %v2940 = vpop.f32.mrf.mxu0
    %v2941 = vadd.f32 %v2928, %v2940
    %v2942 = vpop.f32.mrf.mxu0
    %2943 = vdwg.mxu0
    %v2944 = vadd.f32 %v2941, %v653
    %v2945 = vtanh.pop %v2944
    %v2946 = vxor.u32 %v2944, 2147483648
    %v2947 = vmul.f32 %v2946, 1.442695
    %v2948 = vpow.pop %v2947
    %v2949 = vadd.f32 %v2948, 1.0
    %v2950 = vrcp.pop %v2949
    %v2951 = vmul.f32 %v2949, %v2950
    %v2952 = vsub.f32 1.0, %v2951
    %v2953 = vmul.f32 %v2950, %v2952
    %v2954 = vadd.f32 %v2950, %v2953
    %vm2955 = vweird.f32 %v2949
    %vm2956 = vweird.f32 %v2950
    %vm2957 = vmor %vm2955, %vm2956
    %v2958 = vsel %vm2957, %v2950, %v2954
    %v2959 = vand.u32 2147483647, %v2949
    %vm2960 = vcmp.eq.f32.partialorder %v2959, 8.507059e+37
    %v2961 = vand.u32 %v2949, 2147483648
    %v2962 = vor.u32 1.1754944e-38, %v2961
    %v2963 = vsel %vm2960, %v2962, %v2958
    %v2964 = vmul.f32 1.0, %v2963
    %v2965 = vsel %vm385, %v2945, %v2964
    %2966 = vrot.lane.b32.xlu0 %v2965, 96
    %v2967 = vpop.permute.xlu0 %2966
    %2968 = vrot.lane.b32.xlu0 %v2965, 64
    %v2969 = vpop.permute.xlu0 %2968
    %2970 = vrot.lane.b32.xlu0 %v2965, 32
    %v2971 = vpop.permute.xlu0 %2970
    %v2972 = vmul.f32 %v2967, %v2865
    %v2973 = vmul.f32 %v2965, %v2969
    %v2974 = vadd.f32 %v2972, %v2973
    %v2975 = vtanh.pop %v2974
    %v2976 = vmul.f32 %v2971, %v2975
    %s2977 = scalar_lea.vmem [#allocation2], 176
    %v2978 = vld [vmem:[%s2977] sm:$0xff]
    %2979 = vmatpush.bf16.msra.mxu0 %v442
    %2980 = vmatpush.bf16.msra.mxu0 %v441
    %2981 = vmatpush.bf16.msra.mxu0 %v440
    %2982 = vmatpush.bf16.msra.mxu0 %v439
    %2983 = vmatpush.bf16.msra.mxu0 %v438
    %2984 = vmatpush.bf16.msra.mxu0 %v437
    %2985 = vmatpush.bf16.msra.mxu0 %v436
    %2986 = vmatpush.bf16.msra.mxu0 %v435
    %2987 = vmatmul.bf16.gmra.mxu0 %v2916
    %v2988 = vpop.f32.mrf.mxu0
    %v2989 = vadd.f32 0.0, %v2988
    %v2990 = vpop.f32.mrf.mxu0
    %2991 = vdwg.mxu0
    %v2992 = vadd.f32 %v2978, %v2989
    %v2993 = vtanh.pop %v2992
    %v2994 = vxor.u32 %v2992, 2147483648
    %v2995 = vmul.f32 %v2994, 1.442695
    %v2996 = vpow.pop %v2995
    %v2997 = vadd.f32 %v2996, 1.0
    %v2998 = vrcp.pop %v2997
    %v2999 = vmul.f32 %v2997, %v2998
    %v3000 = vsub.f32 1.0, %v2999
    %v3001 = vmul.f32 %v2998, %v3000
    %v3002 = vadd.f32 %v2998, %v3001
    %vm3003 = vweird.f32 %v2997
    %vm3004 = vweird.f32 %v2998
    %vm3005 = vmor %vm3003, %vm3004
    %v3006 = vsel %vm3005, %v2998, %v3002
    %v3007 = vand.u32 2147483647, %v2997
    %vm3008 = vcmp.eq.f32.partialorder %v3007, 8.507059e+37
    %v3009 = vand.u32 %v2997, 2147483648
    %v3010 = vor.u32 1.1754944e-38, %v3009
    %v3011 = vsel %vm3008, %v3010, %v3006
    %v3012 = vmul.f32 1.0, %v3011
    %v3013 = vsel %vm385, %v2993, %v3012
    %3014 = vrot.lane.b32.xlu0 %v3013, 96
    %v3015 = vpop.permute.xlu0 %3014
    %3016 = vrot.lane.b32.xlu0 %v3013, 64
    %v3017 = vpop.permute.xlu0 %3016
    %3018 = vrot.lane.b32.xlu0 %v3013, 32
    %v3019 = vpop.permute.xlu0 %3018
    %v3020 = vmul.f32 %v3015, %v2913
    %v3021 = vmul.f32 %v3013, %v3017
    %v3022 = vadd.f32 %v3020, %v3021
    %v3023 = vtanh.pop %v3022
    %v3024 = vmul.f32 %v3019, %v3023
    %v3025 = vpack.c.bf16 %v3024, %v3024
    %v3026 = vpack.c.bf16 %v2976, %v2976
    %3027 = vmatpush.bf16.msra.mxu0 %v569
    %3028 = vmatpush.bf16.msra.mxu0 %v568
    %3029 = vmatpush.bf16.msra.mxu0 %v567
    %3030 = vmatpush.bf16.msra.mxu0 %v566
    %3031 = vmatpush.bf16.msra.mxu0 %v565
    %3032 = vmatpush.bf16.msra.mxu0 %v564
    %3033 = vmatpush.bf16.msra.mxu0 %v563
    %3034 = vmatpush.bf16.msra.mxu0 %v562
    %3035 = vmatmul.bf16.gmra.mxu0 %v3026
    %v3036 = vpop.f32.mrf.mxu0
    %v3037 = vadd.f32 0.0, %v3036
    %v3038 = vpop.f32.mrf.mxu0
    %3039 = vdwg.mxu0
    %3040 = vmatpush.bf16.msra.mxu0 %v630
    %3041 = vmatpush.bf16.msra.mxu0 %v629
    %3042 = vmatpush.bf16.msra.mxu0 %v628
    %3043 = vmatpush.bf16.msra.mxu0 %v627
    %3044 = vmatpush.bf16.msra.mxu0 %v626
    %3045 = vmatpush.bf16.msra.mxu0 %v625
    %3046 = vmatpush.bf16.msra.mxu0 %v624
    %3047 = vmatpush.bf16.msra.mxu0 %v623
    %3048 = vmatmul.bf16.gmra.mxu0 %v3025
    %v3049 = vpop.f32.mrf.mxu0
    %v3050 = vadd.f32 %v3037, %v3049
    %v3051 = vpop.f32.mrf.mxu0
    %3052 = vdwg.mxu0
    %v3053 = vadd.f32 %v3050, %v653
    %v3054 = vtanh.pop %v3053
    %v3055 = vxor.u32 %v3053, 2147483648
    %v3056 = vmul.f32 %v3055, 1.442695
    %v3057 = vpow.pop %v3056
    %v3058 = vadd.f32 %v3057, 1.0
    %v3059 = vrcp.pop %v3058
    %v3060 = vmul.f32 %v3058, %v3059
    %v3061 = vsub.f32 1.0, %v3060
    %v3062 = vmul.f32 %v3059, %v3061
    %v3063 = vadd.f32 %v3059, %v3062
    %vm3064 = vweird.f32 %v3058
    %vm3065 = vweird.f32 %v3059
    %vm3066 = vmor %vm3064, %vm3065
    %v3067 = vsel %vm3066, %v3059, %v3063
    %v3068 = vand.u32 2147483647, %v3058
    %vm3069 = vcmp.eq.f32.partialorder %v3068, 8.507059e+37
    %v3070 = vand.u32 %v3058, 2147483648
    %v3071 = vor.u32 1.1754944e-38, %v3070
    %v3072 = vsel %vm3069, %v3071, %v3067
    %v3073 = vmul.f32 1.0, %v3072
    %v3074 = vsel %vm385, %v3054, %v3073
    %3075 = vrot.lane.b32.xlu0 %v3074, 96
    %v3076 = vpop.permute.xlu0 %3075
    %3077 = vrot.lane.b32.xlu0 %v3074, 64
    %v3078 = vpop.permute.xlu0 %3077
    %3079 = vrot.lane.b32.xlu0 %v3074, 32
    %v3080 = vpop.permute.xlu0 %3079
    %v3081 = vmul.f32 %v3076, %v2974
    %v3082 = vmul.f32 %v3074, %v3078
    %v3083 = vadd.f32 %v3081, %v3082
    %v3084 = vtanh.pop %v3083
    %v3085 = vmul.f32 %v3080, %v3084
    %s3086 = scalar_lea.vmem [#allocation2], 184
    %v3087 = vld [vmem:[%s3086] sm:$0xff]
    %3088 = vmatpush.bf16.msra.mxu0 %v442
    %3089 = vmatpush.bf16.msra.mxu0 %v441
    %3090 = vmatpush.bf16.msra.mxu0 %v440
    %3091 = vmatpush.bf16.msra.mxu0 %v439
    %3092 = vmatpush.bf16.msra.mxu0 %v438
    %3093 = vmatpush.bf16.msra.mxu0 %v437
    %3094 = vmatpush.bf16.msra.mxu0 %v436
    %3095 = vmatpush.bf16.msra.mxu0 %v435
    %3096 = vmatmul.bf16.gmra.mxu0 %v3025
    %v3097 = vpop.f32.mrf.mxu0
    %v3098 = vadd.f32 0.0, %v3097
    %v3099 = vpop.f32.mrf.mxu0
    %3100 = vdwg.mxu0
    %v3101 = vadd.f32 %v3087, %v3098
    %v3102 = vtanh.pop %v3101
    %v3103 = vxor.u32 %v3101, 2147483648
    %v3104 = vmul.f32 %v3103, 1.442695
    %v3105 = vpow.pop %v3104
    %v3106 = vadd.f32 %v3105, 1.0
    %v3107 = vrcp.pop %v3106
    %v3108 = vmul.f32 %v3106, %v3107
    %v3109 = vsub.f32 1.0, %v3108
    %v3110 = vmul.f32 %v3107, %v3109
    %v3111 = vadd.f32 %v3107, %v3110
    %vm3112 = vweird.f32 %v3106
    %vm3113 = vweird.f32 %v3107
    %vm3114 = vmor %vm3112, %vm3113
    %v3115 = vsel %vm3114, %v3107, %v3111
    %v3116 = vand.u32 2147483647, %v3106
    %vm3117 = vcmp.eq.f32.partialorder %v3116, 8.507059e+37
    %v3118 = vand.u32 %v3106, 2147483648
    %v3119 = vor.u32 1.1754944e-38, %v3118
    %v3120 = vsel %vm3117, %v3119, %v3115
    %v3121 = vmul.f32 1.0, %v3120
    %v3122 = vsel %vm385, %v3102, %v3121
    %3123 = vrot.lane.b32.xlu0 %v3122, 96
    %v3124 = vpop.permute.xlu0 %3123
    %3125 = vrot.lane.b32.xlu0 %v3122, 64
    %v3126 = vpop.permute.xlu0 %3125
    %3127 = vrot.lane.b32.xlu0 %v3122, 32
    %v3128 = vpop.permute.xlu0 %3127
    %v3129 = vmul.f32 %v3124, %v3022
    %v3130 = vmul.f32 %v3122, %v3126
    %v3131 = vadd.f32 %v3129, %v3130
    %v3132 = vtanh.pop %v3131
    %v3133 = vmul.f32 %v3128, %v3132
    %v3134 = vpack.c.bf16 %v3133, %v3133
    %v3135 = vpack.c.bf16 %v3085, %v3085
    %3136 = vmatpush.bf16.msra.mxu0 %v569
    %3137 = vmatpush.bf16.msra.mxu0 %v568
    %3138 = vmatpush.bf16.msra.mxu0 %v567
    %3139 = vmatpush.bf16.msra.mxu0 %v566
    %3140 = vmatpush.bf16.msra.mxu0 %v565
    %3141 = vmatpush.bf16.msra.mxu0 %v564
    %3142 = vmatpush.bf16.msra.mxu0 %v563
    %3143 = vmatpush.bf16.msra.mxu0 %v562
    %3144 = vmatmul.bf16.gmra.mxu0 %v3135
    %v3145 = vpop.f32.mrf.mxu0
    %v3146 = vadd.f32 0.0, %v3145
    %v3147 = vpop.f32.mrf.mxu0
    %3148 = vdwg.mxu0
    %3149 = vmatpush.bf16.msra.mxu0 %v630
    %3150 = vmatpush.bf16.msra.mxu0 %v629
    %3151 = vmatpush.bf16.msra.mxu0 %v628
    %3152 = vmatpush.bf16.msra.mxu0 %v627
    %3153 = vmatpush.bf16.msra.mxu0 %v626
    %3154 = vmatpush.bf16.msra.mxu0 %v625
    %3155 = vmatpush.bf16.msra.mxu0 %v624
    %3156 = vmatpush.bf16.msra.mxu0 %v623
    %3157 = vmatmul.bf16.gmra.mxu0 %v3134
    %v3158 = vpop.f32.mrf.mxu0
    %v3159 = vadd.f32 %v3146, %v3158
    %v3160 = vpop.f32.mrf.mxu0
    %3161 = vdwg.mxu0
    %v3162 = vadd.f32 %v3159, %v653
    %v3163 = vtanh.pop %v3162
    %v3164 = vxor.u32 %v3162, 2147483648
    %v3165 = vmul.f32 %v3164, 1.442695
    %v3166 = vpow.pop %v3165
    %v3167 = vadd.f32 %v3166, 1.0
    %v3168 = vrcp.pop %v3167
    %v3169 = vmul.f32 %v3167, %v3168
    %v3170 = vsub.f32 1.0, %v3169
    %v3171 = vmul.f32 %v3168, %v3170
    %v3172 = vadd.f32 %v3168, %v3171
    %vm3173 = vweird.f32 %v3167
    %vm3174 = vweird.f32 %v3168
    %vm3175 = vmor %vm3173, %vm3174
    %v3176 = vsel %vm3175, %v3168, %v3172
    %v3177 = vand.u32 2147483647, %v3167
    %vm3178 = vcmp.eq.f32.partialorder %v3177, 8.507059e+37
    %v3179 = vand.u32 %v3167, 2147483648
    %v3180 = vor.u32 1.1754944e-38, %v3179
    %v3181 = vsel %vm3178, %v3180, %v3176
    %v3182 = vmul.f32 1.0, %v3181
    %v3183 = vsel %vm385, %v3163, %v3182
    %3184 = vrot.lane.b32.xlu0 %v3183, 96
    %v3185 = vpop.permute.xlu0 %3184
    %3186 = vrot.lane.b32.xlu0 %v3183, 64
    %v3187 = vpop.permute.xlu0 %3186
    %3188 = vrot.lane.b32.xlu0 %v3183, 32
    %v3189 = vpop.permute.xlu0 %3188
    %v3190 = vmul.f32 %v3185, %v3083
    %v3191 = vmul.f32 %v3183, %v3187
    %v3192 = vadd.f32 %v3190, %v3191
    %v3193 = vtanh.pop %v3192
    %v3194 = vmul.f32 %v3189, %v3193
    %s3195 = scalar_lea.vmem [#allocation2], 192
    %v3196 = vld [vmem:[%s3195] sm:$0xff]
    %3197 = vmatpush.bf16.msra.mxu0 %v442
    %3198 = vmatpush.bf16.msra.mxu0 %v441
    %3199 = vmatpush.bf16.msra.mxu0 %v440
    %3200 = vmatpush.bf16.msra.mxu0 %v439
    %3201 = vmatpush.bf16.msra.mxu0 %v438
    %3202 = vmatpush.bf16.msra.mxu0 %v437
    %3203 = vmatpush.bf16.msra.mxu0 %v436
    %3204 = vmatpush.bf16.msra.mxu0 %v435
    %3205 = vmatmul.bf16.gmra.mxu0 %v3134
    %v3206 = vpop.f32.mrf.mxu0
    %v3207 = vadd.f32 0.0, %v3206
    %v3208 = vpop.f32.mrf.mxu0
    %3209 = vdwg.mxu0
    %v3210 = vadd.f32 %v3196, %v3207
    %v3211 = vtanh.pop %v3210
    %v3212 = vxor.u32 %v3210, 2147483648
    %v3213 = vmul.f32 %v3212, 1.442695
    %v3214 = vpow.pop %v3213
    %v3215 = vadd.f32 %v3214, 1.0
    %v3216 = vrcp.pop %v3215
    %v3217 = vmul.f32 %v3215, %v3216
    %v3218 = vsub.f32 1.0, %v3217
    %v3219 = vmul.f32 %v3216, %v3218
    %v3220 = vadd.f32 %v3216, %v3219
    %vm3221 = vweird.f32 %v3215
    %vm3222 = vweird.f32 %v3216
    %vm3223 = vmor %vm3221, %vm3222
    %v3224 = vsel %vm3223, %v3216, %v3220
    %v3225 = vand.u32 2147483647, %v3215
    %vm3226 = vcmp.eq.f32.partialorder %v3225, 8.507059e+37
    %v3227 = vand.u32 %v3215, 2147483648
    %v3228 = vor.u32 1.1754944e-38, %v3227
    %v3229 = vsel %vm3226, %v3228, %v3224
    %v3230 = vmul.f32 1.0, %v3229
    %v3231 = vsel %vm385, %v3211, %v3230
    %3232 = vrot.lane.b32.xlu0 %v3231, 96
    %v3233 = vpop.permute.xlu0 %3232
    %3234 = vrot.lane.b32.xlu0 %v3231, 64
    %v3235 = vpop.permute.xlu0 %3234
    %3236 = vrot.lane.b32.xlu0 %v3231, 32
    %v3237 = vpop.permute.xlu0 %3236
    %v3238 = vmul.f32 %v3233, %v3131
    %v3239 = vmul.f32 %v3231, %v3235
    %v3240 = vadd.f32 %v3238, %v3239
    %v3241 = vtanh.pop %v3240
    %v3242 = vmul.f32 %v3237, %v3241
    %v3243 = vpack.c.bf16 %v3242, %v3242
    %v3244 = vpack.c.bf16 %v3194, %v3194
    %3245 = vmatpush.bf16.msra.mxu0 %v569
    %3246 = vmatpush.bf16.msra.mxu0 %v568
    %3247 = vmatpush.bf16.msra.mxu0 %v567
    %3248 = vmatpush.bf16.msra.mxu0 %v566
    %3249 = vmatpush.bf16.msra.mxu0 %v565
    %3250 = vmatpush.bf16.msra.mxu0 %v564
    %3251 = vmatpush.bf16.msra.mxu0 %v563
    %3252 = vmatpush.bf16.msra.mxu0 %v562
    %3253 = vmatmul.bf16.gmra.mxu0 %v3244
    %v3254 = vpop.f32.mrf.mxu0
    %v3255 = vadd.f32 0.0, %v3254
    %v3256 = vpop.f32.mrf.mxu0
    %3257 = vdwg.mxu0
    %3258 = vmatpush.bf16.msra.mxu0 %v630
    %3259 = vmatpush.bf16.msra.mxu0 %v629
    %3260 = vmatpush.bf16.msra.mxu0 %v628
    %3261 = vmatpush.bf16.msra.mxu0 %v627
    %3262 = vmatpush.bf16.msra.mxu0 %v626
    %3263 = vmatpush.bf16.msra.mxu0 %v625
    %3264 = vmatpush.bf16.msra.mxu0 %v624
    %3265 = vmatpush.bf16.msra.mxu0 %v623
    %3266 = vmatmul.bf16.gmra.mxu0 %v3243
    %v3267 = vpop.f32.mrf.mxu0
    %v3268 = vadd.f32 %v3255, %v3267
    %v3269 = vpop.f32.mrf.mxu0
    %3270 = vdwg.mxu0
    %v3271 = vadd.f32 %v3268, %v653
    %v3272 = vtanh.pop %v3271
    %v3273 = vxor.u32 %v3271, 2147483648
    %v3274 = vmul.f32 %v3273, 1.442695
    %v3275 = vpow.pop %v3274
    %v3276 = vadd.f32 %v3275, 1.0
    %v3277 = vrcp.pop %v3276
    %v3278 = vmul.f32 %v3276, %v3277
    %v3279 = vsub.f32 1.0, %v3278
    %v3280 = vmul.f32 %v3277, %v3279
    %v3281 = vadd.f32 %v3277, %v3280
    %vm3282 = vweird.f32 %v3276
    %vm3283 = vweird.f32 %v3277
    %vm3284 = vmor %vm3282, %vm3283
    %v3285 = vsel %vm3284, %v3277, %v3281
    %v3286 = vand.u32 2147483647, %v3276
    %vm3287 = vcmp.eq.f32.partialorder %v3286, 8.507059e+37
    %v3288 = vand.u32 %v3276, 2147483648
    %v3289 = vor.u32 1.1754944e-38, %v3288
    %v3290 = vsel %vm3287, %v3289, %v3285
    %v3291 = vmul.f32 1.0, %v3290
    %v3292 = vsel %vm385, %v3272, %v3291
    %3293 = vrot.lane.b32.xlu0 %v3292, 96
    %v3294 = vpop.permute.xlu0 %3293
    %3295 = vrot.lane.b32.xlu0 %v3292, 64
    %v3296 = vpop.permute.xlu0 %3295
    %3297 = vrot.lane.b32.xlu0 %v3292, 32
    %v3298 = vpop.permute.xlu0 %3297
    %v3299 = vmul.f32 %v3294, %v3192
    %v3300 = vmul.f32 %v3292, %v3296
    %v3301 = vadd.f32 %v3299, %v3300
    %v3302 = vtanh.pop %v3301
    %v3303 = vmul.f32 %v3298, %v3302
    %s3304 = scalar_lea.vmem [#allocation2], 200
    %v3305 = vld [vmem:[%s3304] sm:$0xff]
    %3306 = vmatpush.bf16.msra.mxu0 %v442
    %3307 = vmatpush.bf16.msra.mxu0 %v441
    %3308 = vmatpush.bf16.msra.mxu0 %v440
    %3309 = vmatpush.bf16.msra.mxu0 %v439
    %3310 = vmatpush.bf16.msra.mxu0 %v438
    %3311 = vmatpush.bf16.msra.mxu0 %v437
    %3312 = vmatpush.bf16.msra.mxu0 %v436
    %3313 = vmatpush.bf16.msra.mxu0 %v435
    %3314 = vmatmul.bf16.gmra.mxu0 %v3243
    %v3315 = vpop.f32.mrf.mxu0
    %v3316 = vadd.f32 0.0, %v3315
    %v3317 = vpop.f32.mrf.mxu0
    %3318 = vdwg.mxu0
    %v3319 = vadd.f32 %v3305, %v3316
    %v3320 = vtanh.pop %v3319
    %v3321 = vxor.u32 %v3319, 2147483648
    %v3322 = vmul.f32 %v3321, 1.442695
    %v3323 = vpow.pop %v3322
    %v3324 = vadd.f32 %v3323, 1.0
    %v3325 = vrcp.pop %v3324
    %v3326 = vmul.f32 %v3324, %v3325
    %v3327 = vsub.f32 1.0, %v3326
    %v3328 = vmul.f32 %v3325, %v3327
    %v3329 = vadd.f32 %v3325, %v3328
    %vm3330 = vweird.f32 %v3324
    %vm3331 = vweird.f32 %v3325
    %vm3332 = vmor %vm3330, %vm3331
    %v3333 = vsel %vm3332, %v3325, %v3329
    %v3334 = vand.u32 2147483647, %v3324
    %vm3335 = vcmp.eq.f32.partialorder %v3334, 8.507059e+37
    %v3336 = vand.u32 %v3324, 2147483648
    %v3337 = vor.u32 1.1754944e-38, %v3336
    %v3338 = vsel %vm3335, %v3337, %v3333
    %v3339 = vmul.f32 1.0, %v3338
    %v3340 = vsel %vm385, %v3320, %v3339
    %3341 = vrot.lane.b32.xlu0 %v3340, 96
    %v3342 = vpop.permute.xlu0 %3341
    %3343 = vrot.lane.b32.xlu0 %v3340, 64
    %v3344 = vpop.permute.xlu0 %3343
    %3345 = vrot.lane.b32.xlu0 %v3340, 32
    %v3346 = vpop.permute.xlu0 %3345
    %v3347 = vmul.f32 %v3342, %v3240
    %v3348 = vmul.f32 %v3340, %v3344
    %v3349 = vadd.f32 %v3347, %v3348
    %v3350 = vtanh.pop %v3349
    %v3351 = vmul.f32 %v3346, %v3350
    %v3352 = vpack.c.bf16 %v3351, %v3351
    %v3353 = vpack.c.bf16 %v3303, %v3303
    %3354 = vmatpush.bf16.msra.mxu0 %v569
    %3355 = vmatpush.bf16.msra.mxu0 %v568
    %3356 = vmatpush.bf16.msra.mxu0 %v567
    %3357 = vmatpush.bf16.msra.mxu0 %v566
    %3358 = vmatpush.bf16.msra.mxu0 %v565
    %3359 = vmatpush.bf16.msra.mxu0 %v564
    %3360 = vmatpush.bf16.msra.mxu0 %v563
    %3361 = vmatpush.bf16.msra.mxu0 %v562
    %3362 = vmatmul.bf16.gmra.mxu0 %v3353
    %v3363 = vpop.f32.mrf.mxu0
    %v3364 = vadd.f32 0.0, %v3363
    %v3365 = vpop.f32.mrf.mxu0
    %3366 = vdwg.mxu0
    %3367 = vmatpush.bf16.msra.mxu0 %v630
    %3368 = vmatpush.bf16.msra.mxu0 %v629
    %3369 = vmatpush.bf16.msra.mxu0 %v628
    %3370 = vmatpush.bf16.msra.mxu0 %v627
    %3371 = vmatpush.bf16.msra.mxu0 %v626
    %3372 = vmatpush.bf16.msra.mxu0 %v625
    %3373 = vmatpush.bf16.msra.mxu0 %v624
    %3374 = vmatpush.bf16.msra.mxu0 %v623
    %3375 = vmatmul.bf16.gmra.mxu0 %v3352
    %v3376 = vpop.f32.mrf.mxu0
    %v3377 = vadd.f32 %v3364, %v3376
    %v3378 = vpop.f32.mrf.mxu0
    %3379 = vdwg.mxu0
    %v3380 = vadd.f32 %v3377, %v653
    %v3381 = vtanh.pop %v3380
    %v3382 = vxor.u32 %v3380, 2147483648
    %v3383 = vmul.f32 %v3382, 1.442695
    %v3384 = vpow.pop %v3383
    %v3385 = vadd.f32 %v3384, 1.0
    %v3386 = vrcp.pop %v3385
    %v3387 = vmul.f32 %v3385, %v3386
    %v3388 = vsub.f32 1.0, %v3387
    %v3389 = vmul.f32 %v3386, %v3388
    %v3390 = vadd.f32 %v3386, %v3389
    %vm3391 = vweird.f32 %v3385
    %vm3392 = vweird.f32 %v3386
    %vm3393 = vmor %vm3391, %vm3392
    %v3394 = vsel %vm3393, %v3386, %v3390
    %v3395 = vand.u32 2147483647, %v3385
    %vm3396 = vcmp.eq.f32.partialorder %v3395, 8.507059e+37
    %v3397 = vand.u32 %v3385, 2147483648
    %v3398 = vor.u32 1.1754944e-38, %v3397
    %v3399 = vsel %vm3396, %v3398, %v3394
    %v3400 = vmul.f32 1.0, %v3399
    %v3401 = vsel %vm385, %v3381, %v3400
    %3402 = vrot.lane.b32.xlu0 %v3401, 96
    %v3403 = vpop.permute.xlu0 %3402
    %3404 = vrot.lane.b32.xlu0 %v3401, 64
    %v3405 = vpop.permute.xlu0 %3404
    %3406 = vrot.lane.b32.xlu0 %v3401, 32
    %v3407 = vpop.permute.xlu0 %3406
    %v3408 = vmul.f32 %v3403, %v3301
    %v3409 = vmul.f32 %v3401, %v3405
    %v3410 = vadd.f32 %v3408, %v3409
    %v3411 = vtanh.pop %v3410
    %v3412 = vmul.f32 %v3407, %v3411
    %s3413 = scalar_lea.vmem [#allocation2], 208
    %v3414 = vld [vmem:[%s3413] sm:$0xff]
    %3415 = vmatpush.bf16.msra.mxu0 %v442
    %3416 = vmatpush.bf16.msra.mxu0 %v441
    %3417 = vmatpush.bf16.msra.mxu0 %v440
    %3418 = vmatpush.bf16.msra.mxu0 %v439
    %3419 = vmatpush.bf16.msra.mxu0 %v438
    %3420 = vmatpush.bf16.msra.mxu0 %v437
    %3421 = vmatpush.bf16.msra.mxu0 %v436
    %3422 = vmatpush.bf16.msra.mxu0 %v435
    %3423 = vmatmul.bf16.gmra.mxu0 %v3352
    %v3424 = vpop.f32.mrf.mxu0
    %v3425 = vadd.f32 0.0, %v3424
    %v3426 = vpop.f32.mrf.mxu0
    %3427 = vdwg.mxu0
    %v3428 = vadd.f32 %v3414, %v3425
    %v3429 = vtanh.pop %v3428
    %v3430 = vxor.u32 %v3428, 2147483648
    %v3431 = vmul.f32 %v3430, 1.442695
    %v3432 = vpow.pop %v3431
    %v3433 = vadd.f32 %v3432, 1.0
    %v3434 = vrcp.pop %v3433
    %v3435 = vmul.f32 %v3433, %v3434
    %v3436 = vsub.f32 1.0, %v3435
    %v3437 = vmul.f32 %v3434, %v3436
    %v3438 = vadd.f32 %v3434, %v3437
    %vm3439 = vweird.f32 %v3433
    %vm3440 = vweird.f32 %v3434
    %vm3441 = vmor %vm3439, %vm3440
    %v3442 = vsel %vm3441, %v3434, %v3438
    %v3443 = vand.u32 2147483647, %v3433
    %vm3444 = vcmp.eq.f32.partialorder %v3443, 8.507059e+37
    %v3445 = vand.u32 %v3433, 2147483648
    %v3446 = vor.u32 1.1754944e-38, %v3445
    %v3447 = vsel %vm3444, %v3446, %v3442
    %v3448 = vmul.f32 1.0, %v3447
    %v3449 = vsel %vm385, %v3429, %v3448
    %3450 = vrot.lane.b32.xlu0 %v3449, 96
    %v3451 = vpop.permute.xlu0 %3450
    %3452 = vrot.lane.b32.xlu0 %v3449, 64
    %v3453 = vpop.permute.xlu0 %3452
    %3454 = vrot.lane.b32.xlu0 %v3449, 32
    %v3455 = vpop.permute.xlu0 %3454
    %v3456 = vmul.f32 %v3451, %v3349
    %v3457 = vmul.f32 %v3449, %v3453
    %v3458 = vadd.f32 %v3456, %v3457
    %v3459 = vtanh.pop %v3458
    %v3460 = vmul.f32 %v3455, %v3459
    %v3461 = vpack.c.bf16 %v3460, %v3460
    %v3462 = vpack.c.bf16 %v3412, %v3412
    %3463 = vmatpush.bf16.msra.mxu0 %v569
    %3464 = vmatpush.bf16.msra.mxu0 %v568
    %3465 = vmatpush.bf16.msra.mxu0 %v567
    %3466 = vmatpush.bf16.msra.mxu0 %v566
    %3467 = vmatpush.bf16.msra.mxu0 %v565
    %3468 = vmatpush.bf16.msra.mxu0 %v564
    %3469 = vmatpush.bf16.msra.mxu0 %v563
    %3470 = vmatpush.bf16.msra.mxu0 %v562
    %3471 = vmatmul.bf16.gmra.mxu0 %v3462
    %v3472 = vpop.f32.mrf.mxu0
    %v3473 = vadd.f32 0.0, %v3472
    %v3474 = vpop.f32.mrf.mxu0
    %3475 = vdwg.mxu0
    %3476 = vmatpush.bf16.msra.mxu0 %v630
    %3477 = vmatpush.bf16.msra.mxu0 %v629
    %3478 = vmatpush.bf16.msra.mxu0 %v628
    %3479 = vmatpush.bf16.msra.mxu0 %v627
    %3480 = vmatpush.bf16.msra.mxu0 %v626
    %3481 = vmatpush.bf16.msra.mxu0 %v625
    %3482 = vmatpush.bf16.msra.mxu0 %v624
    %3483 = vmatpush.bf16.msra.mxu0 %v623
    %3484 = vmatmul.bf16.gmra.mxu0 %v3461
    %v3485 = vpop.f32.mrf.mxu0
    %v3486 = vadd.f32 %v3473, %v3485
    %v3487 = vpop.f32.mrf.mxu0
    %3488 = vdwg.mxu0
    %v3489 = vadd.f32 %v3486, %v653
    %v3490 = vtanh.pop %v3489
    %v3491 = vxor.u32 %v3489, 2147483648
    %v3492 = vmul.f32 %v3491, 1.442695
    %v3493 = vpow.pop %v3492
    %v3494 = vadd.f32 %v3493, 1.0
    %v3495 = vrcp.pop %v3494
    %v3496 = vmul.f32 %v3494, %v3495
    %v3497 = vsub.f32 1.0, %v3496
    %v3498 = vmul.f32 %v3495, %v3497
    %v3499 = vadd.f32 %v3495, %v3498
    %vm3500 = vweird.f32 %v3494
    %vm3501 = vweird.f32 %v3495
    %vm3502 = vmor %vm3500, %vm3501
    %v3503 = vsel %vm3502, %v3495, %v3499
    %v3504 = vand.u32 2147483647, %v3494
    %vm3505 = vcmp.eq.f32.partialorder %v3504, 8.507059e+37
    %v3506 = vand.u32 %v3494, 2147483648
    %v3507 = vor.u32 1.1754944e-38, %v3506
    %v3508 = vsel %vm3505, %v3507, %v3503
    %v3509 = vmul.f32 1.0, %v3508
    %v3510 = vsel %vm385, %v3490, %v3509
    %3511 = vrot.lane.b32.xlu0 %v3510, 96
    %v3512 = vpop.permute.xlu0 %3511
    %3513 = vrot.lane.b32.xlu0 %v3510, 64
    %v3514 = vpop.permute.xlu0 %3513
    %3515 = vrot.lane.b32.xlu0 %v3510, 32
    %v3516 = vpop.permute.xlu0 %3515
    %v3517 = vmul.f32 %v3512, %v3410
    %v3518 = vmul.f32 %v3510, %v3514
    %v3519 = vadd.f32 %v3517, %v3518
    %v3520 = vtanh.pop %v3519
    %v3521 = vmul.f32 %v3516, %v3520
    %s3522 = scalar_lea.vmem [#allocation2], 216
    %v3523 = vld [vmem:[%s3522] sm:$0xff]
    %3524 = vmatpush.bf16.msra.mxu0 %v442
    %3525 = vmatpush.bf16.msra.mxu0 %v441
    %3526 = vmatpush.bf16.msra.mxu0 %v440
    %3527 = vmatpush.bf16.msra.mxu0 %v439
    %3528 = vmatpush.bf16.msra.mxu0 %v438
    %3529 = vmatpush.bf16.msra.mxu0 %v437
    %3530 = vmatpush.bf16.msra.mxu0 %v436
    %3531 = vmatpush.bf16.msra.mxu0 %v435
    %3532 = vmatmul.bf16.gmra.mxu0 %v3461
    %v3533 = vpop.f32.mrf.mxu0
    %v3534 = vadd.f32 0.0, %v3533
    %v3535 = vpop.f32.mrf.mxu0
    %3536 = vdwg.mxu0
    %v3537 = vadd.f32 %v3523, %v3534
    %v3538 = vtanh.pop %v3537
    %v3539 = vxor.u32 %v3537, 2147483648
    %v3540 = vmul.f32 %v3539, 1.442695
    %v3541 = vpow.pop %v3540
    %v3542 = vadd.f32 %v3541, 1.0
    %v3543 = vrcp.pop %v3542
    %v3544 = vmul.f32 %v3542, %v3543
    %v3545 = vsub.f32 1.0, %v3544
    %v3546 = vmul.f32 %v3543, %v3545
    %v3547 = vadd.f32 %v3543, %v3546
    %vm3548 = vweird.f32 %v3542
    %vm3549 = vweird.f32 %v3543
    %vm3550 = vmor %vm3548, %vm3549
    %v3551 = vsel %vm3550, %v3543, %v3547
    %v3552 = vand.u32 2147483647, %v3542
    %vm3553 = vcmp.eq.f32.partialorder %v3552, 8.507059e+37
    %v3554 = vand.u32 %v3542, 2147483648
    %v3555 = vor.u32 1.1754944e-38, %v3554
    %v3556 = vsel %vm3553, %v3555, %v3551
    %v3557 = vmul.f32 1.0, %v3556
    %v3558 = vsel %vm385, %v3538, %v3557
    %3559 = vrot.lane.b32.xlu0 %v3558, 96
    %v3560 = vpop.permute.xlu0 %3559
    %3561 = vrot.lane.b32.xlu0 %v3558, 64
    %v3562 = vpop.permute.xlu0 %3561
    %3563 = vrot.lane.b32.xlu0 %v3558, 32
    %v3564 = vpop.permute.xlu0 %3563
    %v3565 = vmul.f32 %v3560, %v3458
    %v3566 = vmul.f32 %v3558, %v3562
    %v3567 = vadd.f32 %v3565, %v3566
    %v3568 = vtanh.pop %v3567
    %v3569 = vmul.f32 %v3564, %v3568
    %v3570 = vpack.c.bf16 %v3569, %v3569
    %v3571 = vpack.c.bf16 %v3521, %v3521
    %3572 = vmatpush.bf16.msra.mxu0 %v569
    %3573 = vmatpush.bf16.msra.mxu0 %v568
    %3574 = vmatpush.bf16.msra.mxu0 %v567
    %3575 = vmatpush.bf16.msra.mxu0 %v566
    %3576 = vmatpush.bf16.msra.mxu0 %v565
    %3577 = vmatpush.bf16.msra.mxu0 %v564
    %3578 = vmatpush.bf16.msra.mxu0 %v563
    %3579 = vmatpush.bf16.msra.mxu0 %v562
    %3580 = vmatmul.bf16.gmra.mxu0 %v3571
    %v3581 = vpop.f32.mrf.mxu0
    %v3582 = vadd.f32 0.0, %v3581
    %v3583 = vpop.f32.mrf.mxu0
    %3584 = vdwg.mxu0
    %3585 = vmatpush.bf16.msra.mxu0 %v630
    %3586 = vmatpush.bf16.msra.mxu0 %v629
    %3587 = vmatpush.bf16.msra.mxu0 %v628
    %3588 = vmatpush.bf16.msra.mxu0 %v627
    %3589 = vmatpush.bf16.msra.mxu0 %v626
    %3590 = vmatpush.bf16.msra.mxu0 %v625
    %3591 = vmatpush.bf16.msra.mxu0 %v624
    %3592 = vmatpush.bf16.msra.mxu0 %v623
    %3593 = vmatmul.bf16.gmra.mxu0 %v3570
    %v3594 = vpop.f32.mrf.mxu0
    %v3595 = vadd.f32 %v3582, %v3594
    %v3596 = vpop.f32.mrf.mxu0
    %3597 = vdwg.mxu0
    %v3598 = vadd.f32 %v3595, %v653
    %v3599 = vtanh.pop %v3598
    %v3600 = vxor.u32 %v3598, 2147483648
    %v3601 = vmul.f32 %v3600, 1.442695
    %v3602 = vpow.pop %v3601
    %v3603 = vadd.f32 %v3602, 1.0
    %v3604 = vrcp.pop %v3603
    %v3605 = vmul.f32 %v3603, %v3604
    %v3606 = vsub.f32 1.0, %v3605
    %v3607 = vmul.f32 %v3604, %v3606
    %v3608 = vadd.f32 %v3604, %v3607
    %vm3609 = vweird.f32 %v3603
    %vm3610 = vweird.f32 %v3604
    %vm3611 = vmor %vm3609, %vm3610
    %v3612 = vsel %vm3611, %v3604, %v3608
    %v3613 = vand.u32 2147483647, %v3603
    %vm3614 = vcmp.eq.f32.partialorder %v3613, 8.507059e+37
    %v3615 = vand.u32 %v3603, 2147483648
    %v3616 = vor.u32 1.1754944e-38, %v3615
    %v3617 = vsel %vm3614, %v3616, %v3612
    %v3618 = vmul.f32 1.0, %v3617
    %v3619 = vsel %vm385, %v3599, %v3618
    %3620 = vrot.lane.b32.xlu0 %v3619, 96
    %v3621 = vpop.permute.xlu0 %3620
    %3622 = vrot.lane.b32.xlu0 %v3619, 64
    %v3623 = vpop.permute.xlu0 %3622
    %3624 = vrot.lane.b32.xlu0 %v3619, 32
    %v3625 = vpop.permute.xlu0 %3624
    %v3626 = vmul.f32 %v3621, %v3519
    %v3627 = vmul.f32 %v3619, %v3623
    %v3628 = vadd.f32 %v3626, %v3627
    %v3629 = vtanh.pop %v3628
    %v3630 = vmul.f32 %v3625, %v3629
    %s3631 = scalar_lea.vmem [#allocation2], 224
    %v3632 = vld [vmem:[%s3631] sm:$0xff]
    %3633 = vmatpush.bf16.msra.mxu0 %v442
    %3634 = vmatpush.bf16.msra.mxu0 %v441
    %3635 = vmatpush.bf16.msra.mxu0 %v440
    %3636 = vmatpush.bf16.msra.mxu0 %v439
    %3637 = vmatpush.bf16.msra.mxu0 %v438
    %3638 = vmatpush.bf16.msra.mxu0 %v437
    %3639 = vmatpush.bf16.msra.mxu0 %v436
    %3640 = vmatpush.bf16.msra.mxu0 %v435
    %3641 = vmatmul.bf16.gmra.mxu0 %v3570
    %v3642 = vpop.f32.mrf.mxu0
    %v3643 = vadd.f32 0.0, %v3642
    %v3644 = vpop.f32.mrf.mxu0
    %3645 = vdwg.mxu0
    %v3646 = vadd.f32 %v3632, %v3643
    %v3647 = vtanh.pop %v3646
    %v3648 = vxor.u32 %v3646, 2147483648
    %v3649 = vmul.f32 %v3648, 1.442695
    %v3650 = vpow.pop %v3649
    %v3651 = vadd.f32 %v3650, 1.0
    %v3652 = vrcp.pop %v3651
    %v3653 = vmul.f32 %v3651, %v3652
    %v3654 = vsub.f32 1.0, %v3653
    %v3655 = vmul.f32 %v3652, %v3654
    %v3656 = vadd.f32 %v3652, %v3655
    %vm3657 = vweird.f32 %v3651
    %vm3658 = vweird.f32 %v3652
    %vm3659 = vmor %vm3657, %vm3658
    %v3660 = vsel %vm3659, %v3652, %v3656
    %v3661 = vand.u32 2147483647, %v3651
    %vm3662 = vcmp.eq.f32.partialorder %v3661, 8.507059e+37
    %v3663 = vand.u32 %v3651, 2147483648
    %v3664 = vor.u32 1.1754944e-38, %v3663
    %v3665 = vsel %vm3662, %v3664, %v3660
    %v3666 = vmul.f32 1.0, %v3665
    %v3667 = vsel %vm385, %v3647, %v3666
    %3668 = vrot.lane.b32.xlu0 %v3667, 96
    %v3669 = vpop.permute.xlu0 %3668
    %3670 = vrot.lane.b32.xlu0 %v3667, 64
    %v3671 = vpop.permute.xlu0 %3670
    %3672 = vrot.lane.b32.xlu0 %v3667, 32
    %v3673 = vpop.permute.xlu0 %3672
    %v3674 = vmul.f32 %v3669, %v3567
    %v3675 = vmul.f32 %v3667, %v3671
    %v3676 = vadd.f32 %v3674, %v3675
    %v3677 = vtanh.pop %v3676
    %v3678 = vmul.f32 %v3673, %v3677
    %v3679 = vpack.c.bf16 %v3678, %v3678
    %v3680 = vpack.c.bf16 %v3630, %v3630
    %3681 = vmatpush.bf16.msra.mxu0 %v569
    %3682 = vmatpush.bf16.msra.mxu0 %v568
    %3683 = vmatpush.bf16.msra.mxu0 %v567
    %3684 = vmatpush.bf16.msra.mxu0 %v566
    %3685 = vmatpush.bf16.msra.mxu0 %v565
    %3686 = vmatpush.bf16.msra.mxu0 %v564
    %3687 = vmatpush.bf16.msra.mxu0 %v563
    %3688 = vmatpush.bf16.msra.mxu0 %v562
    %3689 = vmatmul.bf16.gmra.mxu0 %v3680
    %v3690 = vpop.f32.mrf.mxu0
    %v3691 = vadd.f32 0.0, %v3690
    %v3692 = vpop.f32.mrf.mxu0
    %3693 = vdwg.mxu0
    %3694 = vmatpush.bf16.msra.mxu0 %v630
    %3695 = vmatpush.bf16.msra.mxu0 %v629
    %3696 = vmatpush.bf16.msra.mxu0 %v628
    %3697 = vmatpush.bf16.msra.mxu0 %v627
    %3698 = vmatpush.bf16.msra.mxu0 %v626
    %3699 = vmatpush.bf16.msra.mxu0 %v625
    %3700 = vmatpush.bf16.msra.mxu0 %v624
    %3701 = vmatpush.bf16.msra.mxu0 %v623
    %3702 = vmatmul.bf16.gmra.mxu0 %v3679
    %v3703 = vpop.f32.mrf.mxu0
    %v3704 = vadd.f32 %v3691, %v3703
    %v3705 = vpop.f32.mrf.mxu0
    %3706 = vdwg.mxu0
    %v3707 = vadd.f32 %v3704, %v653
    %v3708 = vtanh.pop %v3707
    %v3709 = vxor.u32 %v3707, 2147483648
    %v3710 = vmul.f32 %v3709, 1.442695
    %v3711 = vpow.pop %v3710
    %v3712 = vadd.f32 %v3711, 1.0
    %v3713 = vrcp.pop %v3712
    %v3714 = vmul.f32 %v3712, %v3713
    %v3715 = vsub.f32 1.0, %v3714
    %v3716 = vmul.f32 %v3713, %v3715
    %v3717 = vadd.f32 %v3713, %v3716
    %vm3718 = vweird.f32 %v3712
    %vm3719 = vweird.f32 %v3713
    %vm3720 = vmor %vm3718, %vm3719
    %v3721 = vsel %vm3720, %v3713, %v3717
    %v3722 = vand.u32 2147483647, %v3712
    %vm3723 = vcmp.eq.f32.partialorder %v3722, 8.507059e+37
    %v3724 = vand.u32 %v3712, 2147483648
    %v3725 = vor.u32 1.1754944e-38, %v3724
    %v3726 = vsel %vm3723, %v3725, %v3721
    %v3727 = vmul.f32 1.0, %v3726
    %v3728 = vsel %vm385, %v3708, %v3727
    %3729 = vrot.lane.b32.xlu0 %v3728, 96
    %v3730 = vpop.permute.xlu0 %3729
    %3731 = vrot.lane.b32.xlu0 %v3728, 64
    %v3732 = vpop.permute.xlu0 %3731
    %3733 = vrot.lane.b32.xlu0 %v3728, 32
    %v3734 = vpop.permute.xlu0 %3733
    %v3735 = vmul.f32 %v3730, %v3628
    %v3736 = vmul.f32 %v3728, %v3732
    %v3737 = vadd.f32 %v3735, %v3736
    %v3738 = vtanh.pop %v3737
    %v3739 = vmul.f32 %v3734, %v3738
    %s3740 = scalar_lea.vmem [#allocation2], 232
    %v3741 = vld [vmem:[%s3740] sm:$0xff]
    %3742 = vmatpush.bf16.msra.mxu0 %v442
    %3743 = vmatpush.bf16.msra.mxu0 %v441
    %3744 = vmatpush.bf16.msra.mxu0 %v440
    %3745 = vmatpush.bf16.msra.mxu0 %v439
    %3746 = vmatpush.bf16.msra.mxu0 %v438
    %3747 = vmatpush.bf16.msra.mxu0 %v437
    %3748 = vmatpush.bf16.msra.mxu0 %v436
    %3749 = vmatpush.bf16.msra.mxu0 %v435
    %3750 = vmatmul.bf16.gmra.mxu0 %v3679
    %v3751 = vpop.f32.mrf.mxu0
    %v3752 = vadd.f32 0.0, %v3751
    %v3753 = vpop.f32.mrf.mxu0
    %3754 = vdwg.mxu0
    %v3755 = vadd.f32 %v3741, %v3752
    %v3756 = vtanh.pop %v3755
    %v3757 = vxor.u32 %v3755, 2147483648
    %v3758 = vmul.f32 %v3757, 1.442695
    %v3759 = vpow.pop %v3758
    %v3760 = vadd.f32 %v3759, 1.0
    %v3761 = vrcp.pop %v3760
    %v3762 = vmul.f32 %v3760, %v3761
    %v3763 = vsub.f32 1.0, %v3762
    %v3764 = vmul.f32 %v3761, %v3763
    %v3765 = vadd.f32 %v3761, %v3764
    %vm3766 = vweird.f32 %v3760
    %vm3767 = vweird.f32 %v3761
    %vm3768 = vmor %vm3766, %vm3767
    %v3769 = vsel %vm3768, %v3761, %v3765
    %v3770 = vand.u32 2147483647, %v3760
    %vm3771 = vcmp.eq.f32.partialorder %v3770, 8.507059e+37
    %v3772 = vand.u32 %v3760, 2147483648
    %v3773 = vor.u32 1.1754944e-38, %v3772
    %v3774 = vsel %vm3771, %v3773, %v3769
    %v3775 = vmul.f32 1.0, %v3774
    %v3776 = vsel %vm385, %v3756, %v3775
    %3777 = vrot.lane.b32.xlu0 %v3776, 96
    %v3778 = vpop.permute.xlu0 %3777
    %3779 = vrot.lane.b32.xlu0 %v3776, 64
    %v3780 = vpop.permute.xlu0 %3779
    %3781 = vrot.lane.b32.xlu0 %v3776, 32
    %v3782 = vpop.permute.xlu0 %3781
    %v3783 = vmul.f32 %v3778, %v3676
    %v3784 = vmul.f32 %v3776, %v3780
    %v3785 = vadd.f32 %v3783, %v3784
    %v3786 = vtanh.pop %v3785
    %v3787 = vmul.f32 %v3782, %v3786
    %v3788 = vpack.c.bf16 %v3787, %v3787
    %v3789 = vpack.c.bf16 %v3739, %v3739
    %3790 = vmatpush.bf16.msra.mxu0 %v569
    %3791 = vmatpush.bf16.msra.mxu0 %v568
    %3792 = vmatpush.bf16.msra.mxu0 %v567
    %3793 = vmatpush.bf16.msra.mxu0 %v566
    %3794 = vmatpush.bf16.msra.mxu0 %v565
    %3795 = vmatpush.bf16.msra.mxu0 %v564
    %3796 = vmatpush.bf16.msra.mxu0 %v563
    %3797 = vmatpush.bf16.msra.mxu0 %v562
    %3798 = vmatmul.bf16.gmra.mxu0 %v3789
    %v3799 = vpop.f32.mrf.mxu0
    %v3800 = vadd.f32 0.0, %v3799
    %v3801 = vpop.f32.mrf.mxu0
    %3802 = vdwg.mxu0
    %3803 = vmatpush.bf16.msra.mxu0 %v630
    %3804 = vmatpush.bf16.msra.mxu0 %v629
    %3805 = vmatpush.bf16.msra.mxu0 %v628
    %3806 = vmatpush.bf16.msra.mxu0 %v627
    %3807 = vmatpush.bf16.msra.mxu0 %v626
    %3808 = vmatpush.bf16.msra.mxu0 %v625
    %3809 = vmatpush.bf16.msra.mxu0 %v624
    %3810 = vmatpush.bf16.msra.mxu0 %v623
    %3811 = vmatmul.bf16.gmra.mxu0 %v3788
    %v3812 = vpop.f32.mrf.mxu0
    %v3813 = vadd.f32 %v3800, %v3812
    %v3814 = vpop.f32.mrf.mxu0
    %3815 = vdwg.mxu0
    %v3816 = vadd.f32 %v3813, %v653
    %v3817 = vtanh.pop %v3816
    %v3818 = vxor.u32 %v3816, 2147483648
    %v3819 = vmul.f32 %v3818, 1.442695
    %v3820 = vpow.pop %v3819
    %v3821 = vadd.f32 %v3820, 1.0
    %v3822 = vrcp.pop %v3821
    %v3823 = vmul.f32 %v3821, %v3822
    %v3824 = vsub.f32 1.0, %v3823
    %v3825 = vmul.f32 %v3822, %v3824
    %v3826 = vadd.f32 %v3822, %v3825
    %vm3827 = vweird.f32 %v3821
    %vm3828 = vweird.f32 %v3822
    %vm3829 = vmor %vm3827, %vm3828
    %v3830 = vsel %vm3829, %v3822, %v3826
    %v3831 = vand.u32 2147483647, %v3821
    %vm3832 = vcmp.eq.f32.partialorder %v3831, 8.507059e+37
    %v3833 = vand.u32 %v3821, 2147483648
    %v3834 = vor.u32 1.1754944e-38, %v3833
    %v3835 = vsel %vm3832, %v3834, %v3830
    %v3836 = vmul.f32 1.0, %v3835
    %v3837 = vsel %vm385, %v3817, %v3836
    %3838 = vrot.lane.b32.xlu0 %v3837, 96
    %v3839 = vpop.permute.xlu0 %3838
    %3840 = vrot.lane.b32.xlu0 %v3837, 64
    %v3841 = vpop.permute.xlu0 %3840
    %3842 = vrot.lane.b32.xlu0 %v3837, 32
    %v3843 = vpop.permute.xlu0 %3842
    %v3844 = vmul.f32 %v3839, %v3737
    %v3845 = vmul.f32 %v3837, %v3841
    %v3846 = vadd.f32 %v3844, %v3845
    %v3847 = vtanh.pop %v3846
    %v3848 = vmul.f32 %v3843, %v3847
    %v3849 = vpack.c.bf16 %v3848, %v3848
    %v3850 = vld [vmem:[#allocation3] sm:$0xf]
    %v3851 = vld [vmem:[#allocation3 + $0x4] sm:$0xf]
    %v3852 = vld [vmem:[#allocation3 + $0x8] sm:$0xf]
    %v3853 = vld [vmem:[#allocation3 + $0xc] sm:$0xf]
    %v3854 = vld [vmem:[#allocation3 + $0x10] sm:$0xf]
    %v3855 = vld [vmem:[#allocation3 + $0x14] sm:$0xf]
    %v3856 = vld [vmem:[#allocation3 + $0x18] sm:$0xf]
    %v3857 = vld [vmem:[#allocation3 + $0x1c] sm:$0xf]
    %v3858 = vld [vmem:[#allocation3 + $0x20] sm:$0xf]
    %v3859 = vld [vmem:[#allocation3 + $0x24] sm:$0xf]
    %v3860 = vld [vmem:[#allocation3 + $0x28] sm:$0xf]
    %v3861 = vld [vmem:[#allocation3 + $0x2c] sm:$0xf]
    %v3862 = vld [vmem:[#allocation3 + $0x30] sm:$0xf]
    %v3863 = vld [vmem:[#allocation3 + $0x34] sm:$0xf]
    %v3864 = vld [vmem:[#allocation3 + $0x38] sm:$0xf]
    %v3865 = vld [vmem:[#allocation3 + $0x3c] sm:$0xf]
    %v3866 = vld [vmem:[%s8] sm:$0x1]
    %v3868 = vperm.slane %v3866, 0
    %v3886 = vunpack.c.l.b16 %v3850
    %v3887 = vunpack.c.l.b16 %v3851
    %v3888 = vunpack.c.l.b16 %v3852
    %v3889 = vunpack.c.l.b16 %v3853
    %v3890 = vunpack.c.l.b16 %v3854
    %v3891 = vunpack.c.l.b16 %v3855
    %v3892 = vunpack.c.l.b16 %v3856
    %v3893 = vunpack.c.l.b16 %v3857
    %v3894 = vunpack.c.l.b16 %v3858
    %v3895 = vunpack.c.l.b16 %v3859
    %v3896 = vunpack.c.l.b16 %v3860
    %v3897 = vunpack.c.l.b16 %v3861
    %v3898 = vunpack.c.l.b16 %v3862
    %v3899 = vunpack.c.l.b16 %v3863
    %v3900 = vunpack.c.l.b16 %v3864
    %v3901 = vunpack.c.l.b16 %v3865
    %v3902 = vpack.c.b16 %v3887, %v3886
    %v3903 = vpack.c.b16 %v3889, %v3888
    %v3904 = vpack.c.b16 %v3891, %v3890
    %v3905 = vpack.c.b16 %v3893, %v3892
    %v3906 = vpack.c.b16 %v3895, %v3894
    %v3907 = vpack.c.b16 %v3897, %v3896
    %v3908 = vpack.c.b16 %v3899, %v3898
    %v3909 = vpack.c.b16 %v3901, %v3900
    %3918 = vmatpush.bf16.msra.mxu0 %v3909
    %3919 = vmatpush.bf16.msra.mxu0 %v3908
    %3920 = vmatpush.bf16.msra.mxu0 %v3907
    %3921 = vmatpush.bf16.msra.mxu0 %v3906
    %3922 = vmatpush.bf16.msra.mxu0 %v3905
    %3923 = vmatpush.bf16.msra.mxu0 %v3904
    %3924 = vmatpush.bf16.msra.mxu0 %v3903
    %3925 = vmatpush.bf16.msra.mxu0 %v3902
    %3926 = vmatmul.bf16.gmra.mxu0 %v3849
    %v3927 = vpop.f32.mrf.mxu0
    %v3928 = vadd.f32 %v3868, %v3927
    %v3929 = vpop.f32.mrf.mxu0
    %3930 = vdwg.mxu0
    %v3931 = vxor.u32 %v3928, 2147483648
    %v3932 = vmul.f32 %v3931, 1.442695
    %v3933 = vpow.pop %v3932
    %v3934 = vadd.f32 %v3933, 1.0
    %v3935 = vrcp.pop %v3934
    %v3936 = vmul.f32 %v3934, %v3935
    %v3937 = vsub.f32 1.0, %v3936
    %v3938 = vmul.f32 %v3935, %v3937
    %v3939 = vadd.f32 %v3935, %v3938
    %vm3940 = vweird.f32 %v3934
    %vm3941 = vweird.f32 %v3935
    %vm3942 = vmor %vm3940, %vm3941
    %v3943 = vsel %vm3942, %v3935, %v3939
    %v3944 = vand.u32 2147483647, %v3934
    %vm3945 = vcmp.eq.f32.partialorder %v3944, 8.507059e+37
    %v3946 = vand.u32 %v3934, 2147483648
    %v3947 = vor.u32 1.1754944e-38, %v3946
    %v3948 = vsel %vm3945, %v3947, %v3943
    %v3949 = vmul.f32 1.0, %v3948
    %v3950 = vmul.f32 %v3928, %v3949
    %v3951 = vpack.c.bf16 %v3950, %v3950
    %v3952 = vld [vmem:[#allocation6] sm:$0xf]
    %v3953 = vld [vmem:[#allocation6 + $0x4] sm:$0xf]
    %v3954 = vld [vmem:[#allocation6 + $0x8] sm:$0xf]
    %v3955 = vld [vmem:[#allocation6 + $0xc] sm:$0xf]
    %v3956 = vld [vmem:[#allocation6 + $0x10] sm:$0xf]
    %v3957 = vld [vmem:[#allocation6 + $0x14] sm:$0xf]
    %v3958 = vld [vmem:[#allocation6 + $0x18] sm:$0xf]
    %v3959 = vld [vmem:[#allocation6 + $0x1c] sm:$0xf]
    %v3960 = vld [vmem:[#allocation6 + $0x20] sm:$0xf]
    %v3961 = vld [vmem:[#allocation6 + $0x24] sm:$0xf]
    %v3962 = vld [vmem:[#allocation6 + $0x28] sm:$0xf]
    %v3963 = vld [vmem:[#allocation6 + $0x2c] sm:$0xf]
    %v3964 = vld [vmem:[#allocation6 + $0x30] sm:$0xf]
    %v3965 = vld [vmem:[#allocation6 + $0x34] sm:$0xf]
    %v3966 = vld [vmem:[#allocation6 + $0x38] sm:$0xf]
    %v3967 = vld [vmem:[#allocation6 + $0x3c] sm:$0xf]
    %v3968 = vld [vmem:[%s10] sm:$0x1]
    %v3970 = vperm.slane %v3968, 0
    %v3988 = vunpack.c.l.b16 %v3952
    %v3989 = vunpack.c.l.b16 %v3953
    %v3990 = vunpack.c.l.b16 %v3954
    %v3991 = vunpack.c.l.b16 %v3955
    %v3992 = vunpack.c.l.b16 %v3956
    %v3993 = vunpack.c.l.b16 %v3957
    %v3994 = vunpack.c.l.b16 %v3958
    %v3995 = vunpack.c.l.b16 %v3959
    %v3996 = vunpack.c.l.b16 %v3960
    %v3997 = vunpack.c.l.b16 %v3961
    %v3998 = vunpack.c.l.b16 %v3962
    %v3999 = vunpack.c.l.b16 %v3963
    %v4000 = vunpack.c.l.b16 %v3964
    %v4001 = vunpack.c.l.b16 %v3965
    %v4002 = vunpack.c.l.b16 %v3966
    %v4003 = vunpack.c.l.b16 %v3967
    %v4004 = vpack.c.b16 %v3989, %v3988
    %v4005 = vpack.c.b16 %v3991, %v3990
    %v4006 = vpack.c.b16 %v3993, %v3992
    %v4007 = vpack.c.b16 %v3995, %v3994
    %v4008 = vpack.c.b16 %v3997, %v3996
    %v4009 = vpack.c.b16 %v3999, %v3998
    %v4010 = vpack.c.b16 %v4001, %v4000
    %v4011 = vpack.c.b16 %v4003, %v4002
    %4020 = vmatpush.bf16.msra.mxu0 %v4011
    %4021 = vmatpush.bf16.msra.mxu0 %v4010
    %4022 = vmatpush.bf16.msra.mxu0 %v4009
    %4023 = vmatpush.bf16.msra.mxu0 %v4008
    %4024 = vmatpush.bf16.msra.mxu0 %v4007
    %4025 = vmatpush.bf16.msra.mxu0 %v4006
    %4026 = vmatpush.bf16.msra.mxu0 %v4005
    %4027 = vmatpush.bf16.msra.mxu0 %v4004
    %4028 = vmatmul.bf16.gmra.mxu0 %v3951
    %v4029 = vpop.f32.mrf.mxu0
    %v4030 = vadd.f32 %v3970, %v4029
    %v4031 = vpop.f32.mrf.mxu0
    %4032 = vdwg.mxu0
    %v4033 = vxor.u32 %v4030, 2147483648
    %v4034 = vmul.f32 %v4033, 1.442695
    %v4035 = vpow.pop %v4034
    %v4036 = vadd.f32 %v4035, 1.0
    %v4037 = vrcp.pop %v4036
    %v4038 = vmul.f32 %v4036, %v4037
    %v4039 = vsub.f32 1.0, %v4038
    %v4040 = vmul.f32 %v4037, %v4039
    %v4041 = vadd.f32 %v4037, %v4040
    %vm4042 = vweird.f32 %v4036
    %vm4043 = vweird.f32 %v4037
    %vm4044 = vmor %vm4042, %vm4043
    %v4045 = vsel %vm4044, %v4037, %v4041
    %v4046 = vand.u32 2147483647, %v4036
    %vm4047 = vcmp.eq.f32.partialorder %v4046, 8.507059e+37
    %v4048 = vand.u32 %v4036, 2147483648
    %v4049 = vor.u32 1.1754944e-38, %v4048
    %v4050 = vsel %vm4047, %v4049, %v4045
    %v4051 = vmul.f32 1.0, %v4050
    %v4052 = vmul.f32 %v4030, %v4051
    %v4053 = vpack.c.bf16 %v4052, %v4052
    %v4054 = vld [vmem:[%s11] sm:$0xf]
    %v4055 = vld [vmem:[%s11 + $0x4] sm:$0xf]
    %v4056 = vld [vmem:[%s11 + $0x8] sm:$0xf]
    %v4057 = vld [vmem:[%s11 + $0xc] sm:$0xf]
    %v4058 = vld [vmem:[%s11 + $0x10] sm:$0xf]
    %v4059 = vld [vmem:[%s11 + $0x14] sm:$0xf]
    %v4060 = vld [vmem:[%s11 + $0x18] sm:$0xf]
    %v4061 = vld [vmem:[%s11 + $0x1c] sm:$0xf]
    %v4062 = vld [vmem:[%s11 + $0x20] sm:$0xf]
    %v4063 = vld [vmem:[%s11 + $0x24] sm:$0xf]
    %v4064 = vld [vmem:[%s11 + $0x28] sm:$0xf]
    %v4065 = vld [vmem:[%s11 + $0x2c] sm:$0xf]
    %v4066 = vld [vmem:[%s11 + $0x30] sm:$0xf]
    %v4067 = vld [vmem:[%s11 + $0x34] sm:$0xf]
    %v4068 = vld [vmem:[%s11 + $0x38] sm:$0xf]
    %v4069 = vld [vmem:[%s11 + $0x3c] sm:$0xf]
    %v4070 = vld [vmem:[%s12] sm:$0x1]
    %v4072 = vperm.slane %v4070, 0
    %v4090 = vunpack.c.l.b16 %v4054
    %v4091 = vunpack.c.l.b16 %v4055
    %v4092 = vunpack.c.l.b16 %v4056
    %v4093 = vunpack.c.l.b16 %v4057
    %v4094 = vunpack.c.l.b16 %v4058
    %v4095 = vunpack.c.l.b16 %v4059
    %v4096 = vunpack.c.l.b16 %v4060
    %v4097 = vunpack.c.l.b16 %v4061
    %v4098 = vunpack.c.l.b16 %v4062
    %v4099 = vunpack.c.l.b16 %v4063
    %v4100 = vunpack.c.l.b16 %v4064
    %v4101 = vunpack.c.l.b16 %v4065
    %v4102 = vunpack.c.l.b16 %v4066
    %v4103 = vunpack.c.l.b16 %v4067
    %v4104 = vunpack.c.l.b16 %v4068
    %v4105 = vunpack.c.l.b16 %v4069
    %v4106 = vpack.c.b16 %v4091, %v4090
    %v4107 = vpack.c.b16 %v4093, %v4092
    %v4108 = vpack.c.b16 %v4095, %v4094
    %v4109 = vpack.c.b16 %v4097, %v4096
    %v4110 = vpack.c.b16 %v4099, %v4098
    %v4111 = vpack.c.b16 %v4101, %v4100
    %v4112 = vpack.c.b16 %v4103, %v4102
    %v4113 = vpack.c.b16 %v4105, %v4104
    %4122 = vmatpush.bf16.msra.mxu0 %v4113
    %4123 = vmatpush.bf16.msra.mxu0 %v4112
    %4124 = vmatpush.bf16.msra.mxu0 %v4111
    %4125 = vmatpush.bf16.msra.mxu0 %v4110
    %4126 = vmatpush.bf16.msra.mxu0 %v4109
    %4127 = vmatpush.bf16.msra.mxu0 %v4108
    %4128 = vmatpush.bf16.msra.mxu0 %v4107
    %4129 = vmatpush.bf16.msra.mxu0 %v4106
    %4130 = vmatmul.bf16.gmra.mxu0 %v4053
    %v4131 = vpop.f32.mrf.mxu0
    %v4132 = vadd.f32 %v4072, %v4131
    %v4133 = vpop.f32.mrf.mxu0
    %4134 = vdwg.mxu0
    %vm4135 = vcmask 15360
    %v4136 = vsel %vm4135, %v4132, -inf
    %4137 = vmax.xlane.f32.xlu0 %v4136
    %v4138 = vpop.xlane.xlu0 %4137
    %v4139 = vsub.f32 %v4132, %v4138
    %v4140 = vmul.f32 %v4139, 1.442695
    %v4141 = vpow.pop %v4140
    %v4142 = vsel %vm4135, %v4141, 0.0
    %4143 = vadd.xlane.f32.xlu0 %v4142
    %v4144 = vpop.xlane.xlu0 %4143
    %v4145 = vrcp.pop %v4144
    %v4146 = vmul.f32 %v4141, %v4145
    %vm4147 = vcmask 9216
    %4148 = vst.msk [vmem:[#allocation8] sm:$0x3] %vm4147, %v4146
    // Predicated region
    $region62: #{model_forward.1} parent=1 // pred_check
      _
    $region63: #{model_forward.1} parent=1 // pred_check_branch
      %4150 = sbr.rel (0) target = $region65
    $region64: #{model_forward.1} parent=1 // pred_region
      %4152 = vsyncadd [#allocation5], 0
      %s4154 = sshll.u32 [#allocation8], 4
      %s4155 = int_to_ptr.vmem [resolvable:$true] %s4154
      %s4156 = sshll.u32 %s13, 4
      %s4157 = int_to_ptr.hbm [resolvable:$true] %s4156
      %4159 = dma.vmem_to_hbm [thread:$0]  %s4155, 32, %s4157, [#allocation5]
    $region65: #{model_forward.1} parent=1 // pred_fallthru
      _
    // Predicated region
    $region66: #{model_forward.1} parent=1 // pred_check
      _
    $region67: #{model_forward.1} parent=1 // pred_check_branch
      %4161 = sbr.rel (0) target = $region69
    $region68: #{model_forward.1} parent=1 // pred_region
      %4163 = dma.done [#allocation5], 32
    $region69: #{model_forward.1} parent=1 // pred_fallthru
      _
    %4164 = vsyncpa [#allocation4], 1
    %4165 = vsyncpa [#allocation7], 1
    %4166 = vsyncpa [#allocation5], 1

</llo_original>
